<compile_context>
chip_gen: v5e
topology: v5e:2x2
jax: 0.10.0
libtpu: 0.0.40
codegen_flags: <defaults>
</compile_context>

<pallas_src>
import jax
import jax.numpy as jnp
from jax.experimental import pallas as pl
from jax.experimental.pallas import tpu as pltpu

KERNEL_SIZE = 3
NUM_CHANNELS = 64          # matches the PyTorch module default
REDUCTION_RATIO = 16       # matches the PyTorch module default
NUM_RESIDUAL_BLOCKS = 4    # reduced from 16 for a small, fast demo


# --------------------------------------------------------------------------
# In-kernel conv helper (shared by both kernels)
# --------------------------------------------------------------------------
def _conv3x3_tile(src_hwc, w_ref, b_ref, xpad_ref, patch_ref, *, relu):
    """3x3 SAME conv of one (H, W, C) f32 tile as a single im2col matmul.

    Assumes xpad_ref's one-pixel border is already zero; only the interior is
    (re)written here.  w_ref is the (9*C, C) bf16 im2col weight, b_ref (1, C)
    f32.  Returns the (H*W, C) f32 result.
    """
    H, W, C = src_hwc.shape
    xpad_ref[1:H + 1, 1:W + 1, :] = src_hwc
    # Build the (H*W, 9*C) bf16 im2col patch matrix in VMEM scratch.
    for dy in range(3):
        for dx in range(3):
            k = dy * 3 + dx
            tap = xpad_ref[dy:dy + H, dx:dx + W, :]              # (H, W, C) f32
            patch_ref[:, k * C:(k + 1) * C] = (
                tap.reshape(H * W, C).astype(patch_ref.dtype))
    # One deep MXU matmul: (H*W, 9C) x (9C, C) with f32 accumulation.
    acc = jnp.dot(patch_ref[...], w_ref[...],
                  preferred_element_type=jnp.float32)            # (H*W, C) f32
    acc = acc + b_ref[...]
    if relu:
        acc = jnp.maximum(acc, 0.0)
    return acc


# --------------------------------------------------------------------------
# Pallas kernels
# --------------------------------------------------------------------------
def _rcab_kernel(x_ref, w1_ref, b1_ref, w2_ref, b2_ref,
                 wd_ref, bd_ref, wu_ref, bu_ref,
                 o_ref, xpad_ref, patch_ref):
    # Fused RCAB: conv+ReLU -> conv -> channel attention -> x + r*scale.
    # x_ref/o_ref: (1, H, W, C) f32; w1/w2: (9C, C) bf16; b1/b2/bu: (1, C);
    # wd: (C, Cr); bd: (1, Cr); wu: (Cr, C).
    _, H, W, C = o_ref.shape

    # Zero the padded scratch once; _conv3x3_tile only rewrites the interior,
    # so the 1-pixel zero border stays valid for both convolutions.
    xpad_ref[...] = jnp.zeros_like(xpad_ref)

    x = x_ref[0].astype(jnp.float32)                              # (H, W, C)
    h = _conv3x3_tile(x, w1_ref, b1_ref, xpad_ref, patch_ref, relu=True)
    r = _conv3x3_tile(h.reshape(H, W, C), w2_ref, b2_ref,
                      xpad_ref, patch_ref, relu=False)            # (H*W, C)

    # Channel attention, all in f32: GAP -> 1x1 conv -> ReLU -> 1x1 -> sigmoid.
    pooled = jnp.sum(r, axis=0, keepdims=True) * (1.0 / float(H * W))   # (1, C)
    hidden = jnp.maximum(
        jnp.dot(pooled, wd_ref[...], preferred_element_type=jnp.float32)
        + bd_ref[...], 0.0)                                        # (1, Cr)
    scale = jax.nn.sigmoid(
        jnp.dot(hidden, wu_ref[...], preferred_element_type=jnp.float32)
        + bu_ref[...])                                             # (1, C)

    out = x.reshape(H * W, C) + r * scale                          # f32 combine
    o_ref[...] = out.reshape(1, H, W, C).astype(o_ref.dtype)


def _group_tail_kernel(gin_ref, x_ref, w_ref, b_ref, o_ref, xpad_ref, patch_ref):
    # Fused group tail: out = group_input + conv3x3(x).
    _, H, W, C = o_ref.shape
    xpad_ref[...] = jnp.zeros_like(xpad_ref)
    r = _conv3x3_tile(x_ref[0].astype(jnp.float32), w_ref, b_ref,
                      xpad_ref, patch_ref, relu=False)            # (H*W, C)
    out = gin_ref[0].astype(jnp.float32).reshape(H * W, C) + r
    o_ref[...] = out.reshape(1, H, W, C).astype(o_ref.dtype)


# --------------------------------------------------------------------------
# Pallas wrappers
# --------------------------------------------------------------------------
def _full_spec(shape):
    n_dims = len(shape)
    return pl.BlockSpec(shape, lambda n, _nd=n_dims: (0,) * _nd)


def rcab_fused(x, bp):
    """Fused RCAB forward.  x: (N, H, W, C) f32."""
    N, H, W, C = x.shape
    Cr = bp["wd"].shape[1]
    w1 = bp["w1"].reshape(9 * C, C).astype(jnp.bfloat16)   # HWIO -> im2col, bf16
    w2 = bp["w2"].reshape(9 * C, C).astype(jnp.bfloat16)
    return pl.pallas_call(
        _rcab_kernel,
        out_shape=jax.ShapeDtypeStruct(x.shape, x.dtype),
        grid_spec=pltpu.PrefetchScalarGridSpec(
            num_scalar_prefetch=0,
            grid=(N,),
            in_specs=[
                pl.BlockSpec((1, H, W, C), lambda n: (n, 0, 0, 0)),
                _full_spec((9 * C, C)),     # w1 (bf16)
                _full_spec((1, C)),         # b1
                _full_spec((9 * C, C)),     # w2 (bf16)
                _full_spec((1, C)),         # b2
                _full_spec((C, Cr)),        # wd
                _full_spec((1, Cr)),        # bd
                _full_spec((Cr, C)),        # wu
                _full_spec((1, C)),         # bu
            ],
            out_specs=pl.BlockSpec((1, H, W, C), lambda n: (n, 0, 0, 0)),
            scratch_shapes=[
                pltpu.VMEM((H + 2, W + 2, C), jnp.float32),     # zero-padded tile
                pltpu.VMEM((H * W, 9 * C), jnp.bfloat16),       # im2col patches
            ],
        ),
        compiler_params=pltpu.CompilerParams(dimension_semantics=("parallel",)),
    )(x, w1, bp["b1"].reshape(1, C), w2, bp["b2"].reshape(1, C),
      bp["wd"], bp["bd"].reshape(1, Cr), bp["wu"], bp["bu"].reshape(1, C))


def group_tail(group_input, h, wf, bf):
    """out = group_input + conv3x3(h); residual add fused into the conv."""
    N, H, W, C = h.shape
    w = wf.reshape(9 * C, C).astype(jnp.bfloat16)
    return pl.pallas_call(
        _group_tail_kernel,
        out_shape=jax.ShapeDtypeStruct(h.shape, h.dtype),
        grid_spec=pltpu.PrefetchScalarGridSpec(
            num_scalar_prefetch=0,
            grid=(N,),
            in_specs=[
                pl.BlockSpec((1, H, W, C), lambda n: (n, 0, 0, 0)),   # group input
                pl.BlockSpec((1, H, W, C), lambda n: (n, 0, 0, 0)),   # h
                _full_spec((9 * C, C)),
                _full_spec((1, C)),
            ],
            out_specs=pl.BlockSpec((1, H, W, C), lambda n: (n, 0, 0, 0)),
            scratch_shapes=[
                pltpu.VMEM((H + 2, W + 2, C), jnp.float32),
                pltpu.VMEM((H * W, 9 * C), jnp.bfloat16),
            ],
        ),
        compiler_params=pltpu.CompilerParams(dimension_semantics=("parallel",)),
    )(group_input, h, w, bf.reshape(1, C))


# --------------------------------------------------------------------------
# ResidualGroup forward (Pallas path); public API is NCHW like PyTorch
# --------------------------------------------------------------------------
def residual_group_forward(x_nchw, params):
    x = jnp.transpose(x_nchw, (0, 2, 3, 1))          # NCHW -> NHWC
    h = x
    for bp in params["blocks"]:
        h = rcab_fused(h, bp)
    out = group_tail(x, h, params["wf"], params["bf"])
    return jnp.transpose(out, (0, 3, 1, 2))          # NHWC -> NCHW


# --------------------------------------------------------------------------
# Pure-JAX reference (mirrors the kernel's bf16 matmul / f32 accumulate policy)
# --------------------------------------------------------------------------
def _conv3x3_ref(x, w_hwio, b, relu=False):
    y = jax.lax.conv_general_dilated(
        x.astype(jnp.bfloat16), w_hwio.astype(jnp.bfloat16),
        window_strides=(1, 1), padding="SAME",
        dimension_numbers=("NHWC", "HWIO", "NHWC"),
        preferred_element_type=jnp.float32) + b
    return jnp.maximum(y, 0.0) if relu else y


def residual_group_forward_ref(x_nchw, params):
    x = jnp.transpose(x_nchw, (0, 2, 3, 1))
    h = x
    for bp in params["blocks"]:
        t = _conv3x3_ref(h, bp["w1"], bp["b1"], relu=True)
        r = _conv3x3_ref(t, bp["w2"], bp["b2"])
        pooled = jnp.mean(r, axis=(1, 2))                        # (N, C) f32
        hid = jnp.maximum(pooled @ bp["wd"] + bp["bd"], 0.0)
        scale = jax.nn.sigmoid(hid @ bp["wu"] + bp["bu"])
        h = h + r * scale[:, None, None, :]
    out = x + _conv3x3_ref(h, params["wf"], params["bf"])
    return jnp.transpose(out, (0, 3, 1, 2))


# --------------------------------------------------------------------------
# Deterministic parameter init (PyTorch Conv2d-style uniform init)
# --------------------------------------------------------------------------
def _init_conv(key, kh, kw, cin, cout):
    fan_in = cin * kh * kw
    bound = 1.0 / float(fan_in) ** 0.5
    kw_, kb_ = jax.random.split(key)
    w = jax.random.uniform(kw_, (kh, kw, cin, cout), jnp.float32, -bound, bound)
    b = jax.random.uniform(kb_, (cout,), jnp.float32, -bound, bound)
    return w, b


def init_params(key, num_blocks, c, reduction, k):
    cr = c // reduction
    blocks = []
    for _ in range(num_blocks):
        key, k1, k2, k3, k4 = jax.random.split(key, 5)
        w1, b1 = _init_conv(k1, k, k, c, c)
        w2, b2 = _init_conv(k2, k, k, c, c)
        wd, bd = _init_conv(k3, 1, 1, c, cr)
        wu, bu = _init_conv(k4, 1, 1, cr, c)
        blocks.append(dict(w1=w1, b1=b1, w2=w2, b2=b2,
                           wd=wd.reshape(c, cr), bd=bd,
                           wu=wu.reshape(cr, c), bu=bu))
    key, kf = jax.random.split(key)
    wf, bf = _init_conv(kf, k, k, c, c)
    return dict(blocks=blocks, wf=wf, bf=bf)


# --------------------------------------------------------------------------
if __name__ == "__main__":
    N, C, H, W = 2, NUM_CHANNELS, 16, 16
    key = jax.random.PRNGKey(0)
    kx, kp = jax.random.split(key)
    x = jax.random.normal(kx, (N, C, H, W), jnp.float32)   # NCHW like PyTorch
    params = init_params(kp, NUM_RESIDUAL_BLOCKS, NUM_CHANNELS,
                         REDUCTION_RATIO, KERNEL_SIZE)

    out = jax.jit(residual_group_forward)(x, params)
    out = jax.block_until_ready(out)

    ref = residual_group_forward_ref(x, params)
    assert out.shape == (N, C, H, W), out.shape
    if not jnp.allclose(out, ref, atol=2e-2, rtol=2e-2):
        max_err = float(jnp.max(jnp.abs(out - ref)))
        raise AssertionError(f"Pallas output mismatch vs reference, max_err={max_err}")

    print("KERNEL_OK")
</pallas_src>

<mosaic_0001>
module attributes {stable_mosaic.version = 11 : i64} {
  func.func @_rcab_kernel(%arg0: i32, %arg1: memref<1x16x16x64xf32, #tpu.memory_space<vmem>>, %arg2: memref<576x64xbf16, #tpu.memory_space<vmem>>, %arg3: memref<1x64xf32, #tpu.memory_space<vmem>>, %arg4: memref<576x64xbf16, #tpu.memory_space<vmem>>, %arg5: memref<1x64xf32, #tpu.memory_space<vmem>>, %arg6: memref<64x4xf32, #tpu.memory_space<vmem>>, %arg7: memref<1x4xf32, #tpu.memory_space<vmem>>, %arg8: memref<4x64xf32, #tpu.memory_space<vmem>>, %arg9: memref<1x64xf32, #tpu.memory_space<vmem>>, %arg10: memref<1x16x16x64xf32, #tpu.memory_space<vmem>>, %arg11: memref<18x18x64xf32, #tpu.memory_space<vmem>>, %arg12: memref<256x576xbf16, #tpu.memory_space<vmem>>) attributes {dimension_semantics = [#tpu.dimension_semantics<parallel>], iteration_bounds = array<i64: 2>, scalar_prefetch = 0 : i64, scratch_operands = 2 : i64, tpu.core_type = #tpu.core_type<tc>, window_params = [{transform_indices = @transform_0, window_bounds = array<i64: 1, 16, 16, 64>}, {pipeline_mode = #tpu.pipeline_mode<synchronous>, transform_indices = @transform_1, window_bounds = array<i64: 576, 64>}, {pipeline_mode = #tpu.pipeline_mode<synchronous>, transform_indices = @transform_2, window_bounds = array<i64: 1, 64>}, {pipeline_mode = #tpu.pipeline_mode<synchronous>, transform_indices = @transform_3, window_bounds = array<i64: 576, 64>}, {pipeline_mode = #tpu.pipeline_mode<synchronous>, transform_indices = @transform_4, window_bounds = array<i64: 1, 64>}, {pipeline_mode = #tpu.pipeline_mode<synchronous>, transform_indices = @transform_5, window_bounds = array<i64: 64, 4>}, {pipeline_mode = #tpu.pipeline_mode<synchronous>, transform_indices = @transform_6, window_bounds = array<i64: 1, 4>}, {pipeline_mode = #tpu.pipeline_mode<synchronous>, transform_indices = @transform_7, window_bounds = array<i64: 4, 64>}, {pipeline_mode = #tpu.pipeline_mode<synchronous>, transform_indices = @transform_8, window_bounds = array<i64: 1, 64>}, {transform_indices = @transform_9, window_bounds = array<i64: 1, 16, 16, 64>}]} {
    %cst = arith.constant 0.000000e+00 : f32
    %0 = vector.broadcast %cst : f32 to vector<18x18x64xf32>
    %c0 = arith.constant 0 : index
    %c0_0 = arith.constant 0 : index
    %c0_1 = arith.constant 0 : index
    %1 = vector.load %arg11[%c0, %c0_0, %c0_1] : memref<18x18x64xf32, #tpu.memory_space<vmem>>, vector<18x18x64xf32>
    tpu.vector_store %arg11[%c0, %c0_0, %c0_1], %0 {strides = array<i32>} : memref<18x18x64xf32, #tpu.memory_space<vmem>>, vector<18x18x64xf32>,
    %c0_2 = arith.constant 0 : index
    %c0_3 = arith.constant 0 : index
    %c0_4 = arith.constant 0 : index
    %c0_5 = arith.constant 0 : index
    %2 = vector.load %arg1[%c0_2, %c0_3, %c0_4, %c0_5] : memref<1x16x16x64xf32, #tpu.memory_space<vmem>>, vector<1x16x16x64xf32>
    %3 = vector.shape_cast %2 : vector<1x16x16x64xf32> to vector<16x16x64xf32>
    %c1 = arith.constant 1 : index
    %c1_6 = arith.constant 1 : index
    %c0_7 = arith.constant 0 : index
    %4 = vector.load %arg11[%c1, %c1_6, %c0_7] : memref<18x18x64xf32, #tpu.memory_space<vmem>>, vector<16x16x64xf32>
    tpu.vector_store %arg11[%c1, %c1_6, %c0_7], %3 {strides = array<i32>} : memref<18x18x64xf32, #tpu.memory_space<vmem>>, vector<16x16x64xf32>,
    %c0_8 = arith.constant 0 : index
    %c0_9 = arith.constant 0 : index
    %c0_10 = arith.constant 0 : index
    %5 = vector.load %arg11[%c0_8, %c0_9, %c0_10] : memref<18x18x64xf32, #tpu.memory_space<vmem>>, vector<16x16x64xf32>
    %6 = vector.shape_cast %5 : vector<16x16x64xf32> to vector<256x64xf32>
    %7 = arith.truncf %6 : vector<256x64xf32> to vector<256x64xbf16>
    %c0_11 = arith.constant 0 : index
    %c0_12 = arith.constant 0 : index
    %8 = vector.load %arg12[%c0_11, %c0_12] : memref<256x576xbf16, #tpu.memory_space<vmem>>, vector<256x64xbf16>
    tpu.vector_store %arg12[%c0_11, %c0_12], %7 {strides = array<i32>} : memref<256x576xbf16, #tpu.memory_space<vmem>>, vector<256x64xbf16>,
    %c0_13 = arith.constant 0 : index
    %c1_14 = arith.constant 1 : index
    %c0_15 = arith.constant 0 : index
    %9 = vector.load %arg11[%c0_13, %c1_14, %c0_15] : memref<18x18x64xf32, #tpu.memory_space<vmem>>, vector<16x16x64xf32>
    %10 = vector.shape_cast %9 : vector<16x16x64xf32> to vector<256x64xf32>
    %11 = arith.truncf %10 : vector<256x64xf32> to vector<256x64xbf16>
    %c0_16 = arith.constant 0 : index
    %c64 = arith.constant 64 : index
    %12 = vector.load %arg12[%c0_16, %c64] : memref<256x576xbf16, #tpu.memory_space<vmem>>, vector<256x64xbf16>
    tpu.vector_store %arg12[%c0_16, %c64], %11 {strides = array<i32>} : memref<256x576xbf16, #tpu.memory_space<vmem>>, vector<256x64xbf16>,
    %c0_17 = arith.constant 0 : index
    %c2 = arith.constant 2 : index
    %c0_18 = arith.constant 0 : index
    %13 = vector.load %arg11[%c0_17, %c2, %c0_18] : memref<18x18x64xf32, #tpu.memory_space<vmem>>, vector<16x16x64xf32>
    %14 = vector.shape_cast %13 : vector<16x16x64xf32> to vector<256x64xf32>
    %15 = arith.truncf %14 : vector<256x64xf32> to vector<256x64xbf16>
    %c0_19 = arith.constant 0 : index
    %c128 = arith.constant 128 : index
    %16 = vector.load %arg12[%c0_19, %c128] : memref<256x576xbf16, #tpu.memory_space<vmem>>, vector<256x64xbf16>
    tpu.vector_store %arg12[%c0_19, %c128], %15 {strides = array<i32>} : memref<256x576xbf16, #tpu.memory_space<vmem>>, vector<256x64xbf16>,
    %c1_20 = arith.constant 1 : index
    %c0_21 = arith.constant 0 : index
    %c0_22 = arith.constant 0 : index
    %17 = vector.load %arg11[%c1_20, %c0_21, %c0_22] : memref<18x18x64xf32, #tpu.memory_space<vmem>>, vector<16x16x64xf32>
    %18 = vector.shape_cast %17 : vector<16x16x64xf32> to vector<256x64xf32>
    %19 = arith.truncf %18 : vector<256x64xf32> to vector<256x64xbf16>
    %c0_23 = arith.constant 0 : index
    %c192 = arith.constant 192 : index
    %20 = vector.load %arg12[%c0_23, %c192] : memref<256x576xbf16, #tpu.memory_space<vmem>>, vector<256x64xbf16>
    tpu.vector_store %arg12[%c0_23, %c192], %19 {strides = array<i32>} : memref<256x576xbf16, #tpu.memory_space<vmem>>, vector<256x64xbf16>,
    %c1_24 = arith.constant 1 : index
    %c1_25 = arith.constant 1 : index
    %c0_26 = arith.constant 0 : index
    %21 = vector.load %arg11[%c1_24, %c1_25, %c0_26] : memref<18x18x64xf32, #tpu.memory_space<vmem>>, vector<16x16x64xf32>
    %22 = vector.shape_cast %21 : vector<16x16x64xf32> to vector<256x64xf32>
    %23 = arith.truncf %22 : vector<256x64xf32> to vector<256x64xbf16>
    %c0_27 = arith.constant 0 : index
    %c256 = arith.constant 256 : index
    %24 = vector.load %arg12[%c0_27, %c256] : memref<256x576xbf16, #tpu.memory_space<vmem>>, vector<256x64xbf16>
    tpu.vector_store %arg12[%c0_27, %c256], %23 {strides = array<i32>} : memref<256x576xbf16, #tpu.memory_space<vmem>>, vector<256x64xbf16>,
    %c1_28 = arith.constant 1 : index
    %c2_29 = arith.constant 2 : index
    %c0_30 = arith.constant 0 : index
    %25 = vector.load %arg11[%c1_28, %c2_29, %c0_30] : memref<18x18x64xf32, #tpu.memory_space<vmem>>, vector<16x16x64xf32>
    %26 = vector.shape_cast %25 : vector<16x16x64xf32> to vector<256x64xf32>
    %27 = arith.truncf %26 : vector<256x64xf32> to vector<256x64xbf16>
    %c0_31 = arith.constant 0 : index
    %c320 = arith.constant 320 : index
    %28 = vector.load %arg12[%c0_31, %c320] : memref<256x576xbf16, #tpu.memory_space<vmem>>, vector<256x64xbf16>
    tpu.vector_store %arg12[%c0_31, %c320], %27 {strides = array<i32>} : memref<256x576xbf16, #tpu.memory_space<vmem>>, vector<256x64xbf16>,
    %c2_32 = arith.constant 2 : index
    %c0_33 = arith.constant 0 : index
    %c0_34 = arith.constant 0 : index
    %29 = vector.load %arg11[%c2_32, %c0_33, %c0_34] : memref<18x18x64xf32, #tpu.memory_space<vmem>>, vector<16x16x64xf32>
    %30 = vector.shape_cast %29 : vector<16x16x64xf32> to vector<256x64xf32>
    %31 = arith.truncf %30 : vector<256x64xf32> to vector<256x64xbf16>
    %c0_35 = arith.constant 0 : index
    %c384 = arith.constant 384 : index
    %32 = vector.load %arg12[%c0_35, %c384] : memref<256x576xbf16, #tpu.memory_space<vmem>>, vector<256x64xbf16>
    tpu.vector_store %arg12[%c0_35, %c384], %31 {strides = array<i32>} : memref<256x576xbf16, #tpu.memory_space<vmem>>, vector<256x64xbf16>,
    %c2_36 = arith.constant 2 : index
    %c1_37 = arith.constant 1 : index
    %c0_38 = arith.constant 0 : index
    %33 = vector.load %arg11[%c2_36, %c1_37, %c0_38] : memref<18x18x64xf32, #tpu.memory_space<vmem>>, vector<16x16x64xf32>
    %34 = vector.shape_cast %33 : vector<16x16x64xf32> to vector<256x64xf32>
    %35 = arith.truncf %34 : vector<256x64xf32> to vector<256x64xbf16>
    %c0_39 = arith.constant 0 : index
    %c448 = arith.constant 448 : index
    %36 = vector.load %arg12[%c0_39, %c448] : memref<256x576xbf16, #tpu.memory_space<vmem>>, vector<256x64xbf16>
    tpu.vector_store %arg12[%c0_39, %c448], %35 {strides = array<i32>} : memref<256x576xbf16, #tpu.memory_space<vmem>>, vector<256x64xbf16>,
    %c2_40 = arith.constant 2 : index
    %c2_41 = arith.constant 2 : index
    %c0_42 = arith.constant 0 : index
    %37 = vector.load %arg11[%c2_40, %c2_41, %c0_42] : memref<18x18x64xf32, #tpu.memory_space<vmem>>, vector<16x16x64xf32>
    %38 = vector.shape_cast %37 : vector<16x16x64xf32> to vector<256x64xf32>
    %39 = arith.truncf %38 : vector<256x64xf32> to vector<256x64xbf16>
    %c0_43 = arith.constant 0 : index
    %c512 = arith.constant 512 : index
    %40 = vector.load %arg12[%c0_43, %c512] : memref<256x576xbf16, #tpu.memory_space<vmem>>, vector<256x64xbf16>
    tpu.vector_store %arg12[%c0_43, %c512], %39 {strides = array<i32>} : memref<256x576xbf16, #tpu.memory_space<vmem>>, vector<256x64xbf16>,
    %c0_44 = arith.constant 0 : index
    %c0_45 = arith.constant 0 : index
    %41 = vector.load %arg12[%c0_44, %c0_45] : memref<256x576xbf16, #tpu.memory_space<vmem>>, vector<256x576xbf16>
    %c0_46 = arith.constant 0 : index
    %c0_47 = arith.constant 0 : index
    %42 = vector.load %arg2[%c0_46, %c0_47] : memref<576x64xbf16, #tpu.memory_space<vmem>>, vector<576x64xbf16>
    %cst_48 = arith.constant dense<0.000000e+00> : vector<256x64xf32>
    %43 = tpu.matmul %41, %42, %cst_48 {dimension_numbers = #tpu.dot_dimension_numbers<[1], [0], [0], [1], [0, 0, 1, 1], [], []>} : vector<256x576xbf16>, vector<576x64xbf16>, vector<256x64xf32> -> vector<256x64xf32>
    %c0_49 = arith.constant 0 : index
    %c0_50 = arith.constant 0 : index
    %44 = vector.load %arg3[%c0_49, %c0_50] : memref<1x64xf32, #tpu.memory_space<vmem>>, vector<1x64xf32>
    %45 = vector.broadcast %44 : vector<1x64xf32> to vector<256x64xf32>
    %46 = arith.addf %43, %45 : vector<256x64xf32>
    %cst_51 = arith.constant 0.000000e+00 : f32
    %47 = vector.broadcast %cst_51 : f32 to vector<256x64xf32>
    %48 = arith.maximumf %46, %47 : vector<256x64xf32>
    %49 = vector.shape_cast %48 : vector<256x64xf32> to vector<16x16x64xf32>
    %c1_52 = arith.constant 1 : index
    %c1_53 = arith.constant 1 : index
    %c0_54 = arith.constant 0 : index
    %50 = vector.load %arg11[%c1_52, %c1_53, %c0_54] : memref<18x18x64xf32, #tpu.memory_space<vmem>>, vector<16x16x64xf32>
    tpu.vector_store %arg11[%c1_52, %c1_53, %c0_54], %49 {strides = array<i32>} : memref<18x18x64xf32, #tpu.memory_space<vmem>>, vector<16x16x64xf32>,
    %c0_55 = arith.constant 0 : index
    %c0_56 = arith.constant 0 : index
    %c0_57 = arith.constant 0 : index
    %51 = vector.load %arg11[%c0_55, %c0_56, %c0_57] : memref<18x18x64xf32, #tpu.memory_space<vmem>>, vector<16x16x64xf32>
    %52 = vector.shape_cast %51 : vector<16x16x64xf32> to vector<256x64xf32>
    %53 = arith.truncf %52 : vector<256x64xf32> to vector<256x64xbf16>
    %c0_58 = arith.constant 0 : index
    %c0_59 = arith.constant 0 : index
    %54 = vector.load %arg12[%c0_58, %c0_59] : memref<256x576xbf16, #tpu.memory_space<vmem>>, vector<256x64xbf16>
    tpu.vector_store %arg12[%c0_58, %c0_59], %53 {strides = array<i32>} : memref<256x576xbf16, #tpu.memory_space<vmem>>, vector<256x64xbf16>,
    %c0_60 = arith.constant 0 : index
    %c1_61 = arith.constant 1 : index
    %c0_62 = arith.constant 0 : index
    %55 = vector.load %arg11[%c0_60, %c1_61, %c0_62] : memref<18x18x64xf32, #tpu.memory_space<vmem>>, vector<16x16x64xf32>
    %56 = vector.shape_cast %55 : vector<16x16x64xf32> to vector<256x64xf32>
    %57 = arith.truncf %56 : vector<256x64xf32> to vector<256x64xbf16>
    %c0_63 = arith.constant 0 : index
    %c64_64 = arith.constant 64 : index
    %58 = vector.load %arg12[%c0_63, %c64_64] : memref<256x576xbf16, #tpu.memory_space<vmem>>, vector<256x64xbf16>
    tpu.vector_store %arg12[%c0_63, %c64_64], %57 {strides = array<i32>} : memref<256x576xbf16, #tpu.memory_space<vmem>>, vector<256x64xbf16>,
    %c0_65 = arith.constant 0 : index
    %c2_66 = arith.constant 2 : index
    %c0_67 = arith.constant 0 : index
    %59 = vector.load %arg11[%c0_65, %c2_66, %c0_67] : memref<18x18x64xf32, #tpu.memory_space<vmem>>, vector<16x16x64xf32>
    %60 = vector.shape_cast %59 : vector<16x16x64xf32> to vector<256x64xf32>
    %61 = arith.truncf %60 : vector<256x64xf32> to vector<256x64xbf16>
    %c0_68 = arith.constant 0 : index
    %c128_69 = arith.constant 128 : index
    %62 = vector.load %arg12[%c0_68, %c128_69] : memref<256x576xbf16, #tpu.memory_space<vmem>>, vector<256x64xbf16>
    tpu.vector_store %arg12[%c0_68, %c128_69], %61 {strides = array<i32>} : memref<256x576xbf16, #tpu.memory_space<vmem>>, vector<256x64xbf16>,
    %c1_70 = arith.constant 1 : index
    %c0_71 = arith.constant 0 : index
    %c0_72 = arith.constant 0 : index
    %63 = vector.load %arg11[%c1_70, %c0_71, %c0_72] : memref<18x18x64xf32, #tpu.memory_space<vmem>>, vector<16x16x64xf32>
    %64 = vector.shape_cast %63 : vector<16x16x64xf32> to vector<256x64xf32>
    %65 = arith.truncf %64 : vector<256x64xf32> to vector<256x64xbf16>
    %c0_73 = arith.constant 0 : index
    %c192_74 = arith.constant 192 : index
    %66 = vector.load %arg12[%c0_73, %c192_74] : memref<256x576xbf16, #tpu.memory_space<vmem>>, vector<256x64xbf16>
    tpu.vector_store %arg12[%c0_73, %c192_74], %65 {strides = array<i32>} : memref<256x576xbf16, #tpu.memory_space<vmem>>, vector<256x64xbf16>,
    %c1_75 = arith.constant 1 : index
    %c1_76 = arith.constant 1 : index
    %c0_77 = arith.constant 0 : index
    %67 = vector.load %arg11[%c1_75, %c1_76, %c0_77] : memref<18x18x64xf32, #tpu.memory_space<vmem>>, vector<16x16x64xf32>
    %68 = vector.shape_cast %67 : vector<16x16x64xf32> to vector<256x64xf32>
    %69 = arith.truncf %68 : vector<256x64xf32> to vector<256x64xbf16>
    %c0_78 = arith.constant 0 : index
    %c256_79 = arith.constant 256 : index
    %70 = vector.load %arg12[%c0_78, %c256_79] : memref<256x576xbf16, #tpu.memory_space<vmem>>, vector<256x64xbf16>
    tpu.vector_store %arg12[%c0_78, %c256_79], %69 {strides = array<i32>} : memref<256x576xbf16, #tpu.memory_space<vmem>>, vector<256x64xbf16>,
    %c1_80 = arith.constant 1 : index
    %c2_81 = arith.constant 2 : index
    %c0_82 = arith.constant 0 : index
    %71 = vector.load %arg11[%c1_80, %c2_81, %c0_82] : memref<18x18x64xf32, #tpu.memory_space<vmem>>, vector<16x16x64xf32>
    %72 = vector.shape_cast %71 : vector<16x16x64xf32> to vector<256x64xf32>
    %73 = arith.truncf %72 : vector<256x64xf32> to vector<256x64xbf16>
    %c0_83 = arith.constant 0 : index
    %c320_84 = arith.constant 320 : index
    %74 = vector.load %arg12[%c0_83, %c320_84] : memref<256x576xbf16, #tpu.memory_space<vmem>>, vector<256x64xbf16>
    tpu.vector_store %arg12[%c0_83, %c320_84], %73 {strides = array<i32>} : memref<256x576xbf16, #tpu.memory_space<vmem>>, vector<256x64xbf16>,
    %c2_85 = arith.constant 2 : index
    %c0_86 = arith.constant 0 : index
    %c0_87 = arith.constant 0 : index
    %75 = vector.load %arg11[%c2_85, %c0_86, %c0_87] : memref<18x18x64xf32, #tpu.memory_space<vmem>>, vector<16x16x64xf32>
    %76 = vector.shape_cast %75 : vector<16x16x64xf32> to vector<256x64xf32>
    %77 = arith.truncf %76 : vector<256x64xf32> to vector<256x64xbf16>
    %c0_88 = arith.constant 0 : index
    %c384_89 = arith.constant 384 : index
    %78 = vector.load %arg12[%c0_88, %c384_89] : memref<256x576xbf16, #tpu.memory_space<vmem>>, vector<256x64xbf16>
    tpu.vector_store %arg12[%c0_88, %c384_89], %77 {strides = array<i32>} : memref<256x576xbf16, #tpu.memory_space<vmem>>, vector<256x64xbf16>,
    %c2_90 = arith.constant 2 : index
    %c1_91 = arith.constant 1 : index
    %c0_92 = arith.constant 0 : index
    %79 = vector.load %arg11[%c2_90, %c1_91, %c0_92] : memref<18x18x64xf32, #tpu.memory_space<vmem>>, vector<16x16x64xf32>
    %80 = vector.shape_cast %79 : vector<16x16x64xf32> to vector<256x64xf32>
    %81 = arith.truncf %80 : vector<256x64xf32> to vector<256x64xbf16>
    %c0_93 = arith.constant 0 : index
    %c448_94 = arith.constant 448 : index
    %82 = vector.load %arg12[%c0_93, %c448_94] : memref<256x576xbf16, #tpu.memory_space<vmem>>, vector<256x64xbf16>
    tpu.vector_store %arg12[%c0_93, %c448_94], %81 {strides = array<i32>} : memref<256x576xbf16, #tpu.memory_space<vmem>>, vector<256x64xbf16>,
    %c2_95 = arith.constant 2 : index
    %c2_96 = arith.constant 2 : index
    %c0_97 = arith.constant 0 : index
    %83 = vector.load %arg11[%c2_95, %c2_96, %c0_97] : memref<18x18x64xf32, #tpu.memory_space<vmem>>, vector<16x16x64xf32>
    %84 = vector.shape_cast %83 : vector<16x16x64xf32> to vector<256x64xf32>
    %85 = arith.truncf %84 : vector<256x64xf32> to vector<256x64xbf16>
    %c0_98 = arith.constant 0 : index
    %c512_99 = arith.constant 512 : index
    %86 = vector.load %arg12[%c0_98, %c512_99] : memref<256x576xbf16, #tpu.memory_space<vmem>>, vector<256x64xbf16>
    tpu.vector_store %arg12[%c0_98, %c512_99], %85 {strides = array<i32>} : memref<256x576xbf16, #tpu.memory_space<vmem>>, vector<256x64xbf16>,
    %c0_100 = arith.constant 0 : index
    %c0_101 = arith.constant 0 : index
    %87 = vector.load %arg12[%c0_100, %c0_101] : memref<256x576xbf16, #tpu.memory_space<vmem>>, vector<256x576xbf16>
    %c0_102 = arith.constant 0 : index
    %c0_103 = arith.constant 0 : index
    %88 = vector.load %arg4[%c0_102, %c0_103] : memref<576x64xbf16, #tpu.memory_space<vmem>>, vector<576x64xbf16>
    %cst_104 = arith.constant dense<0.000000e+00> : vector<256x64xf32>
    %89 = tpu.matmul %87, %88, %cst_104 {dimension_numbers = #tpu.dot_dimension_numbers<[1], [0], [0], [1], [0, 0, 1, 1], [], []>} : vector<256x576xbf16>, vector<576x64xbf16>, vector<256x64xf32> -> vector<256x64xf32>
    %c0_105 = arith.constant 0 : index
    %c0_106 = arith.constant 0 : index
    %90 = vector.load %arg5[%c0_105, %c0_106] : memref<1x64xf32, #tpu.memory_space<vmem>>, vector<1x64xf32>
    %91 = vector.broadcast %90 : vector<1x64xf32> to vector<256x64xf32>
    %92 = arith.addf %89, %91 : vector<256x64xf32>
    %cst_107 = arith.constant dense<0.000000e+00> : vector<64xf32>
    %93 = vector.multi_reduction <add>, %92, %cst_107 [0] : vector<256x64xf32> to vector<64xf32>
    %94 = vector.shape_cast %93 : vector<64xf32> to vector<1x64xf32>
    %cst_108 = arith.constant 3.906250e-03 : f32
    %95 = vector.broadcast %cst_108 : f32 to vector<1x64xf32>
    %96 = arith.mulf %94, %95 : vector<1x64xf32>
    %c0_109 = arith.constant 0 : index
    %c0_110 = arith.constant 0 : index
    %97 = vector.load %arg6[%c0_109, %c0_110] : memref<64x4xf32, #tpu.memory_space<vmem>>, vector<64x4xf32>
    %cst_111 = arith.constant dense<0.000000e+00> : vector<1x4xf32>
    %98 = tpu.matmul %96, %97, %cst_111 {dimension_numbers = #tpu.dot_dimension_numbers<[1], [0], [0], [1], [0, 0, 1, 1], [], []>} : vector<1x64xf32>, vector<64x4xf32>, vector<1x4xf32> -> vector<1x4xf32>
    %c0_112 = arith.constant 0 : index
    %c0_113 = arith.constant 0 : index
    %99 = vector.load %arg7[%c0_112, %c0_113] : memref<1x4xf32, #tpu.memory_space<vmem>>, vector<1x4xf32>
    %100 = arith.addf %98, %99 : vector<1x4xf32>
    %cst_114 = arith.constant 0.000000e+00 : f32
    %101 = vector.broadcast %cst_114 : f32 to vector<1x4xf32>
    %102 = arith.maximumf %100, %101 : vector<1x4xf32>
    %c0_115 = arith.constant 0 : index
    %c0_116 = arith.constant 0 : index
    %103 = vector.load %arg8[%c0_115, %c0_116] : memref<4x64xf32, #tpu.memory_space<vmem>>, vector<4x64xf32>
    %cst_117 = arith.constant dense<0.000000e+00> : vector<1x64xf32>
    %104 = tpu.matmul %102, %103, %cst_117 {dimension_numbers = #tpu.dot_dimension_numbers<[1], [0], [0], [1], [0, 0, 1, 1], [], []>} : vector<1x4xf32>, vector<4x64xf32>, vector<1x64xf32> -> vector<1x64xf32>
    %c0_118 = arith.constant 0 : index
    %c0_119 = arith.constant 0 : index
    %105 = vector.load %arg9[%c0_118, %c0_119] : memref<1x64xf32, #tpu.memory_space<vmem>>, vector<1x64xf32>
    %106 = arith.addf %104, %105 : vector<1x64xf32>
    %107 = arith.negf %106 : vector<1x64xf32>
    %108 = math.exp %107 : vector<1x64xf32>
    %cst_120 = arith.constant 1.000000e+00 : f32
    %109 = vector.broadcast %cst_120 : f32 to vector<1x64xf32>
    %110 = arith.addf %109, %108 : vector<1x64xf32>
    %111 = arith.divf %109, %110 : vector<1x64xf32>
    %112 = vector.shape_cast %3 : vector<16x16x64xf32> to vector<256x64xf32>
    %113 = vector.broadcast %111 : vector<1x64xf32> to vector<256x64xf32>
    %114 = arith.mulf %92, %113 : vector<256x64xf32>
    %115 = arith.addf %112, %114 : vector<256x64xf32>
    %116 = vector.shape_cast %115 : vector<256x64xf32> to vector<1x16x16x64xf32>
    %c0_121 = arith.constant 0 : index
    %c0_122 = arith.constant 0 : index
    %c0_123 = arith.constant 0 : index
    %c0_124 = arith.constant 0 : index
    %117 = vector.load %arg10[%c0_121, %c0_122, %c0_123, %c0_124] : memref<1x16x16x64xf32, #tpu.memory_space<vmem>>, vector<1x16x16x64xf32>
    tpu.vector_store %arg10[%c0_121, %c0_122, %c0_123, %c0_124], %116 {strides = array<i32>} : memref<1x16x16x64xf32, #tpu.memory_space<vmem>>, vector<1x16x16x64xf32>,
    return
  }
  func.func @transform_0(%arg0: i32) -> (i32, i32, i32, i32) {
    %c0_i32 = arith.constant 0 : i32
    %c0_i32_0 = arith.constant 0 : i32
    %c0_i32_1 = arith.constant 0 : i32
    %c0_i32_2 = arith.constant 0 : i32
    return %arg0, %c0_i32, %c0_i32_0, %c0_i32_1 : i32, i32, i32, i32
  }
  func.func @transform_1(%arg0: i32) -> (i32, i32) {
    %c0_i32 = arith.constant 0 : i32
    %c0_i32_0 = arith.constant 0 : i32
    %c0_i32_1 = arith.constant 0 : i32
    return %c0_i32, %c0_i32_0 : i32, i32
  }
  func.func @transform_2(%arg0: i32) -> (i32, i32) {
    %c0_i32 = arith.constant 0 : i32
    %c0_i32_0 = arith.constant 0 : i32
    %c0_i32_1 = arith.constant 0 : i32
    return %c0_i32, %c0_i32_0 : i32, i32
  }
  func.func @transform_3(%arg0: i32) -> (i32, i32) {
    %c0_i32 = arith.constant 0 : i32
    %c0_i32_0 = arith.constant 0 : i32
    %c0_i32_1 = arith.constant 0 : i32
    return %c0_i32, %c0_i32_0 : i32, i32
  }
  func.func @transform_4(%arg0: i32) -> (i32, i32) {
    %c0_i32 = arith.constant 0 : i32
    %c0_i32_0 = arith.constant 0 : i32
    %c0_i32_1 = arith.constant 0 : i32
    return %c0_i32, %c0_i32_0 : i32, i32
  }
  func.func @transform_5(%arg0: i32) -> (i32, i32) {
    %c0_i32 = arith.constant 0 : i32
    %c0_i32_0 = arith.constant 0 : i32
    %c0_i32_1 = arith.constant 0 : i32
    return %c0_i32, %c0_i32_0 : i32, i32
  }
  func.func @transform_6(%arg0: i32) -> (i32, i32) {
    %c0_i32 = arith.constant 0 : i32
    %c0_i32_0 = arith.constant 0 : i32
    %c0_i32_1 = arith.constant 0 : i32
    return %c0_i32, %c0_i32_0 : i32, i32
  }
  func.func @transform_7(%arg0: i32) -> (i32, i32) {
    %c0_i32 = arith.constant 0 : i32
    %c0_i32_0 = arith.constant 0 : i32
    %c0_i32_1 = arith.constant 0 : i32
    return %c0_i32, %c0_i32_0 : i32, i32
  }
  func.func @transform_8(%arg0: i32) -> (i32, i32) {
    %c0_i32 = arith.constant 0 : i32
    %c0_i32_0 = arith.constant 0 : i32
    %c0_i32_1 = arith.constant 0 : i32
    return %c0_i32, %c0_i32_0 : i32, i32
  }
  func.func @transform_9(%arg0: i32) -> (i32, i32, i32, i32) {
    %c0_i32 = arith.constant 0 : i32
    %c0_i32_0 = arith.constant 0 : i32
    %c0_i32_1 = arith.constant 0 : i32
    %c0_i32_2 = arith.constant 0 : i32
    return %arg0, %c0_i32, %c0_i32_0, %c0_i32_1 : i32, i32, i32, i32
  }
}

module attributes {stable_mosaic.version = 11 : i64} {
  func.func @_group_tail_kernel(%arg0: i32, %arg1: memref<1x16x16x64xf32, #tpu.memory_space<vmem>>, %arg2: memref<1x16x16x64xf32, #tpu.memory_space<vmem>>, %arg3: memref<576x64xbf16, #tpu.memory_space<vmem>>, %arg4: memref<1x64xf32, #tpu.memory_space<vmem>>, %arg5: memref<1x16x16x64xf32, #tpu.memory_space<vmem>>, %arg6: memref<18x18x64xf32, #tpu.memory_space<vmem>>, %arg7: memref<256x576xbf16, #tpu.memory_space<vmem>>) attributes {dimension_semantics = [#tpu.dimension_semantics<parallel>], iteration_bounds = array<i64: 2>, scalar_prefetch = 0 : i64, scratch_operands = 2 : i64, tpu.core_type = #tpu.core_type<tc>, window_params = [{transform_indices = @transform_0, window_bounds = array<i64: 1, 16, 16, 64>}, {transform_indices = @transform_1, window_bounds = array<i64: 1, 16, 16, 64>}, {pipeline_mode = #tpu.pipeline_mode<synchronous>, transform_indices = @transform_2, window_bounds = array<i64: 576, 64>}, {pipeline_mode = #tpu.pipeline_mode<synchronous>, transform_indices = @transform_3, window_bounds = array<i64: 1, 64>}, {transform_indices = @transform_4, window_bounds = array<i64: 1, 16, 16, 64>}]} {
    %cst = arith.constant 0.000000e+00 : f32
    %0 = vector.broadcast %cst : f32 to vector<18x18x64xf32>
    %c0 = arith.constant 0 : index
    %c0_0 = arith.constant 0 : index
    %c0_1 = arith.constant 0 : index
    %1 = vector.load %arg6[%c0, %c0_0, %c0_1] : memref<18x18x64xf32, #tpu.memory_space<vmem>>, vector<18x18x64xf32>
    tpu.vector_store %arg6[%c0, %c0_0, %c0_1], %0 {strides = array<i32>} : memref<18x18x64xf32, #tpu.memory_space<vmem>>, vector<18x18x64xf32>,
    %c0_2 = arith.constant 0 : index
    %c0_3 = arith.constant 0 : index
    %c0_4 = arith.constant 0 : index
    %c0_5 = arith.constant 0 : index
    %2 = vector.load %arg2[%c0_2, %c0_3, %c0_4, %c0_5] : memref<1x16x16x64xf32, #tpu.memory_space<vmem>>, vector<1x16x16x64xf32>
    %3 = vector.shape_cast %2 : vector<1x16x16x64xf32> to vector<16x16x64xf32>
    %c1 = arith.constant 1 : index
    %c1_6 = arith.constant 1 : index
    %c0_7 = arith.constant 0 : index
    %4 = vector.load %arg6[%c1, %c1_6, %c0_7] : memref<18x18x64xf32, #tpu.memory_space<vmem>>, vector<16x16x64xf32>
    tpu.vector_store %arg6[%c1, %c1_6, %c0_7], %3 {strides = array<i32>} : memref<18x18x64xf32, #tpu.memory_space<vmem>>, vector<16x16x64xf32>,
    %c0_8 = arith.constant 0 : index
    %c0_9 = arith.constant 0 : index
    %c0_10 = arith.constant 0 : index
    %5 = vector.load %arg6[%c0_8, %c0_9, %c0_10] : memref<18x18x64xf32, #tpu.memory_space<vmem>>, vector<16x16x64xf32>
    %6 = vector.shape_cast %5 : vector<16x16x64xf32> to vector<256x64xf32>
    %7 = arith.truncf %6 : vector<256x64xf32> to vector<256x64xbf16>
    %c0_11 = arith.constant 0 : index
    %c0_12 = arith.constant 0 : index
    %8 = vector.load %arg7[%c0_11, %c0_12] : memref<256x576xbf16, #tpu.memory_space<vmem>>, vector<256x64xbf16>
    tpu.vector_store %arg7[%c0_11, %c0_12], %7 {strides = array<i32>} : memref<256x576xbf16, #tpu.memory_space<vmem>>, vector<256x64xbf16>,
    %c0_13 = arith.constant 0 : index
    %c1_14 = arith.constant 1 : index
    %c0_15 = arith.constant 0 : index
    %9 = vector.load %arg6[%c0_13, %c1_14, %c0_15] : memref<18x18x64xf32, #tpu.memory_space<vmem>>, vector<16x16x64xf32>
    %10 = vector.shape_cast %9 : vector<16x16x64xf32> to vector<256x64xf32>
    %11 = arith.truncf %10 : vector<256x64xf32> to vector<256x64xbf16>
    %c0_16 = arith.constant 0 : index
    %c64 = arith.constant 64 : index
    %12 = vector.load %arg7[%c0_16, %c64] : memref<256x576xbf16, #tpu.memory_space<vmem>>, vector<256x64xbf16>
    tpu.vector_store %arg7[%c0_16, %c64], %11 {strides = array<i32>} : memref<256x576xbf16, #tpu.memory_space<vmem>>, vector<256x64xbf16>,
    %c0_17 = arith.constant 0 : index
    %c2 = arith.constant 2 : index
    %c0_18 = arith.constant 0 : index
    %13 = vector.load %arg6[%c0_17, %c2, %c0_18] : memref<18x18x64xf32, #tpu.memory_space<vmem>>, vector<16x16x64xf32>
    %14 = vector.shape_cast %13 : vector<16x16x64xf32> to vector<256x64xf32>
    %15 = arith.truncf %14 : vector<256x64xf32> to vector<256x64xbf16>
    %c0_19 = arith.constant 0 : index
    %c128 = arith.constant 128 : index
    %16 = vector.load %arg7[%c0_19, %c128] : memref<256x576xbf16, #tpu.memory_space<vmem>>, vector<256x64xbf16>
    tpu.vector_store %arg7[%c0_19, %c128], %15 {strides = array<i32>} : memref<256x576xbf16, #tpu.memory_space<vmem>>, vector<256x64xbf16>,
    %c1_20 = arith.constant 1 : index
    %c0_21 = arith.constant 0 : index
    %c0_22 = arith.constant 0 : index
    %17 = vector.load %arg6[%c1_20, %c0_21, %c0_22] : memref<18x18x64xf32, #tpu.memory_space<vmem>>, vector<16x16x64xf32>
    %18 = vector.shape_cast %17 : vector<16x16x64xf32> to vector<256x64xf32>
    %19 = arith.truncf %18 : vector<256x64xf32> to vector<256x64xbf16>
    %c0_23 = arith.constant 0 : index
    %c192 = arith.constant 192 : index
    %20 = vector.load %arg7[%c0_23, %c192] : memref<256x576xbf16, #tpu.memory_space<vmem>>, vector<256x64xbf16>
    tpu.vector_store %arg7[%c0_23, %c192], %19 {strides = array<i32>} : memref<256x576xbf16, #tpu.memory_space<vmem>>, vector<256x64xbf16>,
    %c1_24 = arith.constant 1 : index
    %c1_25 = arith.constant 1 : index
    %c0_26 = arith.constant 0 : index
    %21 = vector.load %arg6[%c1_24, %c1_25, %c0_26] : memref<18x18x64xf32, #tpu.memory_space<vmem>>, vector<16x16x64xf32>
    %22 = vector.shape_cast %21 : vector<16x16x64xf32> to vector<256x64xf32>
    %23 = arith.truncf %22 : vector<256x64xf32> to vector<256x64xbf16>
    %c0_27 = arith.constant 0 : index
    %c256 = arith.constant 256 : index
    %24 = vector.load %arg7[%c0_27, %c256] : memref<256x576xbf16, #tpu.memory_space<vmem>>, vector<256x64xbf16>
    tpu.vector_store %arg7[%c0_27, %c256], %23 {strides = array<i32>} : memref<256x576xbf16, #tpu.memory_space<vmem>>, vector<256x64xbf16>,
    %c1_28 = arith.constant 1 : index
    %c2_29 = arith.constant 2 : index
    %c0_30 = arith.constant 0 : index
    %25 = vector.load %arg6[%c1_28, %c2_29, %c0_30] : memref<18x18x64xf32, #tpu.memory_space<vmem>>, vector<16x16x64xf32>
    %26 = vector.shape_cast %25 : vector<16x16x64xf32> to vector<256x64xf32>
    %27 = arith.truncf %26 : vector<256x64xf32> to vector<256x64xbf16>
    %c0_31 = arith.constant 0 : index
    %c320 = arith.constant 320 : index
    %28 = vector.load %arg7[%c0_31, %c320] : memref<256x576xbf16, #tpu.memory_space<vmem>>, vector<256x64xbf16>
    tpu.vector_store %arg7[%c0_31, %c320], %27 {strides = array<i32>} : memref<256x576xbf16, #tpu.memory_space<vmem>>, vector<256x64xbf16>,
    %c2_32 = arith.constant 2 : index
    %c0_33 = arith.constant 0 : index
    %c0_34 = arith.constant 0 : index
    %29 = vector.load %arg6[%c2_32, %c0_33, %c0_34] : memref<18x18x64xf32, #tpu.memory_space<vmem>>, vector<16x16x64xf32>
    %30 = vector.shape_cast %29 : vector<16x16x64xf32> to vector<256x64xf32>
    %31 = arith.truncf %30 : vector<256x64xf32> to vector<256x64xbf16>
    %c0_35 = arith.constant 0 : index
    %c384 = arith.constant 384 : index
    %32 = vector.load %arg7[%c0_35, %c384] : memref<256x576xbf16, #tpu.memory_space<vmem>>, vector<256x64xbf16>
    tpu.vector_store %arg7[%c0_35, %c384], %31 {strides = array<i32>} : memref<256x576xbf16, #tpu.memory_space<vmem>>, vector<256x64xbf16>,
    %c2_36 = arith.constant 2 : index
    %c1_37 = arith.constant 1 : index
    %c0_38 = arith.constant 0 : index
    %33 = vector.load %arg6[%c2_36, %c1_37, %c0_38] : memref<18x18x64xf32, #tpu.memory_space<vmem>>, vector<16x16x64xf32>
    %34 = vector.shape_cast %33 : vector<16x16x64xf32> to vector<256x64xf32>
    %35 = arith.truncf %34 : vector<256x64xf32> to vector<256x64xbf16>
    %c0_39 = arith.constant 0 : index
    %c448 = arith.constant 448 : index
    %36 = vector.load %arg7[%c0_39, %c448] : memref<256x576xbf16, #tpu.memory_space<vmem>>, vector<256x64xbf16>
    tpu.vector_store %arg7[%c0_39, %c448], %35 {strides = array<i32>} : memref<256x576xbf16, #tpu.memory_space<vmem>>, vector<256x64xbf16>,
    %c2_40 = arith.constant 2 : index
    %c2_41 = arith.constant 2 : index
    %c0_42 = arith.constant 0 : index
    %37 = vector.load %arg6[%c2_40, %c2_41, %c0_42] : memref<18x18x64xf32, #tpu.memory_space<vmem>>, vector<16x16x64xf32>
    %38 = vector.shape_cast %37 : vector<16x16x64xf32> to vector<256x64xf32>
    %39 = arith.truncf %38 : vector<256x64xf32> to vector<256x64xbf16>
    %c0_43 = arith.constant 0 : index
    %c512 = arith.constant 512 : index
    %40 = vector.load %arg7[%c0_43, %c512] : memref<256x576xbf16, #tpu.memory_space<vmem>>, vector<256x64xbf16>
    tpu.vector_store %arg7[%c0_43, %c512], %39 {strides = array<i32>} : memref<256x576xbf16, #tpu.memory_space<vmem>>, vector<256x64xbf16>,
    %c0_44 = arith.constant 0 : index
    %c0_45 = arith.constant 0 : index
    %41 = vector.load %arg7[%c0_44, %c0_45] : memref<256x576xbf16, #tpu.memory_space<vmem>>, vector<256x576xbf16>
    %c0_46 = arith.constant 0 : index
    %c0_47 = arith.constant 0 : index
    %42 = vector.load %arg3[%c0_46, %c0_47] : memref<576x64xbf16, #tpu.memory_space<vmem>>, vector<576x64xbf16>
    %cst_48 = arith.constant dense<0.000000e+00> : vector<256x64xf32>
    %43 = tpu.matmul %41, %42, %cst_48 {dimension_numbers = #tpu.dot_dimension_numbers<[1], [0], [0], [1], [0, 0, 1, 1], [], []>} : vector<256x576xbf16>, vector<576x64xbf16>, vector<256x64xf32> -> vector<256x64xf32>
    %c0_49 = arith.constant 0 : index
    %c0_50 = arith.constant 0 : index
    %44 = vector.load %arg4[%c0_49, %c0_50] : memref<1x64xf32, #tpu.memory_space<vmem>>, vector<1x64xf32>
    %45 = vector.broadcast %44 : vector<1x64xf32> to vector<256x64xf32>
    %46 = arith.addf %43, %45 : vector<256x64xf32>
    %c0_51 = arith.constant 0 : index
    %c0_52 = arith.constant 0 : index
    %c0_53 = arith.constant 0 : index
    %c0_54 = arith.constant 0 : index
    %47 = vector.load %arg1[%c0_51, %c0_52, %c0_53, %c0_54] : memref<1x16x16x64xf32, #tpu.memory_space<vmem>>, vector<1x16x16x64xf32>
    %48 = vector.shape_cast %47 : vector<1x16x16x64xf32> to vector<16x16x64xf32>
    %49 = vector.shape_cast %48 : vector<16x16x64xf32> to vector<256x64xf32>
    %50 = arith.addf %49, %46 : vector<256x64xf32>
    %51 = vector.shape_cast %50 : vector<256x64xf32> to vector<1x16x16x64xf32>
    %c0_55 = arith.constant 0 : index
    %c0_56 = arith.constant 0 : index
    %c0_57 = arith.constant 0 : index
    %c0_58 = arith.constant 0 : index
    %52 = vector.load %arg5[%c0_55, %c0_56, %c0_57, %c0_58] : memref<1x16x16x64xf32, #tpu.memory_space<vmem>>, vector<1x16x16x64xf32>
    tpu.vector_store %arg5[%c0_55, %c0_56, %c0_57, %c0_58], %51 {strides = array<i32>} : memref<1x16x16x64xf32, #tpu.memory_space<vmem>>, vector<1x16x16x64xf32>,
    return
  }
  func.func @transform_0(%arg0: i32) -> (i32, i32, i32, i32) {
    %c0_i32 = arith.constant 0 : i32
    %c0_i32_0 = arith.constant 0 : i32
    %c0_i32_1 = arith.constant 0 : i32
    %c0_i32_2 = arith.constant 0 : i32
    return %arg0, %c0_i32, %c0_i32_0, %c0_i32_1 : i32, i32, i32, i32
  }
  func.func @transform_1(%arg0: i32) -> (i32, i32, i32, i32) {
    %c0_i32 = arith.constant 0 : i32
    %c0_i32_0 = arith.constant 0 : i32
    %c0_i32_1 = arith.constant 0 : i32
    %c0_i32_2 = arith.constant 0 : i32
    return %arg0, %c0_i32, %c0_i32_0, %c0_i32_1 : i32, i32, i32, i32
  }
  func.func @transform_2(%arg0: i32) -> (i32, i32) {
    %c0_i32 = arith.constant 0 : i32
    %c0_i32_0 = arith.constant 0 : i32
    %c0_i32_1 = arith.constant 0 : i32
    return %c0_i32, %c0_i32_0 : i32, i32
  }
  func.func @transform_3(%arg0: i32) -> (i32, i32) {
    %c0_i32 = arith.constant 0 : i32
    %c0_i32_0 = arith.constant 0 : i32
    %c0_i32_1 = arith.constant 0 : i32
    return %c0_i32, %c0_i32_0 : i32, i32
  }
  func.func @transform_4(%arg0: i32) -> (i32, i32, i32, i32) {
    %c0_i32 = arith.constant 0 : i32
    %c0_i32_0 = arith.constant 0 : i32
    %c0_i32_1 = arith.constant 0 : i32
    %c0_i32_2 = arith.constant 0 : i32
    return %arg0, %c0_i32, %c0_i32_0, %c0_i32_1 : i32, i32, i32, i32
  }
}

</mosaic_0001>

<llo_original>
// kernel: residual_group_forward.9
$region0: #{residual_group_forward.9}
  #allocation0 [shape = 'u32[]', space=smem, size = 0x4, offset = 0x4, fixed_abs, tag = 'smem constant byte address 0x4 - core index']
  #allocation1 [shape = 'u32[72,128]{1,0:T(1,128)}', space=vmem, size = 0x9000, scoped, tag = 'internal scratch']
  #allocation2 [shape = 'f32[18,18,64]{2,1,0:T(8,128)}', space=vmem, size = 0x36000, scoped, tag = 'scratch operand']
  #allocation3 [shape = 'bf16[256,576]{1,0:T(8,128)(2,1)}', space=vmem, size = 0x50000, scoped, tag = 'scratch operand']
  %s0 = inlined_call_operand.vmem [shape: f32[2,16,16,64], index: 0, kind: input, shape index: {}]
  %s1 = inlined_call_operand.vmem [shape: f32[2,16,16,64], index: 1, kind: input, shape index: {}]
  %s2 = inlined_call_operand.vmem [shape: bf16[576,64], index: 2, kind: input, shape index: {}]
  %s3 = inlined_call_operand.vmem [shape: f32[1,64], index: 3, kind: input, shape index: {}]
  %s4 = inlined_call_operand.hbm [shape: f32[2,16,16,64], index: 4, kind: output, shape index: {}]
  %s5 = sld [smem:[#allocation0]]
  $region49: #{residual_group_forward.9} parent=0
    _
  %s7 = ssub.s32 1, %s5
  %s8 = scalar_select 0, %s7, %s5
  $region1: #{residual_group_forward.9} parent=0
    #allocation4 [shape = 'u8[262144]{0}', space=vmem, size = 0x40000, scoped, tag = 'output window, operand 0']
    #allocation5 [shape = 's32[2]{0}', space=sflag, size = 0x8, scoped, tag = 'scoped memory for residual_group_forward.9']
    %9 = vsyncpa [#allocation5], 0
    %s10 = scalar_lea.sflag [#allocation5], 1
    %11 = vsyncpa %s10, 0
    loop: start=0, step=1, limit=4
    $region2: #{residual_group_forward.9} parent=1 // loop_pre_header
      _
    $region3: #{residual_group_forward.9} parent=1 // loop_header
      %s13 = sphi 0, %s17
      %p14 = scmp.ge.s32.totalorder %s13, 4
      %s23 = sphi 0, %s25
      %s26 = sphi 0, %s23
      %s27 = sphi 0, %s26
      %s43 = sphi 0, %s27
      %s49 = sphi 0, %s51
      %s52 = sphi 0, %s49
      %s53 = sphi 0, %s52
      %s69 = sphi 0, %s53
      %s73 = sphi 0, %s73
      %s75 = sphi 0, %s73
      %s76 = sphi 0, %s75
      %s90 = sphi 0, %s76
      %s94 = sphi 0, %s94
      %s96 = sphi 0, %s94
      %s97 = sphi 0, %s96
      %s111 = sphi 0, %s97
      %s117 = sphi 0, %s119
      %s120 = sphi 0, %s117
      %s121 = sphi 0, %s120
      %s137 = sphi 0, %s121
    $region4: #{residual_group_forward.9} parent=1 // loop_header_branch
      %16 = sbr.rel (%p14) target = $region8
    $region5: #{residual_group_forward.9} parent=1 // loop_body
      %s18 = ssub.s32 %s13, 1
      %s19 = ssub.s32 %s13, 2
      %s20 = sadd.s32 %s13, 1
      %s21 = ssub.s32 %s13, %s20
      %p22 = scmp.eq.s32.totalorder %s21, 0
      %s24 = sadd.s32 %s23, 1
      %s25 = scalar_select %p22, %s23, %s24
      %p28 = pneg %p22
      %p29 = scmp.eq.s32.totalorder %s13, 1
      %p30 = por %p28, %p29
      %p31 = scmp.ne.s32.totalorder %s23, %s26
      %p32 = scmp.eq.s32.totalorder %s13, 0
      %p33 = por %p31, %p32
      %p34 = scmp.ne.s32.totalorder %s23, %s26
      %p35 = scmp.eq.s32.totalorder %s18, 1
      %p36 = por %p34, %p35
      %p37 = scmp.ne.s32.totalorder %s26, %s27
      %p38 = scmp.eq.s32.totalorder %s18, 0
      %p39 = por %p37, %p38
      %p40 = scmp.ne.s32.totalorder %s26, %s27
      %p41 = scmp.eq.s32.totalorder %s19, 1
      %p42 = por %p40, %p41
      %p44 = scmp.ne.s32.totalorder %s27, %s43
      %p45 = scmp.eq.s32.totalorder %s19, 0
      %p46 = por %p44, %p45
      %s47 = ssub.s32 %s13, %s20
      %p48 = scmp.eq.s32.totalorder %s47, 0
      %s50 = sadd.s32 %s49, 1
      %s51 = scalar_select %p48, %s49, %s50
      %p54 = pneg %p48
      %p55 = scmp.eq.s32.totalorder %s13, 1
      %p56 = por %p54, %p55
      %p57 = scmp.ne.s32.totalorder %s49, %s52
      %p58 = scmp.eq.s32.totalorder %s13, 0
      %p59 = por %p57, %p58
      %p60 = scmp.ne.s32.totalorder %s49, %s52
      %p61 = scmp.eq.s32.totalorder %s18, 1
      %p62 = por %p60, %p61
      %p63 = scmp.ne.s32.totalorder %s52, %s53
      %p64 = scmp.eq.s32.totalorder %s18, 0
      %p65 = por %p63, %p64
      %p66 = scmp.ne.s32.totalorder %s52, %s53
      %p67 = scmp.eq.s32.totalorder %s19, 1
      %p68 = por %p66, %p67
      %p70 = scmp.ne.s32.totalorder %s53, %s69
      %p71 = scmp.eq.s32.totalorder %s19, 0
      %p72 = por %p70, %p71
      %s74 = sadd.s32 %s73, 1
      %p77 = scmp.eq.s32.totalorder %s13, 1
      %p78 = scmp.ne.s32.totalorder %s73, %s75
      %p79 = scmp.eq.s32.totalorder %s13, 0
      %p80 = por %p78, %p79
      %p81 = scmp.ne.s32.totalorder %s73, %s75
      %p82 = scmp.eq.s32.totalorder %s18, 1
      %p83 = por %p81, %p82
      %p84 = scmp.ne.s32.totalorder %s75, %s76
      %p85 = scmp.eq.s32.totalorder %s18, 0
      %p86 = por %p84, %p85
      %p87 = scmp.ne.s32.totalorder %s75, %s76
      %p88 = scmp.eq.s32.totalorder %s19, 1
      %p89 = por %p87, %p88
      %p91 = scmp.ne.s32.totalorder %s76, %s90
      %p92 = scmp.eq.s32.totalorder %s19, 0
      %p93 = por %p91, %p92
      %s95 = sadd.s32 %s94, 1
      %p98 = scmp.eq.s32.totalorder %s13, 1
      %p99 = scmp.ne.s32.totalorder %s94, %s96
      %p100 = scmp.eq.s32.totalorder %s13, 0
      %p101 = por %p99, %p100
      %p102 = scmp.ne.s32.totalorder %s94, %s96
      %p103 = scmp.eq.s32.totalorder %s18, 1
      %p104 = por %p102, %p103
      %p105 = scmp.ne.s32.totalorder %s96, %s97
      %p106 = scmp.eq.s32.totalorder %s18, 0
      %p107 = por %p105, %p106
      %p108 = scmp.ne.s32.totalorder %s96, %s97
      %p109 = scmp.eq.s32.totalorder %s19, 1
      %p110 = por %p108, %p109
      %p112 = scmp.ne.s32.totalorder %s97, %s111
      %p113 = scmp.eq.s32.totalorder %s19, 0
      %p114 = por %p112, %p113
      %s115 = ssub.s32 %s13, %s20
      %p116 = scmp.eq.s32.totalorder %s115, 0
      %s118 = sadd.s32 %s117, 1
      %s119 = scalar_select %p116, %s117, %s118
      %p122 = pneg %p116
      %p123 = scmp.eq.s32.totalorder %s13, 1
      %p124 = por %p122, %p123
      %p125 = scmp.ne.s32.totalorder %s117, %s120
      %p126 = scmp.eq.s32.totalorder %s13, 0
      %p127 = por %p125, %p126
      %p128 = scmp.ne.s32.totalorder %s117, %s120
      %p129 = scmp.eq.s32.totalorder %s18, 1
      %p130 = por %p128, %p129
      %p131 = scmp.ne.s32.totalorder %s120, %s121
      %p132 = scmp.eq.s32.totalorder %s18, 0
      %p133 = por %p131, %p132
      %p134 = scmp.ne.s32.totalorder %s120, %s121
      %p135 = scmp.eq.s32.totalorder %s19, 1
      %p136 = por %p134, %p135
      %p138 = scmp.ne.s32.totalorder %s121, %s137
      %p139 = scmp.eq.s32.totalorder %s19, 0
      %p140 = por %p138, %p139
      %p141 = scmp.le.s32.totalorder 1, %s13
      %p142 = scmp.lt.s32.totalorder %s13, 3
      %p143 = pnand %p141, %p142
      %p144 = pneg %p143
      // Predicated region
      $region9: #{residual_group_forward.9} parent=5 // pred_check
        _
      $region10: #{residual_group_forward.9} parent=5 // pred_check_branch
        %146 = sbr.rel (%p143) target = $region12
      $region11: #{residual_group_forward.9} parent=5 // pred_region
        %s147 = ssub.s32 %s13, 1
        // Predicated region
        $region13: #{residual_group_forward.9} parent=11 // pred_check
          %p148 = pneg %p86
        $region14: #{residual_group_forward.9} parent=11 // pred_check_branch
          %150 = sbr.rel (%p148) target = $region16
        $region15: #{residual_group_forward.9} parent=11 // pred_region
          _
        $region16: #{residual_group_forward.9} parent=11 // pred_fallthru
          _
        // Predicated region
        $region17: #{residual_group_forward.9} parent=11 // pred_check
          %p151 = pneg %p107
        $region18: #{residual_group_forward.9} parent=11 // pred_check_branch
          %153 = sbr.rel (%p151) target = $region20
        $region19: #{residual_group_forward.9} parent=11 // pred_region
          _
        $region20: #{residual_group_forward.9} parent=11 // pred_fallthru
          _
      $region12: #{residual_group_forward.9} parent=5 // pred_fallthru
        _
      %p154 = scmp.lt.s32.totalorder %s13, 2
      // Predicated region
      $region21: #{residual_group_forward.9} parent=5 // pred_check
        %p155 = pneg %p154
      $region22: #{residual_group_forward.9} parent=5 // pred_check_branch
        %157 = sbr.rel (%p155) target = $region24
      $region23: #{residual_group_forward.9} parent=5 // pred_region
        // Predicated region
        $region25: #{residual_group_forward.9} parent=23 // pred_check
          %p158 = pneg %p33
        $region26: #{residual_group_forward.9} parent=23 // pred_check_branch
          %160 = sbr.rel (%p158) target = $region28
        $region27: #{residual_group_forward.9} parent=23 // pred_region
          %p161 = scmp.lt.s32.totalorder %s13, 1
          %s162 = scalar_select %p161, %s13, 1
          %s163 = smul.addr %s162, 32
          %s164 = smul.addr %s163, 8
          %s165 = scalar_lea.vmem %s0, %s164
        $region28: #{residual_group_forward.9} parent=23 // pred_fallthru
          _
        // Predicated region
        $region29: #{residual_group_forward.9} parent=23 // pred_check
          %p166 = pneg %p59
        $region30: #{residual_group_forward.9} parent=23 // pred_check_branch
          %168 = sbr.rel (%p166) target = $region32
        $region31: #{residual_group_forward.9} parent=23 // pred_region
          %p169 = scmp.lt.s32.totalorder %s13, 1
          %s170 = scalar_select %p169, %s13, 1
          %s171 = smul.addr %s170, 32
          %s172 = smul.addr %s171, 8
          %s173 = scalar_lea.vmem %s1, %s172
        $region32: #{residual_group_forward.9} parent=23 // pred_fallthru
          _
      $region24: #{residual_group_forward.9} parent=5 // pred_fallthru
        _
      %p174 = scmp.le.s32.totalorder 1, %s13
      %p175 = scmp.lt.s32.totalorder %s13, 3
      %p176 = pnand %p174, %p175
      %p177 = pneg %p176
      // Predicated region
      $region33: #{residual_group_forward.9} parent=5 // pred_check
        _
      $region34: #{residual_group_forward.9} parent=5 // pred_check_branch
        %179 = sbr.rel (%p176) target = $region36
      $region35: #{residual_group_forward.9} parent=5 // pred_region
        %s180 = ssub.s32 %s13, 1
        %p181 = scmp.lt.s32.totalorder %s18, 1
        %s182 = scalar_select %p181, %s18, 1
        %s183 = smul.addr %s182, 32
        %s184 = smul.addr %s183, 8
        %s185 = scalar_lea.vmem %s0, %s184
        %p186 = pneg %p39
        %p187 = pneg %p36
        %p188 = scmp.lt.s32.totalorder %s18, 1
        %s189 = scalar_select %p188, %s18, 1
        %s190 = smul.addr %s189, 32
        %s191 = smul.addr %s190, 8
        %s192 = scalar_lea.vmem %s1, %s191
        %p193 = pneg %p65
        %p194 = pneg %p62
        %p195 = pneg %p86
        %p196 = pneg %p83
        %p197 = pneg %p107
        %p198 = pneg %p104
        %p199 = pneg %p133
        %p200 = pneg %p130
        %s201 = sand.u32 %s120, 1
        %s202 = scalar_lea.sflag [#allocation5], %s201
        %s203 = sand.u32 %s120, 1
        %s204 = smul.addr %s203, 256
        %s205 = scalar_lea.vmem [#allocation4], %s204
        %p206 = scmp.lt.s32.totalorder %s18, 1
        %s207 = scalar_select %p206, %s18, 1
        %s208 = smul.addr %s207, 32
        %s209 = smul.addr %s208, 8
        %s210 = scalar_lea.vmem %s0, %s209
        %p211 = scmp.lt.s32.totalorder %s18, 1
        %s212 = scalar_select %p211, %s18, 1
        %s213 = smul.addr %s212, 32
        %s214 = smul.addr %s213, 8
        %s215 = scalar_lea.vmem %s1, %s214
        %vm217 = vcmask 523264
        %218 = vst.msk [vmem:[#allocation2] sm:$0xff] %vm217, 0.0
        %219 = vst.msk [vmem:[#allocation2 + $0x8] sm:$0xff] %vm217, 0.0
        %vm220 = vcmask 517120
        %221 = vst.msk [vmem:[#allocation2 + $0x10] sm:$0x3] %vm220, 0.0
        %222 = vst.msk [vmem:[#allocation2 + $0x18] sm:$0xff] %vm217, 0.0
        %223 = vst.msk [vmem:[#allocation2 + $0x20] sm:$0xff] %vm217, 0.0
        %224 = vst.msk [vmem:[#allocation2 + $0x28] sm:$0x3] %vm220, 0.0
        %225 = vst.msk [vmem:[#allocation2 + $0x30] sm:$0xff] %vm217, 0.0
        %226 = vst.msk [vmem:[#allocation2 + $0x38] sm:$0xff] %vm217, 0.0
        %227 = vst.msk [vmem:[#allocation2 + $0x40] sm:$0x3] %vm220, 0.0
        %228 = vst.msk [vmem:[#allocation2 + $0x48] sm:$0xff] %vm217, 0.0
        %229 = vst.msk [vmem:[#allocation2 + $0x50] sm:$0xff] %vm217, 0.0
        %230 = vst.msk [vmem:[#allocation2 + $0x58] sm:$0x3] %vm220, 0.0
        %231 = vst.msk [vmem:[#allocation2 + $0x60] sm:$0xff] %vm217, 0.0
        %232 = vst.msk [vmem:[#allocation2 + $0x68] sm:$0xff] %vm217, 0.0
        %233 = vst.msk [vmem:[#allocation2 + $0x70] sm:$0x3] %vm220, 0.0
        %234 = vst.msk [vmem:[#allocation2 + $0x78] sm:$0xff] %vm217, 0.0
        %235 = vst.msk [vmem:[#allocation2 + $0x80] sm:$0xff] %vm217, 0.0
        %236 = vst.msk [vmem:[#allocation2 + $0x88] sm:$0x3] %vm220, 0.0
        %237 = vst.msk [vmem:[#allocation2 + $0x90] sm:$0xff] %vm217, 0.0
        %238 = vst.msk [vmem:[#allocation2 + $0x98] sm:$0xff] %vm217, 0.0
        %239 = vst.msk [vmem:[#allocation2 + $0xa0] sm:$0x3] %vm220, 0.0
        %240 = vst.msk [vmem:[#allocation2 + $0xa8] sm:$0xff] %vm217, 0.0
        %241 = vst.msk [vmem:[#allocation2 + $0xb0] sm:$0xff] %vm217, 0.0
        %242 = vst.msk [vmem:[#allocation2 + $0xb8] sm:$0x3] %vm220, 0.0
        %243 = vst.msk [vmem:[#allocation2 + $0xc0] sm:$0xff] %vm217, 0.0
        %244 = vst.msk [vmem:[#allocation2 + $0xc8] sm:$0xff] %vm217, 0.0
        %245 = vst.msk [vmem:[#allocation2 + $0xd0] sm:$0x3] %vm220, 0.0
        %246 = vst.msk [vmem:[#allocation2 + $0xd8] sm:$0xff] %vm217, 0.0
        %247 = vst.msk [vmem:[#allocation2 + $0xe0] sm:$0xff] %vm217, 0.0
        %248 = vst.msk [vmem:[#allocation2 + $0xe8] sm:$0x3] %vm220, 0.0
        %249 = vst.msk [vmem:[#allocation2 + $0xf0] sm:$0xff] %vm217, 0.0
        %250 = vst.msk [vmem:[#allocation2 + $0xf8] sm:$0xff] %vm217, 0.0
        %251 = vst.msk [vmem:[#allocation2 + $0x100] sm:$0x3] %vm220, 0.0
        %252 = vst.msk [vmem:[#allocation2 + $0x108] sm:$0xff] %vm217, 0.0
        %253 = vst.msk [vmem:[#allocation2 + $0x110] sm:$0xff] %vm217, 0.0
        %254 = vst.msk [vmem:[#allocation2 + $0x118] sm:$0x3] %vm220, 0.0
        %255 = vst.msk [vmem:[#allocation2 + $0x120] sm:$0xff] %vm217, 0.0
        %256 = vst.msk [vmem:[#allocation2 + $0x128] sm:$0xff] %vm217, 0.0
        %257 = vst.msk [vmem:[#allocation2 + $0x130] sm:$0x3] %vm220, 0.0
        %258 = vst.msk [vmem:[#allocation2 + $0x138] sm:$0xff] %vm217, 0.0
        %259 = vst.msk [vmem:[#allocation2 + $0x140] sm:$0xff] %vm217, 0.0
        %260 = vst.msk [vmem:[#allocation2 + $0x148] sm:$0x3] %vm220, 0.0
        %261 = vst.msk [vmem:[#allocation2 + $0x150] sm:$0xff] %vm217, 0.0
        %262 = vst.msk [vmem:[#allocation2 + $0x158] sm:$0xff] %vm217, 0.0
        %263 = vst.msk [vmem:[#allocation2 + $0x160] sm:$0x3] %vm220, 0.0
        %264 = vst.msk [vmem:[#allocation2 + $0x168] sm:$0xff] %vm217, 0.0
        %265 = vst.msk [vmem:[#allocation2 + $0x170] sm:$0xff] %vm217, 0.0
        %266 = vst.msk [vmem:[#allocation2 + $0x178] sm:$0x3] %vm220, 0.0
        %267 = vst.msk [vmem:[#allocation2 + $0x180] sm:$0xff] %vm217, 0.0
        %268 = vst.msk [vmem:[#allocation2 + $0x188] sm:$0xff] %vm217, 0.0
        %269 = vst.msk [vmem:[#allocation2 + $0x190] sm:$0x3] %vm220, 0.0
        %270 = vst.msk [vmem:[#allocation2 + $0x198] sm:$0xff] %vm217, 0.0
        %271 = vst.msk [vmem:[#allocation2 + $0x1a0] sm:$0xff] %vm217, 0.0
        %272 = vst.msk [vmem:[#allocation2 + $0x1a8] sm:$0x3] %vm220, 0.0
        %v273 = vld [vmem:[%s215] sm:$0xff]
        %v274 = vld [vmem:[%s215 + $0x8] sm:$0xff]
        %v275 = vld [vmem:[%s215 + $0x10] sm:$0xff]
        %v276 = vld [vmem:[%s215 + $0x18] sm:$0xff]
        %v277 = vld [vmem:[%s215 + $0x20] sm:$0xff]
        %v278 = vld [vmem:[%s215 + $0x28] sm:$0xff]
        %v279 = vld [vmem:[%s215 + $0x30] sm:$0xff]
        %v280 = vld [vmem:[%s215 + $0x38] sm:$0xff]
        %v281 = vld [vmem:[%s215 + $0x40] sm:$0xff]
        %v282 = vld [vmem:[%s215 + $0x48] sm:$0xff]
        %v283 = vld [vmem:[%s215 + $0x50] sm:$0xff]
        %v284 = vld [vmem:[%s215 + $0x58] sm:$0xff]
        %v285 = vld [vmem:[%s215 + $0x60] sm:$0xff]
        %v286 = vld [vmem:[%s215 + $0x68] sm:$0xff]
        %v287 = vld [vmem:[%s215 + $0x70] sm:$0xff]
        %v288 = vld [vmem:[%s215 + $0x78] sm:$0xff]
        %v289 = vld [vmem:[%s215 + $0x80] sm:$0xff]
        %v290 = vld [vmem:[%s215 + $0x88] sm:$0xff]
        %v291 = vld [vmem:[%s215 + $0x90] sm:$0xff]
        %v292 = vld [vmem:[%s215 + $0x98] sm:$0xff]
        %v293 = vld [vmem:[%s215 + $0xa0] sm:$0xff]
        %v294 = vld [vmem:[%s215 + $0xa8] sm:$0xff]
        %v295 = vld [vmem:[%s215 + $0xb0] sm:$0xff]
        %v296 = vld [vmem:[%s215 + $0xb8] sm:$0xff]
        %v297 = vld [vmem:[%s215 + $0xc0] sm:$0xff]
        %v298 = vld [vmem:[%s215 + $0xc8] sm:$0xff]
        %v299 = vld [vmem:[%s215 + $0xd0] sm:$0xff]
        %v300 = vld [vmem:[%s215 + $0xd8] sm:$0xff]
        %v301 = vld [vmem:[%s215 + $0xe0] sm:$0xff]
        %v302 = vld [vmem:[%s215 + $0xe8] sm:$0xff]
        %v303 = vld [vmem:[%s215 + $0xf0] sm:$0xff]
        %v304 = vld [vmem:[%s215 + $0xf8] sm:$0xff]
        %s305 = scalar_lea.vmem [#allocation2], 24
        %306 = vst.msk [vmem:[%s305 + $0x1] sm:$0xff] %vm217, %v273
        %307 = vst.msk [vmem:[%s305 + $0x9] sm:$0xff] %vm217, %v274
        %308 = vst.msk [vmem:[%s305 + $0x19] sm:$0xff] %vm217, %v275
        %309 = vst.msk [vmem:[%s305 + $0x21] sm:$0xff] %vm217, %v276
        %310 = vst.msk [vmem:[%s305 + $0x31] sm:$0xff] %vm217, %v277
        %311 = vst.msk [vmem:[%s305 + $0x39] sm:$0xff] %vm217, %v278
        %312 = vst.msk [vmem:[%s305 + $0x49] sm:$0xff] %vm217, %v279
        %313 = vst.msk [vmem:[%s305 + $0x51] sm:$0xff] %vm217, %v280
        %314 = vst.msk [vmem:[%s305 + $0x61] sm:$0xff] %vm217, %v281
        %315 = vst.msk [vmem:[%s305 + $0x69] sm:$0xff] %vm217, %v282
        %316 = vst.msk [vmem:[%s305 + $0x79] sm:$0xff] %vm217, %v283
        %317 = vst.msk [vmem:[%s305 + $0x81] sm:$0xff] %vm217, %v284
        %318 = vst.msk [vmem:[%s305 + $0x91] sm:$0xff] %vm217, %v285
        %319 = vst.msk [vmem:[%s305 + $0x99] sm:$0xff] %vm217, %v286
        %320 = vst.msk [vmem:[%s305 + $0xa9] sm:$0xff] %vm217, %v287
        %321 = vst.msk [vmem:[%s305 + $0xb1] sm:$0xff] %vm217, %v288
        %322 = vst.msk [vmem:[%s305 + $0xc1] sm:$0xff] %vm217, %v289
        %323 = vst.msk [vmem:[%s305 + $0xc9] sm:$0xff] %vm217, %v290
        %324 = vst.msk [vmem:[%s305 + $0xd9] sm:$0xff] %vm217, %v291
        %325 = vst.msk [vmem:[%s305 + $0xe1] sm:$0xff] %vm217, %v292
        %326 = vst.msk [vmem:[%s305 + $0xf1] sm:$0xff] %vm217, %v293
        %327 = vst.msk [vmem:[%s305 + $0xf9] sm:$0xff] %vm217, %v294
        %328 = vst.msk [vmem:[%s305 + $0x109] sm:$0xff] %vm217, %v295
        %329 = vst.msk [vmem:[%s305 + $0x111] sm:$0xff] %vm217, %v296
        %330 = vst.msk [vmem:[%s305 + $0x121] sm:$0xff] %vm217, %v297
        %331 = vst.msk [vmem:[%s305 + $0x129] sm:$0xff] %vm217, %v298
        %332 = vst.msk [vmem:[%s305 + $0x139] sm:$0xff] %vm217, %v299
        %333 = vst.msk [vmem:[%s305 + $0x141] sm:$0xff] %vm217, %v300
        %334 = vst.msk [vmem:[%s305 + $0x151] sm:$0xff] %vm217, %v301
        %335 = vst.msk [vmem:[%s305 + $0x159] sm:$0xff] %vm217, %v302
        %336 = vst.msk [vmem:[%s305 + $0x169] sm:$0xff] %vm217, %v303
        %337 = vst.msk [vmem:[%s305 + $0x171] sm:$0xff] %vm217, %v304
        %v338 = vld [vmem:[#allocation2] sm:$0xff]
        %v339 = vld [vmem:[#allocation2 + $0x8] sm:$0xff]
        %v340 = vld [vmem:[#allocation2 + $0x18] sm:$0xff]
        %v341 = vld [vmem:[#allocation2 + $0x20] sm:$0xff]
        %v342 = vld [vmem:[#allocation2 + $0x30] sm:$0xff]
        %v343 = vld [vmem:[#allocation2 + $0x38] sm:$0xff]
        %v344 = vld [vmem:[#allocation2 + $0x48] sm:$0xff]
        %v345 = vld [vmem:[#allocation2 + $0x50] sm:$0xff]
        %v346 = vld [vmem:[#allocation2 + $0x60] sm:$0xff]
        %v347 = vld [vmem:[#allocation2 + $0x68] sm:$0xff]
        %v348 = vld [vmem:[#allocation2 + $0x78] sm:$0xff]
        %v349 = vld [vmem:[#allocation2 + $0x80] sm:$0xff]
        %v350 = vld [vmem:[#allocation2 + $0x90] sm:$0xff]
        %v351 = vld [vmem:[#allocation2 + $0x98] sm:$0xff]
        %v352 = vld [vmem:[#allocation2 + $0xa8] sm:$0xff]
        %v353 = vld [vmem:[#allocation2 + $0xb0] sm:$0xff]
        %v354 = vld [vmem:[#allocation2 + $0xc0] sm:$0xff]
        %v355 = vld [vmem:[#allocation2 + $0xc8] sm:$0xff]
        %v356 = vld [vmem:[#allocation2 + $0xd8] sm:$0xff]
        %v357 = vld [vmem:[#allocation2 + $0xe0] sm:$0xff]
        %v358 = vld [vmem:[#allocation2 + $0xf0] sm:$0xff]
        %v359 = vld [vmem:[#allocation2 + $0xf8] sm:$0xff]
        %v360 = vld [vmem:[#allocation2 + $0x108] sm:$0xff]
        %v361 = vld [vmem:[#allocation2 + $0x110] sm:$0xff]
        %v362 = vld [vmem:[#allocation2 + $0x120] sm:$0xff]
        %v363 = vld [vmem:[#allocation2 + $0x128] sm:$0xff]
        %v364 = vld [vmem:[#allocation2 + $0x138] sm:$0xff]
        %v365 = vld [vmem:[#allocation2 + $0x140] sm:$0xff]
        %v366 = vld [vmem:[#allocation2 + $0x150] sm:$0xff]
        %v367 = vld [vmem:[#allocation2 + $0x158] sm:$0xff]
        %v368 = vld [vmem:[#allocation2 + $0x168] sm:$0xff]
        %v369 = vld [vmem:[#allocation2 + $0x170] sm:$0xff]
        %v370 = vpack.c.bf16 %v338, %v338
        %v371 = vpack.c.bf16 %v339, %v339
        %v372 = vpack.c.bf16 %v340, %v340
        %v373 = vpack.c.bf16 %v341, %v341
        %v374 = vpack.c.bf16 %v342, %v342
        %v375 = vpack.c.bf16 %v343, %v343
        %v376 = vpack.c.bf16 %v344, %v344
        %v377 = vpack.c.bf16 %v345, %v345
        %v378 = vpack.c.bf16 %v346, %v346
        %v379 = vpack.c.bf16 %v347, %v347
        %v380 = vpack.c.bf16 %v348, %v348
        %v381 = vpack.c.bf16 %v349, %v349
        %v382 = vpack.c.bf16 %v350, %v350
        %v383 = vpack.c.bf16 %v351, %v351
        %v384 = vpack.c.bf16 %v352, %v352
        %v385 = vpack.c.bf16 %v353, %v353
        %v386 = vpack.c.bf16 %v354, %v354
        %v387 = vpack.c.bf16 %v355, %v355
        %v388 = vpack.c.bf16 %v356, %v356
        %v389 = vpack.c.bf16 %v357, %v357
        %v390 = vpack.c.bf16 %v358, %v358
        %v391 = vpack.c.bf16 %v359, %v359
        %v392 = vpack.c.bf16 %v360, %v360
        %v393 = vpack.c.bf16 %v361, %v361
        %v394 = vpack.c.bf16 %v362, %v362
        %v395 = vpack.c.bf16 %v363, %v363
        %v396 = vpack.c.bf16 %v364, %v364
        %v397 = vpack.c.bf16 %v365, %v365
        %v398 = vpack.c.bf16 %v366, %v366
        %v399 = vpack.c.bf16 %v367, %v367
        %v400 = vpack.c.bf16 %v368, %v368
        %v401 = vpack.c.bf16 %v369, %v369
        %vm402 = vcmask 519168
        %403 = vst.msk [vmem:[#allocation3] sm:$0xf] %vm402, %v370
        %404 = vst.msk [vmem:[#allocation3 + $0x14] sm:$0xf] %vm402, %v371
        %405 = vst.msk [vmem:[#allocation3 + $0x28] sm:$0xf] %vm402, %v372
        %406 = vst.msk [vmem:[#allocation3 + $0x3c] sm:$0xf] %vm402, %v373
        %407 = vst.msk [vmem:[#allocation3 + $0x50] sm:$0xf] %vm402, %v374
        %408 = vst.msk [vmem:[#allocation3 + $0x64] sm:$0xf] %vm402, %v375
        %409 = vst.msk [vmem:[#allocation3 + $0x78] sm:$0xf] %vm402, %v376
        %410 = vst.msk [vmem:[#allocation3 + $0x8c] sm:$0xf] %vm402, %v377
        %411 = vst.msk [vmem:[#allocation3 + $0xa0] sm:$0xf] %vm402, %v378
        %412 = vst.msk [vmem:[#allocation3 + $0xb4] sm:$0xf] %vm402, %v379
        %413 = vst.msk [vmem:[#allocation3 + $0xc8] sm:$0xf] %vm402, %v380
        %414 = vst.msk [vmem:[#allocation3 + $0xdc] sm:$0xf] %vm402, %v381
        %415 = vst.msk [vmem:[#allocation3 + $0xf0] sm:$0xf] %vm402, %v382
        %416 = vst.msk [vmem:[#allocation3 + $0x104] sm:$0xf] %vm402, %v383
        %417 = vst.msk [vmem:[#allocation3 + $0x118] sm:$0xf] %vm402, %v384
        %418 = vst.msk [vmem:[#allocation3 + $0x12c] sm:$0xf] %vm402, %v385
        %419 = vst.msk [vmem:[#allocation3 + $0x140] sm:$0xf] %vm402, %v386
        %420 = vst.msk [vmem:[#allocation3 + $0x154] sm:$0xf] %vm402, %v387
        %421 = vst.msk [vmem:[#allocation3 + $0x168] sm:$0xf] %vm402, %v388
        %422 = vst.msk [vmem:[#allocation3 + $0x17c] sm:$0xf] %vm402, %v389
        %423 = vst.msk [vmem:[#allocation3 + $0x190] sm:$0xf] %vm402, %v390
        %424 = vst.msk [vmem:[#allocation3 + $0x1a4] sm:$0xf] %vm402, %v391
        %425 = vst.msk [vmem:[#allocation3 + $0x1b8] sm:$0xf] %vm402, %v392
        %426 = vst.msk [vmem:[#allocation3 + $0x1cc] sm:$0xf] %vm402, %v393
        %427 = vst.msk [vmem:[#allocation3 + $0x1e0] sm:$0xf] %vm402, %v394
        %428 = vst.msk [vmem:[#allocation3 + $0x1f4] sm:$0xf] %vm402, %v395
        %429 = vst.msk [vmem:[#allocation3 + $0x208] sm:$0xf] %vm402, %v396
        %430 = vst.msk [vmem:[#allocation3 + $0x21c] sm:$0xf] %vm402, %v397
        %431 = vst.msk [vmem:[#allocation3 + $0x230] sm:$0xf] %vm402, %v398
        %432 = vst.msk [vmem:[#allocation3 + $0x244] sm:$0xf] %vm402, %v399
        %433 = vst.msk [vmem:[#allocation3 + $0x258] sm:$0xf] %vm402, %v400
        %434 = vst.msk [vmem:[#allocation3 + $0x26c] sm:$0xf] %vm402, %v401
        %v435 = vld [vmem:[#allocation2 + $0x1] sm:$0xff]
        %v436 = vld [vmem:[#allocation2 + $0x9] sm:$0xff]
        %v437 = vld [vmem:[#allocation2 + $0x19] sm:$0xff]
        %v438 = vld [vmem:[#allocation2 + $0x21] sm:$0xff]
        %v439 = vld [vmem:[#allocation2 + $0x31] sm:$0xff]
        %v440 = vld [vmem:[#allocation2 + $0x39] sm:$0xff]
        %v441 = vld [vmem:[#allocation2 + $0x49] sm:$0xff]
        %v442 = vld [vmem:[#allocation2 + $0x51] sm:$0xff]
        %v443 = vld [vmem:[#allocation2 + $0x61] sm:$0xff]
        %v444 = vld [vmem:[#allocation2 + $0x69] sm:$0xff]
        %v445 = vld [vmem:[#allocation2 + $0x79] sm:$0xff]
        %v446 = vld [vmem:[#allocation2 + $0x81] sm:$0xff]
        %v447 = vld [vmem:[#allocation2 + $0x91] sm:$0xff]
        %v448 = vld [vmem:[#allocation2 + $0x99] sm:$0xff]
        %v449 = vld [vmem:[#allocation2 + $0xa9] sm:$0xff]
        %v450 = vld [vmem:[#allocation2 + $0xb1] sm:$0xff]
        %v451 = vld [vmem:[#allocation2 + $0xc1] sm:$0xff]
        %v452 = vld [vmem:[#allocation2 + $0xc9] sm:$0xff]
        %v453 = vld [vmem:[#allocation2 + $0xd9] sm:$0xff]
        %v454 = vld [vmem:[#allocation2 + $0xe1] sm:$0xff]
        %v455 = vld [vmem:[#allocation2 + $0xf1] sm:$0xff]
        %v456 = vld [vmem:[#allocation2 + $0xf9] sm:$0xff]
        %v457 = vld [vmem:[#allocation2 + $0x109] sm:$0xff]
        %v458 = vld [vmem:[#allocation2 + $0x111] sm:$0xff]
        %v459 = vld [vmem:[#allocation2 + $0x121] sm:$0xff]
        %v460 = vld [vmem:[#allocation2 + $0x129] sm:$0xff]
        %v461 = vld [vmem:[#allocation2 + $0x139] sm:$0xff]
        %v462 = vld [vmem:[#allocation2 + $0x141] sm:$0xff]
        %v463 = vld [vmem:[#allocation2 + $0x151] sm:$0xff]
        %v464 = vld [vmem:[#allocation2 + $0x159] sm:$0xff]
        %v465 = vld [vmem:[#allocation2 + $0x169] sm:$0xff]
        %v466 = vld [vmem:[#allocation2 + $0x171] sm:$0xff]
        %v467 = vpack.c.bf16 %v435, %v435
        %v468 = vpack.c.bf16 %v436, %v436
        %v469 = vpack.c.bf16 %v437, %v437
        %v470 = vpack.c.bf16 %v438, %v438
        %v471 = vpack.c.bf16 %v439, %v439
        %v472 = vpack.c.bf16 %v440, %v440
        %v473 = vpack.c.bf16 %v441, %v441
        %v474 = vpack.c.bf16 %v442, %v442
        %v475 = vpack.c.bf16 %v443, %v443
        %v476 = vpack.c.bf16 %v444, %v444
        %v477 = vpack.c.bf16 %v445, %v445
        %v478 = vpack.c.bf16 %v446, %v446
        %v479 = vpack.c.bf16 %v447, %v447
        %v480 = vpack.c.bf16 %v448, %v448
        %v481 = vpack.c.bf16 %v449, %v449
        %v482 = vpack.c.bf16 %v450, %v450
        %v483 = vpack.c.bf16 %v451, %v451
        %v484 = vpack.c.bf16 %v452, %v452
        %v485 = vpack.c.bf16 %v453, %v453
        %v486 = vpack.c.bf16 %v454, %v454
        %v487 = vpack.c.bf16 %v455, %v455
        %v488 = vpack.c.bf16 %v456, %v456
        %v489 = vpack.c.bf16 %v457, %v457
        %v490 = vpack.c.bf16 %v458, %v458
        %v491 = vpack.c.bf16 %v459, %v459
        %v492 = vpack.c.bf16 %v460, %v460
        %v493 = vpack.c.bf16 %v461, %v461
        %v494 = vpack.c.bf16 %v462, %v462
        %v495 = vpack.c.bf16 %v463, %v463
        %v496 = vpack.c.bf16 %v464, %v464
        %v497 = vpack.c.bf16 %v465, %v465
        %v498 = vpack.c.bf16 %v466, %v466
        %531 = vrot.lane.b32.xlu0 %v467, 64
        %v532 = vpop.permute.xlu0 %531
        %533 = vrot.lane.b32.xlu0 %v468, 64
        %v534 = vpop.permute.xlu0 %533
        %535 = vrot.lane.b32.xlu0 %v469, 64
        %v536 = vpop.permute.xlu0 %535
        %537 = vrot.lane.b32.xlu0 %v470, 64
        %v538 = vpop.permute.xlu0 %537
        %539 = vrot.lane.b32.xlu0 %v471, 64
        %v540 = vpop.permute.xlu0 %539
        %541 = vrot.lane.b32.xlu0 %v472, 64
        %v542 = vpop.permute.xlu0 %541
        %543 = vrot.lane.b32.xlu0 %v473, 64
        %v544 = vpop.permute.xlu0 %543
        %545 = vrot.lane.b32.xlu0 %v474, 64
        %v546 = vpop.permute.xlu0 %545
        %547 = vrot.lane.b32.xlu0 %v475, 64
        %v548 = vpop.permute.xlu0 %547
        %549 = vrot.lane.b32.xlu0 %v476, 64
        %v550 = vpop.permute.xlu0 %549
        %551 = vrot.lane.b32.xlu0 %v477, 64
        %v552 = vpop.permute.xlu0 %551
        %553 = vrot.lane.b32.xlu0 %v478, 64
        %v554 = vpop.permute.xlu0 %553
        %555 = vrot.lane.b32.xlu0 %v479, 64
        %v556 = vpop.permute.xlu0 %555
        %557 = vrot.lane.b32.xlu0 %v480, 64
        %v558 = vpop.permute.xlu0 %557
        %559 = vrot.lane.b32.xlu0 %v481, 64
        %v560 = vpop.permute.xlu0 %559
        %561 = vrot.lane.b32.xlu0 %v482, 64
        %v562 = vpop.permute.xlu0 %561
        %563 = vrot.lane.b32.xlu0 %v483, 64
        %v564 = vpop.permute.xlu0 %563
        %565 = vrot.lane.b32.xlu0 %v484, 64
        %v566 = vpop.permute.xlu0 %565
        %567 = vrot.lane.b32.xlu0 %v485, 64
        %v568 = vpop.permute.xlu0 %567
        %569 = vrot.lane.b32.xlu0 %v486, 64
        %v570 = vpop.permute.xlu0 %569
        %571 = vrot.lane.b32.xlu0 %v487, 64
        %v572 = vpop.permute.xlu0 %571
        %573 = vrot.lane.b32.xlu0 %v488, 64
        %v574 = vpop.permute.xlu0 %573
        %575 = vrot.lane.b32.xlu0 %v489, 64
        %v576 = vpop.permute.xlu0 %575
        %577 = vrot.lane.b32.xlu0 %v490, 64
        %v578 = vpop.permute.xlu0 %577
        %579 = vrot.lane.b32.xlu0 %v491, 64
        %v580 = vpop.permute.xlu0 %579
        %581 = vrot.lane.b32.xlu0 %v492, 64
        %v582 = vpop.permute.xlu0 %581
        %583 = vrot.lane.b32.xlu0 %v493, 64
        %v584 = vpop.permute.xlu0 %583
        %585 = vrot.lane.b32.xlu0 %v494, 64
        %v586 = vpop.permute.xlu0 %585
        %587 = vrot.lane.b32.xlu0 %v495, 64
        %v588 = vpop.permute.xlu0 %587
        %589 = vrot.lane.b32.xlu0 %v496, 64
        %v590 = vpop.permute.xlu0 %589
        %591 = vrot.lane.b32.xlu0 %v497, 64
        %v592 = vpop.permute.xlu0 %591
        %593 = vrot.lane.b32.xlu0 %v498, 64
        %v594 = vpop.permute.xlu0 %593
        %vm627 = vcmask 1043968
        %628 = vst.msk [vmem:[#allocation3] sm:$0xf] %vm627, %v532
        %629 = vst.msk [vmem:[#allocation3 + $0x14] sm:$0xf] %vm627, %v534
        %630 = vst.msk [vmem:[#allocation3 + $0x28] sm:$0xf] %vm627, %v536
        %631 = vst.msk [vmem:[#allocation3 + $0x3c] sm:$0xf] %vm627, %v538
        %632 = vst.msk [vmem:[#allocation3 + $0x50] sm:$0xf] %vm627, %v540
        %633 = vst.msk [vmem:[#allocation3 + $0x64] sm:$0xf] %vm627, %v542
        %634 = vst.msk [vmem:[#allocation3 + $0x78] sm:$0xf] %vm627, %v544
        %635 = vst.msk [vmem:[#allocation3 + $0x8c] sm:$0xf] %vm627, %v546
        %636 = vst.msk [vmem:[#allocation3 + $0xa0] sm:$0xf] %vm627, %v548
        %637 = vst.msk [vmem:[#allocation3 + $0xb4] sm:$0xf] %vm627, %v550
        %638 = vst.msk [vmem:[#allocation3 + $0xc8] sm:$0xf] %vm627, %v552
        %639 = vst.msk [vmem:[#allocation3 + $0xdc] sm:$0xf] %vm627, %v554
        %640 = vst.msk [vmem:[#allocation3 + $0xf0] sm:$0xf] %vm627, %v556
        %641 = vst.msk [vmem:[#allocation3 + $0x104] sm:$0xf] %vm627, %v558
        %642 = vst.msk [vmem:[#allocation3 + $0x118] sm:$0xf] %vm627, %v560
        %643 = vst.msk [vmem:[#allocation3 + $0x12c] sm:$0xf] %vm627, %v562
        %644 = vst.msk [vmem:[#allocation3 + $0x140] sm:$0xf] %vm627, %v564
        %645 = vst.msk [vmem:[#allocation3 + $0x154] sm:$0xf] %vm627, %v566
        %646 = vst.msk [vmem:[#allocation3 + $0x168] sm:$0xf] %vm627, %v568
        %647 = vst.msk [vmem:[#allocation3 + $0x17c] sm:$0xf] %vm627, %v570
        %648 = vst.msk [vmem:[#allocation3 + $0x190] sm:$0xf] %vm627, %v572
        %649 = vst.msk [vmem:[#allocation3 + $0x1a4] sm:$0xf] %vm627, %v574
        %650 = vst.msk [vmem:[#allocation3 + $0x1b8] sm:$0xf] %vm627, %v576
        %651 = vst.msk [vmem:[#allocation3 + $0x1cc] sm:$0xf] %vm627, %v578
        %652 = vst.msk [vmem:[#allocation3 + $0x1e0] sm:$0xf] %vm627, %v580
        %653 = vst.msk [vmem:[#allocation3 + $0x1f4] sm:$0xf] %vm627, %v582
        %654 = vst.msk [vmem:[#allocation3 + $0x208] sm:$0xf] %vm627, %v584
        %655 = vst.msk [vmem:[#allocation3 + $0x21c] sm:$0xf] %vm627, %v586
        %656 = vst.msk [vmem:[#allocation3 + $0x230] sm:$0xf] %vm627, %v588
        %657 = vst.msk [vmem:[#allocation3 + $0x244] sm:$0xf] %vm627, %v590
        %658 = vst.msk [vmem:[#allocation3 + $0x258] sm:$0xf] %vm627, %v592
        %659 = vst.msk [vmem:[#allocation3 + $0x26c] sm:$0xf] %vm627, %v594
        %v660 = vld [vmem:[#allocation2 + $0x2] sm:$0xff]
        %v661 = vld [vmem:[#allocation2 + $0xa] sm:$0xff]
        %v662 = vld [vmem:[#allocation2 + $0x1a] sm:$0xff]
        %v663 = vld [vmem:[#allocation2 + $0x22] sm:$0xff]
        %v664 = vld [vmem:[#allocation2 + $0x32] sm:$0xff]
        %v665 = vld [vmem:[#allocation2 + $0x3a] sm:$0xff]
        %v666 = vld [vmem:[#allocation2 + $0x4a] sm:$0xff]
        %v667 = vld [vmem:[#allocation2 + $0x52] sm:$0xff]
        %v668 = vld [vmem:[#allocation2 + $0x62] sm:$0xff]
        %v669 = vld [vmem:[#allocation2 + $0x6a] sm:$0xff]
        %v670 = vld [vmem:[#allocation2 + $0x7a] sm:$0xff]
        %v671 = vld [vmem:[#allocation2 + $0x82] sm:$0xff]
        %v672 = vld [vmem:[#allocation2 + $0x92] sm:$0xff]
        %v673 = vld [vmem:[#allocation2 + $0x9a] sm:$0xff]
        %v674 = vld [vmem:[#allocation2 + $0xaa] sm:$0xff]
        %v675 = vld [vmem:[#allocation2 + $0xb2] sm:$0xff]
        %v676 = vld [vmem:[#allocation2 + $0xc2] sm:$0xff]
        %v677 = vld [vmem:[#allocation2 + $0xca] sm:$0xff]
        %v678 = vld [vmem:[#allocation2 + $0xda] sm:$0xff]
        %v679 = vld [vmem:[#allocation2 + $0xe2] sm:$0xff]
        %v680 = vld [vmem:[#allocation2 + $0xf2] sm:$0xff]
        %v681 = vld [vmem:[#allocation2 + $0xfa] sm:$0xff]
        %v682 = vld [vmem:[#allocation2 + $0x10a] sm:$0xff]
        %v683 = vld [vmem:[#allocation2 + $0x112] sm:$0xff]
        %v684 = vld [vmem:[#allocation2 + $0x122] sm:$0xff]
        %v685 = vld [vmem:[#allocation2 + $0x12a] sm:$0xff]
        %v686 = vld [vmem:[#allocation2 + $0x13a] sm:$0xff]
        %v687 = vld [vmem:[#allocation2 + $0x142] sm:$0xff]
        %v688 = vld [vmem:[#allocation2 + $0x152] sm:$0xff]
        %v689 = vld [vmem:[#allocation2 + $0x15a] sm:$0xff]
        %v690 = vld [vmem:[#allocation2 + $0x16a] sm:$0xff]
        %v691 = vld [vmem:[#allocation2 + $0x172] sm:$0xff]
        %v692 = vpack.c.bf16 %v660, %v660
        %v693 = vpack.c.bf16 %v661, %v661
        %v694 = vpack.c.bf16 %v662, %v662
        %v695 = vpack.c.bf16 %v663, %v663
        %v696 = vpack.c.bf16 %v664, %v664
        %v697 = vpack.c.bf16 %v665, %v665
        %v698 = vpack.c.bf16 %v666, %v666
        %v699 = vpack.c.bf16 %v667, %v667
        %v700 = vpack.c.bf16 %v668, %v668
        %v701 = vpack.c.bf16 %v669, %v669
        %v702 = vpack.c.bf16 %v670, %v670
        %v703 = vpack.c.bf16 %v671, %v671
        %v704 = vpack.c.bf16 %v672, %v672
        %v705 = vpack.c.bf16 %v673, %v673
        %v706 = vpack.c.bf16 %v674, %v674
        %v707 = vpack.c.bf16 %v675, %v675
        %v708 = vpack.c.bf16 %v676, %v676
        %v709 = vpack.c.bf16 %v677, %v677
        %v710 = vpack.c.bf16 %v678, %v678
        %v711 = vpack.c.bf16 %v679, %v679
        %v712 = vpack.c.bf16 %v680, %v680
        %v713 = vpack.c.bf16 %v681, %v681
        %v714 = vpack.c.bf16 %v682, %v682
        %v715 = vpack.c.bf16 %v683, %v683
        %v716 = vpack.c.bf16 %v684, %v684
        %v717 = vpack.c.bf16 %v685, %v685
        %v718 = vpack.c.bf16 %v686, %v686
        %v719 = vpack.c.bf16 %v687, %v687
        %v720 = vpack.c.bf16 %v688, %v688
        %v721 = vpack.c.bf16 %v689, %v689
        %v722 = vpack.c.bf16 %v690, %v690
        %v723 = vpack.c.bf16 %v691, %v691
        %724 = vst.msk [vmem:[#allocation3 + $0x4] sm:$0xf] %vm402, %v692
        %725 = vst.msk [vmem:[#allocation3 + $0x18] sm:$0xf] %vm402, %v693
        %726 = vst.msk [vmem:[#allocation3 + $0x2c] sm:$0xf] %vm402, %v694
        %727 = vst.msk [vmem:[#allocation3 + $0x40] sm:$0xf] %vm402, %v695
        %728 = vst.msk [vmem:[#allocation3 + $0x54] sm:$0xf] %vm402, %v696
        %729 = vst.msk [vmem:[#allocation3 + $0x68] sm:$0xf] %vm402, %v697
        %730 = vst.msk [vmem:[#allocation3 + $0x7c] sm:$0xf] %vm402, %v698
        %731 = vst.msk [vmem:[#allocation3 + $0x90] sm:$0xf] %vm402, %v699
        %732 = vst.msk [vmem:[#allocation3 + $0xa4] sm:$0xf] %vm402, %v700
        %733 = vst.msk [vmem:[#allocation3 + $0xb8] sm:$0xf] %vm402, %v701
        %734 = vst.msk [vmem:[#allocation3 + $0xcc] sm:$0xf] %vm402, %v702
        %735 = vst.msk [vmem:[#allocation3 + $0xe0] sm:$0xf] %vm402, %v703
        %736 = vst.msk [vmem:[#allocation3 + $0xf4] sm:$0xf] %vm402, %v704
        %737 = vst.msk [vmem:[#allocation3 + $0x108] sm:$0xf] %vm402, %v705
        %738 = vst.msk [vmem:[#allocation3 + $0x11c] sm:$0xf] %vm402, %v706
        %739 = vst.msk [vmem:[#allocation3 + $0x130] sm:$0xf] %vm402, %v707
        %740 = vst.msk [vmem:[#allocation3 + $0x144] sm:$0xf] %vm402, %v708
        %741 = vst.msk [vmem:[#allocation3 + $0x158] sm:$0xf] %vm402, %v709
        %742 = vst.msk [vmem:[#allocation3 + $0x16c] sm:$0xf] %vm402, %v710
        %743 = vst.msk [vmem:[#allocation3 + $0x180] sm:$0xf] %vm402, %v711
        %744 = vst.msk [vmem:[#allocation3 + $0x194] sm:$0xf] %vm402, %v712
        %745 = vst.msk [vmem:[#allocation3 + $0x1a8] sm:$0xf] %vm402, %v713
        %746 = vst.msk [vmem:[#allocation3 + $0x1bc] sm:$0xf] %vm402, %v714
        %747 = vst.msk [vmem:[#allocation3 + $0x1d0] sm:$0xf] %vm402, %v715
        %748 = vst.msk [vmem:[#allocation3 + $0x1e4] sm:$0xf] %vm402, %v716
        %749 = vst.msk [vmem:[#allocation3 + $0x1f8] sm:$0xf] %vm402, %v717
        %750 = vst.msk [vmem:[#allocation3 + $0x20c] sm:$0xf] %vm402, %v718
        %751 = vst.msk [vmem:[#allocation3 + $0x220] sm:$0xf] %vm402, %v719
        %752 = vst.msk [vmem:[#allocation3 + $0x234] sm:$0xf] %vm402, %v720
        %753 = vst.msk [vmem:[#allocation3 + $0x248] sm:$0xf] %vm402, %v721
        %754 = vst.msk [vmem:[#allocation3 + $0x25c] sm:$0xf] %vm402, %v722
        %755 = vst.msk [vmem:[#allocation3 + $0x270] sm:$0xf] %vm402, %v723
        %v756 = vld [vmem:[%s305] sm:$0xff]
        %v757 = vld [vmem:[%s305 + $0x8] sm:$0xff]
        %v758 = vld [vmem:[%s305 + $0x18] sm:$0xff]
        %v759 = vld [vmem:[%s305 + $0x20] sm:$0xff]
        %v760 = vld [vmem:[%s305 + $0x30] sm:$0xff]
        %v761 = vld [vmem:[%s305 + $0x38] sm:$0xff]
        %v762 = vld [vmem:[%s305 + $0x48] sm:$0xff]
        %v763 = vld [vmem:[%s305 + $0x50] sm:$0xff]
        %v764 = vld [vmem:[%s305 + $0x60] sm:$0xff]
        %v765 = vld [vmem:[%s305 + $0x68] sm:$0xff]
        %v766 = vld [vmem:[%s305 + $0x78] sm:$0xff]
        %v767 = vld [vmem:[%s305 + $0x80] sm:$0xff]
        %v768 = vld [vmem:[%s305 + $0x90] sm:$0xff]
        %v769 = vld [vmem:[%s305 + $0x98] sm:$0xff]
        %v770 = vld [vmem:[%s305 + $0xa8] sm:$0xff]
        %v771 = vld [vmem:[%s305 + $0xb0] sm:$0xff]
        %v772 = vld [vmem:[%s305 + $0xc0] sm:$0xff]
        %v773 = vld [vmem:[%s305 + $0xc8] sm:$0xff]
        %v774 = vld [vmem:[%s305 + $0xd8] sm:$0xff]
        %v775 = vld [vmem:[%s305 + $0xe0] sm:$0xff]
        %v776 = vld [vmem:[%s305 + $0xf0] sm:$0xff]
        %v777 = vld [vmem:[%s305 + $0xf8] sm:$0xff]
        %v778 = vld [vmem:[%s305 + $0x108] sm:$0xff]
        %v779 = vld [vmem:[%s305 + $0x110] sm:$0xff]
        %v780 = vld [vmem:[%s305 + $0x120] sm:$0xff]
        %v781 = vld [vmem:[%s305 + $0x128] sm:$0xff]
        %v782 = vld [vmem:[%s305 + $0x138] sm:$0xff]
        %v783 = vld [vmem:[%s305 + $0x140] sm:$0xff]
        %v784 = vld [vmem:[%s305 + $0x150] sm:$0xff]
        %v785 = vld [vmem:[%s305 + $0x158] sm:$0xff]
        %v786 = vld [vmem:[%s305 + $0x168] sm:$0xff]
        %v787 = vld [vmem:[%s305 + $0x170] sm:$0xff]
        %v788 = vpack.c.bf16 %v756, %v756
        %v789 = vpack.c.bf16 %v757, %v757
        %v790 = vpack.c.bf16 %v758, %v758
        %v791 = vpack.c.bf16 %v759, %v759
        %v792 = vpack.c.bf16 %v760, %v760
        %v793 = vpack.c.bf16 %v761, %v761
        %v794 = vpack.c.bf16 %v762, %v762
        %v795 = vpack.c.bf16 %v763, %v763
        %v796 = vpack.c.bf16 %v764, %v764
        %v797 = vpack.c.bf16 %v765, %v765
        %v798 = vpack.c.bf16 %v766, %v766
        %v799 = vpack.c.bf16 %v767, %v767
        %v800 = vpack.c.bf16 %v768, %v768
        %v801 = vpack.c.bf16 %v769, %v769
        %v802 = vpack.c.bf16 %v770, %v770
        %v803 = vpack.c.bf16 %v771, %v771
        %v804 = vpack.c.bf16 %v772, %v772
        %v805 = vpack.c.bf16 %v773, %v773
        %v806 = vpack.c.bf16 %v774, %v774
        %v807 = vpack.c.bf16 %v775, %v775
        %v808 = vpack.c.bf16 %v776, %v776
        %v809 = vpack.c.bf16 %v777, %v777
        %v810 = vpack.c.bf16 %v778, %v778
        %v811 = vpack.c.bf16 %v779, %v779
        %v812 = vpack.c.bf16 %v780, %v780
        %v813 = vpack.c.bf16 %v781, %v781
        %v814 = vpack.c.bf16 %v782, %v782
        %v815 = vpack.c.bf16 %v783, %v783
        %v816 = vpack.c.bf16 %v784, %v784
        %v817 = vpack.c.bf16 %v785, %v785
        %v818 = vpack.c.bf16 %v786, %v786
        %v819 = vpack.c.bf16 %v787, %v787
        %852 = vrot.lane.b32.xlu0 %v788, 64
        %v853 = vpop.permute.xlu0 %852
        %854 = vrot.lane.b32.xlu0 %v789, 64
        %v855 = vpop.permute.xlu0 %854
        %856 = vrot.lane.b32.xlu0 %v790, 64
        %v857 = vpop.permute.xlu0 %856
        %858 = vrot.lane.b32.xlu0 %v791, 64
        %v859 = vpop.permute.xlu0 %858
        %860 = vrot.lane.b32.xlu0 %v792, 64
        %v861 = vpop.permute.xlu0 %860
        %862 = vrot.lane.b32.xlu0 %v793, 64
        %v863 = vpop.permute.xlu0 %862
        %864 = vrot.lane.b32.xlu0 %v794, 64
        %v865 = vpop.permute.xlu0 %864
        %866 = vrot.lane.b32.xlu0 %v795, 64
        %v867 = vpop.permute.xlu0 %866
        %868 = vrot.lane.b32.xlu0 %v796, 64
        %v869 = vpop.permute.xlu0 %868
        %870 = vrot.lane.b32.xlu0 %v797, 64
        %v871 = vpop.permute.xlu0 %870
        %872 = vrot.lane.b32.xlu0 %v798, 64
        %v873 = vpop.permute.xlu0 %872
        %874 = vrot.lane.b32.xlu0 %v799, 64
        %v875 = vpop.permute.xlu0 %874
        %876 = vrot.lane.b32.xlu0 %v800, 64
        %v877 = vpop.permute.xlu0 %876
        %878 = vrot.lane.b32.xlu0 %v801, 64
        %v879 = vpop.permute.xlu0 %878
        %880 = vrot.lane.b32.xlu0 %v802, 64
        %v881 = vpop.permute.xlu0 %880
        %882 = vrot.lane.b32.xlu0 %v803, 64
        %v883 = vpop.permute.xlu0 %882
        %884 = vrot.lane.b32.xlu0 %v804, 64
        %v885 = vpop.permute.xlu0 %884
        %886 = vrot.lane.b32.xlu0 %v805, 64
        %v887 = vpop.permute.xlu0 %886
        %888 = vrot.lane.b32.xlu0 %v806, 64
        %v889 = vpop.permute.xlu0 %888
        %890 = vrot.lane.b32.xlu0 %v807, 64
        %v891 = vpop.permute.xlu0 %890
        %892 = vrot.lane.b32.xlu0 %v808, 64
        %v893 = vpop.permute.xlu0 %892
        %894 = vrot.lane.b32.xlu0 %v809, 64
        %v895 = vpop.permute.xlu0 %894
        %896 = vrot.lane.b32.xlu0 %v810, 64
        %v897 = vpop.permute.xlu0 %896
        %898 = vrot.lane.b32.xlu0 %v811, 64
        %v899 = vpop.permute.xlu0 %898
        %900 = vrot.lane.b32.xlu0 %v812, 64
        %v901 = vpop.permute.xlu0 %900
        %902 = vrot.lane.b32.xlu0 %v813, 64
        %v903 = vpop.permute.xlu0 %902
        %904 = vrot.lane.b32.xlu0 %v814, 64
        %v905 = vpop.permute.xlu0 %904
        %906 = vrot.lane.b32.xlu0 %v815, 64
        %v907 = vpop.permute.xlu0 %906
        %908 = vrot.lane.b32.xlu0 %v816, 64
        %v909 = vpop.permute.xlu0 %908
        %910 = vrot.lane.b32.xlu0 %v817, 64
        %v911 = vpop.permute.xlu0 %910
        %912 = vrot.lane.b32.xlu0 %v818, 64
        %v913 = vpop.permute.xlu0 %912
        %914 = vrot.lane.b32.xlu0 %v819, 64
        %v915 = vpop.permute.xlu0 %914
        %948 = vst.msk [vmem:[#allocation3 + $0x4] sm:$0xf] %vm627, %v853
        %949 = vst.msk [vmem:[#allocation3 + $0x18] sm:$0xf] %vm627, %v855
        %950 = vst.msk [vmem:[#allocation3 + $0x2c] sm:$0xf] %vm627, %v857
        %951 = vst.msk [vmem:[#allocation3 + $0x40] sm:$0xf] %vm627, %v859
        %952 = vst.msk [vmem:[#allocation3 + $0x54] sm:$0xf] %vm627, %v861
        %953 = vst.msk [vmem:[#allocation3 + $0x68] sm:$0xf] %vm627, %v863
        %954 = vst.msk [vmem:[#allocation3 + $0x7c] sm:$0xf] %vm627, %v865
        %955 = vst.msk [vmem:[#allocation3 + $0x90] sm:$0xf] %vm627, %v867
        %956 = vst.msk [vmem:[#allocation3 + $0xa4] sm:$0xf] %vm627, %v869
        %957 = vst.msk [vmem:[#allocation3 + $0xb8] sm:$0xf] %vm627, %v871
        %958 = vst.msk [vmem:[#allocation3 + $0xcc] sm:$0xf] %vm627, %v873
        %959 = vst.msk [vmem:[#allocation3 + $0xe0] sm:$0xf] %vm627, %v875
        %960 = vst.msk [vmem:[#allocation3 + $0xf4] sm:$0xf] %vm627, %v877
        %961 = vst.msk [vmem:[#allocation3 + $0x108] sm:$0xf] %vm627, %v879
        %962 = vst.msk [vmem:[#allocation3 + $0x11c] sm:$0xf] %vm627, %v881
        %963 = vst.msk [vmem:[#allocation3 + $0x130] sm:$0xf] %vm627, %v883
        %964 = vst.msk [vmem:[#allocation3 + $0x144] sm:$0xf] %vm627, %v885
        %965 = vst.msk [vmem:[#allocation3 + $0x158] sm:$0xf] %vm627, %v887
        %966 = vst.msk [vmem:[#allocation3 + $0x16c] sm:$0xf] %vm627, %v889
        %967 = vst.msk [vmem:[#allocation3 + $0x180] sm:$0xf] %vm627, %v891
        %968 = vst.msk [vmem:[#allocation3 + $0x194] sm:$0xf] %vm627, %v893
        %969 = vst.msk [vmem:[#allocation3 + $0x1a8] sm:$0xf] %vm627, %v895
        %970 = vst.msk [vmem:[#allocation3 + $0x1bc] sm:$0xf] %vm627, %v897
        %971 = vst.msk [vmem:[#allocation3 + $0x1d0] sm:$0xf] %vm627, %v899
        %972 = vst.msk [vmem:[#allocation3 + $0x1e4] sm:$0xf] %vm627, %v901
        %973 = vst.msk [vmem:[#allocation3 + $0x1f8] sm:$0xf] %vm627, %v903
        %974 = vst.msk [vmem:[#allocation3 + $0x20c] sm:$0xf] %vm627, %v905
        %975 = vst.msk [vmem:[#allocation3 + $0x220] sm:$0xf] %vm627, %v907
        %976 = vst.msk [vmem:[#allocation3 + $0x234] sm:$0xf] %vm627, %v909
        %977 = vst.msk [vmem:[#allocation3 + $0x248] sm:$0xf] %vm627, %v911
        %978 = vst.msk [vmem:[#allocation3 + $0x25c] sm:$0xf] %vm627, %v913
        %979 = vst.msk [vmem:[#allocation3 + $0x270] sm:$0xf] %vm627, %v915
        %v980 = vld [vmem:[%s305 + $0x1] sm:$0xff]
        %v981 = vld [vmem:[%s305 + $0x9] sm:$0xff]
        %v982 = vld [vmem:[%s305 + $0x19] sm:$0xff]
        %v983 = vld [vmem:[%s305 + $0x21] sm:$0xff]
        %v984 = vld [vmem:[%s305 + $0x31] sm:$0xff]
        %v985 = vld [vmem:[%s305 + $0x39] sm:$0xff]
        %v986 = vld [vmem:[%s305 + $0x49] sm:$0xff]
        %v987 = vld [vmem:[%s305 + $0x51] sm:$0xff]
        %v988 = vld [vmem:[%s305 + $0x61] sm:$0xff]
        %v989 = vld [vmem:[%s305 + $0x69] sm:$0xff]
        %v990 = vld [vmem:[%s305 + $0x79] sm:$0xff]
        %v991 = vld [vmem:[%s305 + $0x81] sm:$0xff]
        %v992 = vld [vmem:[%s305 + $0x91] sm:$0xff]
        %v993 = vld [vmem:[%s305 + $0x99] sm:$0xff]
        %v994 = vld [vmem:[%s305 + $0xa9] sm:$0xff]
        %v995 = vld [vmem:[%s305 + $0xb1] sm:$0xff]
        %v996 = vld [vmem:[%s305 + $0xc1] sm:$0xff]
        %v997 = vld [vmem:[%s305 + $0xc9] sm:$0xff]
        %v998 = vld [vmem:[%s305 + $0xd9] sm:$0xff]
        %v999 = vld [vmem:[%s305 + $0xe1] sm:$0xff]
        %v1000 = vld [vmem:[%s305 + $0xf1] sm:$0xff]
        %v1001 = vld [vmem:[%s305 + $0xf9] sm:$0xff]
        %v1002 = vld [vmem:[%s305 + $0x109] sm:$0xff]
        %v1003 = vld [vmem:[%s305 + $0x111] sm:$0xff]
        %v1004 = vld [vmem:[%s305 + $0x121] sm:$0xff]
        %v1005 = vld [vmem:[%s305 + $0x129] sm:$0xff]
        %v1006 = vld [vmem:[%s305 + $0x139] sm:$0xff]
        %v1007 = vld [vmem:[%s305 + $0x141] sm:$0xff]
        %v1008 = vld [vmem:[%s305 + $0x151] sm:$0xff]
        %v1009 = vld [vmem:[%s305 + $0x159] sm:$0xff]
        %v1010 = vld [vmem:[%s305 + $0x169] sm:$0xff]
        %v1011 = vld [vmem:[%s305 + $0x171] sm:$0xff]
        %v1012 = vpack.c.bf16 %v980, %v980
        %v1013 = vpack.c.bf16 %v981, %v981
        %v1014 = vpack.c.bf16 %v982, %v982
        %v1015 = vpack.c.bf16 %v983, %v983
        %v1016 = vpack.c.bf16 %v984, %v984
        %v1017 = vpack.c.bf16 %v985, %v985
        %v1018 = vpack.c.bf16 %v986, %v986
        %v1019 = vpack.c.bf16 %v987, %v987
        %v1020 = vpack.c.bf16 %v988, %v988
        %v1021 = vpack.c.bf16 %v989, %v989
        %v1022 = vpack.c.bf16 %v990, %v990
        %v1023 = vpack.c.bf16 %v991, %v991
        %v1024 = vpack.c.bf16 %v992, %v992
        %v1025 = vpack.c.bf16 %v993, %v993
        %v1026 = vpack.c.bf16 %v994, %v994
        %v1027 = vpack.c.bf16 %v995, %v995
        %v1028 = vpack.c.bf16 %v996, %v996
        %v1029 = vpack.c.bf16 %v997, %v997
        %v1030 = vpack.c.bf16 %v998, %v998
        %v1031 = vpack.c.bf16 %v999, %v999
        %v1032 = vpack.c.bf16 %v1000, %v1000
        %v1033 = vpack.c.bf16 %v1001, %v1001
        %v1034 = vpack.c.bf16 %v1002, %v1002
        %v1035 = vpack.c.bf16 %v1003, %v1003
        %v1036 = vpack.c.bf16 %v1004, %v1004
        %v1037 = vpack.c.bf16 %v1005, %v1005
        %v1038 = vpack.c.bf16 %v1006, %v1006
        %v1039 = vpack.c.bf16 %v1007, %v1007
        %v1040 = vpack.c.bf16 %v1008, %v1008
        %v1041 = vpack.c.bf16 %v1009, %v1009
        %v1042 = vpack.c.bf16 %v1010, %v1010
        %v1043 = vpack.c.bf16 %v1011, %v1011
        %1044 = vst.msk [vmem:[#allocation3 + $0x8] sm:$0xf] %vm402, %v1012
        %1045 = vst.msk [vmem:[#allocation3 + $0x1c] sm:$0xf] %vm402, %v1013
        %1046 = vst.msk [vmem:[#allocation3 + $0x30] sm:$0xf] %vm402, %v1014
        %1047 = vst.msk [vmem:[#allocation3 + $0x44] sm:$0xf] %vm402, %v1015
        %1048 = vst.msk [vmem:[#allocation3 + $0x58] sm:$0xf] %vm402, %v1016
        %1049 = vst.msk [vmem:[#allocation3 + $0x6c] sm:$0xf] %vm402, %v1017
        %1050 = vst.msk [vmem:[#allocation3 + $0x80] sm:$0xf] %vm402, %v1018
        %1051 = vst.msk [vmem:[#allocation3 + $0x94] sm:$0xf] %vm402, %v1019
        %1052 = vst.msk [vmem:[#allocation3 + $0xa8] sm:$0xf] %vm402, %v1020
        %1053 = vst.msk [vmem:[#allocation3 + $0xbc] sm:$0xf] %vm402, %v1021
        %1054 = vst.msk [vmem:[#allocation3 + $0xd0] sm:$0xf] %vm402, %v1022
        %1055 = vst.msk [vmem:[#allocation3 + $0xe4] sm:$0xf] %vm402, %v1023
        %1056 = vst.msk [vmem:[#allocation3 + $0xf8] sm:$0xf] %vm402, %v1024
        %1057 = vst.msk [vmem:[#allocation3 + $0x10c] sm:$0xf] %vm402, %v1025
        %1058 = vst.msk [vmem:[#allocation3 + $0x120] sm:$0xf] %vm402, %v1026
        %1059 = vst.msk [vmem:[#allocation3 + $0x134] sm:$0xf] %vm402, %v1027
        %1060 = vst.msk [vmem:[#allocation3 + $0x148] sm:$0xf] %vm402, %v1028
        %1061 = vst.msk [vmem:[#allocation3 + $0x15c] sm:$0xf] %vm402, %v1029
        %1062 = vst.msk [vmem:[#allocation3 + $0x170] sm:$0xf] %vm402, %v1030
        %1063 = vst.msk [vmem:[#allocation3 + $0x184] sm:$0xf] %vm402, %v1031
        %1064 = vst.msk [vmem:[#allocation3 + $0x198] sm:$0xf] %vm402, %v1032
        %1065 = vst.msk [vmem:[#allocation3 + $0x1ac] sm:$0xf] %vm402, %v1033
        %1066 = vst.msk [vmem:[#allocation3 + $0x1c0] sm:$0xf] %vm402, %v1034
        %1067 = vst.msk [vmem:[#allocation3 + $0x1d4] sm:$0xf] %vm402, %v1035
        %1068 = vst.msk [vmem:[#allocation3 + $0x1e8] sm:$0xf] %vm402, %v1036
        %1069 = vst.msk [vmem:[#allocation3 + $0x1fc] sm:$0xf] %vm402, %v1037
        %1070 = vst.msk [vmem:[#allocation3 + $0x210] sm:$0xf] %vm402, %v1038
        %1071 = vst.msk [vmem:[#allocation3 + $0x224] sm:$0xf] %vm402, %v1039
        %1072 = vst.msk [vmem:[#allocation3 + $0x238] sm:$0xf] %vm402, %v1040
        %1073 = vst.msk [vmem:[#allocation3 + $0x24c] sm:$0xf] %vm402, %v1041
        %1074 = vst.msk [vmem:[#allocation3 + $0x260] sm:$0xf] %vm402, %v1042
        %1075 = vst.msk [vmem:[#allocation3 + $0x274] sm:$0xf] %vm402, %v1043
        %v1076 = vld [vmem:[%s305 + $0x2] sm:$0xff]
        %v1077 = vld [vmem:[%s305 + $0xa] sm:$0xff]
        %v1078 = vld [vmem:[%s305 + $0x1a] sm:$0xff]
        %v1079 = vld [vmem:[%s305 + $0x22] sm:$0xff]
        %v1080 = vld [vmem:[%s305 + $0x32] sm:$0xff]
        %v1081 = vld [vmem:[%s305 + $0x3a] sm:$0xff]
        %v1082 = vld [vmem:[%s305 + $0x4a] sm:$0xff]
        %v1083 = vld [vmem:[%s305 + $0x52] sm:$0xff]
        %v1084 = vld [vmem:[%s305 + $0x62] sm:$0xff]
        %v1085 = vld [vmem:[%s305 + $0x6a] sm:$0xff]
        %v1086 = vld [vmem:[%s305 + $0x7a] sm:$0xff]
        %v1087 = vld [vmem:[%s305 + $0x82] sm:$0xff]
        %v1088 = vld [vmem:[%s305 + $0x92] sm:$0xff]
        %v1089 = vld [vmem:[%s305 + $0x9a] sm:$0xff]
        %v1090 = vld [vmem:[%s305 + $0xaa] sm:$0xff]
        %v1091 = vld [vmem:[%s305 + $0xb2] sm:$0xff]
        %v1092 = vld [vmem:[%s305 + $0xc2] sm:$0xff]
        %v1093 = vld [vmem:[%s305 + $0xca] sm:$0xff]
        %v1094 = vld [vmem:[%s305 + $0xda] sm:$0xff]
        %v1095 = vld [vmem:[%s305 + $0xe2] sm:$0xff]
        %v1096 = vld [vmem:[%s305 + $0xf2] sm:$0xff]
        %v1097 = vld [vmem:[%s305 + $0xfa] sm:$0xff]
        %v1098 = vld [vmem:[%s305 + $0x10a] sm:$0xff]
        %v1099 = vld [vmem:[%s305 + $0x112] sm:$0xff]
        %v1100 = vld [vmem:[%s305 + $0x122] sm:$0xff]
        %v1101 = vld [vmem:[%s305 + $0x12a] sm:$0xff]
        %v1102 = vld [vmem:[%s305 + $0x13a] sm:$0xff]
        %v1103 = vld [vmem:[%s305 + $0x142] sm:$0xff]
        %v1104 = vld [vmem:[%s305 + $0x152] sm:$0xff]
        %v1105 = vld [vmem:[%s305 + $0x15a] sm:$0xff]
        %v1106 = vld [vmem:[%s305 + $0x16a] sm:$0xff]
        %v1107 = vld [vmem:[%s305 + $0x172] sm:$0xff]
        %v1108 = vpack.c.bf16 %v1076, %v1076
        %v1109 = vpack.c.bf16 %v1077, %v1077
        %v1110 = vpack.c.bf16 %v1078, %v1078
        %v1111 = vpack.c.bf16 %v1079, %v1079
        %v1112 = vpack.c.bf16 %v1080, %v1080
        %v1113 = vpack.c.bf16 %v1081, %v1081
        %v1114 = vpack.c.bf16 %v1082, %v1082
        %v1115 = vpack.c.bf16 %v1083, %v1083
        %v1116 = vpack.c.bf16 %v1084, %v1084
        %v1117 = vpack.c.bf16 %v1085, %v1085
        %v1118 = vpack.c.bf16 %v1086, %v1086
        %v1119 = vpack.c.bf16 %v1087, %v1087
        %v1120 = vpack.c.bf16 %v1088, %v1088
        %v1121 = vpack.c.bf16 %v1089, %v1089
        %v1122 = vpack.c.bf16 %v1090, %v1090
        %v1123 = vpack.c.bf16 %v1091, %v1091
        %v1124 = vpack.c.bf16 %v1092, %v1092
        %v1125 = vpack.c.bf16 %v1093, %v1093
        %v1126 = vpack.c.bf16 %v1094, %v1094
        %v1127 = vpack.c.bf16 %v1095, %v1095
        %v1128 = vpack.c.bf16 %v1096, %v1096
        %v1129 = vpack.c.bf16 %v1097, %v1097
        %v1130 = vpack.c.bf16 %v1098, %v1098
        %v1131 = vpack.c.bf16 %v1099, %v1099
        %v1132 = vpack.c.bf16 %v1100, %v1100
        %v1133 = vpack.c.bf16 %v1101, %v1101
        %v1134 = vpack.c.bf16 %v1102, %v1102
        %v1135 = vpack.c.bf16 %v1103, %v1103
        %v1136 = vpack.c.bf16 %v1104, %v1104
        %v1137 = vpack.c.bf16 %v1105, %v1105
        %v1138 = vpack.c.bf16 %v1106, %v1106
        %v1139 = vpack.c.bf16 %v1107, %v1107
        %1172 = vrot.lane.b32.xlu0 %v1108, 64
        %v1173 = vpop.permute.xlu0 %1172
        %1174 = vrot.lane.b32.xlu0 %v1109, 64
        %v1175 = vpop.permute.xlu0 %1174
        %1176 = vrot.lane.b32.xlu0 %v1110, 64
        %v1177 = vpop.permute.xlu0 %1176
        %1178 = vrot.lane.b32.xlu0 %v1111, 64
        %v1179 = vpop.permute.xlu0 %1178
        %1180 = vrot.lane.b32.xlu0 %v1112, 64
        %v1181 = vpop.permute.xlu0 %1180
        %1182 = vrot.lane.b32.xlu0 %v1113, 64
        %v1183 = vpop.permute.xlu0 %1182
        %1184 = vrot.lane.b32.xlu0 %v1114, 64
        %v1185 = vpop.permute.xlu0 %1184
        %1186 = vrot.lane.b32.xlu0 %v1115, 64
        %v1187 = vpop.permute.xlu0 %1186
        %1188 = vrot.lane.b32.xlu0 %v1116, 64
        %v1189 = vpop.permute.xlu0 %1188
        %1190 = vrot.lane.b32.xlu0 %v1117, 64
        %v1191 = vpop.permute.xlu0 %1190
        %1192 = vrot.lane.b32.xlu0 %v1118, 64
        %v1193 = vpop.permute.xlu0 %1192
        %1194 = vrot.lane.b32.xlu0 %v1119, 64
        %v1195 = vpop.permute.xlu0 %1194
        %1196 = vrot.lane.b32.xlu0 %v1120, 64
        %v1197 = vpop.permute.xlu0 %1196
        %1198 = vrot.lane.b32.xlu0 %v1121, 64
        %v1199 = vpop.permute.xlu0 %1198
        %1200 = vrot.lane.b32.xlu0 %v1122, 64
        %v1201 = vpop.permute.xlu0 %1200
        %1202 = vrot.lane.b32.xlu0 %v1123, 64
        %v1203 = vpop.permute.xlu0 %1202
        %1204 = vrot.lane.b32.xlu0 %v1124, 64
        %v1205 = vpop.permute.xlu0 %1204
        %1206 = vrot.lane.b32.xlu0 %v1125, 64
        %v1207 = vpop.permute.xlu0 %1206
        %1208 = vrot.lane.b32.xlu0 %v1126, 64
        %v1209 = vpop.permute.xlu0 %1208
        %1210 = vrot.lane.b32.xlu0 %v1127, 64
        %v1211 = vpop.permute.xlu0 %1210
        %1212 = vrot.lane.b32.xlu0 %v1128, 64
        %v1213 = vpop.permute.xlu0 %1212
        %1214 = vrot.lane.b32.xlu0 %v1129, 64
        %v1215 = vpop.permute.xlu0 %1214
        %1216 = vrot.lane.b32.xlu0 %v1130, 64
        %v1217 = vpop.permute.xlu0 %1216
        %1218 = vrot.lane.b32.xlu0 %v1131, 64
        %v1219 = vpop.permute.xlu0 %1218
        %1220 = vrot.lane.b32.xlu0 %v1132, 64
        %v1221 = vpop.permute.xlu0 %1220
        %1222 = vrot.lane.b32.xlu0 %v1133, 64
        %v1223 = vpop.permute.xlu0 %1222
        %1224 = vrot.lane.b32.xlu0 %v1134, 64
        %v1225 = vpop.permute.xlu0 %1224
        %1226 = vrot.lane.b32.xlu0 %v1135, 64
        %v1227 = vpop.permute.xlu0 %1226
        %1228 = vrot.lane.b32.xlu0 %v1136, 64
        %v1229 = vpop.permute.xlu0 %1228
        %1230 = vrot.lane.b32.xlu0 %v1137, 64
        %v1231 = vpop.permute.xlu0 %1230
        %1232 = vrot.lane.b32.xlu0 %v1138, 64
        %v1233 = vpop.permute.xlu0 %1232
        %1234 = vrot.lane.b32.xlu0 %v1139, 64
        %v1235 = vpop.permute.xlu0 %1234
        %1268 = vst.msk [vmem:[#allocation3 + $0x8] sm:$0xf] %vm627, %v1173
        %1269 = vst.msk [vmem:[#allocation3 + $0x1c] sm:$0xf] %vm627, %v1175
        %1270 = vst.msk [vmem:[#allocation3 + $0x30] sm:$0xf] %vm627, %v1177
        %1271 = vst.msk [vmem:[#allocation3 + $0x44] sm:$0xf] %vm627, %v1179
        %1272 = vst.msk [vmem:[#allocation3 + $0x58] sm:$0xf] %vm627, %v1181
        %1273 = vst.msk [vmem:[#allocation3 + $0x6c] sm:$0xf] %vm627, %v1183
        %1274 = vst.msk [vmem:[#allocation3 + $0x80] sm:$0xf] %vm627, %v1185
        %1275 = vst.msk [vmem:[#allocation3 + $0x94] sm:$0xf] %vm627, %v1187
        %1276 = vst.msk [vmem:[#allocation3 + $0xa8] sm:$0xf] %vm627, %v1189
        %1277 = vst.msk [vmem:[#allocation3 + $0xbc] sm:$0xf] %vm627, %v1191
        %1278 = vst.msk [vmem:[#allocation3 + $0xd0] sm:$0xf] %vm627, %v1193
        %1279 = vst.msk [vmem:[#allocation3 + $0xe4] sm:$0xf] %vm627, %v1195
        %1280 = vst.msk [vmem:[#allocation3 + $0xf8] sm:$0xf] %vm627, %v1197
        %1281 = vst.msk [vmem:[#allocation3 + $0x10c] sm:$0xf] %vm627, %v1199
        %1282 = vst.msk [vmem:[#allocation3 + $0x120] sm:$0xf] %vm627, %v1201
        %1283 = vst.msk [vmem:[#allocation3 + $0x134] sm:$0xf] %vm627, %v1203
        %1284 = vst.msk [vmem:[#allocation3 + $0x148] sm:$0xf] %vm627, %v1205
        %1285 = vst.msk [vmem:[#allocation3 + $0x15c] sm:$0xf] %vm627, %v1207
        %1286 = vst.msk [vmem:[#allocation3 + $0x170] sm:$0xf] %vm627, %v1209
        %1287 = vst.msk [vmem:[#allocation3 + $0x184] sm:$0xf] %vm627, %v1211
        %1288 = vst.msk [vmem:[#allocation3 + $0x198] sm:$0xf] %vm627, %v1213
        %1289 = vst.msk [vmem:[#allocation3 + $0x1ac] sm:$0xf] %vm627, %v1215
        %1290 = vst.msk [vmem:[#allocation3 + $0x1c0] sm:$0xf] %vm627, %v1217
        %1291 = vst.msk [vmem:[#allocation3 + $0x1d4] sm:$0xf] %vm627, %v1219
        %1292 = vst.msk [vmem:[#allocation3 + $0x1e8] sm:$0xf] %vm627, %v1221
        %1293 = vst.msk [vmem:[#allocation3 + $0x1fc] sm:$0xf] %vm627, %v1223
        %1294 = vst.msk [vmem:[#allocation3 + $0x210] sm:$0xf] %vm627, %v1225
        %1295 = vst.msk [vmem:[#allocation3 + $0x224] sm:$0xf] %vm627, %v1227
        %1296 = vst.msk [vmem:[#allocation3 + $0x238] sm:$0xf] %vm627, %v1229
        %1297 = vst.msk [vmem:[#allocation3 + $0x24c] sm:$0xf] %vm627, %v1231
        %1298 = vst.msk [vmem:[#allocation3 + $0x260] sm:$0xf] %vm627, %v1233
        %1299 = vst.msk [vmem:[#allocation3 + $0x274] sm:$0xf] %vm627, %v1235
        %s1300 = scalar_lea.vmem [#allocation2], 48
        %v1301 = vld [vmem:[%s1300] sm:$0xff]
        %v1302 = vld [vmem:[%s1300 + $0x8] sm:$0xff]
        %v1303 = vld [vmem:[%s1300 + $0x18] sm:$0xff]
        %v1304 = vld [vmem:[%s1300 + $0x20] sm:$0xff]
        %v1305 = vld [vmem:[%s1300 + $0x30] sm:$0xff]
        %v1306 = vld [vmem:[%s1300 + $0x38] sm:$0xff]
        %v1307 = vld [vmem:[%s1300 + $0x48] sm:$0xff]
        %v1308 = vld [vmem:[%s1300 + $0x50] sm:$0xff]
        %v1309 = vld [vmem:[%s1300 + $0x60] sm:$0xff]
        %v1310 = vld [vmem:[%s1300 + $0x68] sm:$0xff]
        %v1311 = vld [vmem:[%s1300 + $0x78] sm:$0xff]
        %v1312 = vld [vmem:[%s1300 + $0x80] sm:$0xff]
        %v1313 = vld [vmem:[%s1300 + $0x90] sm:$0xff]
        %v1314 = vld [vmem:[%s1300 + $0x98] sm:$0xff]
        %v1315 = vld [vmem:[%s1300 + $0xa8] sm:$0xff]
        %v1316 = vld [vmem:[%s1300 + $0xb0] sm:$0xff]
        %v1317 = vld [vmem:[%s1300 + $0xc0] sm:$0xff]
        %v1318 = vld [vmem:[%s1300 + $0xc8] sm:$0xff]
        %v1319 = vld [vmem:[%s1300 + $0xd8] sm:$0xff]
        %v1320 = vld [vmem:[%s1300 + $0xe0] sm:$0xff]
        %v1321 = vld [vmem:[%s1300 + $0xf0] sm:$0xff]
        %v1322 = vld [vmem:[%s1300 + $0xf8] sm:$0xff]
        %v1323 = vld [vmem:[%s1300 + $0x108] sm:$0xff]
        %v1324 = vld [vmem:[%s1300 + $0x110] sm:$0xff]
        %v1325 = vld [vmem:[%s1300 + $0x120] sm:$0xff]
        %v1326 = vld [vmem:[%s1300 + $0x128] sm:$0xff]
        %v1327 = vld [vmem:[%s1300 + $0x138] sm:$0xff]
        %v1328 = vld [vmem:[%s1300 + $0x140] sm:$0xff]
        %v1329 = vld [vmem:[%s1300 + $0x150] sm:$0xff]
        %v1330 = vld [vmem:[%s1300 + $0x158] sm:$0xff]
        %v1331 = vld [vmem:[%s1300 + $0x168] sm:$0xff]
        %v1332 = vld [vmem:[%s1300 + $0x170] sm:$0xff]
        %v1333 = vpack.c.bf16 %v1301, %v1301
        %v1334 = vpack.c.bf16 %v1302, %v1302
        %v1335 = vpack.c.bf16 %v1303, %v1303
        %v1336 = vpack.c.bf16 %v1304, %v1304
        %v1337 = vpack.c.bf16 %v1305, %v1305
        %v1338 = vpack.c.bf16 %v1306, %v1306
        %v1339 = vpack.c.bf16 %v1307, %v1307
        %v1340 = vpack.c.bf16 %v1308, %v1308
        %v1341 = vpack.c.bf16 %v1309, %v1309
        %v1342 = vpack.c.bf16 %v1310, %v1310
        %v1343 = vpack.c.bf16 %v1311, %v1311
        %v1344 = vpack.c.bf16 %v1312, %v1312
        %v1345 = vpack.c.bf16 %v1313, %v1313
        %v1346 = vpack.c.bf16 %v1314, %v1314
        %v1347 = vpack.c.bf16 %v1315, %v1315
        %v1348 = vpack.c.bf16 %v1316, %v1316
        %v1349 = vpack.c.bf16 %v1317, %v1317
        %v1350 = vpack.c.bf16 %v1318, %v1318
        %v1351 = vpack.c.bf16 %v1319, %v1319
        %v1352 = vpack.c.bf16 %v1320, %v1320
        %v1353 = vpack.c.bf16 %v1321, %v1321
        %v1354 = vpack.c.bf16 %v1322, %v1322
        %v1355 = vpack.c.bf16 %v1323, %v1323
        %v1356 = vpack.c.bf16 %v1324, %v1324
        %v1357 = vpack.c.bf16 %v1325, %v1325
        %v1358 = vpack.c.bf16 %v1326, %v1326
        %v1359 = vpack.c.bf16 %v1327, %v1327
        %v1360 = vpack.c.bf16 %v1328, %v1328
        %v1361 = vpack.c.bf16 %v1329, %v1329
        %v1362 = vpack.c.bf16 %v1330, %v1330
        %v1363 = vpack.c.bf16 %v1331, %v1331
        %v1364 = vpack.c.bf16 %v1332, %v1332
        %1365 = vst.msk [vmem:[#allocation3 + $0xc] sm:$0xf] %vm402, %v1333
        %1366 = vst.msk [vmem:[#allocation3 + $0x20] sm:$0xf] %vm402, %v1334
        %1367 = vst.msk [vmem:[#allocation3 + $0x34] sm:$0xf] %vm402, %v1335
        %1368 = vst.msk [vmem:[#allocation3 + $0x48] sm:$0xf] %vm402, %v1336
        %1369 = vst.msk [vmem:[#allocation3 + $0x5c] sm:$0xf] %vm402, %v1337
        %1370 = vst.msk [vmem:[#allocation3 + $0x70] sm:$0xf] %vm402, %v1338
        %1371 = vst.msk [vmem:[#allocation3 + $0x84] sm:$0xf] %vm402, %v1339
        %1372 = vst.msk [vmem:[#allocation3 + $0x98] sm:$0xf] %vm402, %v1340
        %1373 = vst.msk [vmem:[#allocation3 + $0xac] sm:$0xf] %vm402, %v1341
        %1374 = vst.msk [vmem:[#allocation3 + $0xc0] sm:$0xf] %vm402, %v1342
        %1375 = vst.msk [vmem:[#allocation3 + $0xd4] sm:$0xf] %vm402, %v1343
        %1376 = vst.msk [vmem:[#allocation3 + $0xe8] sm:$0xf] %vm402, %v1344
        %1377 = vst.msk [vmem:[#allocation3 + $0xfc] sm:$0xf] %vm402, %v1345
        %1378 = vst.msk [vmem:[#allocation3 + $0x110] sm:$0xf] %vm402, %v1346
        %1379 = vst.msk [vmem:[#allocation3 + $0x124] sm:$0xf] %vm402, %v1347
        %1380 = vst.msk [vmem:[#allocation3 + $0x138] sm:$0xf] %vm402, %v1348
        %1381 = vst.msk [vmem:[#allocation3 + $0x14c] sm:$0xf] %vm402, %v1349
        %1382 = vst.msk [vmem:[#allocation3 + $0x160] sm:$0xf] %vm402, %v1350
        %1383 = vst.msk [vmem:[#allocation3 + $0x174] sm:$0xf] %vm402, %v1351
        %1384 = vst.msk [vmem:[#allocation3 + $0x188] sm:$0xf] %vm402, %v1352
        %1385 = vst.msk [vmem:[#allocation3 + $0x19c] sm:$0xf] %vm402, %v1353
        %1386 = vst.msk [vmem:[#allocation3 + $0x1b0] sm:$0xf] %vm402, %v1354
        %1387 = vst.msk [vmem:[#allocation3 + $0x1c4] sm:$0xf] %vm402, %v1355
        %1388 = vst.msk [vmem:[#allocation3 + $0x1d8] sm:$0xf] %vm402, %v1356
        %1389 = vst.msk [vmem:[#allocation3 + $0x1ec] sm:$0xf] %vm402, %v1357
        %1390 = vst.msk [vmem:[#allocation3 + $0x200] sm:$0xf] %vm402, %v1358
        %1391 = vst.msk [vmem:[#allocation3 + $0x214] sm:$0xf] %vm402, %v1359
        %1392 = vst.msk [vmem:[#allocation3 + $0x228] sm:$0xf] %vm402, %v1360
        %1393 = vst.msk [vmem:[#allocation3 + $0x23c] sm:$0xf] %vm402, %v1361
        %1394 = vst.msk [vmem:[#allocation3 + $0x250] sm:$0xf] %vm402, %v1362
        %1395 = vst.msk [vmem:[#allocation3 + $0x264] sm:$0xf] %vm402, %v1363
        %1396 = vst.msk [vmem:[#allocation3 + $0x278] sm:$0xf] %vm402, %v1364
        %v1397 = vld [vmem:[%s1300 + $0x1] sm:$0xff]
        %v1398 = vld [vmem:[%s1300 + $0x9] sm:$0xff]
        %v1399 = vld [vmem:[%s1300 + $0x19] sm:$0xff]
        %v1400 = vld [vmem:[%s1300 + $0x21] sm:$0xff]
        %v1401 = vld [vmem:[%s1300 + $0x31] sm:$0xff]
        %v1402 = vld [vmem:[%s1300 + $0x39] sm:$0xff]
        %v1403 = vld [vmem:[%s1300 + $0x49] sm:$0xff]
        %v1404 = vld [vmem:[%s1300 + $0x51] sm:$0xff]
        %v1405 = vld [vmem:[%s1300 + $0x61] sm:$0xff]
        %v1406 = vld [vmem:[%s1300 + $0x69] sm:$0xff]
        %v1407 = vld [vmem:[%s1300 + $0x79] sm:$0xff]
        %v1408 = vld [vmem:[%s1300 + $0x81] sm:$0xff]
        %v1409 = vld [vmem:[%s1300 + $0x91] sm:$0xff]
        %v1410 = vld [vmem:[%s1300 + $0x99] sm:$0xff]
        %v1411 = vld [vmem:[%s1300 + $0xa9] sm:$0xff]
        %v1412 = vld [vmem:[%s1300 + $0xb1] sm:$0xff]
        %v1413 = vld [vmem:[%s1300 + $0xc1] sm:$0xff]
        %v1414 = vld [vmem:[%s1300 + $0xc9] sm:$0xff]
        %v1415 = vld [vmem:[%s1300 + $0xd9] sm:$0xff]
        %v1416 = vld [vmem:[%s1300 + $0xe1] sm:$0xff]
        %v1417 = vld [vmem:[%s1300 + $0xf1] sm:$0xff]
        %v1418 = vld [vmem:[%s1300 + $0xf9] sm:$0xff]
        %v1419 = vld [vmem:[%s1300 + $0x109] sm:$0xff]
        %v1420 = vld [vmem:[%s1300 + $0x111] sm:$0xff]
        %v1421 = vld [vmem:[%s1300 + $0x121] sm:$0xff]
        %v1422 = vld [vmem:[%s1300 + $0x129] sm:$0xff]
        %v1423 = vld [vmem:[%s1300 + $0x139] sm:$0xff]
        %v1424 = vld [vmem:[%s1300 + $0x141] sm:$0xff]
        %v1425 = vld [vmem:[%s1300 + $0x151] sm:$0xff]
        %v1426 = vld [vmem:[%s1300 + $0x159] sm:$0xff]
        %v1427 = vld [vmem:[%s1300 + $0x169] sm:$0xff]
        %v1428 = vld [vmem:[%s1300 + $0x171] sm:$0xff]
        %v1429 = vpack.c.bf16 %v1397, %v1397
        %v1430 = vpack.c.bf16 %v1398, %v1398
        %v1431 = vpack.c.bf16 %v1399, %v1399
        %v1432 = vpack.c.bf16 %v1400, %v1400
        %v1433 = vpack.c.bf16 %v1401, %v1401
        %v1434 = vpack.c.bf16 %v1402, %v1402
        %v1435 = vpack.c.bf16 %v1403, %v1403
        %v1436 = vpack.c.bf16 %v1404, %v1404
        %v1437 = vpack.c.bf16 %v1405, %v1405
        %v1438 = vpack.c.bf16 %v1406, %v1406
        %v1439 = vpack.c.bf16 %v1407, %v1407
        %v1440 = vpack.c.bf16 %v1408, %v1408
        %v1441 = vpack.c.bf16 %v1409, %v1409
        %v1442 = vpack.c.bf16 %v1410, %v1410
        %v1443 = vpack.c.bf16 %v1411, %v1411
        %v1444 = vpack.c.bf16 %v1412, %v1412
        %v1445 = vpack.c.bf16 %v1413, %v1413
        %v1446 = vpack.c.bf16 %v1414, %v1414
        %v1447 = vpack.c.bf16 %v1415, %v1415
        %v1448 = vpack.c.bf16 %v1416, %v1416
        %v1449 = vpack.c.bf16 %v1417, %v1417
        %v1450 = vpack.c.bf16 %v1418, %v1418
        %v1451 = vpack.c.bf16 %v1419, %v1419
        %v1452 = vpack.c.bf16 %v1420, %v1420
        %v1453 = vpack.c.bf16 %v1421, %v1421
        %v1454 = vpack.c.bf16 %v1422, %v1422
        %v1455 = vpack.c.bf16 %v1423, %v1423
        %v1456 = vpack.c.bf16 %v1424, %v1424
        %v1457 = vpack.c.bf16 %v1425, %v1425
        %v1458 = vpack.c.bf16 %v1426, %v1426
        %v1459 = vpack.c.bf16 %v1427, %v1427
        %v1460 = vpack.c.bf16 %v1428, %v1428
        %1493 = vrot.lane.b32.xlu0 %v1429, 64
        %v1494 = vpop.permute.xlu0 %1493
        %1495 = vrot.lane.b32.xlu0 %v1430, 64
        %v1496 = vpop.permute.xlu0 %1495
        %1497 = vrot.lane.b32.xlu0 %v1431, 64
        %v1498 = vpop.permute.xlu0 %1497
        %1499 = vrot.lane.b32.xlu0 %v1432, 64
        %v1500 = vpop.permute.xlu0 %1499
        %1501 = vrot.lane.b32.xlu0 %v1433, 64
        %v1502 = vpop.permute.xlu0 %1501
        %1503 = vrot.lane.b32.xlu0 %v1434, 64
        %v1504 = vpop.permute.xlu0 %1503
        %1505 = vrot.lane.b32.xlu0 %v1435, 64
        %v1506 = vpop.permute.xlu0 %1505
        %1507 = vrot.lane.b32.xlu0 %v1436, 64
        %v1508 = vpop.permute.xlu0 %1507
        %1509 = vrot.lane.b32.xlu0 %v1437, 64
        %v1510 = vpop.permute.xlu0 %1509
        %1511 = vrot.lane.b32.xlu0 %v1438, 64
        %v1512 = vpop.permute.xlu0 %1511
        %1513 = vrot.lane.b32.xlu0 %v1439, 64
        %v1514 = vpop.permute.xlu0 %1513
        %1515 = vrot.lane.b32.xlu0 %v1440, 64
        %v1516 = vpop.permute.xlu0 %1515
        %1517 = vrot.lane.b32.xlu0 %v1441, 64
        %v1518 = vpop.permute.xlu0 %1517
        %1519 = vrot.lane.b32.xlu0 %v1442, 64
        %v1520 = vpop.permute.xlu0 %1519
        %1521 = vrot.lane.b32.xlu0 %v1443, 64
        %v1522 = vpop.permute.xlu0 %1521
        %1523 = vrot.lane.b32.xlu0 %v1444, 64
        %v1524 = vpop.permute.xlu0 %1523
        %1525 = vrot.lane.b32.xlu0 %v1445, 64
        %v1526 = vpop.permute.xlu0 %1525
        %1527 = vrot.lane.b32.xlu0 %v1446, 64
        %v1528 = vpop.permute.xlu0 %1527
        %1529 = vrot.lane.b32.xlu0 %v1447, 64
        %v1530 = vpop.permute.xlu0 %1529
        %1531 = vrot.lane.b32.xlu0 %v1448, 64
        %v1532 = vpop.permute.xlu0 %1531
        %1533 = vrot.lane.b32.xlu0 %v1449, 64
        %v1534 = vpop.permute.xlu0 %1533
        %1535 = vrot.lane.b32.xlu0 %v1450, 64
        %v1536 = vpop.permute.xlu0 %1535
        %1537 = vrot.lane.b32.xlu0 %v1451, 64
        %v1538 = vpop.permute.xlu0 %1537
        %1539 = vrot.lane.b32.xlu0 %v1452, 64
        %v1540 = vpop.permute.xlu0 %1539
        %1541 = vrot.lane.b32.xlu0 %v1453, 64
        %v1542 = vpop.permute.xlu0 %1541
        %1543 = vrot.lane.b32.xlu0 %v1454, 64
        %v1544 = vpop.permute.xlu0 %1543
        %1545 = vrot.lane.b32.xlu0 %v1455, 64
        %v1546 = vpop.permute.xlu0 %1545
        %1547 = vrot.lane.b32.xlu0 %v1456, 64
        %v1548 = vpop.permute.xlu0 %1547
        %1549 = vrot.lane.b32.xlu0 %v1457, 64
        %v1550 = vpop.permute.xlu0 %1549
        %1551 = vrot.lane.b32.xlu0 %v1458, 64
        %v1552 = vpop.permute.xlu0 %1551
        %1553 = vrot.lane.b32.xlu0 %v1459, 64
        %v1554 = vpop.permute.xlu0 %1553
        %1555 = vrot.lane.b32.xlu0 %v1460, 64
        %v1556 = vpop.permute.xlu0 %1555
        %1589 = vst.msk [vmem:[#allocation3 + $0xc] sm:$0xf] %vm627, %v1494
        %1590 = vst.msk [vmem:[#allocation3 + $0x20] sm:$0xf] %vm627, %v1496
        %1591 = vst.msk [vmem:[#allocation3 + $0x34] sm:$0xf] %vm627, %v1498
        %1592 = vst.msk [vmem:[#allocation3 + $0x48] sm:$0xf] %vm627, %v1500
        %1593 = vst.msk [vmem:[#allocation3 + $0x5c] sm:$0xf] %vm627, %v1502
        %1594 = vst.msk [vmem:[#allocation3 + $0x70] sm:$0xf] %vm627, %v1504
        %1595 = vst.msk [vmem:[#allocation3 + $0x84] sm:$0xf] %vm627, %v1506
        %1596 = vst.msk [vmem:[#allocation3 + $0x98] sm:$0xf] %vm627, %v1508
        %1597 = vst.msk [vmem:[#allocation3 + $0xac] sm:$0xf] %vm627, %v1510
        %1598 = vst.msk [vmem:[#allocation3 + $0xc0] sm:$0xf] %vm627, %v1512
        %1599 = vst.msk [vmem:[#allocation3 + $0xd4] sm:$0xf] %vm627, %v1514
        %1600 = vst.msk [vmem:[#allocation3 + $0xe8] sm:$0xf] %vm627, %v1516
        %1601 = vst.msk [vmem:[#allocation3 + $0xfc] sm:$0xf] %vm627, %v1518
        %1602 = vst.msk [vmem:[#allocation3 + $0x110] sm:$0xf] %vm627, %v1520
        %1603 = vst.msk [vmem:[#allocation3 + $0x124] sm:$0xf] %vm627, %v1522
        %1604 = vst.msk [vmem:[#allocation3 + $0x138] sm:$0xf] %vm627, %v1524
        %1605 = vst.msk [vmem:[#allocation3 + $0x14c] sm:$0xf] %vm627, %v1526
        %1606 = vst.msk [vmem:[#allocation3 + $0x160] sm:$0xf] %vm627, %v1528
        %1607 = vst.msk [vmem:[#allocation3 + $0x174] sm:$0xf] %vm627, %v1530
        %1608 = vst.msk [vmem:[#allocation3 + $0x188] sm:$0xf] %vm627, %v1532
        %1609 = vst.msk [vmem:[#allocation3 + $0x19c] sm:$0xf] %vm627, %v1534
        %1610 = vst.msk [vmem:[#allocation3 + $0x1b0] sm:$0xf] %vm627, %v1536
        %1611 = vst.msk [vmem:[#allocation3 + $0x1c4] sm:$0xf] %vm627, %v1538
        %1612 = vst.msk [vmem:[#allocation3 + $0x1d8] sm:$0xf] %vm627, %v1540
        %1613 = vst.msk [vmem:[#allocation3 + $0x1ec] sm:$0xf] %vm627, %v1542
        %1614 = vst.msk [vmem:[#allocation3 + $0x200] sm:$0xf] %vm627, %v1544
        %1615 = vst.msk [vmem:[#allocation3 + $0x214] sm:$0xf] %vm627, %v1546
        %1616 = vst.msk [vmem:[#allocation3 + $0x228] sm:$0xf] %vm627, %v1548
        %1617 = vst.msk [vmem:[#allocation3 + $0x23c] sm:$0xf] %vm627, %v1550
        %1618 = vst.msk [vmem:[#allocation3 + $0x250] sm:$0xf] %vm627, %v1552
        %1619 = vst.msk [vmem:[#allocation3 + $0x264] sm:$0xf] %vm627, %v1554
        %1620 = vst.msk [vmem:[#allocation3 + $0x278] sm:$0xf] %vm627, %v1556
        %v1621 = vld [vmem:[%s1300 + $0x2] sm:$0xff]
        %v1622 = vld [vmem:[%s1300 + $0xa] sm:$0xff]
        %v1623 = vld [vmem:[%s1300 + $0x1a] sm:$0xff]
        %v1624 = vld [vmem:[%s1300 + $0x22] sm:$0xff]
        %v1625 = vld [vmem:[%s1300 + $0x32] sm:$0xff]
        %v1626 = vld [vmem:[%s1300 + $0x3a] sm:$0xff]
        %v1627 = vld [vmem:[%s1300 + $0x4a] sm:$0xff]
        %v1628 = vld [vmem:[%s1300 + $0x52] sm:$0xff]
        %v1629 = vld [vmem:[%s1300 + $0x62] sm:$0xff]
        %v1630 = vld [vmem:[%s1300 + $0x6a] sm:$0xff]
        %v1631 = vld [vmem:[%s1300 + $0x7a] sm:$0xff]
        %v1632 = vld [vmem:[%s1300 + $0x82] sm:$0xff]
        %v1633 = vld [vmem:[%s1300 + $0x92] sm:$0xff]
        %v1634 = vld [vmem:[%s1300 + $0x9a] sm:$0xff]
        %v1635 = vld [vmem:[%s1300 + $0xaa] sm:$0xff]
        %v1636 = vld [vmem:[%s1300 + $0xb2] sm:$0xff]
        %v1637 = vld [vmem:[%s1300 + $0xc2] sm:$0xff]
        %v1638 = vld [vmem:[%s1300 + $0xca] sm:$0xff]
        %v1639 = vld [vmem:[%s1300 + $0xda] sm:$0xff]
        %v1640 = vld [vmem:[%s1300 + $0xe2] sm:$0xff]
        %v1641 = vld [vmem:[%s1300 + $0xf2] sm:$0xff]
        %v1642 = vld [vmem:[%s1300 + $0xfa] sm:$0xff]
        %v1643 = vld [vmem:[%s1300 + $0x10a] sm:$0xff]
        %v1644 = vld [vmem:[%s1300 + $0x112] sm:$0xff]
        %v1645 = vld [vmem:[%s1300 + $0x122] sm:$0xff]
        %v1646 = vld [vmem:[%s1300 + $0x12a] sm:$0xff]
        %v1647 = vld [vmem:[%s1300 + $0x13a] sm:$0xff]
        %v1648 = vld [vmem:[%s1300 + $0x142] sm:$0xff]
        %v1649 = vld [vmem:[%s1300 + $0x152] sm:$0xff]
        %v1650 = vld [vmem:[%s1300 + $0x15a] sm:$0xff]
        %v1651 = vld [vmem:[%s1300 + $0x16a] sm:$0xff]
        %v1652 = vld [vmem:[%s1300 + $0x172] sm:$0xff]
        %v1653 = vpack.c.bf16 %v1621, %v1621
        %v1654 = vpack.c.bf16 %v1622, %v1622
        %v1655 = vpack.c.bf16 %v1623, %v1623
        %v1656 = vpack.c.bf16 %v1624, %v1624
        %v1657 = vpack.c.bf16 %v1625, %v1625
        %v1658 = vpack.c.bf16 %v1626, %v1626
        %v1659 = vpack.c.bf16 %v1627, %v1627
        %v1660 = vpack.c.bf16 %v1628, %v1628
        %v1661 = vpack.c.bf16 %v1629, %v1629
        %v1662 = vpack.c.bf16 %v1630, %v1630
        %v1663 = vpack.c.bf16 %v1631, %v1631
        %v1664 = vpack.c.bf16 %v1632, %v1632
        %v1665 = vpack.c.bf16 %v1633, %v1633
        %v1666 = vpack.c.bf16 %v1634, %v1634
        %v1667 = vpack.c.bf16 %v1635, %v1635
        %v1668 = vpack.c.bf16 %v1636, %v1636
        %v1669 = vpack.c.bf16 %v1637, %v1637
        %v1670 = vpack.c.bf16 %v1638, %v1638
        %v1671 = vpack.c.bf16 %v1639, %v1639
        %v1672 = vpack.c.bf16 %v1640, %v1640
        %v1673 = vpack.c.bf16 %v1641, %v1641
        %v1674 = vpack.c.bf16 %v1642, %v1642
        %v1675 = vpack.c.bf16 %v1643, %v1643
        %v1676 = vpack.c.bf16 %v1644, %v1644
        %v1677 = vpack.c.bf16 %v1645, %v1645
        %v1678 = vpack.c.bf16 %v1646, %v1646
        %v1679 = vpack.c.bf16 %v1647, %v1647
        %v1680 = vpack.c.bf16 %v1648, %v1648
        %v1681 = vpack.c.bf16 %v1649, %v1649
        %v1682 = vpack.c.bf16 %v1650, %v1650
        %v1683 = vpack.c.bf16 %v1651, %v1651
        %v1684 = vpack.c.bf16 %v1652, %v1652
        %1685 = vst.msk [vmem:[#allocation3 + $0x10] sm:$0xf] %vm402, %v1653
        %1686 = vst.msk [vmem:[#allocation3 + $0x24] sm:$0xf] %vm402, %v1654
        %1687 = vst.msk [vmem:[#allocation3 + $0x38] sm:$0xf] %vm402, %v1655
        %1688 = vst.msk [vmem:[#allocation3 + $0x4c] sm:$0xf] %vm402, %v1656
        %1689 = vst.msk [vmem:[#allocation3 + $0x60] sm:$0xf] %vm402, %v1657
        %1690 = vst.msk [vmem:[#allocation3 + $0x74] sm:$0xf] %vm402, %v1658
        %1691 = vst.msk [vmem:[#allocation3 + $0x88] sm:$0xf] %vm402, %v1659
        %1692 = vst.msk [vmem:[#allocation3 + $0x9c] sm:$0xf] %vm402, %v1660
        %1693 = vst.msk [vmem:[#allocation3 + $0xb0] sm:$0xf] %vm402, %v1661
        %1694 = vst.msk [vmem:[#allocation3 + $0xc4] sm:$0xf] %vm402, %v1662
        %1695 = vst.msk [vmem:[#allocation3 + $0xd8] sm:$0xf] %vm402, %v1663
        %1696 = vst.msk [vmem:[#allocation3 + $0xec] sm:$0xf] %vm402, %v1664
        %1697 = vst.msk [vmem:[#allocation3 + $0x100] sm:$0xf] %vm402, %v1665
        %1698 = vst.msk [vmem:[#allocation3 + $0x114] sm:$0xf] %vm402, %v1666
        %1699 = vst.msk [vmem:[#allocation3 + $0x128] sm:$0xf] %vm402, %v1667
        %1700 = vst.msk [vmem:[#allocation3 + $0x13c] sm:$0xf] %vm402, %v1668
        %1701 = vst.msk [vmem:[#allocation3 + $0x150] sm:$0xf] %vm402, %v1669
        %1702 = vst.msk [vmem:[#allocation3 + $0x164] sm:$0xf] %vm402, %v1670
        %1703 = vst.msk [vmem:[#allocation3 + $0x178] sm:$0xf] %vm402, %v1671
        %1704 = vst.msk [vmem:[#allocation3 + $0x18c] sm:$0xf] %vm402, %v1672
        %1705 = vst.msk [vmem:[#allocation3 + $0x1a0] sm:$0xf] %vm402, %v1673
        %1706 = vst.msk [vmem:[#allocation3 + $0x1b4] sm:$0xf] %vm402, %v1674
        %1707 = vst.msk [vmem:[#allocation3 + $0x1c8] sm:$0xf] %vm402, %v1675
        %1708 = vst.msk [vmem:[#allocation3 + $0x1dc] sm:$0xf] %vm402, %v1676
        %1709 = vst.msk [vmem:[#allocation3 + $0x1f0] sm:$0xf] %vm402, %v1677
        %1710 = vst.msk [vmem:[#allocation3 + $0x204] sm:$0xf] %vm402, %v1678
        %1711 = vst.msk [vmem:[#allocation3 + $0x218] sm:$0xf] %vm402, %v1679
        %1712 = vst.msk [vmem:[#allocation3 + $0x22c] sm:$0xf] %vm402, %v1680
        %1713 = vst.msk [vmem:[#allocation3 + $0x240] sm:$0xf] %vm402, %v1681
        %1714 = vst.msk [vmem:[#allocation3 + $0x254] sm:$0xf] %vm402, %v1682
        %1715 = vst.msk [vmem:[#allocation3 + $0x268] sm:$0xf] %vm402, %v1683
        %1716 = vst.msk [vmem:[#allocation3 + $0x27c] sm:$0xf] %vm402, %v1684
        %v1717 = vld [vmem:[#allocation3] sm:$0xff]
        %v1718 = vld [vmem:[#allocation3 + $0x8] sm:$0xff]
        %v1719 = vld [vmem:[#allocation3 + $0x10] sm:$0xf]
        %v1720 = vld [vmem:[#allocation3 + $0x14] sm:$0xff]
        %v1721 = vld [vmem:[#allocation3 + $0x1c] sm:$0xff]
        %v1722 = vld [vmem:[#allocation3 + $0x24] sm:$0xf]
        %v1723 = vld [vmem:[#allocation3 + $0x28] sm:$0xff]
        %v1724 = vld [vmem:[#allocation3 + $0x30] sm:$0xff]
        %v1725 = vld [vmem:[#allocation3 + $0x38] sm:$0xf]
        %v1726 = vld [vmem:[#allocation3 + $0x3c] sm:$0xff]
        %v1727 = vld [vmem:[#allocation3 + $0x44] sm:$0xff]
        %v1728 = vld [vmem:[#allocation3 + $0x4c] sm:$0xf]
        %v1729 = vld [vmem:[#allocation3 + $0x50] sm:$0xff]
        %v1730 = vld [vmem:[#allocation3 + $0x58] sm:$0xff]
        %v1731 = vld [vmem:[#allocation3 + $0x60] sm:$0xf]
        %v1732 = vld [vmem:[#allocation3 + $0x64] sm:$0xff]
        %v1733 = vld [vmem:[#allocation3 + $0x6c] sm:$0xff]
        %v1734 = vld [vmem:[#allocation3 + $0x74] sm:$0xf]
        %v1735 = vld [vmem:[#allocation3 + $0x78] sm:$0xff]
        %v1736 = vld [vmem:[#allocation3 + $0x80] sm:$0xff]
        %v1737 = vld [vmem:[#allocation3 + $0x88] sm:$0xf]
        %v1738 = vld [vmem:[#allocation3 + $0x8c] sm:$0xff]
        %v1739 = vld [vmem:[#allocation3 + $0x94] sm:$0xff]
        %v1740 = vld [vmem:[#allocation3 + $0x9c] sm:$0xf]
        %v1741 = vld [vmem:[#allocation3 + $0xa0] sm:$0xff]
        %v1742 = vld [vmem:[#allocation3 + $0xa8] sm:$0xff]
        %v1743 = vld [vmem:[#allocation3 + $0xb0] sm:$0xf]
        %v1744 = vld [vmem:[#allocation3 + $0xb4] sm:$0xff]
        %v1745 = vld [vmem:[#allocation3 + $0xbc] sm:$0xff]
        %v1746 = vld [vmem:[#allocation3 + $0xc4] sm:$0xf]
        %v1747 = vld [vmem:[#allocation3 + $0xc8] sm:$0xff]
        %v1748 = vld [vmem:[#allocation3 + $0xd0] sm:$0xff]
        %v1749 = vld [vmem:[#allocation3 + $0xd8] sm:$0xf]
        %v1750 = vld [vmem:[#allocation3 + $0xdc] sm:$0xff]
        %v1751 = vld [vmem:[#allocation3 + $0xe4] sm:$0xff]
        %v1752 = vld [vmem:[#allocation3 + $0xec] sm:$0xf]
        %v1753 = vld [vmem:[#allocation3 + $0xf0] sm:$0xff]
        %v1754 = vld [vmem:[#allocation3 + $0xf8] sm:$0xff]
        %v1755 = vld [vmem:[#allocation3 + $0x100] sm:$0xf]
        %v1756 = vld [vmem:[#allocation3 + $0x104] sm:$0xff]
        %v1757 = vld [vmem:[#allocation3 + $0x10c] sm:$0xff]
        %v1758 = vld [vmem:[#allocation3 + $0x114] sm:$0xf]
        %v1759 = vld [vmem:[#allocation3 + $0x118] sm:$0xff]
        %v1760 = vld [vmem:[#allocation3 + $0x120] sm:$0xff]
        %v1761 = vld [vmem:[#allocation3 + $0x128] sm:$0xf]
        %v1762 = vld [vmem:[#allocation3 + $0x12c] sm:$0xff]
        %v1763 = vld [vmem:[#allocation3 + $0x134] sm:$0xff]
        %v1764 = vld [vmem:[#allocation3 + $0x13c] sm:$0xf]
        %v1765 = vld [vmem:[#allocation3 + $0x140] sm:$0xff]
        %v1766 = vld [vmem:[#allocation3 + $0x148] sm:$0xff]
        %v1767 = vld [vmem:[#allocation3 + $0x150] sm:$0xf]
        %v1768 = vld [vmem:[#allocation3 + $0x154] sm:$0xff]
        %v1769 = vld [vmem:[#allocation3 + $0x15c] sm:$0xff]
        %v1770 = vld [vmem:[#allocation3 + $0x164] sm:$0xf]
        %v1771 = vld [vmem:[#allocation3 + $0x168] sm:$0xff]
        %v1772 = vld [vmem:[#allocation3 + $0x170] sm:$0xff]
        %v1773 = vld [vmem:[#allocation3 + $0x178] sm:$0xf]
        %v1774 = vld [vmem:[#allocation3 + $0x17c] sm:$0xff]
        %v1775 = vld [vmem:[#allocation3 + $0x184] sm:$0xff]
        %v1776 = vld [vmem:[#allocation3 + $0x18c] sm:$0xf]
        %v1777 = vld [vmem:[#allocation3 + $0x190] sm:$0xff]
        %v1778 = vld [vmem:[#allocation3 + $0x198] sm:$0xff]
        %v1779 = vld [vmem:[#allocation3 + $0x1a0] sm:$0xf]
        %v1780 = vld [vmem:[#allocation3 + $0x1a4] sm:$0xff]
        %v1781 = vld [vmem:[#allocation3 + $0x1ac] sm:$0xff]
        %v1782 = vld [vmem:[#allocation3 + $0x1b4] sm:$0xf]
        %v1783 = vld [vmem:[#allocation3 + $0x1b8] sm:$0xff]
        %v1784 = vld [vmem:[#allocation3 + $0x1c0] sm:$0xff]
        %v1785 = vld [vmem:[#allocation3 + $0x1c8] sm:$0xf]
        %v1786 = vld [vmem:[#allocation3 + $0x1cc] sm:$0xff]
        %v1787 = vld [vmem:[#allocation3 + $0x1d4] sm:$0xff]
        %v1788 = vld [vmem:[#allocation3 + $0x1dc] sm:$0xf]
        %v1789 = vld [vmem:[#allocation3 + $0x1e0] sm:$0xff]
        %v1790 = vld [vmem:[#allocation3 + $0x1e8] sm:$0xff]
        %v1791 = vld [vmem:[#allocation3 + $0x1f0] sm:$0xf]
        %v1792 = vld [vmem:[#allocation3 + $0x1f4] sm:$0xff]
        %v1793 = vld [vmem:[#allocation3 + $0x1fc] sm:$0xff]
        %v1794 = vld [vmem:[#allocation3 + $0x204] sm:$0xf]
        %v1795 = vld [vmem:[#allocation3 + $0x208] sm:$0xff]
        %v1796 = vld [vmem:[#allocation3 + $0x210] sm:$0xff]
        %v1797 = vld [vmem:[#allocation3 + $0x218] sm:$0xf]
        %v1798 = vld [vmem:[#allocation3 + $0x21c] sm:$0xff]
        %v1799 = vld [vmem:[#allocation3 + $0x224] sm:$0xff]
        %v1800 = vld [vmem:[#allocation3 + $0x22c] sm:$0xf]
        %v1801 = vld [vmem:[#allocation3 + $0x230] sm:$0xff]
        %v1802 = vld [vmem:[#allocation3 + $0x238] sm:$0xff]
        %v1803 = vld [vmem:[#allocation3 + $0x240] sm:$0xf]
        %v1804 = vld [vmem:[#allocation3 + $0x244] sm:$0xff]
        %v1805 = vld [vmem:[#allocation3 + $0x24c] sm:$0xff]
        %v1806 = vld [vmem:[#allocation3 + $0x254] sm:$0xf]
        %v1807 = vld [vmem:[#allocation3 + $0x258] sm:$0xff]
        %v1808 = vld [vmem:[#allocation3 + $0x260] sm:$0xff]
        %v1809 = vld [vmem:[#allocation3 + $0x268] sm:$0xf]
        %v1810 = vld [vmem:[#allocation3 + $0x26c] sm:$0xff]
        %v1811 = vld [vmem:[#allocation3 + $0x274] sm:$0xff]
        %v1812 = vld [vmem:[#allocation3 + $0x27c] sm:$0xf]
        %v1813 = vld [vmem:[%s2] sm:$0xf]
        %v1814 = vld [vmem:[%s2 + $0x4] sm:$0xf]
        %v1815 = vld [vmem:[%s2 + $0x8] sm:$0xf]
        %v1816 = vld [vmem:[%s2 + $0xc] sm:$0xf]
        %v1817 = vld [vmem:[%s2 + $0x10] sm:$0xf]
        %v1818 = vld [vmem:[%s2 + $0x14] sm:$0xf]
        %v1819 = vld [vmem:[%s2 + $0x18] sm:$0xf]
        %v1820 = vld [vmem:[%s2 + $0x1c] sm:$0xf]
        %v1821 = vld [vmem:[%s2 + $0x20] sm:$0xf]
        %v1822 = vld [vmem:[%s2 + $0x24] sm:$0xf]
        %v1823 = vld [vmem:[%s2 + $0x28] sm:$0xf]
        %v1824 = vld [vmem:[%s2 + $0x2c] sm:$0xf]
        %v1825 = vld [vmem:[%s2 + $0x30] sm:$0xf]
        %v1826 = vld [vmem:[%s2 + $0x34] sm:$0xf]
        %v1827 = vld [vmem:[%s2 + $0x38] sm:$0xf]
        %v1828 = vld [vmem:[%s2 + $0x3c] sm:$0xf]
        %v1829 = vld [vmem:[%s2 + $0x40] sm:$0xf]
        %v1830 = vld [vmem:[%s2 + $0x44] sm:$0xf]
        %v1831 = vld [vmem:[%s2 + $0x48] sm:$0xf]
        %v1832 = vld [vmem:[%s2 + $0x4c] sm:$0xf]
        %v1833 = vld [vmem:[%s2 + $0x50] sm:$0xf]
        %v1834 = vld [vmem:[%s2 + $0x54] sm:$0xf]
        %v1835 = vld [vmem:[%s2 + $0x58] sm:$0xf]
        %v1836 = vld [vmem:[%s2 + $0x5c] sm:$0xf]
        %v1837 = vld [vmem:[%s2 + $0x60] sm:$0xf]
        %v1838 = vld [vmem:[%s2 + $0x64] sm:$0xf]
        %v1839 = vld [vmem:[%s2 + $0x68] sm:$0xf]
        %v1840 = vld [vmem:[%s2 + $0x6c] sm:$0xf]
        %v1841 = vld [vmem:[%s2 + $0x70] sm:$0xf]
        %v1842 = vld [vmem:[%s2 + $0x74] sm:$0xf]
        %v1843 = vld [vmem:[%s2 + $0x78] sm:$0xf]
        %v1844 = vld [vmem:[%s2 + $0x7c] sm:$0xf]
        %v1845 = vld [vmem:[%s2 + $0x80] sm:$0xf]
        %v1846 = vld [vmem:[%s2 + $0x84] sm:$0xf]
        %v1847 = vld [vmem:[%s2 + $0x88] sm:$0xf]
        %v1848 = vld [vmem:[%s2 + $0x8c] sm:$0xf]
        %v1849 = vld [vmem:[%s2 + $0x90] sm:$0xf]
        %v1850 = vld [vmem:[%s2 + $0x94] sm:$0xf]
        %v1851 = vld [vmem:[%s2 + $0x98] sm:$0xf]
        %v1852 = vld [vmem:[%s2 + $0x9c] sm:$0xf]
        %v1853 = vld [vmem:[%s2 + $0xa0] sm:$0xf]
        %v1854 = vld [vmem:[%s2 + $0xa4] sm:$0xf]
        %v1855 = vld [vmem:[%s2 + $0xa8] sm:$0xf]
        %v1856 = vld [vmem:[%s2 + $0xac] sm:$0xf]
        %v1857 = vld [vmem:[%s2 + $0xb0] sm:$0xf]
        %v1858 = vld [vmem:[%s2 + $0xb4] sm:$0xf]
        %v1859 = vld [vmem:[%s2 + $0xb8] sm:$0xf]
        %v1860 = vld [vmem:[%s2 + $0xbc] sm:$0xf]
        %v1861 = vld [vmem:[%s2 + $0xc0] sm:$0xf]
        %v1862 = vld [vmem:[%s2 + $0xc4] sm:$0xf]
        %v1863 = vld [vmem:[%s2 + $0xc8] sm:$0xf]
        %v1864 = vld [vmem:[%s2 + $0xcc] sm:$0xf]
        %v1865 = vld [vmem:[%s2 + $0xd0] sm:$0xf]
        %v1866 = vld [vmem:[%s2 + $0xd4] sm:$0xf]
        %v1867 = vld [vmem:[%s2 + $0xd8] sm:$0xf]
        %v1868 = vld [vmem:[%s2 + $0xdc] sm:$0xf]
        %v1869 = vld [vmem:[%s2 + $0xe0] sm:$0xf]
        %v1870 = vld [vmem:[%s2 + $0xe4] sm:$0xf]
        %v1871 = vld [vmem:[%s2 + $0xe8] sm:$0xf]
        %v1872 = vld [vmem:[%s2 + $0xec] sm:$0xf]
        %v1873 = vld [vmem:[%s2 + $0xf0] sm:$0xf]
        %v1874 = vld [vmem:[%s2 + $0xf4] sm:$0xf]
        %v1875 = vld [vmem:[%s2 + $0xf8] sm:$0xf]
        %v1876 = vld [vmem:[%s2 + $0xfc] sm:$0xf]
        %v1877 = vld [vmem:[%s2 + $0x100] sm:$0xf]
        %v1878 = vld [vmem:[%s2 + $0x104] sm:$0xf]
        %v1879 = vld [vmem:[%s2 + $0x108] sm:$0xf]
        %v1880 = vld [vmem:[%s2 + $0x10c] sm:$0xf]
        %v1881 = vld [vmem:[%s2 + $0x110] sm:$0xf]
        %v1882 = vld [vmem:[%s2 + $0x114] sm:$0xf]
        %v1883 = vld [vmem:[%s2 + $0x118] sm:$0xf]
        %v1884 = vld [vmem:[%s2 + $0x11c] sm:$0xf]
        %v1885 = vld [vmem:[%s3] sm:$0x1]
        %v1887 = vperm.slane %v1885, 0
        %v1985 = vunpack.c.l.b16 %v1717
        %v1986 = vunpack.c.h.b16 %v1717
        %v1987 = vunpack.c.l.b16 %v1718
        %v1988 = vunpack.c.h.b16 %v1718
        %v1989 = vunpack.c.l.b16 %v1719
        %v1990 = vunpack.c.l.b16 %v1720
        %v1991 = vunpack.c.h.b16 %v1720
        %v1992 = vunpack.c.l.b16 %v1721
        %v1993 = vunpack.c.h.b16 %v1721
        %v1994 = vunpack.c.l.b16 %v1722
        %v1995 = vunpack.c.l.b16 %v1723
        %v1996 = vunpack.c.h.b16 %v1723
        %v1997 = vunpack.c.l.b16 %v1724
        %v1998 = vunpack.c.h.b16 %v1724
        %v1999 = vunpack.c.l.b16 %v1725
        %v2000 = vunpack.c.l.b16 %v1726
        %v2001 = vunpack.c.h.b16 %v1726
        %v2002 = vunpack.c.l.b16 %v1727
        %v2003 = vunpack.c.h.b16 %v1727
        %v2004 = vunpack.c.l.b16 %v1728
        %v2005 = vunpack.c.l.b16 %v1729
        %v2006 = vunpack.c.h.b16 %v1729
        %v2007 = vunpack.c.l.b16 %v1730
        %v2008 = vunpack.c.h.b16 %v1730
        %v2009 = vunpack.c.l.b16 %v1731
        %v2010 = vunpack.c.l.b16 %v1732
        %v2011 = vunpack.c.h.b16 %v1732
        %v2012 = vunpack.c.l.b16 %v1733
        %v2013 = vunpack.c.h.b16 %v1733
        %v2014 = vunpack.c.l.b16 %v1734
        %v2015 = vunpack.c.l.b16 %v1735
        %v2016 = vunpack.c.h.b16 %v1735
        %v2017 = vunpack.c.l.b16 %v1736
        %v2018 = vunpack.c.h.b16 %v1736
        %v2019 = vunpack.c.l.b16 %v1737
        %v2020 = vunpack.c.l.b16 %v1738
        %v2021 = vunpack.c.h.b16 %v1738
        %v2022 = vunpack.c.l.b16 %v1739
        %v2023 = vunpack.c.h.b16 %v1739
        %v2024 = vunpack.c.l.b16 %v1740
        %v2025 = vunpack.c.l.b16 %v1741
        %v2026 = vunpack.c.h.b16 %v1741
        %v2027 = vunpack.c.l.b16 %v1742
        %v2028 = vunpack.c.h.b16 %v1742
        %v2029 = vunpack.c.l.b16 %v1743
        %v2030 = vunpack.c.l.b16 %v1744
        %v2031 = vunpack.c.h.b16 %v1744
        %v2032 = vunpack.c.l.b16 %v1745
        %v2033 = vunpack.c.h.b16 %v1745
        %v2034 = vunpack.c.l.b16 %v1746
        %v2035 = vunpack.c.l.b16 %v1747
        %v2036 = vunpack.c.h.b16 %v1747
        %v2037 = vunpack.c.l.b16 %v1748
        %v2038 = vunpack.c.h.b16 %v1748
        %v2039 = vunpack.c.l.b16 %v1749
        %v2040 = vunpack.c.l.b16 %v1750
        %v2041 = vunpack.c.h.b16 %v1750
        %v2042 = vunpack.c.l.b16 %v1751
        %v2043 = vunpack.c.h.b16 %v1751
        %v2044 = vunpack.c.l.b16 %v1752
        %v2045 = vunpack.c.l.b16 %v1753
        %v2046 = vunpack.c.h.b16 %v1753
        %v2047 = vunpack.c.l.b16 %v1754
        %v2048 = vunpack.c.h.b16 %v1754
        %v2049 = vunpack.c.l.b16 %v1755
        %v2050 = vunpack.c.l.b16 %v1756
        %v2051 = vunpack.c.h.b16 %v1756
        %v2052 = vunpack.c.l.b16 %v1757
        %v2053 = vunpack.c.h.b16 %v1757
        %v2054 = vunpack.c.l.b16 %v1758
        %v2055 = vunpack.c.l.b16 %v1759
        %v2056 = vunpack.c.h.b16 %v1759
        %v2057 = vunpack.c.l.b16 %v1760
        %v2058 = vunpack.c.h.b16 %v1760
        %v2059 = vunpack.c.l.b16 %v1761
        %v2060 = vunpack.c.l.b16 %v1762
        %v2061 = vunpack.c.h.b16 %v1762
        %v2062 = vunpack.c.l.b16 %v1763
        %v2063 = vunpack.c.h.b16 %v1763
        %v2064 = vunpack.c.l.b16 %v1764
        %v2065 = vunpack.c.l.b16 %v1765
        %v2066 = vunpack.c.h.b16 %v1765
        %v2067 = vunpack.c.l.b16 %v1766
        %v2068 = vunpack.c.h.b16 %v1766
        %v2069 = vunpack.c.l.b16 %v1767
        %v2070 = vunpack.c.l.b16 %v1768
        %v2071 = vunpack.c.h.b16 %v1768
        %v2072 = vunpack.c.l.b16 %v1769
        %v2073 = vunpack.c.h.b16 %v1769
        %v2074 = vunpack.c.l.b16 %v1770
        %v2075 = vunpack.c.l.b16 %v1771
        %v2076 = vunpack.c.h.b16 %v1771
        %v2077 = vunpack.c.l.b16 %v1772
        %v2078 = vunpack.c.h.b16 %v1772
        %v2079 = vunpack.c.l.b16 %v1773
        %v2080 = vunpack.c.l.b16 %v1774
        %v2081 = vunpack.c.h.b16 %v1774
        %v2082 = vunpack.c.l.b16 %v1775
        %v2083 = vunpack.c.h.b16 %v1775
        %v2084 = vunpack.c.l.b16 %v1776
        %v2085 = vunpack.c.l.b16 %v1777
        %v2086 = vunpack.c.h.b16 %v1777
        %v2087 = vunpack.c.l.b16 %v1778
        %v2088 = vunpack.c.h.b16 %v1778
        %v2089 = vunpack.c.l.b16 %v1779
        %v2090 = vunpack.c.l.b16 %v1780
        %v2091 = vunpack.c.h.b16 %v1780
        %v2092 = vunpack.c.l.b16 %v1781
        %v2093 = vunpack.c.h.b16 %v1781
        %v2094 = vunpack.c.l.b16 %v1782
        %v2095 = vunpack.c.l.b16 %v1783
        %v2096 = vunpack.c.h.b16 %v1783
        %v2097 = vunpack.c.l.b16 %v1784
        %v2098 = vunpack.c.h.b16 %v1784
        %v2099 = vunpack.c.l.b16 %v1785
        %v2100 = vunpack.c.l.b16 %v1786
        %v2101 = vunpack.c.h.b16 %v1786
        %v2102 = vunpack.c.l.b16 %v1787
        %v2103 = vunpack.c.h.b16 %v1787
        %v2104 = vunpack.c.l.b16 %v1788
        %v2105 = vunpack.c.l.b16 %v1789
        %v2106 = vunpack.c.h.b16 %v1789
        %v2107 = vunpack.c.l.b16 %v1790
        %v2108 = vunpack.c.h.b16 %v1790
        %v2109 = vunpack.c.l.b16 %v1791
        %v2110 = vunpack.c.l.b16 %v1792
        %v2111 = vunpack.c.h.b16 %v1792
        %v2112 = vunpack.c.l.b16 %v1793
        %v2113 = vunpack.c.h.b16 %v1793
        %v2114 = vunpack.c.l.b16 %v1794
        %v2115 = vunpack.c.l.b16 %v1795
        %v2116 = vunpack.c.h.b16 %v1795
        %v2117 = vunpack.c.l.b16 %v1796
        %v2118 = vunpack.c.h.b16 %v1796
        %v2119 = vunpack.c.l.b16 %v1797
        %v2120 = vunpack.c.l.b16 %v1798
        %v2121 = vunpack.c.h.b16 %v1798
        %v2122 = vunpack.c.l.b16 %v1799
        %v2123 = vunpack.c.h.b16 %v1799
        %v2124 = vunpack.c.l.b16 %v1800
        %v2125 = vunpack.c.l.b16 %v1801
        %v2126 = vunpack.c.h.b16 %v1801
        %v2127 = vunpack.c.l.b16 %v1802
        %v2128 = vunpack.c.h.b16 %v1802
        %v2129 = vunpack.c.l.b16 %v1803
        %v2130 = vunpack.c.l.b16 %v1804
        %v2131 = vunpack.c.h.b16 %v1804
        %v2132 = vunpack.c.l.b16 %v1805
        %v2133 = vunpack.c.h.b16 %v1805
        %v2134 = vunpack.c.l.b16 %v1806
        %v2135 = vunpack.c.l.b16 %v1807
        %v2136 = vunpack.c.h.b16 %v1807
        %v2137 = vunpack.c.l.b16 %v1808
        %v2138 = vunpack.c.h.b16 %v1808
        %v2139 = vunpack.c.l.b16 %v1809
        %v2140 = vunpack.c.l.b16 %v1810
        %v2141 = vunpack.c.h.b16 %v1810
        %v2142 = vunpack.c.l.b16 %v1811
        %v2143 = vunpack.c.h.b16 %v1811
        %v2144 = vunpack.c.l.b16 %v1812
        %v2145 = vpack.c.b16 %v1990, %v1985
        %v2146 = vpack.c.b16 %v1991, %v1986
        %v2147 = vpack.c.b16 %v1992, %v1987
        %v2148 = vpack.c.b16 %v1993, %v1988
        %v2149 = vpack.c.b16 %v1994, %v1989
        %v2150 = vpack.c.b16 %v2000, %v1995
        %v2151 = vpack.c.b16 %v2001, %v1996
        %v2152 = vpack.c.b16 %v2002, %v1997
        %v2153 = vpack.c.b16 %v2003, %v1998
        %v2154 = vpack.c.b16 %v2004, %v1999
        %v2155 = vpack.c.b16 %v2010, %v2005
        %v2156 = vpack.c.b16 %v2011, %v2006
        %v2157 = vpack.c.b16 %v2012, %v2007
        %v2158 = vpack.c.b16 %v2013, %v2008
        %v2159 = vpack.c.b16 %v2014, %v2009
        %v2160 = vpack.c.b16 %v2020, %v2015
        %v2161 = vpack.c.b16 %v2021, %v2016
        %v2162 = vpack.c.b16 %v2022, %v2017
        %v2163 = vpack.c.b16 %v2023, %v2018
        %v2164 = vpack.c.b16 %v2024, %v2019
        %v2165 = vpack.c.b16 %v2030, %v2025
        %v2166 = vpack.c.b16 %v2031, %v2026
        %v2167 = vpack.c.b16 %v2032, %v2027
        %v2168 = vpack.c.b16 %v2033, %v2028
        %v2169 = vpack.c.b16 %v2034, %v2029
        %v2170 = vpack.c.b16 %v2040, %v2035
        %v2171 = vpack.c.b16 %v2041, %v2036
        %v2172 = vpack.c.b16 %v2042, %v2037
        %v2173 = vpack.c.b16 %v2043, %v2038
        %v2174 = vpack.c.b16 %v2044, %v2039
        %v2175 = vpack.c.b16 %v2050, %v2045
        %v2176 = vpack.c.b16 %v2051, %v2046
        %v2177 = vpack.c.b16 %v2052, %v2047
        %v2178 = vpack.c.b16 %v2053, %v2048
        %v2179 = vpack.c.b16 %v2054, %v2049
        %v2180 = vpack.c.b16 %v2060, %v2055
        %v2181 = vpack.c.b16 %v2061, %v2056
        %v2182 = vpack.c.b16 %v2062, %v2057
        %v2183 = vpack.c.b16 %v2063, %v2058
        %v2184 = vpack.c.b16 %v2064, %v2059
        %v2185 = vpack.c.b16 %v2070, %v2065
        %v2186 = vpack.c.b16 %v2071, %v2066
        %v2187 = vpack.c.b16 %v2072, %v2067
        %v2188 = vpack.c.b16 %v2073, %v2068
        %v2189 = vpack.c.b16 %v2074, %v2069
        %v2190 = vpack.c.b16 %v2080, %v2075
        %v2191 = vpack.c.b16 %v2081, %v2076
        %v2192 = vpack.c.b16 %v2082, %v2077
        %v2193 = vpack.c.b16 %v2083, %v2078
        %v2194 = vpack.c.b16 %v2084, %v2079
        %v2195 = vpack.c.b16 %v2090, %v2085
        %v2196 = vpack.c.b16 %v2091, %v2086
        %v2197 = vpack.c.b16 %v2092, %v2087
        %v2198 = vpack.c.b16 %v2093, %v2088
        %v2199 = vpack.c.b16 %v2094, %v2089
        %v2200 = vpack.c.b16 %v2100, %v2095
        %v2201 = vpack.c.b16 %v2101, %v2096
        %v2202 = vpack.c.b16 %v2102, %v2097
        %v2203 = vpack.c.b16 %v2103, %v2098
        %v2204 = vpack.c.b16 %v2104, %v2099
        %v2205 = vpack.c.b16 %v2110, %v2105
        %v2206 = vpack.c.b16 %v2111, %v2106
        %v2207 = vpack.c.b16 %v2112, %v2107
        %v2208 = vpack.c.b16 %v2113, %v2108
        %v2209 = vpack.c.b16 %v2114, %v2109
        %v2210 = vpack.c.b16 %v2120, %v2115
        %v2211 = vpack.c.b16 %v2121, %v2116
        %v2212 = vpack.c.b16 %v2122, %v2117
        %v2213 = vpack.c.b16 %v2123, %v2118
        %v2214 = vpack.c.b16 %v2124, %v2119
        %v2215 = vpack.c.b16 %v2130, %v2125
        %v2216 = vpack.c.b16 %v2131, %v2126
        %v2217 = vpack.c.b16 %v2132, %v2127
        %v2218 = vpack.c.b16 %v2133, %v2128
        %v2219 = vpack.c.b16 %v2134, %v2129
        %v2220 = vpack.c.b16 %v2140, %v2135
        %v2221 = vpack.c.b16 %v2141, %v2136
        %v2222 = vpack.c.b16 %v2142, %v2137
        %v2223 = vpack.c.b16 %v2143, %v2138
        %v2224 = vpack.c.b16 %v2144, %v2139
        %v2361 = vunpack.c.l.b16 %v1813
        %v2362 = vunpack.c.l.b16 %v1814
        %v2363 = vunpack.c.l.b16 %v1815
        %v2364 = vunpack.c.l.b16 %v1816
        %v2365 = vunpack.c.l.b16 %v1817
        %v2366 = vunpack.c.l.b16 %v1818
        %v2367 = vunpack.c.l.b16 %v1819
        %v2368 = vunpack.c.l.b16 %v1820
        %v2369 = vunpack.c.l.b16 %v1821
        %v2370 = vunpack.c.l.b16 %v1822
        %v2371 = vunpack.c.l.b16 %v1823
        %v2372 = vunpack.c.l.b16 %v1824
        %v2373 = vunpack.c.l.b16 %v1825
        %v2374 = vunpack.c.l.b16 %v1826
        %v2375 = vunpack.c.l.b16 %v1827
        %v2376 = vunpack.c.l.b16 %v1828
        %v2377 = vunpack.c.l.b16 %v1829
        %v2378 = vunpack.c.l.b16 %v1830
        %v2379 = vunpack.c.l.b16 %v1831
        %v2380 = vunpack.c.l.b16 %v1832
        %v2381 = vunpack.c.l.b16 %v1833
        %v2382 = vunpack.c.l.b16 %v1834
        %v2383 = vunpack.c.l.b16 %v1835
        %v2384 = vunpack.c.l.b16 %v1836
        %v2385 = vunpack.c.l.b16 %v1837
        %v2386 = vunpack.c.l.b16 %v1838
        %v2387 = vunpack.c.l.b16 %v1839
        %v2388 = vunpack.c.l.b16 %v1840
        %v2389 = vunpack.c.l.b16 %v1841
        %v2390 = vunpack.c.l.b16 %v1842
        %v2391 = vunpack.c.l.b16 %v1843
        %v2392 = vunpack.c.l.b16 %v1844
        %v2393 = vunpack.c.l.b16 %v1845
        %v2394 = vunpack.c.l.b16 %v1846
        %v2395 = vunpack.c.l.b16 %v1847
        %v2396 = vunpack.c.l.b16 %v1848
        %v2397 = vunpack.c.l.b16 %v1849
        %v2398 = vunpack.c.l.b16 %v1850
        %v2399 = vunpack.c.l.b16 %v1851
        %v2400 = vunpack.c.l.b16 %v1852
        %v2401 = vunpack.c.l.b16 %v1853
        %v2402 = vunpack.c.l.b16 %v1854
        %v2403 = vunpack.c.l.b16 %v1855
        %v2404 = vunpack.c.l.b16 %v1856
        %v2405 = vunpack.c.l.b16 %v1857
        %v2406 = vunpack.c.l.b16 %v1858
        %v2407 = vunpack.c.l.b16 %v1859
        %v2408 = vunpack.c.l.b16 %v1860
        %v2409 = vunpack.c.l.b16 %v1861
        %v2410 = vunpack.c.l.b16 %v1862
        %v2411 = vunpack.c.l.b16 %v1863
        %v2412 = vunpack.c.l.b16 %v1864
        %v2413 = vunpack.c.l.b16 %v1865
        %v2414 = vunpack.c.l.b16 %v1866
        %v2415 = vunpack.c.l.b16 %v1867
        %v2416 = vunpack.c.l.b16 %v1868
        %v2417 = vunpack.c.l.b16 %v1869
        %v2418 = vunpack.c.l.b16 %v1870
        %v2419 = vunpack.c.l.b16 %v1871
        %v2420 = vunpack.c.l.b16 %v1872
        %v2421 = vunpack.c.l.b16 %v1873
        %v2422 = vunpack.c.l.b16 %v1874
        %v2423 = vunpack.c.l.b16 %v1875
        %v2424 = vunpack.c.l.b16 %v1876
        %v2425 = vunpack.c.l.b16 %v1877
        %v2426 = vunpack.c.l.b16 %v1878
        %v2427 = vunpack.c.l.b16 %v1879
        %v2428 = vunpack.c.l.b16 %v1880
        %v2429 = vunpack.c.l.b16 %v1881
        %v2430 = vunpack.c.l.b16 %v1882
        %v2431 = vunpack.c.l.b16 %v1883
        %v2432 = vunpack.c.l.b16 %v1884
        %v2433 = vpack.c.b16 %v2362, %v2361
        %v2434 = vpack.c.b16 %v2364, %v2363
        %v2435 = vpack.c.b16 %v2366, %v2365
        %v2436 = vpack.c.b16 %v2368, %v2367
        %v2437 = vpack.c.b16 %v2370, %v2369
        %v2438 = vpack.c.b16 %v2372, %v2371
        %v2439 = vpack.c.b16 %v2374, %v2373
        %v2440 = vpack.c.b16 %v2376, %v2375
        %v2441 = vpack.c.b16 %v2378, %v2377
        %v2442 = vpack.c.b16 %v2380, %v2379
        %v2443 = vpack.c.b16 %v2382, %v2381
        %v2444 = vpack.c.b16 %v2384, %v2383
        %v2445 = vpack.c.b16 %v2386, %v2385
        %v2446 = vpack.c.b16 %v2388, %v2387
        %v2447 = vpack.c.b16 %v2390, %v2389
        %v2448 = vpack.c.b16 %v2392, %v2391
        %v2449 = vpack.c.b16 %v2394, %v2393
        %v2450 = vpack.c.b16 %v2396, %v2395
        %v2451 = vpack.c.b16 %v2398, %v2397
        %v2452 = vpack.c.b16 %v2400, %v2399
        %v2453 = vpack.c.b16 %v2402, %v2401
        %v2454 = vpack.c.b16 %v2404, %v2403
        %v2455 = vpack.c.b16 %v2406, %v2405
        %v2456 = vpack.c.b16 %v2408, %v2407
        %v2457 = vpack.c.b16 %v2410, %v2409
        %v2458 = vpack.c.b16 %v2412, %v2411
        %v2459 = vpack.c.b16 %v2414, %v2413
        %v2460 = vpack.c.b16 %v2416, %v2415
        %v2461 = vpack.c.b16 %v2418, %v2417
        %v2462 = vpack.c.b16 %v2420, %v2419
        %v2463 = vpack.c.b16 %v2422, %v2421
        %v2464 = vpack.c.b16 %v2424, %v2423
        %v2465 = vpack.c.b16 %v2426, %v2425
        %v2466 = vpack.c.b16 %v2428, %v2427
        %v2467 = vpack.c.b16 %v2430, %v2429
        %v2468 = vpack.c.b16 %v2432, %v2431
        %v2506 = vsel %vm217, %v2149, 0
        %v2509 = vsel %vm217, %v2154, 0
        %v2512 = vsel %vm217, %v2159, 0
        %v2515 = vsel %vm217, %v2164, 0
        %v2518 = vsel %vm217, %v2169, 0
        %v2521 = vsel %vm217, %v2174, 0
        %v2524 = vsel %vm217, %v2179, 0
        %v2527 = vsel %vm217, %v2184, 0
        %v2530 = vsel %vm217, %v2189, 0
        %v2533 = vsel %vm217, %v2194, 0
        %v2536 = vsel %vm217, %v2199, 0
        %v2539 = vsel %vm217, %v2204, 0
        %v2542 = vsel %vm217, %v2209, 0
        %v2545 = vsel %vm217, %v2214, 0
        %v2548 = vsel %vm217, %v2219, 0
        %v2551 = vsel %vm217, %v2224, 0
        %2553 = vmatpush.bf16.msra.mxu0 %v2440
        %2554 = vmatpush.bf16.msra.mxu0 %v2439
        %2555 = vmatpush.bf16.msra.mxu0 %v2438
        %2556 = vmatpush.bf16.msra.mxu0 %v2437
        %2557 = vmatpush.bf16.msra.mxu0 %v2436
        %2558 = vmatpush.bf16.msra.mxu0 %v2435
        %2559 = vmatpush.bf16.msra.mxu0 %v2434
        %2560 = vmatpush.bf16.msra.mxu0 %v2433
        %2561 = vmatmul.bf16.gmra.mxu0 %v2145
        %v2562 = vpop.f32.mrf.mxu0
        %v2563 = vadd.f32 %v1887, %v2562
        %v2564 = vpop.f32.mrf.mxu0
        %v2565 = vadd.f32 %v1887, %v2564
        %2566 = vmatmul.bf16.gmra.mxu0 %v2150
        %v2567 = vpop.f32.mrf.mxu0
        %v2568 = vadd.f32 %v1887, %v2567
        %v2569 = vpop.f32.mrf.mxu0
        %v2570 = vadd.f32 %v1887, %v2569
        %2571 = vmatmul.bf16.gmra.mxu0 %v2155
        %v2572 = vpop.f32.mrf.mxu0
        %v2573 = vadd.f32 %v1887, %v2572
        %v2574 = vpop.f32.mrf.mxu0
        %v2575 = vadd.f32 %v1887, %v2574
        %2576 = vmatmul.bf16.gmra.mxu0 %v2160
        %v2577 = vpop.f32.mrf.mxu0
        %v2578 = vadd.f32 %v1887, %v2577
        %v2579 = vpop.f32.mrf.mxu0
        %v2580 = vadd.f32 %v1887, %v2579
        %2581 = vmatmul.bf16.gmra.mxu0 %v2165
        %v2582 = vpop.f32.mrf.mxu0
        %v2583 = vadd.f32 %v1887, %v2582
        %v2584 = vpop.f32.mrf.mxu0
        %v2585 = vadd.f32 %v1887, %v2584
        %2586 = vmatmul.bf16.gmra.mxu0 %v2170
        %v2587 = vpop.f32.mrf.mxu0
        %v2588 = vadd.f32 %v1887, %v2587
        %v2589 = vpop.f32.mrf.mxu0
        %v2590 = vadd.f32 %v1887, %v2589
        %2591 = vmatmul.bf16.gmra.mxu0 %v2175
        %v2592 = vpop.f32.mrf.mxu0
        %v2593 = vadd.f32 %v1887, %v2592
        %v2594 = vpop.f32.mrf.mxu0
        %v2595 = vadd.f32 %v1887, %v2594
        %2596 = vmatmul.bf16.gmra.mxu0 %v2180
        %v2597 = vpop.f32.mrf.mxu0
        %v2598 = vadd.f32 %v1887, %v2597
        %v2599 = vpop.f32.mrf.mxu0
        %v2600 = vadd.f32 %v1887, %v2599
        %2601 = vmatmul.bf16.gmra.mxu0 %v2185
        %v2602 = vpop.f32.mrf.mxu0
        %v2603 = vadd.f32 %v1887, %v2602
        %v2604 = vpop.f32.mrf.mxu0
        %v2605 = vadd.f32 %v1887, %v2604
        %2606 = vmatmul.bf16.gmra.mxu0 %v2190
        %v2607 = vpop.f32.mrf.mxu0
        %v2608 = vadd.f32 %v1887, %v2607
        %v2609 = vpop.f32.mrf.mxu0
        %v2610 = vadd.f32 %v1887, %v2609
        %2611 = vmatmul.bf16.gmra.mxu0 %v2195
        %v2612 = vpop.f32.mrf.mxu0
        %v2613 = vadd.f32 %v1887, %v2612
        %v2614 = vpop.f32.mrf.mxu0
        %v2615 = vadd.f32 %v1887, %v2614
        %2616 = vmatmul.bf16.gmra.mxu0 %v2200
        %v2617 = vpop.f32.mrf.mxu0
        %v2618 = vadd.f32 %v1887, %v2617
        %v2619 = vpop.f32.mrf.mxu0
        %v2620 = vadd.f32 %v1887, %v2619
        %2621 = vmatmul.bf16.gmra.mxu0 %v2205
        %v2622 = vpop.f32.mrf.mxu0
        %v2623 = vadd.f32 %v1887, %v2622
        %v2624 = vpop.f32.mrf.mxu0
        %v2625 = vadd.f32 %v1887, %v2624
        %2626 = vmatmul.bf16.gmra.mxu0 %v2210
        %v2627 = vpop.f32.mrf.mxu0
        %v2628 = vadd.f32 %v1887, %v2627
        %v2629 = vpop.f32.mrf.mxu0
        %v2630 = vadd.f32 %v1887, %v2629
        %2631 = vmatmul.bf16.gmra.mxu0 %v2215
        %v2632 = vpop.f32.mrf.mxu0
        %v2633 = vadd.f32 %v1887, %v2632
        %v2634 = vpop.f32.mrf.mxu0
        %v2635 = vadd.f32 %v1887, %v2634
        %2636 = vmatmul.bf16.gmra.mxu0 %v2220
        %v2637 = vpop.f32.mrf.mxu0
        %v2638 = vadd.f32 %v1887, %v2637
        %v2639 = vpop.f32.mrf.mxu0
        %v2640 = vadd.f32 %v1887, %v2639
        %2641 = vdwg.mxu0
        %2642 = vmatpush.bf16.msra.mxu0 %v2448
        %2643 = vmatpush.bf16.msra.mxu0 %v2447
        %2644 = vmatpush.bf16.msra.mxu0 %v2446
        %2645 = vmatpush.bf16.msra.mxu0 %v2445
        %2646 = vmatpush.bf16.msra.mxu0 %v2444
        %2647 = vmatpush.bf16.msra.mxu0 %v2443
        %2648 = vmatpush.bf16.msra.mxu0 %v2442
        %2649 = vmatpush.bf16.msra.mxu0 %v2441
        %2650 = vmatmul.bf16.gmra.mxu0 %v2146
        %v2651 = vpop.f32.mrf.mxu0
        %v2652 = vadd.f32 %v2563, %v2651
        %v2653 = vpop.f32.mrf.mxu0
        %v2654 = vadd.f32 %v2565, %v2653
        %2655 = vmatmul.bf16.gmra.mxu0 %v2151
        %v2656 = vpop.f32.mrf.mxu0
        %v2657 = vadd.f32 %v2568, %v2656
        %v2658 = vpop.f32.mrf.mxu0
        %v2659 = vadd.f32 %v2570, %v2658
        %2660 = vmatmul.bf16.gmra.mxu0 %v2156
        %v2661 = vpop.f32.mrf.mxu0
        %v2662 = vadd.f32 %v2573, %v2661
        %v2663 = vpop.f32.mrf.mxu0
        %v2664 = vadd.f32 %v2575, %v2663
        %2665 = vmatmul.bf16.gmra.mxu0 %v2161
        %v2666 = vpop.f32.mrf.mxu0
        %v2667 = vadd.f32 %v2578, %v2666
        %v2668 = vpop.f32.mrf.mxu0
        %v2669 = vadd.f32 %v2580, %v2668
        %2670 = vmatmul.bf16.gmra.mxu0 %v2166
        %v2671 = vpop.f32.mrf.mxu0
        %v2672 = vadd.f32 %v2583, %v2671
        %v2673 = vpop.f32.mrf.mxu0
        %v2674 = vadd.f32 %v2585, %v2673
        %2675 = vmatmul.bf16.gmra.mxu0 %v2171
        %v2676 = vpop.f32.mrf.mxu0
        %v2677 = vadd.f32 %v2588, %v2676
        %v2678 = vpop.f32.mrf.mxu0
        %v2679 = vadd.f32 %v2590, %v2678
        %2680 = vmatmul.bf16.gmra.mxu0 %v2176
        %v2681 = vpop.f32.mrf.mxu0
        %v2682 = vadd.f32 %v2593, %v2681
        %v2683 = vpop.f32.mrf.mxu0
        %v2684 = vadd.f32 %v2595, %v2683
        %2685 = vmatmul.bf16.gmra.mxu0 %v2181
        %v2686 = vpop.f32.mrf.mxu0
        %v2687 = vadd.f32 %v2598, %v2686
        %v2688 = vpop.f32.mrf.mxu0
        %v2689 = vadd.f32 %v2600, %v2688
        %2690 = vmatmul.bf16.gmra.mxu0 %v2186
        %v2691 = vpop.f32.mrf.mxu0
        %v2692 = vadd.f32 %v2603, %v2691
        %v2693 = vpop.f32.mrf.mxu0
        %v2694 = vadd.f32 %v2605, %v2693
        %2695 = vmatmul.bf16.gmra.mxu0 %v2191
        %v2696 = vpop.f32.mrf.mxu0
        %v2697 = vadd.f32 %v2608, %v2696
        %v2698 = vpop.f32.mrf.mxu0
        %v2699 = vadd.f32 %v2610, %v2698
        %2700 = vmatmul.bf16.gmra.mxu0 %v2196
        %v2701 = vpop.f32.mrf.mxu0
        %v2702 = vadd.f32 %v2613, %v2701
        %v2703 = vpop.f32.mrf.mxu0
        %v2704 = vadd.f32 %v2615, %v2703
        %2705 = vmatmul.bf16.gmra.mxu0 %v2201
        %v2706 = vpop.f32.mrf.mxu0
        %v2707 = vadd.f32 %v2618, %v2706
        %v2708 = vpop.f32.mrf.mxu0
        %v2709 = vadd.f32 %v2620, %v2708
        %2710 = vmatmul.bf16.gmra.mxu0 %v2206
        %v2711 = vpop.f32.mrf.mxu0
        %v2712 = vadd.f32 %v2623, %v2711
        %v2713 = vpop.f32.mrf.mxu0
        %v2714 = vadd.f32 %v2625, %v2713
        %2715 = vmatmul.bf16.gmra.mxu0 %v2211
        %v2716 = vpop.f32.mrf.mxu0
        %v2717 = vadd.f32 %v2628, %v2716
        %v2718 = vpop.f32.mrf.mxu0
        %v2719 = vadd.f32 %v2630, %v2718
        %2720 = vmatmul.bf16.gmra.mxu0 %v2216
        %v2721 = vpop.f32.mrf.mxu0
        %v2722 = vadd.f32 %v2633, %v2721
        %v2723 = vpop.f32.mrf.mxu0
        %v2724 = vadd.f32 %v2635, %v2723
        %2725 = vmatmul.bf16.gmra.mxu0 %v2221
        %v2726 = vpop.f32.mrf.mxu0
        %v2727 = vadd.f32 %v2638, %v2726
        %v2728 = vpop.f32.mrf.mxu0
        %v2729 = vadd.f32 %v2640, %v2728
        %2730 = vdwg.mxu0
        %2731 = vmatpush.bf16.msra.mxu0 %v2456
        %2732 = vmatpush.bf16.msra.mxu0 %v2455
        %2733 = vmatpush.bf16.msra.mxu0 %v2454
        %2734 = vmatpush.bf16.msra.mxu0 %v2453
        %2735 = vmatpush.bf16.msra.mxu0 %v2452
        %2736 = vmatpush.bf16.msra.mxu0 %v2451
        %2737 = vmatpush.bf16.msra.mxu0 %v2450
        %2738 = vmatpush.bf16.msra.mxu0 %v2449
        %2739 = vmatmul.bf16.gmra.mxu0 %v2147
        %v2740 = vpop.f32.mrf.mxu0
        %v2741 = vadd.f32 %v2652, %v2740
        %v2742 = vpop.f32.mrf.mxu0
        %v2743 = vadd.f32 %v2654, %v2742
        %2744 = vmatmul.bf16.gmra.mxu0 %v2152
        %v2745 = vpop.f32.mrf.mxu0
        %v2746 = vadd.f32 %v2657, %v2745
        %v2747 = vpop.f32.mrf.mxu0
        %v2748 = vadd.f32 %v2659, %v2747
        %2749 = vmatmul.bf16.gmra.mxu0 %v2157
        %v2750 = vpop.f32.mrf.mxu0
        %v2751 = vadd.f32 %v2662, %v2750
        %v2752 = vpop.f32.mrf.mxu0
        %v2753 = vadd.f32 %v2664, %v2752
        %2754 = vmatmul.bf16.gmra.mxu0 %v2162
        %v2755 = vpop.f32.mrf.mxu0
        %v2756 = vadd.f32 %v2667, %v2755
        %v2757 = vpop.f32.mrf.mxu0
        %v2758 = vadd.f32 %v2669, %v2757
        %2759 = vmatmul.bf16.gmra.mxu0 %v2167
        %v2760 = vpop.f32.mrf.mxu0
        %v2761 = vadd.f32 %v2672, %v2760
        %v2762 = vpop.f32.mrf.mxu0
        %v2763 = vadd.f32 %v2674, %v2762
        %2764 = vmatmul.bf16.gmra.mxu0 %v2172
        %v2765 = vpop.f32.mrf.mxu0
        %v2766 = vadd.f32 %v2677, %v2765
        %v2767 = vpop.f32.mrf.mxu0
        %v2768 = vadd.f32 %v2679, %v2767
        %2769 = vmatmul.bf16.gmra.mxu0 %v2177
        %v2770 = vpop.f32.mrf.mxu0
        %v2771 = vadd.f32 %v2682, %v2770
        %v2772 = vpop.f32.mrf.mxu0
        %v2773 = vadd.f32 %v2684, %v2772
        %2774 = vmatmul.bf16.gmra.mxu0 %v2182
        %v2775 = vpop.f32.mrf.mxu0
        %v2776 = vadd.f32 %v2687, %v2775
        %v2777 = vpop.f32.mrf.mxu0
        %v2778 = vadd.f32 %v2689, %v2777
        %2779 = vmatmul.bf16.gmra.mxu0 %v2187
        %v2780 = vpop.f32.mrf.mxu0
        %v2781 = vadd.f32 %v2692, %v2780
        %v2782 = vpop.f32.mrf.mxu0
        %v2783 = vadd.f32 %v2694, %v2782
        %2784 = vmatmul.bf16.gmra.mxu0 %v2192
        %v2785 = vpop.f32.mrf.mxu0
        %v2786 = vadd.f32 %v2697, %v2785
        %v2787 = vpop.f32.mrf.mxu0
        %v2788 = vadd.f32 %v2699, %v2787
        %2789 = vmatmul.bf16.gmra.mxu0 %v2197
        %v2790 = vpop.f32.mrf.mxu0
        %v2791 = vadd.f32 %v2702, %v2790
        %v2792 = vpop.f32.mrf.mxu0
        %v2793 = vadd.f32 %v2704, %v2792
        %2794 = vmatmul.bf16.gmra.mxu0 %v2202
        %v2795 = vpop.f32.mrf.mxu0
        %v2796 = vadd.f32 %v2707, %v2795
        %v2797 = vpop.f32.mrf.mxu0
        %v2798 = vadd.f32 %v2709, %v2797
        %2799 = vmatmul.bf16.gmra.mxu0 %v2207
        %v2800 = vpop.f32.mrf.mxu0
        %v2801 = vadd.f32 %v2712, %v2800
        %v2802 = vpop.f32.mrf.mxu0
        %v2803 = vadd.f32 %v2714, %v2802
        %2804 = vmatmul.bf16.gmra.mxu0 %v2212
        %v2805 = vpop.f32.mrf.mxu0
        %v2806 = vadd.f32 %v2717, %v2805
        %v2807 = vpop.f32.mrf.mxu0
        %v2808 = vadd.f32 %v2719, %v2807
        %2809 = vmatmul.bf16.gmra.mxu0 %v2217
        %v2810 = vpop.f32.mrf.mxu0
        %v2811 = vadd.f32 %v2722, %v2810
        %v2812 = vpop.f32.mrf.mxu0
        %v2813 = vadd.f32 %v2724, %v2812
        %2814 = vmatmul.bf16.gmra.mxu0 %v2222
        %v2815 = vpop.f32.mrf.mxu0
        %v2816 = vadd.f32 %v2727, %v2815
        %v2817 = vpop.f32.mrf.mxu0
        %v2818 = vadd.f32 %v2729, %v2817
        %2819 = vdwg.mxu0
        %2820 = vmatpush.bf16.msra.mxu0 %v2464
        %2821 = vmatpush.bf16.msra.mxu0 %v2463
        %2822 = vmatpush.bf16.msra.mxu0 %v2462
        %2823 = vmatpush.bf16.msra.mxu0 %v2461
        %2824 = vmatpush.bf16.msra.mxu0 %v2460
        %2825 = vmatpush.bf16.msra.mxu0 %v2459
        %2826 = vmatpush.bf16.msra.mxu0 %v2458
        %2827 = vmatpush.bf16.msra.mxu0 %v2457
        %2828 = vmatmul.bf16.gmra.mxu0 %v2148
        %v2829 = vpop.f32.mrf.mxu0
        %v2830 = vadd.f32 %v2741, %v2829
        %v2831 = vpop.f32.mrf.mxu0
        %v2832 = vadd.f32 %v2743, %v2831
        %2833 = vmatmul.bf16.gmra.mxu0 %v2153
        %v2834 = vpop.f32.mrf.mxu0
        %v2835 = vadd.f32 %v2746, %v2834
        %v2836 = vpop.f32.mrf.mxu0
        %v2837 = vadd.f32 %v2748, %v2836
        %2838 = vmatmul.bf16.gmra.mxu0 %v2158
        %v2839 = vpop.f32.mrf.mxu0
        %v2840 = vadd.f32 %v2751, %v2839
        %v2841 = vpop.f32.mrf.mxu0
        %v2842 = vadd.f32 %v2753, %v2841
        %2843 = vmatmul.bf16.gmra.mxu0 %v2163
        %v2844 = vpop.f32.mrf.mxu0
        %v2845 = vadd.f32 %v2756, %v2844
        %v2846 = vpop.f32.mrf.mxu0
        %v2847 = vadd.f32 %v2758, %v2846
        %2848 = vmatmul.bf16.gmra.mxu0 %v2168
        %v2849 = vpop.f32.mrf.mxu0
        %v2850 = vadd.f32 %v2761, %v2849
        %v2851 = vpop.f32.mrf.mxu0
        %v2852 = vadd.f32 %v2763, %v2851
        %2853 = vmatmul.bf16.gmra.mxu0 %v2173
        %v2854 = vpop.f32.mrf.mxu0
        %v2855 = vadd.f32 %v2766, %v2854
        %v2856 = vpop.f32.mrf.mxu0
        %v2857 = vadd.f32 %v2768, %v2856
        %2858 = vmatmul.bf16.gmra.mxu0 %v2178
        %v2859 = vpop.f32.mrf.mxu0
        %v2860 = vadd.f32 %v2771, %v2859
        %v2861 = vpop.f32.mrf.mxu0
        %v2862 = vadd.f32 %v2773, %v2861
        %2863 = vmatmul.bf16.gmra.mxu0 %v2183
        %v2864 = vpop.f32.mrf.mxu0
        %v2865 = vadd.f32 %v2776, %v2864
        %v2866 = vpop.f32.mrf.mxu0
        %v2867 = vadd.f32 %v2778, %v2866
        %2868 = vmatmul.bf16.gmra.mxu0 %v2188
        %v2869 = vpop.f32.mrf.mxu0
        %v2870 = vadd.f32 %v2781, %v2869
        %v2871 = vpop.f32.mrf.mxu0
        %v2872 = vadd.f32 %v2783, %v2871
        %2873 = vmatmul.bf16.gmra.mxu0 %v2193
        %v2874 = vpop.f32.mrf.mxu0
        %v2875 = vadd.f32 %v2786, %v2874
        %v2876 = vpop.f32.mrf.mxu0
        %v2877 = vadd.f32 %v2788, %v2876
        %2878 = vmatmul.bf16.gmra.mxu0 %v2198
        %v2879 = vpop.f32.mrf.mxu0
        %v2880 = vadd.f32 %v2791, %v2879
        %v2881 = vpop.f32.mrf.mxu0
        %v2882 = vadd.f32 %v2793, %v2881
        %2883 = vmatmul.bf16.gmra.mxu0 %v2203
        %v2884 = vpop.f32.mrf.mxu0
        %v2885 = vadd.f32 %v2796, %v2884
        %v2886 = vpop.f32.mrf.mxu0
        %v2887 = vadd.f32 %v2798, %v2886
        %2888 = vmatmul.bf16.gmra.mxu0 %v2208
        %v2889 = vpop.f32.mrf.mxu0
        %v2890 = vadd.f32 %v2801, %v2889
        %v2891 = vpop.f32.mrf.mxu0
        %v2892 = vadd.f32 %v2803, %v2891
        %2893 = vmatmul.bf16.gmra.mxu0 %v2213
        %v2894 = vpop.f32.mrf.mxu0
        %v2895 = vadd.f32 %v2806, %v2894
        %v2896 = vpop.f32.mrf.mxu0
        %v2897 = vadd.f32 %v2808, %v2896
        %2898 = vmatmul.bf16.gmra.mxu0 %v2218
        %v2899 = vpop.f32.mrf.mxu0
        %v2900 = vadd.f32 %v2811, %v2899
        %v2901 = vpop.f32.mrf.mxu0
        %v2902 = vadd.f32 %v2813, %v2901
        %2903 = vmatmul.bf16.gmra.mxu0 %v2223
        %v2904 = vpop.f32.mrf.mxu0
        %v2905 = vadd.f32 %v2816, %v2904
        %v2906 = vpop.f32.mrf.mxu0
        %v2907 = vadd.f32 %v2818, %v2906
        %2908 = vdwg.mxu0
        %2909 = vmatpush.bf16.msra.mxu0 0
        %2910 = vmatpush.bf16.msra.mxu0 0
        %2911 = vmatpush.bf16.msra.mxu0 0
        %2912 = vmatpush.bf16.msra.mxu0 0
        %2913 = vmatpush.bf16.msra.mxu0 %v2468
        %2914 = vmatpush.bf16.msra.mxu0 %v2467
        %2915 = vmatpush.bf16.msra.mxu0 %v2466
        %2916 = vmatpush.bf16.msra.mxu0 %v2465
        %2917 = vmatmul.bf16.gmra.mxu0 %v2506
        %v2918 = vpop.f32.mrf.mxu0
        %v2919 = vadd.f32 %v2830, %v2918
        %v2920 = vpop.f32.mrf.mxu0
        %v2921 = vadd.f32 %v2832, %v2920
        %2922 = vmatmul.bf16.gmra.mxu0 %v2509
        %v2923 = vpop.f32.mrf.mxu0
        %v2924 = vadd.f32 %v2835, %v2923
        %v2925 = vpop.f32.mrf.mxu0
        %v2926 = vadd.f32 %v2837, %v2925
        %2927 = vmatmul.bf16.gmra.mxu0 %v2512
        %v2928 = vpop.f32.mrf.mxu0
        %v2929 = vadd.f32 %v2840, %v2928
        %v2930 = vpop.f32.mrf.mxu0
        %v2931 = vadd.f32 %v2842, %v2930
        %2932 = vmatmul.bf16.gmra.mxu0 %v2515
        %v2933 = vpop.f32.mrf.mxu0
        %v2934 = vadd.f32 %v2845, %v2933
        %v2935 = vpop.f32.mrf.mxu0
        %v2936 = vadd.f32 %v2847, %v2935
        %2937 = vmatmul.bf16.gmra.mxu0 %v2518
        %v2938 = vpop.f32.mrf.mxu0
        %v2939 = vadd.f32 %v2850, %v2938
        %v2940 = vpop.f32.mrf.mxu0
        %v2941 = vadd.f32 %v2852, %v2940
        %2942 = vmatmul.bf16.gmra.mxu0 %v2521
        %v2943 = vpop.f32.mrf.mxu0
        %v2944 = vadd.f32 %v2855, %v2943
        %v2945 = vpop.f32.mrf.mxu0
        %v2946 = vadd.f32 %v2857, %v2945
        %2947 = vmatmul.bf16.gmra.mxu0 %v2524
        %v2948 = vpop.f32.mrf.mxu0
        %v2949 = vadd.f32 %v2860, %v2948
        %v2950 = vpop.f32.mrf.mxu0
        %v2951 = vadd.f32 %v2862, %v2950
        %2952 = vmatmul.bf16.gmra.mxu0 %v2527
        %v2953 = vpop.f32.mrf.mxu0
        %v2954 = vadd.f32 %v2865, %v2953
        %v2955 = vpop.f32.mrf.mxu0
        %v2956 = vadd.f32 %v2867, %v2955
        %2957 = vmatmul.bf16.gmra.mxu0 %v2530
        %v2958 = vpop.f32.mrf.mxu0
        %v2959 = vadd.f32 %v2870, %v2958
        %v2960 = vpop.f32.mrf.mxu0
        %v2961 = vadd.f32 %v2872, %v2960
        %2962 = vmatmul.bf16.gmra.mxu0 %v2533
        %v2963 = vpop.f32.mrf.mxu0
        %v2964 = vadd.f32 %v2875, %v2963
        %v2965 = vpop.f32.mrf.mxu0
        %v2966 = vadd.f32 %v2877, %v2965
        %2967 = vmatmul.bf16.gmra.mxu0 %v2536
        %v2968 = vpop.f32.mrf.mxu0
        %v2969 = vadd.f32 %v2880, %v2968
        %v2970 = vpop.f32.mrf.mxu0
        %v2971 = vadd.f32 %v2882, %v2970
        %2972 = vmatmul.bf16.gmra.mxu0 %v2539
        %v2973 = vpop.f32.mrf.mxu0
        %v2974 = vadd.f32 %v2885, %v2973
        %v2975 = vpop.f32.mrf.mxu0
        %v2976 = vadd.f32 %v2887, %v2975
        %2977 = vmatmul.bf16.gmra.mxu0 %v2542
        %v2978 = vpop.f32.mrf.mxu0
        %v2979 = vadd.f32 %v2890, %v2978
        %v2980 = vpop.f32.mrf.mxu0
        %v2981 = vadd.f32 %v2892, %v2980
        %2982 = vmatmul.bf16.gmra.mxu0 %v2545
        %v2983 = vpop.f32.mrf.mxu0
        %v2984 = vadd.f32 %v2895, %v2983
        %v2985 = vpop.f32.mrf.mxu0
        %v2986 = vadd.f32 %v2897, %v2985
        %2987 = vmatmul.bf16.gmra.mxu0 %v2548
        %v2988 = vpop.f32.mrf.mxu0
        %v2989 = vadd.f32 %v2900, %v2988
        %v2990 = vpop.f32.mrf.mxu0
        %v2991 = vadd.f32 %v2902, %v2990
        %2992 = vmatmul.bf16.gmra.mxu0 %v2551
        %v2993 = vpop.f32.mrf.mxu0
        %v2994 = vadd.f32 %v2905, %v2993
        %v2995 = vpop.f32.mrf.mxu0
        %v2996 = vadd.f32 %v2907, %v2995
        %2997 = vdwg.mxu0
        %v2998 = vld [vmem:[%s210] sm:$0xff]
        %v2999 = vld [vmem:[%s210 + $0x8] sm:$0xff]
        %v3000 = vld [vmem:[%s210 + $0x10] sm:$0xff]
        %v3001 = vld [vmem:[%s210 + $0x18] sm:$0xff]
        %v3002 = vld [vmem:[%s210 + $0x20] sm:$0xff]
        %v3003 = vld [vmem:[%s210 + $0x28] sm:$0xff]
        %v3004 = vld [vmem:[%s210 + $0x30] sm:$0xff]
        %v3005 = vld [vmem:[%s210 + $0x38] sm:$0xff]
        %v3006 = vld [vmem:[%s210 + $0x40] sm:$0xff]
        %v3007 = vld [vmem:[%s210 + $0x48] sm:$0xff]
        %v3008 = vld [vmem:[%s210 + $0x50] sm:$0xff]
        %v3009 = vld [vmem:[%s210 + $0x58] sm:$0xff]
        %v3010 = vld [vmem:[%s210 + $0x60] sm:$0xff]
        %v3011 = vld [vmem:[%s210 + $0x68] sm:$0xff]
        %v3012 = vld [vmem:[%s210 + $0x70] sm:$0xff]
        %v3013 = vld [vmem:[%s210 + $0x78] sm:$0xff]
        %v3014 = vld [vmem:[%s210 + $0x80] sm:$0xff]
        %v3015 = vld [vmem:[%s210 + $0x88] sm:$0xff]
        %v3016 = vld [vmem:[%s210 + $0x90] sm:$0xff]
        %v3017 = vld [vmem:[%s210 + $0x98] sm:$0xff]
        %v3018 = vld [vmem:[%s210 + $0xa0] sm:$0xff]
        %v3019 = vld [vmem:[%s210 + $0xa8] sm:$0xff]
        %v3020 = vld [vmem:[%s210 + $0xb0] sm:$0xff]
        %v3021 = vld [vmem:[%s210 + $0xb8] sm:$0xff]
        %v3022 = vld [vmem:[%s210 + $0xc0] sm:$0xff]
        %v3023 = vld [vmem:[%s210 + $0xc8] sm:$0xff]
        %v3024 = vld [vmem:[%s210 + $0xd0] sm:$0xff]
        %v3025 = vld [vmem:[%s210 + $0xd8] sm:$0xff]
        %v3026 = vld [vmem:[%s210 + $0xe0] sm:$0xff]
        %v3027 = vld [vmem:[%s210 + $0xe8] sm:$0xff]
        %v3028 = vld [vmem:[%s210 + $0xf0] sm:$0xff]
        %v3029 = vld [vmem:[%s210 + $0xf8] sm:$0xff]
        %v3030 = vadd.f32 %v2998, %v2919
        %v3031 = vadd.f32 %v2999, %v2921
        %v3032 = vadd.f32 %v3000, %v2924
        %v3033 = vadd.f32 %v3001, %v2926
        %v3034 = vadd.f32 %v3002, %v2929
        %v3035 = vadd.f32 %v3003, %v2931
        %v3036 = vadd.f32 %v3004, %v2934
        %v3037 = vadd.f32 %v3005, %v2936
        %v3038 = vadd.f32 %v3006, %v2939
        %v3039 = vadd.f32 %v3007, %v2941
        %v3040 = vadd.f32 %v3008, %v2944
        %v3041 = vadd.f32 %v3009, %v2946
        %v3042 = vadd.f32 %v3010, %v2949
        %v3043 = vadd.f32 %v3011, %v2951
        %v3044 = vadd.f32 %v3012, %v2954
        %v3045 = vadd.f32 %v3013, %v2956
        %v3046 = vadd.f32 %v3014, %v2959
        %v3047 = vadd.f32 %v3015, %v2961
        %v3048 = vadd.f32 %v3016, %v2964
        %v3049 = vadd.f32 %v3017, %v2966
        %v3050 = vadd.f32 %v3018, %v2969
        %v3051 = vadd.f32 %v3019, %v2971
        %v3052 = vadd.f32 %v3020, %v2974
        %v3053 = vadd.f32 %v3021, %v2976
        %v3054 = vadd.f32 %v3022, %v2979
        %v3055 = vadd.f32 %v3023, %v2981
        %v3056 = vadd.f32 %v3024, %v2984
        %v3057 = vadd.f32 %v3025, %v2986
        %v3058 = vadd.f32 %v3026, %v2989
        %v3059 = vadd.f32 %v3027, %v2991
        %v3060 = vadd.f32 %v3028, %v2994
        %v3061 = vadd.f32 %v3029, %v2996
        %3062 = vst.msk [vmem:[%s205] sm:$0xff] %vm217, %v3030
        %3063 = vst.msk [vmem:[%s205 + $0x8] sm:$0xff] %vm217, %v3031
        %3064 = vst.msk [vmem:[%s205 + $0x10] sm:$0xff] %vm217, %v3032
        %3065 = vst.msk [vmem:[%s205 + $0x18] sm:$0xff] %vm217, %v3033
        %3066 = vst.msk [vmem:[%s205 + $0x20] sm:$0xff] %vm217, %v3034
        %3067 = vst.msk [vmem:[%s205 + $0x28] sm:$0xff] %vm217, %v3035
        %3068 = vst.msk [vmem:[%s205 + $0x30] sm:$0xff] %vm217, %v3036
        %3069 = vst.msk [vmem:[%s205 + $0x38] sm:$0xff] %vm217, %v3037
        %3070 = vst.msk [vmem:[%s205 + $0x40] sm:$0xff] %vm217, %v3038
        %3071 = vst.msk [vmem:[%s205 + $0x48] sm:$0xff] %vm217, %v3039
        %3072 = vst.msk [vmem:[%s205 + $0x50] sm:$0xff] %vm217, %v3040
        %3073 = vst.msk [vmem:[%s205 + $0x58] sm:$0xff] %vm217, %v3041
        %3074 = vst.msk [vmem:[%s205 + $0x60] sm:$0xff] %vm217, %v3042
        %3075 = vst.msk [vmem:[%s205 + $0x68] sm:$0xff] %vm217, %v3043
        %3076 = vst.msk [vmem:[%s205 + $0x70] sm:$0xff] %vm217, %v3044
        %3077 = vst.msk [vmem:[%s205 + $0x78] sm:$0xff] %vm217, %v3045
        %3078 = vst.msk [vmem:[%s205 + $0x80] sm:$0xff] %vm217, %v3046
        %3079 = vst.msk [vmem:[%s205 + $0x88] sm:$0xff] %vm217, %v3047
        %3080 = vst.msk [vmem:[%s205 + $0x90] sm:$0xff] %vm217, %v3048
        %3081 = vst.msk [vmem:[%s205 + $0x98] sm:$0xff] %vm217, %v3049
        %3082 = vst.msk [vmem:[%s205 + $0xa0] sm:$0xff] %vm217, %v3050
        %3083 = vst.msk [vmem:[%s205 + $0xa8] sm:$0xff] %vm217, %v3051
        %3084 = vst.msk [vmem:[%s205 + $0xb0] sm:$0xff] %vm217, %v3052
        %3085 = vst.msk [vmem:[%s205 + $0xb8] sm:$0xff] %vm217, %v3053
        %3086 = vst.msk [vmem:[%s205 + $0xc0] sm:$0xff] %vm217, %v3054
        %3087 = vst.msk [vmem:[%s205 + $0xc8] sm:$0xff] %vm217, %v3055
        %3088 = vst.msk [vmem:[%s205 + $0xd0] sm:$0xff] %vm217, %v3056
        %3089 = vst.msk [vmem:[%s205 + $0xd8] sm:$0xff] %vm217, %v3057
        %3090 = vst.msk [vmem:[%s205 + $0xe0] sm:$0xff] %vm217, %v3058
        %3091 = vst.msk [vmem:[%s205 + $0xe8] sm:$0xff] %vm217, %v3059
        %3092 = vst.msk [vmem:[%s205 + $0xf0] sm:$0xff] %vm217, %v3060
        %3093 = vst.msk [vmem:[%s205 + $0xf8] sm:$0xff] %vm217, %v3061
        %s3094 = sand.u32 %s120, 1
        %s3095 = scalar_lea.sflag [#allocation5], %s3094
        %s3096 = sand.u32 %s120, 1
        %s3097 = smul.addr %s3096, 256
        %s3098 = scalar_lea.vmem [#allocation4], %s3097
        // Predicated region
        $region37: #{residual_group_forward.9} parent=35 // pred_check
          %p3099 = pneg %p130
        $region38: #{residual_group_forward.9} parent=35 // pred_check_branch
          %3101 = sbr.rel (%p3099) target = $region40
        $region39: #{residual_group_forward.9} parent=35 // pred_region
          %3103 = vsyncadd %s3095, 0
          %s3104 = smul.addr %s18, 32
          %s3105 = smul.addr %s3104, 8
          %s3106 = scalar_lea.hbm %s4, %s3105
          %s3107 = sshll.u32 %s3098, 4
          %s3108 = int_to_ptr.vmem [resolvable:$true] %s3107
          %s3109 = sshll.u32 %s3106, 4
          %s3110 = int_to_ptr.hbm [resolvable:$true] %s3109
          %3115 = dma.vmem_to_hbm [thread:$0]  %s3108, 4096, %s3110, %s3095, 128, 128, 8
        $region40: #{residual_group_forward.9} parent=35 // pred_fallthru
          _
      $region36: #{residual_group_forward.9} parent=5 // pred_fallthru
        _
      %p3116 = scmp.le.s32.totalorder 2, %s13
      // Predicated region
      $region41: #{residual_group_forward.9} parent=5 // pred_check
        %p3117 = pneg %p3116
      $region42: #{residual_group_forward.9} parent=5 // pred_check_branch
        %3119 = sbr.rel (%p3117) target = $region44
      $region43: #{residual_group_forward.9} parent=5 // pred_region
        %s3120 = ssub.s32 %s13, 2
        // Predicated region
        $region45: #{residual_group_forward.9} parent=43 // pred_check
          %p3121 = pneg %p136
        $region46: #{residual_group_forward.9} parent=43 // pred_check_branch
          %3123 = sbr.rel (%p3121) target = $region48
        $region47: #{residual_group_forward.9} parent=43 // pred_region
          %s3124 = sand.u32 %s121, 1
          %s3125 = scalar_lea.sflag [#allocation5], %s3124
          %s3126 = sand.u32 %s121, 1
          %s3127 = smul.addr %s3126, 256
          %s3128 = scalar_lea.vmem [#allocation4], %s3127
          %3130 = dma.done %s3125, 4096
        $region48: #{residual_group_forward.9} parent=43 // pred_fallthru
          _
      $region44: #{residual_group_forward.9} parent=5 // pred_fallthru
        _
    $region6: #{residual_group_forward.9} parent=1 // loop_footer
      %s17 = sadd.s32 1, %s13
    $region7: #{residual_group_forward.9} parent=1 // loop_footer_branch
      %12 = sbr.rel target = $region3
    $region8: #{residual_group_forward.9} parent=1 // loop_exit
      _
    %3131 = vsyncpa [#allocation5], 1
    %s3132 = scalar_lea.sflag [#allocation5], 1
    %3133 = vsyncpa %s3132, 1

// kernel: residual_group_forward.5
$region0: #{residual_group_forward.5}
  #allocation0 [shape = 'u32[]', space=smem, size = 0x4, offset = 0x4, fixed_abs, tag = 'smem constant byte address 0x4 - core index']
  #allocation1 [shape = 'u32[72,128]{1,0:T(1,128)}', space=vmem, size = 0x9000, scoped, tag = 'internal scratch']
  #allocation2 [shape = 'f32[18,18,64]{2,1,0:T(8,128)}', space=vmem, size = 0x36000, scoped, tag = 'scratch operand']
  #allocation3 [shape = 'bf16[256,576]{1,0:T(8,128)(2,1)}', space=vmem, size = 0x50000, scoped, tag = 'scratch operand']
  %s0 = inlined_call_operand.vmem [shape: f32[2,16,16,64], index: 0, kind: input, shape index: {}]
  %s1 = inlined_call_operand.vmem [shape: bf16[576,64], index: 1, kind: input, shape index: {}]
  %s2 = inlined_call_operand.vmem [shape: f32[1,64], index: 2, kind: input, shape index: {}]
  %s3 = inlined_call_operand.vmem [shape: bf16[576,64], index: 3, kind: input, shape index: {}]
  %s4 = inlined_call_operand.vmem [shape: f32[1,64], index: 4, kind: input, shape index: {}]
  %s5 = inlined_call_operand.vmem [shape: f32[64,4], index: 5, kind: input, shape index: {}]
  %s6 = inlined_call_operand.vmem [shape: f32[1,4], index: 6, kind: input, shape index: {}]
  %s7 = inlined_call_operand.vmem [shape: f32[4,64], index: 7, kind: input, shape index: {}]
  %s8 = inlined_call_operand.vmem [shape: f32[1,64], index: 8, kind: input, shape index: {}]
  %s9 = inlined_call_operand.vmem [shape: f32[2,16,16,64], index: 9, kind: output, shape index: {}]
  %s10 = sld [smem:[#allocation0]]
  $region69: #{residual_group_forward.5} parent=0
    _
  %s12 = ssub.s32 1, %s10
  %s13 = scalar_select 0, %s12, %s10
  loop: start=0, step=1, limit=4
  $region2: #{residual_group_forward.5} parent=0 // loop_pre_header
    _
  $region3: #{residual_group_forward.5} parent=0 // loop_header
    %s15 = sphi 0, %s19
    %p16 = scmp.ge.s32.totalorder %s15, 4
    %s25 = sphi 0, %s27
    %s28 = sphi 0, %s25
    %s29 = sphi 0, %s28
    %s45 = sphi 0, %s29
    %s49 = sphi 0, %s49
    %s51 = sphi 0, %s49
    %s52 = sphi 0, %s51
    %s66 = sphi 0, %s52
    %s70 = sphi 0, %s70
    %s72 = sphi 0, %s70
    %s73 = sphi 0, %s72
    %s87 = sphi 0, %s73
    %s91 = sphi 0, %s91
    %s93 = sphi 0, %s91
    %s94 = sphi 0, %s93
    %s108 = sphi 0, %s94
    %s112 = sphi 0, %s112
    %s114 = sphi 0, %s112
    %s115 = sphi 0, %s114
    %s129 = sphi 0, %s115
    %s133 = sphi 0, %s133
    %s135 = sphi 0, %s133
    %s136 = sphi 0, %s135
    %s150 = sphi 0, %s136
    %s154 = sphi 0, %s154
    %s156 = sphi 0, %s154
    %s157 = sphi 0, %s156
    %s171 = sphi 0, %s157
    %s175 = sphi 0, %s175
    %s177 = sphi 0, %s175
    %s178 = sphi 0, %s177
    %s192 = sphi 0, %s178
    %s196 = sphi 0, %s196
    %s198 = sphi 0, %s196
    %s199 = sphi 0, %s198
    %s213 = sphi 0, %s199
    %s219 = sphi 0, %s221
    %s222 = sphi 0, %s219
    %s223 = sphi 0, %s222
    %s239 = sphi 0, %s223
  $region4: #{residual_group_forward.5} parent=0 // loop_header_branch
    %18 = sbr.rel (%p16) target = $region8
  $region5: #{residual_group_forward.5} parent=0 // loop_body
    %s20 = ssub.s32 %s15, 1
    %s21 = ssub.s32 %s15, 2
    %s22 = sadd.s32 %s15, 1
    %s23 = ssub.s32 %s15, %s22
    %p24 = scmp.eq.s32.totalorder %s23, 0
    %s26 = sadd.s32 %s25, 1
    %s27 = scalar_select %p24, %s25, %s26
    %p30 = pneg %p24
    %p31 = scmp.eq.s32.totalorder %s15, 1
    %p32 = por %p30, %p31
    %p33 = scmp.ne.s32.totalorder %s25, %s28
    %p34 = scmp.eq.s32.totalorder %s15, 0
    %p35 = por %p33, %p34
    %p36 = scmp.ne.s32.totalorder %s25, %s28
    %p37 = scmp.eq.s32.totalorder %s20, 1
    %p38 = por %p36, %p37
    %p39 = scmp.ne.s32.totalorder %s28, %s29
    %p40 = scmp.eq.s32.totalorder %s20, 0
    %p41 = por %p39, %p40
    %p42 = scmp.ne.s32.totalorder %s28, %s29
    %p43 = scmp.eq.s32.totalorder %s21, 1
    %p44 = por %p42, %p43
    %p46 = scmp.ne.s32.totalorder %s29, %s45
    %p47 = scmp.eq.s32.totalorder %s21, 0
    %p48 = por %p46, %p47
    %s50 = sadd.s32 %s49, 1
    %p53 = scmp.eq.s32.totalorder %s15, 1
    %p54 = scmp.ne.s32.totalorder %s49, %s51
    %p55 = scmp.eq.s32.totalorder %s15, 0
    %p56 = por %p54, %p55
    %p57 = scmp.ne.s32.totalorder %s49, %s51
    %p58 = scmp.eq.s32.totalorder %s20, 1
    %p59 = por %p57, %p58
    %p60 = scmp.ne.s32.totalorder %s51, %s52
    %p61 = scmp.eq.s32.totalorder %s20, 0
    %p62 = por %p60, %p61
    %p63 = scmp.ne.s32.totalorder %s51, %s52
    %p64 = scmp.eq.s32.totalorder %s21, 1
    %p65 = por %p63, %p64
    %p67 = scmp.ne.s32.totalorder %s52, %s66
    %p68 = scmp.eq.s32.totalorder %s21, 0
    %p69 = por %p67, %p68
    %s71 = sadd.s32 %s70, 1
    %p74 = scmp.eq.s32.totalorder %s15, 1
    %p75 = scmp.ne.s32.totalorder %s70, %s72
    %p76 = scmp.eq.s32.totalorder %s15, 0
    %p77 = por %p75, %p76
    %p78 = scmp.ne.s32.totalorder %s70, %s72
    %p79 = scmp.eq.s32.totalorder %s20, 1
    %p80 = por %p78, %p79
    %p81 = scmp.ne.s32.totalorder %s72, %s73
    %p82 = scmp.eq.s32.totalorder %s20, 0
    %p83 = por %p81, %p82
    %p84 = scmp.ne.s32.totalorder %s72, %s73
    %p85 = scmp.eq.s32.totalorder %s21, 1
    %p86 = por %p84, %p85
    %p88 = scmp.ne.s32.totalorder %s73, %s87
    %p89 = scmp.eq.s32.totalorder %s21, 0
    %p90 = por %p88, %p89
    %s92 = sadd.s32 %s91, 1
    %p95 = scmp.eq.s32.totalorder %s15, 1
    %p96 = scmp.ne.s32.totalorder %s91, %s93
    %p97 = scmp.eq.s32.totalorder %s15, 0
    %p98 = por %p96, %p97
    %p99 = scmp.ne.s32.totalorder %s91, %s93
    %p100 = scmp.eq.s32.totalorder %s20, 1
    %p101 = por %p99, %p100
    %p102 = scmp.ne.s32.totalorder %s93, %s94
    %p103 = scmp.eq.s32.totalorder %s20, 0
    %p104 = por %p102, %p103
    %p105 = scmp.ne.s32.totalorder %s93, %s94
    %p106 = scmp.eq.s32.totalorder %s21, 1
    %p107 = por %p105, %p106
    %p109 = scmp.ne.s32.totalorder %s94, %s108
    %p110 = scmp.eq.s32.totalorder %s21, 0
    %p111 = por %p109, %p110
    %s113 = sadd.s32 %s112, 1
    %p116 = scmp.eq.s32.totalorder %s15, 1
    %p117 = scmp.ne.s32.totalorder %s112, %s114
    %p118 = scmp.eq.s32.totalorder %s15, 0
    %p119 = por %p117, %p118
    %p120 = scmp.ne.s32.totalorder %s112, %s114
    %p121 = scmp.eq.s32.totalorder %s20, 1
    %p122 = por %p120, %p121
    %p123 = scmp.ne.s32.totalorder %s114, %s115
    %p124 = scmp.eq.s32.totalorder %s20, 0
    %p125 = por %p123, %p124
    %p126 = scmp.ne.s32.totalorder %s114, %s115
    %p127 = scmp.eq.s32.totalorder %s21, 1
    %p128 = por %p126, %p127
    %p130 = scmp.ne.s32.totalorder %s115, %s129
    %p131 = scmp.eq.s32.totalorder %s21, 0
    %p132 = por %p130, %p131
    %s134 = sadd.s32 %s133, 1
    %p137 = scmp.eq.s32.totalorder %s15, 1
    %p138 = scmp.ne.s32.totalorder %s133, %s135
    %p139 = scmp.eq.s32.totalorder %s15, 0
    %p140 = por %p138, %p139
    %p141 = scmp.ne.s32.totalorder %s133, %s135
    %p142 = scmp.eq.s32.totalorder %s20, 1
    %p143 = por %p141, %p142
    %p144 = scmp.ne.s32.totalorder %s135, %s136
    %p145 = scmp.eq.s32.totalorder %s20, 0
    %p146 = por %p144, %p145
    %p147 = scmp.ne.s32.totalorder %s135, %s136
    %p148 = scmp.eq.s32.totalorder %s21, 1
    %p149 = por %p147, %p148
    %p151 = scmp.ne.s32.totalorder %s136, %s150
    %p152 = scmp.eq.s32.totalorder %s21, 0
    %p153 = por %p151, %p152
    %s155 = sadd.s32 %s154, 1
    %p158 = scmp.eq.s32.totalorder %s15, 1
    %p159 = scmp.ne.s32.totalorder %s154, %s156
    %p160 = scmp.eq.s32.totalorder %s15, 0
    %p161 = por %p159, %p160
    %p162 = scmp.ne.s32.totalorder %s154, %s156
    %p163 = scmp.eq.s32.totalorder %s20, 1
    %p164 = por %p162, %p163
    %p165 = scmp.ne.s32.totalorder %s156, %s157
    %p166 = scmp.eq.s32.totalorder %s20, 0
    %p167 = por %p165, %p166
    %p168 = scmp.ne.s32.totalorder %s156, %s157
    %p169 = scmp.eq.s32.totalorder %s21, 1
    %p170 = por %p168, %p169
    %p172 = scmp.ne.s32.totalorder %s157, %s171
    %p173 = scmp.eq.s32.totalorder %s21, 0
    %p174 = por %p172, %p173
    %s176 = sadd.s32 %s175, 1
    %p179 = scmp.eq.s32.totalorder %s15, 1
    %p180 = scmp.ne.s32.totalorder %s175, %s177
    %p181 = scmp.eq.s32.totalorder %s15, 0
    %p182 = por %p180, %p181
    %p183 = scmp.ne.s32.totalorder %s175, %s177
    %p184 = scmp.eq.s32.totalorder %s20, 1
    %p185 = por %p183, %p184
    %p186 = scmp.ne.s32.totalorder %s177, %s178
    %p187 = scmp.eq.s32.totalorder %s20, 0
    %p188 = por %p186, %p187
    %p189 = scmp.ne.s32.totalorder %s177, %s178
    %p190 = scmp.eq.s32.totalorder %s21, 1
    %p191 = por %p189, %p190
    %p193 = scmp.ne.s32.totalorder %s178, %s192
    %p194 = scmp.eq.s32.totalorder %s21, 0
    %p195 = por %p193, %p194
    %s197 = sadd.s32 %s196, 1
    %p200 = scmp.eq.s32.totalorder %s15, 1
    %p201 = scmp.ne.s32.totalorder %s196, %s198
    %p202 = scmp.eq.s32.totalorder %s15, 0
    %p203 = por %p201, %p202
    %p204 = scmp.ne.s32.totalorder %s196, %s198
    %p205 = scmp.eq.s32.totalorder %s20, 1
    %p206 = por %p204, %p205
    %p207 = scmp.ne.s32.totalorder %s198, %s199
    %p208 = scmp.eq.s32.totalorder %s20, 0
    %p209 = por %p207, %p208
    %p210 = scmp.ne.s32.totalorder %s198, %s199
    %p211 = scmp.eq.s32.totalorder %s21, 1
    %p212 = por %p210, %p211
    %p214 = scmp.ne.s32.totalorder %s199, %s213
    %p215 = scmp.eq.s32.totalorder %s21, 0
    %p216 = por %p214, %p215
    %s217 = ssub.s32 %s15, %s22
    %p218 = scmp.eq.s32.totalorder %s217, 0
    %s220 = sadd.s32 %s219, 1
    %s221 = scalar_select %p218, %s219, %s220
    %p224 = pneg %p218
    %p225 = scmp.eq.s32.totalorder %s15, 1
    %p226 = por %p224, %p225
    %p227 = scmp.ne.s32.totalorder %s219, %s222
    %p228 = scmp.eq.s32.totalorder %s15, 0
    %p229 = por %p227, %p228
    %p230 = scmp.ne.s32.totalorder %s219, %s222
    %p231 = scmp.eq.s32.totalorder %s20, 1
    %p232 = por %p230, %p231
    %p233 = scmp.ne.s32.totalorder %s222, %s223
    %p234 = scmp.eq.s32.totalorder %s20, 0
    %p235 = por %p233, %p234
    %p236 = scmp.ne.s32.totalorder %s222, %s223
    %p237 = scmp.eq.s32.totalorder %s21, 1
    %p238 = por %p236, %p237
    %p240 = scmp.ne.s32.totalorder %s223, %s239
    %p241 = scmp.eq.s32.totalorder %s21, 0
    %p242 = por %p240, %p241
    %p243 = scmp.le.s32.totalorder 1, %s15
    %p244 = scmp.lt.s32.totalorder %s15, 3
    %p245 = pnand %p243, %p244
    %p246 = pneg %p245
    // Predicated region
    $region9: #{residual_group_forward.5} parent=5 // pred_check
      _
    $region10: #{residual_group_forward.5} parent=5 // pred_check_branch
      %248 = sbr.rel (%p245) target = $region12
    $region11: #{residual_group_forward.5} parent=5 // pred_region
      %s249 = ssub.s32 %s15, 1
      // Predicated region
      $region13: #{residual_group_forward.5} parent=11 // pred_check
        %p250 = pneg %p62
      $region14: #{residual_group_forward.5} parent=11 // pred_check_branch
        %252 = sbr.rel (%p250) target = $region16
      $region15: #{residual_group_forward.5} parent=11 // pred_region
        _
      $region16: #{residual_group_forward.5} parent=11 // pred_fallthru
        _
      // Predicated region
      $region17: #{residual_group_forward.5} parent=11 // pred_check
        %p253 = pneg %p83
      $region18: #{residual_group_forward.5} parent=11 // pred_check_branch
        %255 = sbr.rel (%p253) target = $region20
      $region19: #{residual_group_forward.5} parent=11 // pred_region
        _
      $region20: #{residual_group_forward.5} parent=11 // pred_fallthru
        _
      // Predicated region
      $region21: #{residual_group_forward.5} parent=11 // pred_check
        %p256 = pneg %p104
      $region22: #{residual_group_forward.5} parent=11 // pred_check_branch
        %258 = sbr.rel (%p256) target = $region24
      $region23: #{residual_group_forward.5} parent=11 // pred_region
        _
      $region24: #{residual_group_forward.5} parent=11 // pred_fallthru
        _
      // Predicated region
      $region25: #{residual_group_forward.5} parent=11 // pred_check
        %p259 = pneg %p125
      $region26: #{residual_group_forward.5} parent=11 // pred_check_branch
        %261 = sbr.rel (%p259) target = $region28
      $region27: #{residual_group_forward.5} parent=11 // pred_region
        _
      $region28: #{residual_group_forward.5} parent=11 // pred_fallthru
        _
      // Predicated region
      $region29: #{residual_group_forward.5} parent=11 // pred_check
        %p262 = pneg %p146
      $region30: #{residual_group_forward.5} parent=11 // pred_check_branch
        %264 = sbr.rel (%p262) target = $region32
      $region31: #{residual_group_forward.5} parent=11 // pred_region
        _
      $region32: #{residual_group_forward.5} parent=11 // pred_fallthru
        _
      // Predicated region
      $region33: #{residual_group_forward.5} parent=11 // pred_check
        %p265 = pneg %p167
      $region34: #{residual_group_forward.5} parent=11 // pred_check_branch
        %267 = sbr.rel (%p265) target = $region36
      $region35: #{residual_group_forward.5} parent=11 // pred_region
        _
      $region36: #{residual_group_forward.5} parent=11 // pred_fallthru
        _
      // Predicated region
      $region37: #{residual_group_forward.5} parent=11 // pred_check
        %p268 = pneg %p188
      $region38: #{residual_group_forward.5} parent=11 // pred_check_branch
        %270 = sbr.rel (%p268) target = $region40
      $region39: #{residual_group_forward.5} parent=11 // pred_region
        _
      $region40: #{residual_group_forward.5} parent=11 // pred_fallthru
        _
      // Predicated region
      $region41: #{residual_group_forward.5} parent=11 // pred_check
        %p271 = pneg %p209
      $region42: #{residual_group_forward.5} parent=11 // pred_check_branch
        %273 = sbr.rel (%p271) target = $region44
      $region43: #{residual_group_forward.5} parent=11 // pred_region
        _
      $region44: #{residual_group_forward.5} parent=11 // pred_fallthru
        _
    $region12: #{residual_group_forward.5} parent=5 // pred_fallthru
      _
    %p274 = scmp.lt.s32.totalorder %s15, 2
    // Predicated region
    $region45: #{residual_group_forward.5} parent=5 // pred_check
      %p275 = pneg %p274
    $region46: #{residual_group_forward.5} parent=5 // pred_check_branch
      %277 = sbr.rel (%p275) target = $region48
    $region47: #{residual_group_forward.5} parent=5 // pred_region
      // Predicated region
      $region49: #{residual_group_forward.5} parent=47 // pred_check
        %p278 = pneg %p35
      $region50: #{residual_group_forward.5} parent=47 // pred_check_branch
        %280 = sbr.rel (%p278) target = $region52
      $region51: #{residual_group_forward.5} parent=47 // pred_region
        %p281 = scmp.lt.s32.totalorder %s15, 1
        %s282 = scalar_select %p281, %s15, 1
        %s283 = smul.addr %s282, 32
        %s284 = smul.addr %s283, 8
        %s285 = scalar_lea.vmem %s0, %s284
      $region52: #{residual_group_forward.5} parent=47 // pred_fallthru
        _
    $region48: #{residual_group_forward.5} parent=5 // pred_fallthru
      _
    %p286 = scmp.le.s32.totalorder 1, %s15
    %p287 = scmp.lt.s32.totalorder %s15, 3
    %p288 = pnand %p286, %p287
    %p289 = pneg %p288
    // Predicated region
    $region53: #{residual_group_forward.5} parent=5 // pred_check
      _
    $region54: #{residual_group_forward.5} parent=5 // pred_check_branch
      %291 = sbr.rel (%p288) target = $region56
    $region55: #{residual_group_forward.5} parent=5 // pred_region
      %s292 = ssub.s32 %s15, 1
      %p293 = scmp.lt.s32.totalorder %s20, 1
      %s294 = scalar_select %p293, %s20, 1
      %s295 = smul.addr %s294, 32
      %s296 = smul.addr %s295, 8
      %s297 = scalar_lea.vmem %s0, %s296
      %p298 = pneg %p41
      %p299 = pneg %p38
      %p300 = pneg %p62
      %p301 = pneg %p59
      %p302 = pneg %p83
      %p303 = pneg %p80
      %p304 = pneg %p104
      %p305 = pneg %p101
      %p306 = pneg %p125
      %p307 = pneg %p122
      %p308 = pneg %p146
      %p309 = pneg %p143
      %p310 = pneg %p167
      %p311 = pneg %p164
      %p312 = pneg %p188
      %p313 = pneg %p185
      %p314 = pneg %p209
      %p315 = pneg %p206
      %p316 = pneg %p235
      %p317 = pneg %p232
      %p318 = scmp.lt.s32.totalorder %s20, 1
      %s319 = scalar_select %p318, %s20, 1
      %s320 = smul.addr %s319, 32
      %s321 = smul.addr %s320, 8
      %s322 = scalar_lea.vmem %s9, %s321
      %p323 = scmp.lt.s32.totalorder %s20, 1
      %s324 = scalar_select %p323, %s20, 1
      %s325 = smul.addr %s324, 32
      %s326 = smul.addr %s325, 8
      %s327 = scalar_lea.vmem %s0, %s326
      %p328 = scmp.lt.s32.totalorder %s20, 1
      %s329 = scalar_select %p328, %s20, 1
      %s330 = smul.addr %s329, 32
      %s331 = smul.addr %s330, 8
      %s332 = scalar_lea.vmem %s9, %s331
      %vm334 = vcmask 523264
      %335 = vst.msk [vmem:[#allocation2] sm:$0xff] %vm334, 0.0
      %336 = vst.msk [vmem:[#allocation2 + $0x8] sm:$0xff] %vm334, 0.0
      %vm337 = vcmask 517120
      %338 = vst.msk [vmem:[#allocation2 + $0x10] sm:$0x3] %vm337, 0.0
      %339 = vst.msk [vmem:[#allocation2 + $0x18] sm:$0xff] %vm334, 0.0
      %340 = vst.msk [vmem:[#allocation2 + $0x20] sm:$0xff] %vm334, 0.0
      %341 = vst.msk [vmem:[#allocation2 + $0x28] sm:$0x3] %vm337, 0.0
      %342 = vst.msk [vmem:[#allocation2 + $0x30] sm:$0xff] %vm334, 0.0
      %343 = vst.msk [vmem:[#allocation2 + $0x38] sm:$0xff] %vm334, 0.0
      %344 = vst.msk [vmem:[#allocation2 + $0x40] sm:$0x3] %vm337, 0.0
      %345 = vst.msk [vmem:[#allocation2 + $0x48] sm:$0xff] %vm334, 0.0
      %346 = vst.msk [vmem:[#allocation2 + $0x50] sm:$0xff] %vm334, 0.0
      %347 = vst.msk [vmem:[#allocation2 + $0x58] sm:$0x3] %vm337, 0.0
      %348 = vst.msk [vmem:[#allocation2 + $0x60] sm:$0xff] %vm334, 0.0
      %349 = vst.msk [vmem:[#allocation2 + $0x68] sm:$0xff] %vm334, 0.0
      %350 = vst.msk [vmem:[#allocation2 + $0x70] sm:$0x3] %vm337, 0.0
      %351 = vst.msk [vmem:[#allocation2 + $0x78] sm:$0xff] %vm334, 0.0
      %352 = vst.msk [vmem:[#allocation2 + $0x80] sm:$0xff] %vm334, 0.0
      %353 = vst.msk [vmem:[#allocation2 + $0x88] sm:$0x3] %vm337, 0.0
      %354 = vst.msk [vmem:[#allocation2 + $0x90] sm:$0xff] %vm334, 0.0
      %355 = vst.msk [vmem:[#allocation2 + $0x98] sm:$0xff] %vm334, 0.0
      %356 = vst.msk [vmem:[#allocation2 + $0xa0] sm:$0x3] %vm337, 0.0
      %357 = vst.msk [vmem:[#allocation2 + $0xa8] sm:$0xff] %vm334, 0.0
      %358 = vst.msk [vmem:[#allocation2 + $0xb0] sm:$0xff] %vm334, 0.0
      %359 = vst.msk [vmem:[#allocation2 + $0xb8] sm:$0x3] %vm337, 0.0
      %360 = vst.msk [vmem:[#allocation2 + $0xc0] sm:$0xff] %vm334, 0.0
      %361 = vst.msk [vmem:[#allocation2 + $0xc8] sm:$0xff] %vm334, 0.0
      %362 = vst.msk [vmem:[#allocation2 + $0xd0] sm:$0x3] %vm337, 0.0
      %363 = vst.msk [vmem:[#allocation2 + $0xd8] sm:$0xff] %vm334, 0.0
      %364 = vst.msk [vmem:[#allocation2 + $0xe0] sm:$0xff] %vm334, 0.0
      %365 = vst.msk [vmem:[#allocation2 + $0xe8] sm:$0x3] %vm337, 0.0
      %366 = vst.msk [vmem:[#allocation2 + $0xf0] sm:$0xff] %vm334, 0.0
      %367 = vst.msk [vmem:[#allocation2 + $0xf8] sm:$0xff] %vm334, 0.0
      %368 = vst.msk [vmem:[#allocation2 + $0x100] sm:$0x3] %vm337, 0.0
      %369 = vst.msk [vmem:[#allocation2 + $0x108] sm:$0xff] %vm334, 0.0
      %370 = vst.msk [vmem:[#allocation2 + $0x110] sm:$0xff] %vm334, 0.0
      %371 = vst.msk [vmem:[#allocation2 + $0x118] sm:$0x3] %vm337, 0.0
      %372 = vst.msk [vmem:[#allocation2 + $0x120] sm:$0xff] %vm334, 0.0
      %373 = vst.msk [vmem:[#allocation2 + $0x128] sm:$0xff] %vm334, 0.0
      %374 = vst.msk [vmem:[#allocation2 + $0x130] sm:$0x3] %vm337, 0.0
      %375 = vst.msk [vmem:[#allocation2 + $0x138] sm:$0xff] %vm334, 0.0
      %376 = vst.msk [vmem:[#allocation2 + $0x140] sm:$0xff] %vm334, 0.0
      %377 = vst.msk [vmem:[#allocation2 + $0x148] sm:$0x3] %vm337, 0.0
      %378 = vst.msk [vmem:[#allocation2 + $0x150] sm:$0xff] %vm334, 0.0
      %379 = vst.msk [vmem:[#allocation2 + $0x158] sm:$0xff] %vm334, 0.0
      %380 = vst.msk [vmem:[#allocation2 + $0x160] sm:$0x3] %vm337, 0.0
      %381 = vst.msk [vmem:[#allocation2 + $0x168] sm:$0xff] %vm334, 0.0
      %382 = vst.msk [vmem:[#allocation2 + $0x170] sm:$0xff] %vm334, 0.0
      %383 = vst.msk [vmem:[#allocation2 + $0x178] sm:$0x3] %vm337, 0.0
      %384 = vst.msk [vmem:[#allocation2 + $0x180] sm:$0xff] %vm334, 0.0
      %385 = vst.msk [vmem:[#allocation2 + $0x188] sm:$0xff] %vm334, 0.0
      %386 = vst.msk [vmem:[#allocation2 + $0x190] sm:$0x3] %vm337, 0.0
      %387 = vst.msk [vmem:[#allocation2 + $0x198] sm:$0xff] %vm334, 0.0
      %388 = vst.msk [vmem:[#allocation2 + $0x1a0] sm:$0xff] %vm334, 0.0
      %389 = vst.msk [vmem:[#allocation2 + $0x1a8] sm:$0x3] %vm337, 0.0
      %v390 = vld [vmem:[%s327] sm:$0xff]
      %v391 = vld [vmem:[%s327 + $0x8] sm:$0xff]
      %v392 = vld [vmem:[%s327 + $0x10] sm:$0xff]
      %v393 = vld [vmem:[%s327 + $0x18] sm:$0xff]
      %v394 = vld [vmem:[%s327 + $0x20] sm:$0xff]
      %v395 = vld [vmem:[%s327 + $0x28] sm:$0xff]
      %v396 = vld [vmem:[%s327 + $0x30] sm:$0xff]
      %v397 = vld [vmem:[%s327 + $0x38] sm:$0xff]
      %v398 = vld [vmem:[%s327 + $0x40] sm:$0xff]
      %v399 = vld [vmem:[%s327 + $0x48] sm:$0xff]
      %v400 = vld [vmem:[%s327 + $0x50] sm:$0xff]
      %v401 = vld [vmem:[%s327 + $0x58] sm:$0xff]
      %v402 = vld [vmem:[%s327 + $0x60] sm:$0xff]
      %v403 = vld [vmem:[%s327 + $0x68] sm:$0xff]
      %v404 = vld [vmem:[%s327 + $0x70] sm:$0xff]
      %v405 = vld [vmem:[%s327 + $0x78] sm:$0xff]
      %v406 = vld [vmem:[%s327 + $0x80] sm:$0xff]
      %v407 = vld [vmem:[%s327 + $0x88] sm:$0xff]
      %v408 = vld [vmem:[%s327 + $0x90] sm:$0xff]
      %v409 = vld [vmem:[%s327 + $0x98] sm:$0xff]
      %v410 = vld [vmem:[%s327 + $0xa0] sm:$0xff]
      %v411 = vld [vmem:[%s327 + $0xa8] sm:$0xff]
      %v412 = vld [vmem:[%s327 + $0xb0] sm:$0xff]
      %v413 = vld [vmem:[%s327 + $0xb8] sm:$0xff]
      %v414 = vld [vmem:[%s327 + $0xc0] sm:$0xff]
      %v415 = vld [vmem:[%s327 + $0xc8] sm:$0xff]
      %v416 = vld [vmem:[%s327 + $0xd0] sm:$0xff]
      %v417 = vld [vmem:[%s327 + $0xd8] sm:$0xff]
      %v418 = vld [vmem:[%s327 + $0xe0] sm:$0xff]
      %v419 = vld [vmem:[%s327 + $0xe8] sm:$0xff]
      %v420 = vld [vmem:[%s327 + $0xf0] sm:$0xff]
      %v421 = vld [vmem:[%s327 + $0xf8] sm:$0xff]
      %s422 = scalar_lea.vmem [#allocation2], 24
      %423 = vst.msk [vmem:[%s422 + $0x1] sm:$0xff] %vm334, %v390
      %424 = vst.msk [vmem:[%s422 + $0x9] sm:$0xff] %vm334, %v391
      %425 = vst.msk [vmem:[%s422 + $0x19] sm:$0xff] %vm334, %v392
      %426 = vst.msk [vmem:[%s422 + $0x21] sm:$0xff] %vm334, %v393
      %427 = vst.msk [vmem:[%s422 + $0x31] sm:$0xff] %vm334, %v394
      %428 = vst.msk [vmem:[%s422 + $0x39] sm:$0xff] %vm334, %v395
      %429 = vst.msk [vmem:[%s422 + $0x49] sm:$0xff] %vm334, %v396
      %430 = vst.msk [vmem:[%s422 + $0x51] sm:$0xff] %vm334, %v397
      %431 = vst.msk [vmem:[%s422 + $0x61] sm:$0xff] %vm334, %v398
      %432 = vst.msk [vmem:[%s422 + $0x69] sm:$0xff] %vm334, %v399
      %433 = vst.msk [vmem:[%s422 + $0x79] sm:$0xff] %vm334, %v400
      %434 = vst.msk [vmem:[%s422 + $0x81] sm:$0xff] %vm334, %v401
      %435 = vst.msk [vmem:[%s422 + $0x91] sm:$0xff] %vm334, %v402
      %436 = vst.msk [vmem:[%s422 + $0x99] sm:$0xff] %vm334, %v403
      %437 = vst.msk [vmem:[%s422 + $0xa9] sm:$0xff] %vm334, %v404
      %438 = vst.msk [vmem:[%s422 + $0xb1] sm:$0xff] %vm334, %v405
      %439 = vst.msk [vmem:[%s422 + $0xc1] sm:$0xff] %vm334, %v406
      %440 = vst.msk [vmem:[%s422 + $0xc9] sm:$0xff] %vm334, %v407
      %441 = vst.msk [vmem:[%s422 + $0xd9] sm:$0xff] %vm334, %v408
      %442 = vst.msk [vmem:[%s422 + $0xe1] sm:$0xff] %vm334, %v409
      %443 = vst.msk [vmem:[%s422 + $0xf1] sm:$0xff] %vm334, %v410
      %444 = vst.msk [vmem:[%s422 + $0xf9] sm:$0xff] %vm334, %v411
      %445 = vst.msk [vmem:[%s422 + $0x109] sm:$0xff] %vm334, %v412
      %446 = vst.msk [vmem:[%s422 + $0x111] sm:$0xff] %vm334, %v413
      %447 = vst.msk [vmem:[%s422 + $0x121] sm:$0xff] %vm334, %v414
      %448 = vst.msk [vmem:[%s422 + $0x129] sm:$0xff] %vm334, %v415
      %449 = vst.msk [vmem:[%s422 + $0x139] sm:$0xff] %vm334, %v416
      %450 = vst.msk [vmem:[%s422 + $0x141] sm:$0xff] %vm334, %v417
      %451 = vst.msk [vmem:[%s422 + $0x151] sm:$0xff] %vm334, %v418
      %452 = vst.msk [vmem:[%s422 + $0x159] sm:$0xff] %vm334, %v419
      %453 = vst.msk [vmem:[%s422 + $0x169] sm:$0xff] %vm334, %v420
      %454 = vst.msk [vmem:[%s422 + $0x171] sm:$0xff] %vm334, %v421
      %v455 = vld [vmem:[#allocation2] sm:$0xff]
      %v456 = vld [vmem:[#allocation2 + $0x8] sm:$0xff]
      %v457 = vld [vmem:[#allocation2 + $0x18] sm:$0xff]
      %v458 = vld [vmem:[#allocation2 + $0x20] sm:$0xff]
      %v459 = vld [vmem:[#allocation2 + $0x30] sm:$0xff]
      %v460 = vld [vmem:[#allocation2 + $0x38] sm:$0xff]
      %v461 = vld [vmem:[#allocation2 + $0x48] sm:$0xff]
      %v462 = vld [vmem:[#allocation2 + $0x50] sm:$0xff]
      %v463 = vld [vmem:[#allocation2 + $0x60] sm:$0xff]
      %v464 = vld [vmem:[#allocation2 + $0x68] sm:$0xff]
      %v465 = vld [vmem:[#allocation2 + $0x78] sm:$0xff]
      %v466 = vld [vmem:[#allocation2 + $0x80] sm:$0xff]
      %v467 = vld [vmem:[#allocation2 + $0x90] sm:$0xff]
      %v468 = vld [vmem:[#allocation2 + $0x98] sm:$0xff]
      %v469 = vld [vmem:[#allocation2 + $0xa8] sm:$0xff]
      %v470 = vld [vmem:[#allocation2 + $0xb0] sm:$0xff]
      %v471 = vld [vmem:[#allocation2 + $0xc0] sm:$0xff]
      %v472 = vld [vmem:[#allocation2 + $0xc8] sm:$0xff]
      %v473 = vld [vmem:[#allocation2 + $0xd8] sm:$0xff]
      %v474 = vld [vmem:[#allocation2 + $0xe0] sm:$0xff]
      %v475 = vld [vmem:[#allocation2 + $0xf0] sm:$0xff]
      %v476 = vld [vmem:[#allocation2 + $0xf8] sm:$0xff]
      %v477 = vld [vmem:[#allocation2 + $0x108] sm:$0xff]
      %v478 = vld [vmem:[#allocation2 + $0x110] sm:$0xff]
      %v479 = vld [vmem:[#allocation2 + $0x120] sm:$0xff]
      %v480 = vld [vmem:[#allocation2 + $0x128] sm:$0xff]
      %v481 = vld [vmem:[#allocation2 + $0x138] sm:$0xff]
      %v482 = vld [vmem:[#allocation2 + $0x140] sm:$0xff]
      %v483 = vld [vmem:[#allocation2 + $0x150] sm:$0xff]
      %v484 = vld [vmem:[#allocation2 + $0x158] sm:$0xff]
      %v485 = vld [vmem:[#allocation2 + $0x168] sm:$0xff]
      %v486 = vld [vmem:[#allocation2 + $0x170] sm:$0xff]
      %v487 = vpack.c.bf16 %v455, %v455
      %v488 = vpack.c.bf16 %v456, %v456
      %v489 = vpack.c.bf16 %v457, %v457
      %v490 = vpack.c.bf16 %v458, %v458
      %v491 = vpack.c.bf16 %v459, %v459
      %v492 = vpack.c.bf16 %v460, %v460
      %v493 = vpack.c.bf16 %v461, %v461
      %v494 = vpack.c.bf16 %v462, %v462
      %v495 = vpack.c.bf16 %v463, %v463
      %v496 = vpack.c.bf16 %v464, %v464
      %v497 = vpack.c.bf16 %v465, %v465
      %v498 = vpack.c.bf16 %v466, %v466
      %v499 = vpack.c.bf16 %v467, %v467
      %v500 = vpack.c.bf16 %v468, %v468
      %v501 = vpack.c.bf16 %v469, %v469
      %v502 = vpack.c.bf16 %v470, %v470
      %v503 = vpack.c.bf16 %v471, %v471
      %v504 = vpack.c.bf16 %v472, %v472
      %v505 = vpack.c.bf16 %v473, %v473
      %v506 = vpack.c.bf16 %v474, %v474
      %v507 = vpack.c.bf16 %v475, %v475
      %v508 = vpack.c.bf16 %v476, %v476
      %v509 = vpack.c.bf16 %v477, %v477
      %v510 = vpack.c.bf16 %v478, %v478
      %v511 = vpack.c.bf16 %v479, %v479
      %v512 = vpack.c.bf16 %v480, %v480
      %v513 = vpack.c.bf16 %v481, %v481
      %v514 = vpack.c.bf16 %v482, %v482
      %v515 = vpack.c.bf16 %v483, %v483
      %v516 = vpack.c.bf16 %v484, %v484
      %v517 = vpack.c.bf16 %v485, %v485
      %v518 = vpack.c.bf16 %v486, %v486
      %vm519 = vcmask 519168
      %520 = vst.msk [vmem:[#allocation3] sm:$0xf] %vm519, %v487
      %521 = vst.msk [vmem:[#allocation3 + $0x14] sm:$0xf] %vm519, %v488
      %522 = vst.msk [vmem:[#allocation3 + $0x28] sm:$0xf] %vm519, %v489
      %523 = vst.msk [vmem:[#allocation3 + $0x3c] sm:$0xf] %vm519, %v490
      %524 = vst.msk [vmem:[#allocation3 + $0x50] sm:$0xf] %vm519, %v491
      %525 = vst.msk [vmem:[#allocation3 + $0x64] sm:$0xf] %vm519, %v492
      %526 = vst.msk [vmem:[#allocation3 + $0x78] sm:$0xf] %vm519, %v493
      %527 = vst.msk [vmem:[#allocation3 + $0x8c] sm:$0xf] %vm519, %v494
      %528 = vst.msk [vmem:[#allocation3 + $0xa0] sm:$0xf] %vm519, %v495
      %529 = vst.msk [vmem:[#allocation3 + $0xb4] sm:$0xf] %vm519, %v496
      %530 = vst.msk [vmem:[#allocation3 + $0xc8] sm:$0xf] %vm519, %v497
      %531 = vst.msk [vmem:[#allocation3 + $0xdc] sm:$0xf] %vm519, %v498
      %532 = vst.msk [vmem:[#allocation3 + $0xf0] sm:$0xf] %vm519, %v499
      %533 = vst.msk [vmem:[#allocation3 + $0x104] sm:$0xf] %vm519, %v500
      %534 = vst.msk [vmem:[#allocation3 + $0x118] sm:$0xf] %vm519, %v501
      %535 = vst.msk [vmem:[#allocation3 + $0x12c] sm:$0xf] %vm519, %v502
      %536 = vst.msk [vmem:[#allocation3 + $0x140] sm:$0xf] %vm519, %v503
      %537 = vst.msk [vmem:[#allocation3 + $0x154] sm:$0xf] %vm519, %v504
      %538 = vst.msk [vmem:[#allocation3 + $0x168] sm:$0xf] %vm519, %v505
      %539 = vst.msk [vmem:[#allocation3 + $0x17c] sm:$0xf] %vm519, %v506
      %540 = vst.msk [vmem:[#allocation3 + $0x190] sm:$0xf] %vm519, %v507
      %541 = vst.msk [vmem:[#allocation3 + $0x1a4] sm:$0xf] %vm519, %v508
      %542 = vst.msk [vmem:[#allocation3 + $0x1b8] sm:$0xf] %vm519, %v509
      %543 = vst.msk [vmem:[#allocation3 + $0x1cc] sm:$0xf] %vm519, %v510
      %544 = vst.msk [vmem:[#allocation3 + $0x1e0] sm:$0xf] %vm519, %v511
      %545 = vst.msk [vmem:[#allocation3 + $0x1f4] sm:$0xf] %vm519, %v512
      %546 = vst.msk [vmem:[#allocation3 + $0x208] sm:$0xf] %vm519, %v513
      %547 = vst.msk [vmem:[#allocation3 + $0x21c] sm:$0xf] %vm519, %v514
      %548 = vst.msk [vmem:[#allocation3 + $0x230] sm:$0xf] %vm519, %v515
      %549 = vst.msk [vmem:[#allocation3 + $0x244] sm:$0xf] %vm519, %v516
      %550 = vst.msk [vmem:[#allocation3 + $0x258] sm:$0xf] %vm519, %v517
      %551 = vst.msk [vmem:[#allocation3 + $0x26c] sm:$0xf] %vm519, %v518
      %v552 = vld [vmem:[#allocation2 + $0x1] sm:$0xff]
      %v553 = vld [vmem:[#allocation2 + $0x9] sm:$0xff]
      %v554 = vld [vmem:[#allocation2 + $0x19] sm:$0xff]
      %v555 = vld [vmem:[#allocation2 + $0x21] sm:$0xff]
      %v556 = vld [vmem:[#allocation2 + $0x31] sm:$0xff]
      %v557 = vld [vmem:[#allocation2 + $0x39] sm:$0xff]
      %v558 = vld [vmem:[#allocation2 + $0x49] sm:$0xff]
      %v559 = vld [vmem:[#allocation2 + $0x51] sm:$0xff]
      %v560 = vld [vmem:[#allocation2 + $0x61] sm:$0xff]
      %v561 = vld [vmem:[#allocation2 + $0x69] sm:$0xff]
      %v562 = vld [vmem:[#allocation2 + $0x79] sm:$0xff]
      %v563 = vld [vmem:[#allocation2 + $0x81] sm:$0xff]
      %v564 = vld [vmem:[#allocation2 + $0x91] sm:$0xff]
      %v565 = vld [vmem:[#allocation2 + $0x99] sm:$0xff]
      %v566 = vld [vmem:[#allocation2 + $0xa9] sm:$0xff]
      %v567 = vld [vmem:[#allocation2 + $0xb1] sm:$0xff]
      %v568 = vld [vmem:[#allocation2 + $0xc1] sm:$0xff]
      %v569 = vld [vmem:[#allocation2 + $0xc9] sm:$0xff]
      %v570 = vld [vmem:[#allocation2 + $0xd9] sm:$0xff]
      %v571 = vld [vmem:[#allocation2 + $0xe1] sm:$0xff]
      %v572 = vld [vmem:[#allocation2 + $0xf1] sm:$0xff]
      %v573 = vld [vmem:[#allocation2 + $0xf9] sm:$0xff]
      %v574 = vld [vmem:[#allocation2 + $0x109] sm:$0xff]
      %v575 = vld [vmem:[#allocation2 + $0x111] sm:$0xff]
      %v576 = vld [vmem:[#allocation2 + $0x121] sm:$0xff]
      %v577 = vld [vmem:[#allocation2 + $0x129] sm:$0xff]
      %v578 = vld [vmem:[#allocation2 + $0x139] sm:$0xff]
      %v579 = vld [vmem:[#allocation2 + $0x141] sm:$0xff]
      %v580 = vld [vmem:[#allocation2 + $0x151] sm:$0xff]
      %v581 = vld [vmem:[#allocation2 + $0x159] sm:$0xff]
      %v582 = vld [vmem:[#allocation2 + $0x169] sm:$0xff]
      %v583 = vld [vmem:[#allocation2 + $0x171] sm:$0xff]
      %v584 = vpack.c.bf16 %v552, %v552
      %v585 = vpack.c.bf16 %v553, %v553
      %v586 = vpack.c.bf16 %v554, %v554
      %v587 = vpack.c.bf16 %v555, %v555
      %v588 = vpack.c.bf16 %v556, %v556
      %v589 = vpack.c.bf16 %v557, %v557
      %v590 = vpack.c.bf16 %v558, %v558
      %v591 = vpack.c.bf16 %v559, %v559
      %v592 = vpack.c.bf16 %v560, %v560
      %v593 = vpack.c.bf16 %v561, %v561
      %v594 = vpack.c.bf16 %v562, %v562
      %v595 = vpack.c.bf16 %v563, %v563
      %v596 = vpack.c.bf16 %v564, %v564
      %v597 = vpack.c.bf16 %v565, %v565
      %v598 = vpack.c.bf16 %v566, %v566
      %v599 = vpack.c.bf16 %v567, %v567
      %v600 = vpack.c.bf16 %v568, %v568
      %v601 = vpack.c.bf16 %v569, %v569
      %v602 = vpack.c.bf16 %v570, %v570
      %v603 = vpack.c.bf16 %v571, %v571
      %v604 = vpack.c.bf16 %v572, %v572
      %v605 = vpack.c.bf16 %v573, %v573
      %v606 = vpack.c.bf16 %v574, %v574
      %v607 = vpack.c.bf16 %v575, %v575
      %v608 = vpack.c.bf16 %v576, %v576
      %v609 = vpack.c.bf16 %v577, %v577
      %v610 = vpack.c.bf16 %v578, %v578
      %v611 = vpack.c.bf16 %v579, %v579
      %v612 = vpack.c.bf16 %v580, %v580
      %v613 = vpack.c.bf16 %v581, %v581
      %v614 = vpack.c.bf16 %v582, %v582
      %v615 = vpack.c.bf16 %v583, %v583
      %648 = vrot.lane.b32.xlu0 %v584, 64
      %v649 = vpop.permute.xlu0 %648
      %650 = vrot.lane.b32.xlu0 %v585, 64
      %v651 = vpop.permute.xlu0 %650
      %652 = vrot.lane.b32.xlu0 %v586, 64
      %v653 = vpop.permute.xlu0 %652
      %654 = vrot.lane.b32.xlu0 %v587, 64
      %v655 = vpop.permute.xlu0 %654
      %656 = vrot.lane.b32.xlu0 %v588, 64
      %v657 = vpop.permute.xlu0 %656
      %658 = vrot.lane.b32.xlu0 %v589, 64
      %v659 = vpop.permute.xlu0 %658
      %660 = vrot.lane.b32.xlu0 %v590, 64
      %v661 = vpop.permute.xlu0 %660
      %662 = vrot.lane.b32.xlu0 %v591, 64
      %v663 = vpop.permute.xlu0 %662
      %664 = vrot.lane.b32.xlu0 %v592, 64
      %v665 = vpop.permute.xlu0 %664
      %666 = vrot.lane.b32.xlu0 %v593, 64
      %v667 = vpop.permute.xlu0 %666
      %668 = vrot.lane.b32.xlu0 %v594, 64
      %v669 = vpop.permute.xlu0 %668
      %670 = vrot.lane.b32.xlu0 %v595, 64
      %v671 = vpop.permute.xlu0 %670
      %672 = vrot.lane.b32.xlu0 %v596, 64
      %v673 = vpop.permute.xlu0 %672
      %674 = vrot.lane.b32.xlu0 %v597, 64
      %v675 = vpop.permute.xlu0 %674
      %676 = vrot.lane.b32.xlu0 %v598, 64
      %v677 = vpop.permute.xlu0 %676
      %678 = vrot.lane.b32.xlu0 %v599, 64
      %v679 = vpop.permute.xlu0 %678
      %680 = vrot.lane.b32.xlu0 %v600, 64
      %v681 = vpop.permute.xlu0 %680
      %682 = vrot.lane.b32.xlu0 %v601, 64
      %v683 = vpop.permute.xlu0 %682
      %684 = vrot.lane.b32.xlu0 %v602, 64
      %v685 = vpop.permute.xlu0 %684
      %686 = vrot.lane.b32.xlu0 %v603, 64
      %v687 = vpop.permute.xlu0 %686
      %688 = vrot.lane.b32.xlu0 %v604, 64
      %v689 = vpop.permute.xlu0 %688
      %690 = vrot.lane.b32.xlu0 %v605, 64
      %v691 = vpop.permute.xlu0 %690
      %692 = vrot.lane.b32.xlu0 %v606, 64
      %v693 = vpop.permute.xlu0 %692
      %694 = vrot.lane.b32.xlu0 %v607, 64
      %v695 = vpop.permute.xlu0 %694
      %696 = vrot.lane.b32.xlu0 %v608, 64
      %v697 = vpop.permute.xlu0 %696
      %698 = vrot.lane.b32.xlu0 %v609, 64
      %v699 = vpop.permute.xlu0 %698
      %700 = vrot.lane.b32.xlu0 %v610, 64
      %v701 = vpop.permute.xlu0 %700
      %702 = vrot.lane.b32.xlu0 %v611, 64
      %v703 = vpop.permute.xlu0 %702
      %704 = vrot.lane.b32.xlu0 %v612, 64
      %v705 = vpop.permute.xlu0 %704
      %706 = vrot.lane.b32.xlu0 %v613, 64
      %v707 = vpop.permute.xlu0 %706
      %708 = vrot.lane.b32.xlu0 %v614, 64
      %v709 = vpop.permute.xlu0 %708
      %710 = vrot.lane.b32.xlu0 %v615, 64
      %v711 = vpop.permute.xlu0 %710
      %vm744 = vcmask 1043968
      %745 = vst.msk [vmem:[#allocation3] sm:$0xf] %vm744, %v649
      %746 = vst.msk [vmem:[#allocation3 + $0x14] sm:$0xf] %vm744, %v651
      %747 = vst.msk [vmem:[#allocation3 + $0x28] sm:$0xf] %vm744, %v653
      %748 = vst.msk [vmem:[#allocation3 + $0x3c] sm:$0xf] %vm744, %v655
      %749 = vst.msk [vmem:[#allocation3 + $0x50] sm:$0xf] %vm744, %v657
      %750 = vst.msk [vmem:[#allocation3 + $0x64] sm:$0xf] %vm744, %v659
      %751 = vst.msk [vmem:[#allocation3 + $0x78] sm:$0xf] %vm744, %v661
      %752 = vst.msk [vmem:[#allocation3 + $0x8c] sm:$0xf] %vm744, %v663
      %753 = vst.msk [vmem:[#allocation3 + $0xa0] sm:$0xf] %vm744, %v665
      %754 = vst.msk [vmem:[#allocation3 + $0xb4] sm:$0xf] %vm744, %v667
      %755 = vst.msk [vmem:[#allocation3 + $0xc8] sm:$0xf] %vm744, %v669
      %756 = vst.msk [vmem:[#allocation3 + $0xdc] sm:$0xf] %vm744, %v671
      %757 = vst.msk [vmem:[#allocation3 + $0xf0] sm:$0xf] %vm744, %v673
      %758 = vst.msk [vmem:[#allocation3 + $0x104] sm:$0xf] %vm744, %v675
      %759 = vst.msk [vmem:[#allocation3 + $0x118] sm:$0xf] %vm744, %v677
      %760 = vst.msk [vmem:[#allocation3 + $0x12c] sm:$0xf] %vm744, %v679
      %761 = vst.msk [vmem:[#allocation3 + $0x140] sm:$0xf] %vm744, %v681
      %762 = vst.msk [vmem:[#allocation3 + $0x154] sm:$0xf] %vm744, %v683
      %763 = vst.msk [vmem:[#allocation3 + $0x168] sm:$0xf] %vm744, %v685
      %764 = vst.msk [vmem:[#allocation3 + $0x17c] sm:$0xf] %vm744, %v687
      %765 = vst.msk [vmem:[#allocation3 + $0x190] sm:$0xf] %vm744, %v689
      %766 = vst.msk [vmem:[#allocation3 + $0x1a4] sm:$0xf] %vm744, %v691
      %767 = vst.msk [vmem:[#allocation3 + $0x1b8] sm:$0xf] %vm744, %v693
      %768 = vst.msk [vmem:[#allocation3 + $0x1cc] sm:$0xf] %vm744, %v695
      %769 = vst.msk [vmem:[#allocation3 + $0x1e0] sm:$0xf] %vm744, %v697
      %770 = vst.msk [vmem:[#allocation3 + $0x1f4] sm:$0xf] %vm744, %v699
      %771 = vst.msk [vmem:[#allocation3 + $0x208] sm:$0xf] %vm744, %v701
      %772 = vst.msk [vmem:[#allocation3 + $0x21c] sm:$0xf] %vm744, %v703
      %773 = vst.msk [vmem:[#allocation3 + $0x230] sm:$0xf] %vm744, %v705
      %774 = vst.msk [vmem:[#allocation3 + $0x244] sm:$0xf] %vm744, %v707
      %775 = vst.msk [vmem:[#allocation3 + $0x258] sm:$0xf] %vm744, %v709
      %776 = vst.msk [vmem:[#allocation3 + $0x26c] sm:$0xf] %vm744, %v711
      %v777 = vld [vmem:[#allocation2 + $0x2] sm:$0xff]
      %v778 = vld [vmem:[#allocation2 + $0xa] sm:$0xff]
      %v779 = vld [vmem:[#allocation2 + $0x1a] sm:$0xff]
      %v780 = vld [vmem:[#allocation2 + $0x22] sm:$0xff]
      %v781 = vld [vmem:[#allocation2 + $0x32] sm:$0xff]
      %v782 = vld [vmem:[#allocation2 + $0x3a] sm:$0xff]
      %v783 = vld [vmem:[#allocation2 + $0x4a] sm:$0xff]
      %v784 = vld [vmem:[#allocation2 + $0x52] sm:$0xff]
      %v785 = vld [vmem:[#allocation2 + $0x62] sm:$0xff]
      %v786 = vld [vmem:[#allocation2 + $0x6a] sm:$0xff]
      %v787 = vld [vmem:[#allocation2 + $0x7a] sm:$0xff]
      %v788 = vld [vmem:[#allocation2 + $0x82] sm:$0xff]
      %v789 = vld [vmem:[#allocation2 + $0x92] sm:$0xff]
      %v790 = vld [vmem:[#allocation2 + $0x9a] sm:$0xff]
      %v791 = vld [vmem:[#allocation2 + $0xaa] sm:$0xff]
      %v792 = vld [vmem:[#allocation2 + $0xb2] sm:$0xff]
      %v793 = vld [vmem:[#allocation2 + $0xc2] sm:$0xff]
      %v794 = vld [vmem:[#allocation2 + $0xca] sm:$0xff]
      %v795 = vld [vmem:[#allocation2 + $0xda] sm:$0xff]
      %v796 = vld [vmem:[#allocation2 + $0xe2] sm:$0xff]
      %v797 = vld [vmem:[#allocation2 + $0xf2] sm:$0xff]
      %v798 = vld [vmem:[#allocation2 + $0xfa] sm:$0xff]
      %v799 = vld [vmem:[#allocation2 + $0x10a] sm:$0xff]
      %v800 = vld [vmem:[#allocation2 + $0x112] sm:$0xff]
      %v801 = vld [vmem:[#allocation2 + $0x122] sm:$0xff]
      %v802 = vld [vmem:[#allocation2 + $0x12a] sm:$0xff]
      %v803 = vld [vmem:[#allocation2 + $0x13a] sm:$0xff]
      %v804 = vld [vmem:[#allocation2 + $0x142] sm:$0xff]
      %v805 = vld [vmem:[#allocation2 + $0x152] sm:$0xff]
      %v806 = vld [vmem:[#allocation2 + $0x15a] sm:$0xff]
      %v807 = vld [vmem:[#allocation2 + $0x16a] sm:$0xff]
      %v808 = vld [vmem:[#allocation2 + $0x172] sm:$0xff]
      %v809 = vpack.c.bf16 %v777, %v777
      %v810 = vpack.c.bf16 %v778, %v778
      %v811 = vpack.c.bf16 %v779, %v779
      %v812 = vpack.c.bf16 %v780, %v780
      %v813 = vpack.c.bf16 %v781, %v781
      %v814 = vpack.c.bf16 %v782, %v782
      %v815 = vpack.c.bf16 %v783, %v783
      %v816 = vpack.c.bf16 %v784, %v784
      %v817 = vpack.c.bf16 %v785, %v785
      %v818 = vpack.c.bf16 %v786, %v786
      %v819 = vpack.c.bf16 %v787, %v787
      %v820 = vpack.c.bf16 %v788, %v788
      %v821 = vpack.c.bf16 %v789, %v789
      %v822 = vpack.c.bf16 %v790, %v790
      %v823 = vpack.c.bf16 %v791, %v791
      %v824 = vpack.c.bf16 %v792, %v792
      %v825 = vpack.c.bf16 %v793, %v793
      %v826 = vpack.c.bf16 %v794, %v794
      %v827 = vpack.c.bf16 %v795, %v795
      %v828 = vpack.c.bf16 %v796, %v796
      %v829 = vpack.c.bf16 %v797, %v797
      %v830 = vpack.c.bf16 %v798, %v798
      %v831 = vpack.c.bf16 %v799, %v799
      %v832 = vpack.c.bf16 %v800, %v800
      %v833 = vpack.c.bf16 %v801, %v801
      %v834 = vpack.c.bf16 %v802, %v802
      %v835 = vpack.c.bf16 %v803, %v803
      %v836 = vpack.c.bf16 %v804, %v804
      %v837 = vpack.c.bf16 %v805, %v805
      %v838 = vpack.c.bf16 %v806, %v806
      %v839 = vpack.c.bf16 %v807, %v807
      %v840 = vpack.c.bf16 %v808, %v808
      %841 = vst.msk [vmem:[#allocation3 + $0x4] sm:$0xf] %vm519, %v809
      %842 = vst.msk [vmem:[#allocation3 + $0x18] sm:$0xf] %vm519, %v810
      %843 = vst.msk [vmem:[#allocation3 + $0x2c] sm:$0xf] %vm519, %v811
      %844 = vst.msk [vmem:[#allocation3 + $0x40] sm:$0xf] %vm519, %v812
      %845 = vst.msk [vmem:[#allocation3 + $0x54] sm:$0xf] %vm519, %v813
      %846 = vst.msk [vmem:[#allocation3 + $0x68] sm:$0xf] %vm519, %v814
      %847 = vst.msk [vmem:[#allocation3 + $0x7c] sm:$0xf] %vm519, %v815
      %848 = vst.msk [vmem:[#allocation3 + $0x90] sm:$0xf] %vm519, %v816
      %849 = vst.msk [vmem:[#allocation3 + $0xa4] sm:$0xf] %vm519, %v817
      %850 = vst.msk [vmem:[#allocation3 + $0xb8] sm:$0xf] %vm519, %v818
      %851 = vst.msk [vmem:[#allocation3 + $0xcc] sm:$0xf] %vm519, %v819
      %852 = vst.msk [vmem:[#allocation3 + $0xe0] sm:$0xf] %vm519, %v820
      %853 = vst.msk [vmem:[#allocation3 + $0xf4] sm:$0xf] %vm519, %v821
      %854 = vst.msk [vmem:[#allocation3 + $0x108] sm:$0xf] %vm519, %v822
      %855 = vst.msk [vmem:[#allocation3 + $0x11c] sm:$0xf] %vm519, %v823
      %856 = vst.msk [vmem:[#allocation3 + $0x130] sm:$0xf] %vm519, %v824
      %857 = vst.msk [vmem:[#allocation3 + $0x144] sm:$0xf] %vm519, %v825
      %858 = vst.msk [vmem:[#allocation3 + $0x158] sm:$0xf] %vm519, %v826
      %859 = vst.msk [vmem:[#allocation3 + $0x16c] sm:$0xf] %vm519, %v827
      %860 = vst.msk [vmem:[#allocation3 + $0x180] sm:$0xf] %vm519, %v828
      %861 = vst.msk [vmem:[#allocation3 + $0x194] sm:$0xf] %vm519, %v829
      %862 = vst.msk [vmem:[#allocation3 + $0x1a8] sm:$0xf] %vm519, %v830
      %863 = vst.msk [vmem:[#allocation3 + $0x1bc] sm:$0xf] %vm519, %v831
      %864 = vst.msk [vmem:[#allocation3 + $0x1d0] sm:$0xf] %vm519, %v832
      %865 = vst.msk [vmem:[#allocation3 + $0x1e4] sm:$0xf] %vm519, %v833
      %866 = vst.msk [vmem:[#allocation3 + $0x1f8] sm:$0xf] %vm519, %v834
      %867 = vst.msk [vmem:[#allocation3 + $0x20c] sm:$0xf] %vm519, %v835
      %868 = vst.msk [vmem:[#allocation3 + $0x220] sm:$0xf] %vm519, %v836
      %869 = vst.msk [vmem:[#allocation3 + $0x234] sm:$0xf] %vm519, %v837
      %870 = vst.msk [vmem:[#allocation3 + $0x248] sm:$0xf] %vm519, %v838
      %871 = vst.msk [vmem:[#allocation3 + $0x25c] sm:$0xf] %vm519, %v839
      %872 = vst.msk [vmem:[#allocation3 + $0x270] sm:$0xf] %vm519, %v840
      %v873 = vld [vmem:[%s422] sm:$0xff]
      %v874 = vld [vmem:[%s422 + $0x8] sm:$0xff]
      %v875 = vld [vmem:[%s422 + $0x18] sm:$0xff]
      %v876 = vld [vmem:[%s422 + $0x20] sm:$0xff]
      %v877 = vld [vmem:[%s422 + $0x30] sm:$0xff]
      %v878 = vld [vmem:[%s422 + $0x38] sm:$0xff]
      %v879 = vld [vmem:[%s422 + $0x48] sm:$0xff]
      %v880 = vld [vmem:[%s422 + $0x50] sm:$0xff]
      %v881 = vld [vmem:[%s422 + $0x60] sm:$0xff]
      %v882 = vld [vmem:[%s422 + $0x68] sm:$0xff]
      %v883 = vld [vmem:[%s422 + $0x78] sm:$0xff]
      %v884 = vld [vmem:[%s422 + $0x80] sm:$0xff]
      %v885 = vld [vmem:[%s422 + $0x90] sm:$0xff]
      %v886 = vld [vmem:[%s422 + $0x98] sm:$0xff]
      %v887 = vld [vmem:[%s422 + $0xa8] sm:$0xff]
      %v888 = vld [vmem:[%s422 + $0xb0] sm:$0xff]
      %v889 = vld [vmem:[%s422 + $0xc0] sm:$0xff]
      %v890 = vld [vmem:[%s422 + $0xc8] sm:$0xff]
      %v891 = vld [vmem:[%s422 + $0xd8] sm:$0xff]
      %v892 = vld [vmem:[%s422 + $0xe0] sm:$0xff]
      %v893 = vld [vmem:[%s422 + $0xf0] sm:$0xff]
      %v894 = vld [vmem:[%s422 + $0xf8] sm:$0xff]
      %v895 = vld [vmem:[%s422 + $0x108] sm:$0xff]
      %v896 = vld [vmem:[%s422 + $0x110] sm:$0xff]
      %v897 = vld [vmem:[%s422 + $0x120] sm:$0xff]
      %v898 = vld [vmem:[%s422 + $0x128] sm:$0xff]
      %v899 = vld [vmem:[%s422 + $0x138] sm:$0xff]
      %v900 = vld [vmem:[%s422 + $0x140] sm:$0xff]
      %v901 = vld [vmem:[%s422 + $0x150] sm:$0xff]
      %v902 = vld [vmem:[%s422 + $0x158] sm:$0xff]
      %v903 = vld [vmem:[%s422 + $0x168] sm:$0xff]
      %v904 = vld [vmem:[%s422 + $0x170] sm:$0xff]
      %v905 = vpack.c.bf16 %v873, %v873
      %v906 = vpack.c.bf16 %v874, %v874
      %v907 = vpack.c.bf16 %v875, %v875
      %v908 = vpack.c.bf16 %v876, %v876
      %v909 = vpack.c.bf16 %v877, %v877
      %v910 = vpack.c.bf16 %v878, %v878
      %v911 = vpack.c.bf16 %v879, %v879
      %v912 = vpack.c.bf16 %v880, %v880
      %v913 = vpack.c.bf16 %v881, %v881
      %v914 = vpack.c.bf16 %v882, %v882
      %v915 = vpack.c.bf16 %v883, %v883
      %v916 = vpack.c.bf16 %v884, %v884
      %v917 = vpack.c.bf16 %v885, %v885
      %v918 = vpack.c.bf16 %v886, %v886
      %v919 = vpack.c.bf16 %v887, %v887
      %v920 = vpack.c.bf16 %v888, %v888
      %v921 = vpack.c.bf16 %v889, %v889
      %v922 = vpack.c.bf16 %v890, %v890
      %v923 = vpack.c.bf16 %v891, %v891
      %v924 = vpack.c.bf16 %v892, %v892
      %v925 = vpack.c.bf16 %v893, %v893
      %v926 = vpack.c.bf16 %v894, %v894
      %v927 = vpack.c.bf16 %v895, %v895
      %v928 = vpack.c.bf16 %v896, %v896
      %v929 = vpack.c.bf16 %v897, %v897
      %v930 = vpack.c.bf16 %v898, %v898
      %v931 = vpack.c.bf16 %v899, %v899
      %v932 = vpack.c.bf16 %v900, %v900
      %v933 = vpack.c.bf16 %v901, %v901
      %v934 = vpack.c.bf16 %v902, %v902
      %v935 = vpack.c.bf16 %v903, %v903
      %v936 = vpack.c.bf16 %v904, %v904
      %969 = vrot.lane.b32.xlu0 %v905, 64
      %v970 = vpop.permute.xlu0 %969
      %971 = vrot.lane.b32.xlu0 %v906, 64
      %v972 = vpop.permute.xlu0 %971
      %973 = vrot.lane.b32.xlu0 %v907, 64
      %v974 = vpop.permute.xlu0 %973
      %975 = vrot.lane.b32.xlu0 %v908, 64
      %v976 = vpop.permute.xlu0 %975
      %977 = vrot.lane.b32.xlu0 %v909, 64
      %v978 = vpop.permute.xlu0 %977
      %979 = vrot.lane.b32.xlu0 %v910, 64
      %v980 = vpop.permute.xlu0 %979
      %981 = vrot.lane.b32.xlu0 %v911, 64
      %v982 = vpop.permute.xlu0 %981
      %983 = vrot.lane.b32.xlu0 %v912, 64
      %v984 = vpop.permute.xlu0 %983
      %985 = vrot.lane.b32.xlu0 %v913, 64
      %v986 = vpop.permute.xlu0 %985
      %987 = vrot.lane.b32.xlu0 %v914, 64
      %v988 = vpop.permute.xlu0 %987
      %989 = vrot.lane.b32.xlu0 %v915, 64
      %v990 = vpop.permute.xlu0 %989
      %991 = vrot.lane.b32.xlu0 %v916, 64
      %v992 = vpop.permute.xlu0 %991
      %993 = vrot.lane.b32.xlu0 %v917, 64
      %v994 = vpop.permute.xlu0 %993
      %995 = vrot.lane.b32.xlu0 %v918, 64
      %v996 = vpop.permute.xlu0 %995
      %997 = vrot.lane.b32.xlu0 %v919, 64
      %v998 = vpop.permute.xlu0 %997
      %999 = vrot.lane.b32.xlu0 %v920, 64
      %v1000 = vpop.permute.xlu0 %999
      %1001 = vrot.lane.b32.xlu0 %v921, 64
      %v1002 = vpop.permute.xlu0 %1001
      %1003 = vrot.lane.b32.xlu0 %v922, 64
      %v1004 = vpop.permute.xlu0 %1003
      %1005 = vrot.lane.b32.xlu0 %v923, 64
      %v1006 = vpop.permute.xlu0 %1005
      %1007 = vrot.lane.b32.xlu0 %v924, 64
      %v1008 = vpop.permute.xlu0 %1007
      %1009 = vrot.lane.b32.xlu0 %v925, 64
      %v1010 = vpop.permute.xlu0 %1009
      %1011 = vrot.lane.b32.xlu0 %v926, 64
      %v1012 = vpop.permute.xlu0 %1011
      %1013 = vrot.lane.b32.xlu0 %v927, 64
      %v1014 = vpop.permute.xlu0 %1013
      %1015 = vrot.lane.b32.xlu0 %v928, 64
      %v1016 = vpop.permute.xlu0 %1015
      %1017 = vrot.lane.b32.xlu0 %v929, 64
      %v1018 = vpop.permute.xlu0 %1017
      %1019 = vrot.lane.b32.xlu0 %v930, 64
      %v1020 = vpop.permute.xlu0 %1019
      %1021 = vrot.lane.b32.xlu0 %v931, 64
      %v1022 = vpop.permute.xlu0 %1021
      %1023 = vrot.lane.b32.xlu0 %v932, 64
      %v1024 = vpop.permute.xlu0 %1023
      %1025 = vrot.lane.b32.xlu0 %v933, 64
      %v1026 = vpop.permute.xlu0 %1025
      %1027 = vrot.lane.b32.xlu0 %v934, 64
      %v1028 = vpop.permute.xlu0 %1027
      %1029 = vrot.lane.b32.xlu0 %v935, 64
      %v1030 = vpop.permute.xlu0 %1029
      %1031 = vrot.lane.b32.xlu0 %v936, 64
      %v1032 = vpop.permute.xlu0 %1031
      %1065 = vst.msk [vmem:[#allocation3 + $0x4] sm:$0xf] %vm744, %v970
      %1066 = vst.msk [vmem:[#allocation3 + $0x18] sm:$0xf] %vm744, %v972
      %1067 = vst.msk [vmem:[#allocation3 + $0x2c] sm:$0xf] %vm744, %v974
      %1068 = vst.msk [vmem:[#allocation3 + $0x40] sm:$0xf] %vm744, %v976
      %1069 = vst.msk [vmem:[#allocation3 + $0x54] sm:$0xf] %vm744, %v978
      %1070 = vst.msk [vmem:[#allocation3 + $0x68] sm:$0xf] %vm744, %v980
      %1071 = vst.msk [vmem:[#allocation3 + $0x7c] sm:$0xf] %vm744, %v982
      %1072 = vst.msk [vmem:[#allocation3 + $0x90] sm:$0xf] %vm744, %v984
      %1073 = vst.msk [vmem:[#allocation3 + $0xa4] sm:$0xf] %vm744, %v986
      %1074 = vst.msk [vmem:[#allocation3 + $0xb8] sm:$0xf] %vm744, %v988
      %1075 = vst.msk [vmem:[#allocation3 + $0xcc] sm:$0xf] %vm744, %v990
      %1076 = vst.msk [vmem:[#allocation3 + $0xe0] sm:$0xf] %vm744, %v992
      %1077 = vst.msk [vmem:[#allocation3 + $0xf4] sm:$0xf] %vm744, %v994
      %1078 = vst.msk [vmem:[#allocation3 + $0x108] sm:$0xf] %vm744, %v996
      %1079 = vst.msk [vmem:[#allocation3 + $0x11c] sm:$0xf] %vm744, %v998
      %1080 = vst.msk [vmem:[#allocation3 + $0x130] sm:$0xf] %vm744, %v1000
      %1081 = vst.msk [vmem:[#allocation3 + $0x144] sm:$0xf] %vm744, %v1002
      %1082 = vst.msk [vmem:[#allocation3 + $0x158] sm:$0xf] %vm744, %v1004
      %1083 = vst.msk [vmem:[#allocation3 + $0x16c] sm:$0xf] %vm744, %v1006
      %1084 = vst.msk [vmem:[#allocation3 + $0x180] sm:$0xf] %vm744, %v1008
      %1085 = vst.msk [vmem:[#allocation3 + $0x194] sm:$0xf] %vm744, %v1010
      %1086 = vst.msk [vmem:[#allocation3 + $0x1a8] sm:$0xf] %vm744, %v1012
      %1087 = vst.msk [vmem:[#allocation3 + $0x1bc] sm:$0xf] %vm744, %v1014
      %1088 = vst.msk [vmem:[#allocation3 + $0x1d0] sm:$0xf] %vm744, %v1016
      %1089 = vst.msk [vmem:[#allocation3 + $0x1e4] sm:$0xf] %vm744, %v1018
      %1090 = vst.msk [vmem:[#allocation3 + $0x1f8] sm:$0xf] %vm744, %v1020
      %1091 = vst.msk [vmem:[#allocation3 + $0x20c] sm:$0xf] %vm744, %v1022
      %1092 = vst.msk [vmem:[#allocation3 + $0x220] sm:$0xf] %vm744, %v1024
      %1093 = vst.msk [vmem:[#allocation3 + $0x234] sm:$0xf] %vm744, %v1026
      %1094 = vst.msk [vmem:[#allocation3 + $0x248] sm:$0xf] %vm744, %v1028
      %1095 = vst.msk [vmem:[#allocation3 + $0x25c] sm:$0xf] %vm744, %v1030
      %1096 = vst.msk [vmem:[#allocation3 + $0x270] sm:$0xf] %vm744, %v1032
      %v1097 = vld [vmem:[%s422 + $0x1] sm:$0xff]
      %v1098 = vld [vmem:[%s422 + $0x9] sm:$0xff]
      %v1099 = vld [vmem:[%s422 + $0x19] sm:$0xff]
      %v1100 = vld [vmem:[%s422 + $0x21] sm:$0xff]
      %v1101 = vld [vmem:[%s422 + $0x31] sm:$0xff]
      %v1102 = vld [vmem:[%s422 + $0x39] sm:$0xff]
      %v1103 = vld [vmem:[%s422 + $0x49] sm:$0xff]
      %v1104 = vld [vmem:[%s422 + $0x51] sm:$0xff]
      %v1105 = vld [vmem:[%s422 + $0x61] sm:$0xff]
      %v1106 = vld [vmem:[%s422 + $0x69] sm:$0xff]
      %v1107 = vld [vmem:[%s422 + $0x79] sm:$0xff]
      %v1108 = vld [vmem:[%s422 + $0x81] sm:$0xff]
      %v1109 = vld [vmem:[%s422 + $0x91] sm:$0xff]
      %v1110 = vld [vmem:[%s422 + $0x99] sm:$0xff]
      %v1111 = vld [vmem:[%s422 + $0xa9] sm:$0xff]
      %v1112 = vld [vmem:[%s422 + $0xb1] sm:$0xff]
      %v1113 = vld [vmem:[%s422 + $0xc1] sm:$0xff]
      %v1114 = vld [vmem:[%s422 + $0xc9] sm:$0xff]
      %v1115 = vld [vmem:[%s422 + $0xd9] sm:$0xff]
      %v1116 = vld [vmem:[%s422 + $0xe1] sm:$0xff]
      %v1117 = vld [vmem:[%s422 + $0xf1] sm:$0xff]
      %v1118 = vld [vmem:[%s422 + $0xf9] sm:$0xff]
      %v1119 = vld [vmem:[%s422 + $0x109] sm:$0xff]
      %v1120 = vld [vmem:[%s422 + $0x111] sm:$0xff]
      %v1121 = vld [vmem:[%s422 + $0x121] sm:$0xff]
      %v1122 = vld [vmem:[%s422 + $0x129] sm:$0xff]
      %v1123 = vld [vmem:[%s422 + $0x139] sm:$0xff]
      %v1124 = vld [vmem:[%s422 + $0x141] sm:$0xff]
      %v1125 = vld [vmem:[%s422 + $0x151] sm:$0xff]
      %v1126 = vld [vmem:[%s422 + $0x159] sm:$0xff]
      %v1127 = vld [vmem:[%s422 + $0x169] sm:$0xff]
      %v1128 = vld [vmem:[%s422 + $0x171] sm:$0xff]
      %v1129 = vpack.c.bf16 %v1097, %v1097
      %v1130 = vpack.c.bf16 %v1098, %v1098
      %v1131 = vpack.c.bf16 %v1099, %v1099
      %v1132 = vpack.c.bf16 %v1100, %v1100
      %v1133 = vpack.c.bf16 %v1101, %v1101
      %v1134 = vpack.c.bf16 %v1102, %v1102
      %v1135 = vpack.c.bf16 %v1103, %v1103
      %v1136 = vpack.c.bf16 %v1104, %v1104
      %v1137 = vpack.c.bf16 %v1105, %v1105
      %v1138 = vpack.c.bf16 %v1106, %v1106
      %v1139 = vpack.c.bf16 %v1107, %v1107
      %v1140 = vpack.c.bf16 %v1108, %v1108
      %v1141 = vpack.c.bf16 %v1109, %v1109
      %v1142 = vpack.c.bf16 %v1110, %v1110
      %v1143 = vpack.c.bf16 %v1111, %v1111
      %v1144 = vpack.c.bf16 %v1112, %v1112
      %v1145 = vpack.c.bf16 %v1113, %v1113
      %v1146 = vpack.c.bf16 %v1114, %v1114
      %v1147 = vpack.c.bf16 %v1115, %v1115
      %v1148 = vpack.c.bf16 %v1116, %v1116
      %v1149 = vpack.c.bf16 %v1117, %v1117
      %v1150 = vpack.c.bf16 %v1118, %v1118
      %v1151 = vpack.c.bf16 %v1119, %v1119
      %v1152 = vpack.c.bf16 %v1120, %v1120
      %v1153 = vpack.c.bf16 %v1121, %v1121
      %v1154 = vpack.c.bf16 %v1122, %v1122
      %v1155 = vpack.c.bf16 %v1123, %v1123
      %v1156 = vpack.c.bf16 %v1124, %v1124
      %v1157 = vpack.c.bf16 %v1125, %v1125
      %v1158 = vpack.c.bf16 %v1126, %v1126
      %v1159 = vpack.c.bf16 %v1127, %v1127
      %v1160 = vpack.c.bf16 %v1128, %v1128
      %1161 = vst.msk [vmem:[#allocation3 + $0x8] sm:$0xf] %vm519, %v1129
      %1162 = vst.msk [vmem:[#allocation3 + $0x1c] sm:$0xf] %vm519, %v1130
      %1163 = vst.msk [vmem:[#allocation3 + $0x30] sm:$0xf] %vm519, %v1131
      %1164 = vst.msk [vmem:[#allocation3 + $0x44] sm:$0xf] %vm519, %v1132
      %1165 = vst.msk [vmem:[#allocation3 + $0x58] sm:$0xf] %vm519, %v1133
      %1166 = vst.msk [vmem:[#allocation3 + $0x6c] sm:$0xf] %vm519, %v1134
      %1167 = vst.msk [vmem:[#allocation3 + $0x80] sm:$0xf] %vm519, %v1135
      %1168 = vst.msk [vmem:[#allocation3 + $0x94] sm:$0xf] %vm519, %v1136
      %1169 = vst.msk [vmem:[#allocation3 + $0xa8] sm:$0xf] %vm519, %v1137
      %1170 = vst.msk [vmem:[#allocation3 + $0xbc] sm:$0xf] %vm519, %v1138
      %1171 = vst.msk [vmem:[#allocation3 + $0xd0] sm:$0xf] %vm519, %v1139
      %1172 = vst.msk [vmem:[#allocation3 + $0xe4] sm:$0xf] %vm519, %v1140
      %1173 = vst.msk [vmem:[#allocation3 + $0xf8] sm:$0xf] %vm519, %v1141
      %1174 = vst.msk [vmem:[#allocation3 + $0x10c] sm:$0xf] %vm519, %v1142
      %1175 = vst.msk [vmem:[#allocation3 + $0x120] sm:$0xf] %vm519, %v1143
      %1176 = vst.msk [vmem:[#allocation3 + $0x134] sm:$0xf] %vm519, %v1144
      %1177 = vst.msk [vmem:[#allocation3 + $0x148] sm:$0xf] %vm519, %v1145
      %1178 = vst.msk [vmem:[#allocation3 + $0x15c] sm:$0xf] %vm519, %v1146
      %1179 = vst.msk [vmem:[#allocation3 + $0x170] sm:$0xf] %vm519, %v1147
      %1180 = vst.msk [vmem:[#allocation3 + $0x184] sm:$0xf] %vm519, %v1148
      %1181 = vst.msk [vmem:[#allocation3 + $0x198] sm:$0xf] %vm519, %v1149
      %1182 = vst.msk [vmem:[#allocation3 + $0x1ac] sm:$0xf] %vm519, %v1150
      %1183 = vst.msk [vmem:[#allocation3 + $0x1c0] sm:$0xf] %vm519, %v1151
      %1184 = vst.msk [vmem:[#allocation3 + $0x1d4] sm:$0xf] %vm519, %v1152
      %1185 = vst.msk [vmem:[#allocation3 + $0x1e8] sm:$0xf] %vm519, %v1153
      %1186 = vst.msk [vmem:[#allocation3 + $0x1fc] sm:$0xf] %vm519, %v1154
      %1187 = vst.msk [vmem:[#allocation3 + $0x210] sm:$0xf] %vm519, %v1155
      %1188 = vst.msk [vmem:[#allocation3 + $0x224] sm:$0xf] %vm519, %v1156
      %1189 = vst.msk [vmem:[#allocation3 + $0x238] sm:$0xf] %vm519, %v1157
      %1190 = vst.msk [vmem:[#allocation3 + $0x24c] sm:$0xf] %vm519, %v1158
      %1191 = vst.msk [vmem:[#allocation3 + $0x260] sm:$0xf] %vm519, %v1159
      %1192 = vst.msk [vmem:[#allocation3 + $0x274] sm:$0xf] %vm519, %v1160
      %v1193 = vld [vmem:[%s422 + $0x2] sm:$0xff]
      %v1194 = vld [vmem:[%s422 + $0xa] sm:$0xff]
      %v1195 = vld [vmem:[%s422 + $0x1a] sm:$0xff]
      %v1196 = vld [vmem:[%s422 + $0x22] sm:$0xff]
      %v1197 = vld [vmem:[%s422 + $0x32] sm:$0xff]
      %v1198 = vld [vmem:[%s422 + $0x3a] sm:$0xff]
      %v1199 = vld [vmem:[%s422 + $0x4a] sm:$0xff]
      %v1200 = vld [vmem:[%s422 + $0x52] sm:$0xff]
      %v1201 = vld [vmem:[%s422 + $0x62] sm:$0xff]
      %v1202 = vld [vmem:[%s422 + $0x6a] sm:$0xff]
      %v1203 = vld [vmem:[%s422 + $0x7a] sm:$0xff]
      %v1204 = vld [vmem:[%s422 + $0x82] sm:$0xff]
      %v1205 = vld [vmem:[%s422 + $0x92] sm:$0xff]
      %v1206 = vld [vmem:[%s422 + $0x9a] sm:$0xff]
      %v1207 = vld [vmem:[%s422 + $0xaa] sm:$0xff]
      %v1208 = vld [vmem:[%s422 + $0xb2] sm:$0xff]
      %v1209 = vld [vmem:[%s422 + $0xc2] sm:$0xff]
      %v1210 = vld [vmem:[%s422 + $0xca] sm:$0xff]
      %v1211 = vld [vmem:[%s422 + $0xda] sm:$0xff]
      %v1212 = vld [vmem:[%s422 + $0xe2] sm:$0xff]
      %v1213 = vld [vmem:[%s422 + $0xf2] sm:$0xff]
      %v1214 = vld [vmem:[%s422 + $0xfa] sm:$0xff]
      %v1215 = vld [vmem:[%s422 + $0x10a] sm:$0xff]
      %v1216 = vld [vmem:[%s422 + $0x112] sm:$0xff]
      %v1217 = vld [vmem:[%s422 + $0x122] sm:$0xff]
      %v1218 = vld [vmem:[%s422 + $0x12a] sm:$0xff]
      %v1219 = vld [vmem:[%s422 + $0x13a] sm:$0xff]
      %v1220 = vld [vmem:[%s422 + $0x142] sm:$0xff]
      %v1221 = vld [vmem:[%s422 + $0x152] sm:$0xff]
      %v1222 = vld [vmem:[%s422 + $0x15a] sm:$0xff]
      %v1223 = vld [vmem:[%s422 + $0x16a] sm:$0xff]
      %v1224 = vld [vmem:[%s422 + $0x172] sm:$0xff]
      %v1225 = vpack.c.bf16 %v1193, %v1193
      %v1226 = vpack.c.bf16 %v1194, %v1194
      %v1227 = vpack.c.bf16 %v1195, %v1195
      %v1228 = vpack.c.bf16 %v1196, %v1196
      %v1229 = vpack.c.bf16 %v1197, %v1197
      %v1230 = vpack.c.bf16 %v1198, %v1198
      %v1231 = vpack.c.bf16 %v1199, %v1199
      %v1232 = vpack.c.bf16 %v1200, %v1200
      %v1233 = vpack.c.bf16 %v1201, %v1201
      %v1234 = vpack.c.bf16 %v1202, %v1202
      %v1235 = vpack.c.bf16 %v1203, %v1203
      %v1236 = vpack.c.bf16 %v1204, %v1204
      %v1237 = vpack.c.bf16 %v1205, %v1205
      %v1238 = vpack.c.bf16 %v1206, %v1206
      %v1239 = vpack.c.bf16 %v1207, %v1207
      %v1240 = vpack.c.bf16 %v1208, %v1208
      %v1241 = vpack.c.bf16 %v1209, %v1209
      %v1242 = vpack.c.bf16 %v1210, %v1210
      %v1243 = vpack.c.bf16 %v1211, %v1211
      %v1244 = vpack.c.bf16 %v1212, %v1212
      %v1245 = vpack.c.bf16 %v1213, %v1213
      %v1246 = vpack.c.bf16 %v1214, %v1214
      %v1247 = vpack.c.bf16 %v1215, %v1215
      %v1248 = vpack.c.bf16 %v1216, %v1216
      %v1249 = vpack.c.bf16 %v1217, %v1217
      %v1250 = vpack.c.bf16 %v1218, %v1218
      %v1251 = vpack.c.bf16 %v1219, %v1219
      %v1252 = vpack.c.bf16 %v1220, %v1220
      %v1253 = vpack.c.bf16 %v1221, %v1221
      %v1254 = vpack.c.bf16 %v1222, %v1222
      %v1255 = vpack.c.bf16 %v1223, %v1223
      %v1256 = vpack.c.bf16 %v1224, %v1224
      %1289 = vrot.lane.b32.xlu0 %v1225, 64
      %v1290 = vpop.permute.xlu0 %1289
      %1291 = vrot.lane.b32.xlu0 %v1226, 64
      %v1292 = vpop.permute.xlu0 %1291
      %1293 = vrot.lane.b32.xlu0 %v1227, 64
      %v1294 = vpop.permute.xlu0 %1293
      %1295 = vrot.lane.b32.xlu0 %v1228, 64
      %v1296 = vpop.permute.xlu0 %1295
      %1297 = vrot.lane.b32.xlu0 %v1229, 64
      %v1298 = vpop.permute.xlu0 %1297
      %1299 = vrot.lane.b32.xlu0 %v1230, 64
      %v1300 = vpop.permute.xlu0 %1299
      %1301 = vrot.lane.b32.xlu0 %v1231, 64
      %v1302 = vpop.permute.xlu0 %1301
      %1303 = vrot.lane.b32.xlu0 %v1232, 64
      %v1304 = vpop.permute.xlu0 %1303
      %1305 = vrot.lane.b32.xlu0 %v1233, 64
      %v1306 = vpop.permute.xlu0 %1305
      %1307 = vrot.lane.b32.xlu0 %v1234, 64
      %v1308 = vpop.permute.xlu0 %1307
      %1309 = vrot.lane.b32.xlu0 %v1235, 64
      %v1310 = vpop.permute.xlu0 %1309
      %1311 = vrot.lane.b32.xlu0 %v1236, 64
      %v1312 = vpop.permute.xlu0 %1311
      %1313 = vrot.lane.b32.xlu0 %v1237, 64
      %v1314 = vpop.permute.xlu0 %1313
      %1315 = vrot.lane.b32.xlu0 %v1238, 64
      %v1316 = vpop.permute.xlu0 %1315
      %1317 = vrot.lane.b32.xlu0 %v1239, 64
      %v1318 = vpop.permute.xlu0 %1317
      %1319 = vrot.lane.b32.xlu0 %v1240, 64
      %v1320 = vpop.permute.xlu0 %1319
      %1321 = vrot.lane.b32.xlu0 %v1241, 64
      %v1322 = vpop.permute.xlu0 %1321
      %1323 = vrot.lane.b32.xlu0 %v1242, 64
      %v1324 = vpop.permute.xlu0 %1323
      %1325 = vrot.lane.b32.xlu0 %v1243, 64
      %v1326 = vpop.permute.xlu0 %1325
      %1327 = vrot.lane.b32.xlu0 %v1244, 64
      %v1328 = vpop.permute.xlu0 %1327
      %1329 = vrot.lane.b32.xlu0 %v1245, 64
      %v1330 = vpop.permute.xlu0 %1329
      %1331 = vrot.lane.b32.xlu0 %v1246, 64
      %v1332 = vpop.permute.xlu0 %1331
      %1333 = vrot.lane.b32.xlu0 %v1247, 64
      %v1334 = vpop.permute.xlu0 %1333
      %1335 = vrot.lane.b32.xlu0 %v1248, 64
      %v1336 = vpop.permute.xlu0 %1335
      %1337 = vrot.lane.b32.xlu0 %v1249, 64
      %v1338 = vpop.permute.xlu0 %1337
      %1339 = vrot.lane.b32.xlu0 %v1250, 64
      %v1340 = vpop.permute.xlu0 %1339
      %1341 = vrot.lane.b32.xlu0 %v1251, 64
      %v1342 = vpop.permute.xlu0 %1341
      %1343 = vrot.lane.b32.xlu0 %v1252, 64
      %v1344 = vpop.permute.xlu0 %1343
      %1345 = vrot.lane.b32.xlu0 %v1253, 64
      %v1346 = vpop.permute.xlu0 %1345
      %1347 = vrot.lane.b32.xlu0 %v1254, 64
      %v1348 = vpop.permute.xlu0 %1347
      %1349 = vrot.lane.b32.xlu0 %v1255, 64
      %v1350 = vpop.permute.xlu0 %1349
      %1351 = vrot.lane.b32.xlu0 %v1256, 64
      %v1352 = vpop.permute.xlu0 %1351
      %1385 = vst.msk [vmem:[#allocation3 + $0x8] sm:$0xf] %vm744, %v1290
      %1386 = vst.msk [vmem:[#allocation3 + $0x1c] sm:$0xf] %vm744, %v1292
      %1387 = vst.msk [vmem:[#allocation3 + $0x30] sm:$0xf] %vm744, %v1294
      %1388 = vst.msk [vmem:[#allocation3 + $0x44] sm:$0xf] %vm744, %v1296
      %1389 = vst.msk [vmem:[#allocation3 + $0x58] sm:$0xf] %vm744, %v1298
      %1390 = vst.msk [vmem:[#allocation3 + $0x6c] sm:$0xf] %vm744, %v1300
      %1391 = vst.msk [vmem:[#allocation3 + $0x80] sm:$0xf] %vm744, %v1302
      %1392 = vst.msk [vmem:[#allocation3 + $0x94] sm:$0xf] %vm744, %v1304
      %1393 = vst.msk [vmem:[#allocation3 + $0xa8] sm:$0xf] %vm744, %v1306
      %1394 = vst.msk [vmem:[#allocation3 + $0xbc] sm:$0xf] %vm744, %v1308
      %1395 = vst.msk [vmem:[#allocation3 + $0xd0] sm:$0xf] %vm744, %v1310
      %1396 = vst.msk [vmem:[#allocation3 + $0xe4] sm:$0xf] %vm744, %v1312
      %1397 = vst.msk [vmem:[#allocation3 + $0xf8] sm:$0xf] %vm744, %v1314
      %1398 = vst.msk [vmem:[#allocation3 + $0x10c] sm:$0xf] %vm744, %v1316
      %1399 = vst.msk [vmem:[#allocation3 + $0x120] sm:$0xf] %vm744, %v1318
      %1400 = vst.msk [vmem:[#allocation3 + $0x134] sm:$0xf] %vm744, %v1320
      %1401 = vst.msk [vmem:[#allocation3 + $0x148] sm:$0xf] %vm744, %v1322
      %1402 = vst.msk [vmem:[#allocation3 + $0x15c] sm:$0xf] %vm744, %v1324
      %1403 = vst.msk [vmem:[#allocation3 + $0x170] sm:$0xf] %vm744, %v1326
      %1404 = vst.msk [vmem:[#allocation3 + $0x184] sm:$0xf] %vm744, %v1328
      %1405 = vst.msk [vmem:[#allocation3 + $0x198] sm:$0xf] %vm744, %v1330
      %1406 = vst.msk [vmem:[#allocation3 + $0x1ac] sm:$0xf] %vm744, %v1332
      %1407 = vst.msk [vmem:[#allocation3 + $0x1c0] sm:$0xf] %vm744, %v1334
      %1408 = vst.msk [vmem:[#allocation3 + $0x1d4] sm:$0xf] %vm744, %v1336
      %1409 = vst.msk [vmem:[#allocation3 + $0x1e8] sm:$0xf] %vm744, %v1338
      %1410 = vst.msk [vmem:[#allocation3 + $0x1fc] sm:$0xf] %vm744, %v1340
      %1411 = vst.msk [vmem:[#allocation3 + $0x210] sm:$0xf] %vm744, %v1342
      %1412 = vst.msk [vmem:[#allocation3 + $0x224] sm:$0xf] %vm744, %v1344
      %1413 = vst.msk [vmem:[#allocation3 + $0x238] sm:$0xf] %vm744, %v1346
      %1414 = vst.msk [vmem:[#allocation3 + $0x24c] sm:$0xf] %vm744, %v1348
      %1415 = vst.msk [vmem:[#allocation3 + $0x260] sm:$0xf] %vm744, %v1350
      %1416 = vst.msk [vmem:[#allocation3 + $0x274] sm:$0xf] %vm744, %v1352
      %s1417 = scalar_lea.vmem [#allocation2], 48
      %v1418 = vld [vmem:[%s1417] sm:$0xff]
      %v1419 = vld [vmem:[%s1417 + $0x8] sm:$0xff]
      %v1420 = vld [vmem:[%s1417 + $0x18] sm:$0xff]
      %v1421 = vld [vmem:[%s1417 + $0x20] sm:$0xff]
      %v1422 = vld [vmem:[%s1417 + $0x30] sm:$0xff]
      %v1423 = vld [vmem:[%s1417 + $0x38] sm:$0xff]
      %v1424 = vld [vmem:[%s1417 + $0x48] sm:$0xff]
      %v1425 = vld [vmem:[%s1417 + $0x50] sm:$0xff]
      %v1426 = vld [vmem:[%s1417 + $0x60] sm:$0xff]
      %v1427 = vld [vmem:[%s1417 + $0x68] sm:$0xff]
      %v1428 = vld [vmem:[%s1417 + $0x78] sm:$0xff]
      %v1429 = vld [vmem:[%s1417 + $0x80] sm:$0xff]
      %v1430 = vld [vmem:[%s1417 + $0x90] sm:$0xff]
      %v1431 = vld [vmem:[%s1417 + $0x98] sm:$0xff]
      %v1432 = vld [vmem:[%s1417 + $0xa8] sm:$0xff]
      %v1433 = vld [vmem:[%s1417 + $0xb0] sm:$0xff]
      %v1434 = vld [vmem:[%s1417 + $0xc0] sm:$0xff]
      %v1435 = vld [vmem:[%s1417 + $0xc8] sm:$0xff]
      %v1436 = vld [vmem:[%s1417 + $0xd8] sm:$0xff]
      %v1437 = vld [vmem:[%s1417 + $0xe0] sm:$0xff]
      %v1438 = vld [vmem:[%s1417 + $0xf0] sm:$0xff]
      %v1439 = vld [vmem:[%s1417 + $0xf8] sm:$0xff]
      %v1440 = vld [vmem:[%s1417 + $0x108] sm:$0xff]
      %v1441 = vld [vmem:[%s1417 + $0x110] sm:$0xff]
      %v1442 = vld [vmem:[%s1417 + $0x120] sm:$0xff]
      %v1443 = vld [vmem:[%s1417 + $0x128] sm:$0xff]
      %v1444 = vld [vmem:[%s1417 + $0x138] sm:$0xff]
      %v1445 = vld [vmem:[%s1417 + $0x140] sm:$0xff]
      %v1446 = vld [vmem:[%s1417 + $0x150] sm:$0xff]
      %v1447 = vld [vmem:[%s1417 + $0x158] sm:$0xff]
      %v1448 = vld [vmem:[%s1417 + $0x168] sm:$0xff]
      %v1449 = vld [vmem:[%s1417 + $0x170] sm:$0xff]
      %v1450 = vpack.c.bf16 %v1418, %v1418
      %v1451 = vpack.c.bf16 %v1419, %v1419
      %v1452 = vpack.c.bf16 %v1420, %v1420
      %v1453 = vpack.c.bf16 %v1421, %v1421
      %v1454 = vpack.c.bf16 %v1422, %v1422
      %v1455 = vpack.c.bf16 %v1423, %v1423
      %v1456 = vpack.c.bf16 %v1424, %v1424
      %v1457 = vpack.c.bf16 %v1425, %v1425
      %v1458 = vpack.c.bf16 %v1426, %v1426
      %v1459 = vpack.c.bf16 %v1427, %v1427
      %v1460 = vpack.c.bf16 %v1428, %v1428
      %v1461 = vpack.c.bf16 %v1429, %v1429
      %v1462 = vpack.c.bf16 %v1430, %v1430
      %v1463 = vpack.c.bf16 %v1431, %v1431
      %v1464 = vpack.c.bf16 %v1432, %v1432
      %v1465 = vpack.c.bf16 %v1433, %v1433
      %v1466 = vpack.c.bf16 %v1434, %v1434
      %v1467 = vpack.c.bf16 %v1435, %v1435
      %v1468 = vpack.c.bf16 %v1436, %v1436
      %v1469 = vpack.c.bf16 %v1437, %v1437
      %v1470 = vpack.c.bf16 %v1438, %v1438
      %v1471 = vpack.c.bf16 %v1439, %v1439
      %v1472 = vpack.c.bf16 %v1440, %v1440
      %v1473 = vpack.c.bf16 %v1441, %v1441
      %v1474 = vpack.c.bf16 %v1442, %v1442
      %v1475 = vpack.c.bf16 %v1443, %v1443
      %v1476 = vpack.c.bf16 %v1444, %v1444
      %v1477 = vpack.c.bf16 %v1445, %v1445
      %v1478 = vpack.c.bf16 %v1446, %v1446
      %v1479 = vpack.c.bf16 %v1447, %v1447
      %v1480 = vpack.c.bf16 %v1448, %v1448
      %v1481 = vpack.c.bf16 %v1449, %v1449
      %1482 = vst.msk [vmem:[#allocation3 + $0xc] sm:$0xf] %vm519, %v1450
      %1483 = vst.msk [vmem:[#allocation3 + $0x20] sm:$0xf] %vm519, %v1451
      %1484 = vst.msk [vmem:[#allocation3 + $0x34] sm:$0xf] %vm519, %v1452
      %1485 = vst.msk [vmem:[#allocation3 + $0x48] sm:$0xf] %vm519, %v1453
      %1486 = vst.msk [vmem:[#allocation3 + $0x5c] sm:$0xf] %vm519, %v1454
      %1487 = vst.msk [vmem:[#allocation3 + $0x70] sm:$0xf] %vm519, %v1455
      %1488 = vst.msk [vmem:[#allocation3 + $0x84] sm:$0xf] %vm519, %v1456
      %1489 = vst.msk [vmem:[#allocation3 + $0x98] sm:$0xf] %vm519, %v1457
      %1490 = vst.msk [vmem:[#allocation3 + $0xac] sm:$0xf] %vm519, %v1458
      %1491 = vst.msk [vmem:[#allocation3 + $0xc0] sm:$0xf] %vm519, %v1459
      %1492 = vst.msk [vmem:[#allocation3 + $0xd4] sm:$0xf] %vm519, %v1460
      %1493 = vst.msk [vmem:[#allocation3 + $0xe8] sm:$0xf] %vm519, %v1461
      %1494 = vst.msk [vmem:[#allocation3 + $0xfc] sm:$0xf] %vm519, %v1462
      %1495 = vst.msk [vmem:[#allocation3 + $0x110] sm:$0xf] %vm519, %v1463
      %1496 = vst.msk [vmem:[#allocation3 + $0x124] sm:$0xf] %vm519, %v1464
      %1497 = vst.msk [vmem:[#allocation3 + $0x138] sm:$0xf] %vm519, %v1465
      %1498 = vst.msk [vmem:[#allocation3 + $0x14c] sm:$0xf] %vm519, %v1466
      %1499 = vst.msk [vmem:[#allocation3 + $0x160] sm:$0xf] %vm519, %v1467
      %1500 = vst.msk [vmem:[#allocation3 + $0x174] sm:$0xf] %vm519, %v1468
      %1501 = vst.msk [vmem:[#allocation3 + $0x188] sm:$0xf] %vm519, %v1469
      %1502 = vst.msk [vmem:[#allocation3 + $0x19c] sm:$0xf] %vm519, %v1470
      %1503 = vst.msk [vmem:[#allocation3 + $0x1b0] sm:$0xf] %vm519, %v1471
      %1504 = vst.msk [vmem:[#allocation3 + $0x1c4] sm:$0xf] %vm519, %v1472
      %1505 = vst.msk [vmem:[#allocation3 + $0x1d8] sm:$0xf] %vm519, %v1473
      %1506 = vst.msk [vmem:[#allocation3 + $0x1ec] sm:$0xf] %vm519, %v1474
      %1507 = vst.msk [vmem:[#allocation3 + $0x200] sm:$0xf] %vm519, %v1475
      %1508 = vst.msk [vmem:[#allocation3 + $0x214] sm:$0xf] %vm519, %v1476
      %1509 = vst.msk [vmem:[#allocation3 + $0x228] sm:$0xf] %vm519, %v1477
      %1510 = vst.msk [vmem:[#allocation3 + $0x23c] sm:$0xf] %vm519, %v1478
      %1511 = vst.msk [vmem:[#allocation3 + $0x250] sm:$0xf] %vm519, %v1479
      %1512 = vst.msk [vmem:[#allocation3 + $0x264] sm:$0xf] %vm519, %v1480
      %1513 = vst.msk [vmem:[#allocation3 + $0x278] sm:$0xf] %vm519, %v1481
      %v1514 = vld [vmem:[%s1417 + $0x1] sm:$0xff]
      %v1515 = vld [vmem:[%s1417 + $0x9] sm:$0xff]
      %v1516 = vld [vmem:[%s1417 + $0x19] sm:$0xff]
      %v1517 = vld [vmem:[%s1417 + $0x21] sm:$0xff]
      %v1518 = vld [vmem:[%s1417 + $0x31] sm:$0xff]
      %v1519 = vld [vmem:[%s1417 + $0x39] sm:$0xff]
      %v1520 = vld [vmem:[%s1417 + $0x49] sm:$0xff]
      %v1521 = vld [vmem:[%s1417 + $0x51] sm:$0xff]
      %v1522 = vld [vmem:[%s1417 + $0x61] sm:$0xff]
      %v1523 = vld [vmem:[%s1417 + $0x69] sm:$0xff]
      %v1524 = vld [vmem:[%s1417 + $0x79] sm:$0xff]
      %v1525 = vld [vmem:[%s1417 + $0x81] sm:$0xff]
      %v1526 = vld [vmem:[%s1417 + $0x91] sm:$0xff]
      %v1527 = vld [vmem:[%s1417 + $0x99] sm:$0xff]
      %v1528 = vld [vmem:[%s1417 + $0xa9] sm:$0xff]
      %v1529 = vld [vmem:[%s1417 + $0xb1] sm:$0xff]
      %v1530 = vld [vmem:[%s1417 + $0xc1] sm:$0xff]
      %v1531 = vld [vmem:[%s1417 + $0xc9] sm:$0xff]
      %v1532 = vld [vmem:[%s1417 + $0xd9] sm:$0xff]
      %v1533 = vld [vmem:[%s1417 + $0xe1] sm:$0xff]
      %v1534 = vld [vmem:[%s1417 + $0xf1] sm:$0xff]
      %v1535 = vld [vmem:[%s1417 + $0xf9] sm:$0xff]
      %v1536 = vld [vmem:[%s1417 + $0x109] sm:$0xff]
      %v1537 = vld [vmem:[%s1417 + $0x111] sm:$0xff]
      %v1538 = vld [vmem:[%s1417 + $0x121] sm:$0xff]
      %v1539 = vld [vmem:[%s1417 + $0x129] sm:$0xff]
      %v1540 = vld [vmem:[%s1417 + $0x139] sm:$0xff]
      %v1541 = vld [vmem:[%s1417 + $0x141] sm:$0xff]
      %v1542 = vld [vmem:[%s1417 + $0x151] sm:$0xff]
      %v1543 = vld [vmem:[%s1417 + $0x159] sm:$0xff]
      %v1544 = vld [vmem:[%s1417 + $0x169] sm:$0xff]
      %v1545 = vld [vmem:[%s1417 + $0x171] sm:$0xff]
      %v1546 = vpack.c.bf16 %v1514, %v1514
      %v1547 = vpack.c.bf16 %v1515, %v1515
      %v1548 = vpack.c.bf16 %v1516, %v1516
      %v1549 = vpack.c.bf16 %v1517, %v1517
      %v1550 = vpack.c.bf16 %v1518, %v1518
      %v1551 = vpack.c.bf16 %v1519, %v1519
      %v1552 = vpack.c.bf16 %v1520, %v1520
      %v1553 = vpack.c.bf16 %v1521, %v1521
      %v1554 = vpack.c.bf16 %v1522, %v1522
      %v1555 = vpack.c.bf16 %v1523, %v1523
      %v1556 = vpack.c.bf16 %v1524, %v1524
      %v1557 = vpack.c.bf16 %v1525, %v1525
      %v1558 = vpack.c.bf16 %v1526, %v1526
      %v1559 = vpack.c.bf16 %v1527, %v1527
      %v1560 = vpack.c.bf16 %v1528, %v1528
      %v1561 = vpack.c.bf16 %v1529, %v1529
      %v1562 = vpack.c.bf16 %v1530, %v1530
      %v1563 = vpack.c.bf16 %v1531, %v1531
      %v1564 = vpack.c.bf16 %v1532, %v1532
      %v1565 = vpack.c.bf16 %v1533, %v1533
      %v1566 = vpack.c.bf16 %v1534, %v1534
      %v1567 = vpack.c.bf16 %v1535, %v1535
      %v1568 = vpack.c.bf16 %v1536, %v1536
      %v1569 = vpack.c.bf16 %v1537, %v1537
      %v1570 = vpack.c.bf16 %v1538, %v1538
      %v1571 = vpack.c.bf16 %v1539, %v1539
      %v1572 = vpack.c.bf16 %v1540, %v1540
      %v1573 = vpack.c.bf16 %v1541, %v1541
      %v1574 = vpack.c.bf16 %v1542, %v1542
      %v1575 = vpack.c.bf16 %v1543, %v1543
      %v1576 = vpack.c.bf16 %v1544, %v1544
      %v1577 = vpack.c.bf16 %v1545, %v1545
      %1610 = vrot.lane.b32.xlu0 %v1546, 64
      %v1611 = vpop.permute.xlu0 %1610
      %1612 = vrot.lane.b32.xlu0 %v1547, 64
      %v1613 = vpop.permute.xlu0 %1612
      %1614 = vrot.lane.b32.xlu0 %v1548, 64
      %v1615 = vpop.permute.xlu0 %1614
      %1616 = vrot.lane.b32.xlu0 %v1549, 64
      %v1617 = vpop.permute.xlu0 %1616
      %1618 = vrot.lane.b32.xlu0 %v1550, 64
      %v1619 = vpop.permute.xlu0 %1618
      %1620 = vrot.lane.b32.xlu0 %v1551, 64
      %v1621 = vpop.permute.xlu0 %1620
      %1622 = vrot.lane.b32.xlu0 %v1552, 64
      %v1623 = vpop.permute.xlu0 %1622
      %1624 = vrot.lane.b32.xlu0 %v1553, 64
      %v1625 = vpop.permute.xlu0 %1624
      %1626 = vrot.lane.b32.xlu0 %v1554, 64
      %v1627 = vpop.permute.xlu0 %1626
      %1628 = vrot.lane.b32.xlu0 %v1555, 64
      %v1629 = vpop.permute.xlu0 %1628
      %1630 = vrot.lane.b32.xlu0 %v1556, 64
      %v1631 = vpop.permute.xlu0 %1630
      %1632 = vrot.lane.b32.xlu0 %v1557, 64
      %v1633 = vpop.permute.xlu0 %1632
      %1634 = vrot.lane.b32.xlu0 %v1558, 64
      %v1635 = vpop.permute.xlu0 %1634
      %1636 = vrot.lane.b32.xlu0 %v1559, 64
      %v1637 = vpop.permute.xlu0 %1636
      %1638 = vrot.lane.b32.xlu0 %v1560, 64
      %v1639 = vpop.permute.xlu0 %1638
      %1640 = vrot.lane.b32.xlu0 %v1561, 64
      %v1641 = vpop.permute.xlu0 %1640
      %1642 = vrot.lane.b32.xlu0 %v1562, 64
      %v1643 = vpop.permute.xlu0 %1642
      %1644 = vrot.lane.b32.xlu0 %v1563, 64
      %v1645 = vpop.permute.xlu0 %1644
      %1646 = vrot.lane.b32.xlu0 %v1564, 64
      %v1647 = vpop.permute.xlu0 %1646
      %1648 = vrot.lane.b32.xlu0 %v1565, 64
      %v1649 = vpop.permute.xlu0 %1648
      %1650 = vrot.lane.b32.xlu0 %v1566, 64
      %v1651 = vpop.permute.xlu0 %1650
      %1652 = vrot.lane.b32.xlu0 %v1567, 64
      %v1653 = vpop.permute.xlu0 %1652
      %1654 = vrot.lane.b32.xlu0 %v1568, 64
      %v1655 = vpop.permute.xlu0 %1654
      %1656 = vrot.lane.b32.xlu0 %v1569, 64
      %v1657 = vpop.permute.xlu0 %1656
      %1658 = vrot.lane.b32.xlu0 %v1570, 64
      %v1659 = vpop.permute.xlu0 %1658
      %1660 = vrot.lane.b32.xlu0 %v1571, 64
      %v1661 = vpop.permute.xlu0 %1660
      %1662 = vrot.lane.b32.xlu0 %v1572, 64
      %v1663 = vpop.permute.xlu0 %1662
      %1664 = vrot.lane.b32.xlu0 %v1573, 64
      %v1665 = vpop.permute.xlu0 %1664
      %1666 = vrot.lane.b32.xlu0 %v1574, 64
      %v1667 = vpop.permute.xlu0 %1666
      %1668 = vrot.lane.b32.xlu0 %v1575, 64
      %v1669 = vpop.permute.xlu0 %1668
      %1670 = vrot.lane.b32.xlu0 %v1576, 64
      %v1671 = vpop.permute.xlu0 %1670
      %1672 = vrot.lane.b32.xlu0 %v1577, 64
      %v1673 = vpop.permute.xlu0 %1672
      %1706 = vst.msk [vmem:[#allocation3 + $0xc] sm:$0xf] %vm744, %v1611
      %1707 = vst.msk [vmem:[#allocation3 + $0x20] sm:$0xf] %vm744, %v1613
      %1708 = vst.msk [vmem:[#allocation3 + $0x34] sm:$0xf] %vm744, %v1615
      %1709 = vst.msk [vmem:[#allocation3 + $0x48] sm:$0xf] %vm744, %v1617
      %1710 = vst.msk [vmem:[#allocation3 + $0x5c] sm:$0xf] %vm744, %v1619
      %1711 = vst.msk [vmem:[#allocation3 + $0x70] sm:$0xf] %vm744, %v1621
      %1712 = vst.msk [vmem:[#allocation3 + $0x84] sm:$0xf] %vm744, %v1623
      %1713 = vst.msk [vmem:[#allocation3 + $0x98] sm:$0xf] %vm744, %v1625
      %1714 = vst.msk [vmem:[#allocation3 + $0xac] sm:$0xf] %vm744, %v1627
      %1715 = vst.msk [vmem:[#allocation3 + $0xc0] sm:$0xf] %vm744, %v1629
      %1716 = vst.msk [vmem:[#allocation3 + $0xd4] sm:$0xf] %vm744, %v1631
      %1717 = vst.msk [vmem:[#allocation3 + $0xe8] sm:$0xf] %vm744, %v1633
      %1718 = vst.msk [vmem:[#allocation3 + $0xfc] sm:$0xf] %vm744, %v1635
      %1719 = vst.msk [vmem:[#allocation3 + $0x110] sm:$0xf] %vm744, %v1637
      %1720 = vst.msk [vmem:[#allocation3 + $0x124] sm:$0xf] %vm744, %v1639
      %1721 = vst.msk [vmem:[#allocation3 + $0x138] sm:$0xf] %vm744, %v1641
      %1722 = vst.msk [vmem:[#allocation3 + $0x14c] sm:$0xf] %vm744, %v1643
      %1723 = vst.msk [vmem:[#allocation3 + $0x160] sm:$0xf] %vm744, %v1645
      %1724 = vst.msk [vmem:[#allocation3 + $0x174] sm:$0xf] %vm744, %v1647
      %1725 = vst.msk [vmem:[#allocation3 + $0x188] sm:$0xf] %vm744, %v1649
      %1726 = vst.msk [vmem:[#allocation3 + $0x19c] sm:$0xf] %vm744, %v1651
      %1727 = vst.msk [vmem:[#allocation3 + $0x1b0] sm:$0xf] %vm744, %v1653
      %1728 = vst.msk [vmem:[#allocation3 + $0x1c4] sm:$0xf] %vm744, %v1655
      %1729 = vst.msk [vmem:[#allocation3 + $0x1d8] sm:$0xf] %vm744, %v1657
      %1730 = vst.msk [vmem:[#allocation3 + $0x1ec] sm:$0xf] %vm744, %v1659
      %1731 = vst.msk [vmem:[#allocation3 + $0x200] sm:$0xf] %vm744, %v1661
      %1732 = vst.msk [vmem:[#allocation3 + $0x214] sm:$0xf] %vm744, %v1663
      %1733 = vst.msk [vmem:[#allocation3 + $0x228] sm:$0xf] %vm744, %v1665
      %1734 = vst.msk [vmem:[#allocation3 + $0x23c] sm:$0xf] %vm744, %v1667
      %1735 = vst.msk [vmem:[#allocation3 + $0x250] sm:$0xf] %vm744, %v1669
      %1736 = vst.msk [vmem:[#allocation3 + $0x264] sm:$0xf] %vm744, %v1671
      %1737 = vst.msk [vmem:[#allocation3 + $0x278] sm:$0xf] %vm744, %v1673
      %v1738 = vld [vmem:[%s1417 + $0x2] sm:$0xff]
      %v1739 = vld [vmem:[%s1417 + $0xa] sm:$0xff]
      %v1740 = vld [vmem:[%s1417 + $0x1a] sm:$0xff]
      %v1741 = vld [vmem:[%s1417 + $0x22] sm:$0xff]
      %v1742 = vld [vmem:[%s1417 + $0x32] sm:$0xff]
      %v1743 = vld [vmem:[%s1417 + $0x3a] sm:$0xff]
      %v1744 = vld [vmem:[%s1417 + $0x4a] sm:$0xff]
      %v1745 = vld [vmem:[%s1417 + $0x52] sm:$0xff]
      %v1746 = vld [vmem:[%s1417 + $0x62] sm:$0xff]
      %v1747 = vld [vmem:[%s1417 + $0x6a] sm:$0xff]
      %v1748 = vld [vmem:[%s1417 + $0x7a] sm:$0xff]
      %v1749 = vld [vmem:[%s1417 + $0x82] sm:$0xff]
      %v1750 = vld [vmem:[%s1417 + $0x92] sm:$0xff]
      %v1751 = vld [vmem:[%s1417 + $0x9a] sm:$0xff]
      %v1752 = vld [vmem:[%s1417 + $0xaa] sm:$0xff]
      %v1753 = vld [vmem:[%s1417 + $0xb2] sm:$0xff]
      %v1754 = vld [vmem:[%s1417 + $0xc2] sm:$0xff]
      %v1755 = vld [vmem:[%s1417 + $0xca] sm:$0xff]
      %v1756 = vld [vmem:[%s1417 + $0xda] sm:$0xff]
      %v1757 = vld [vmem:[%s1417 + $0xe2] sm:$0xff]
      %v1758 = vld [vmem:[%s1417 + $0xf2] sm:$0xff]
      %v1759 = vld [vmem:[%s1417 + $0xfa] sm:$0xff]
      %v1760 = vld [vmem:[%s1417 + $0x10a] sm:$0xff]
      %v1761 = vld [vmem:[%s1417 + $0x112] sm:$0xff]
      %v1762 = vld [vmem:[%s1417 + $0x122] sm:$0xff]
      %v1763 = vld [vmem:[%s1417 + $0x12a] sm:$0xff]
      %v1764 = vld [vmem:[%s1417 + $0x13a] sm:$0xff]
      %v1765 = vld [vmem:[%s1417 + $0x142] sm:$0xff]
      %v1766 = vld [vmem:[%s1417 + $0x152] sm:$0xff]
      %v1767 = vld [vmem:[%s1417 + $0x15a] sm:$0xff]
      %v1768 = vld [vmem:[%s1417 + $0x16a] sm:$0xff]
      %v1769 = vld [vmem:[%s1417 + $0x172] sm:$0xff]
      %v1770 = vpack.c.bf16 %v1738, %v1738
      %v1771 = vpack.c.bf16 %v1739, %v1739
      %v1772 = vpack.c.bf16 %v1740, %v1740
      %v1773 = vpack.c.bf16 %v1741, %v1741
      %v1774 = vpack.c.bf16 %v1742, %v1742
      %v1775 = vpack.c.bf16 %v1743, %v1743
      %v1776 = vpack.c.bf16 %v1744, %v1744
      %v1777 = vpack.c.bf16 %v1745, %v1745
      %v1778 = vpack.c.bf16 %v1746, %v1746
      %v1779 = vpack.c.bf16 %v1747, %v1747
      %v1780 = vpack.c.bf16 %v1748, %v1748
      %v1781 = vpack.c.bf16 %v1749, %v1749
      %v1782 = vpack.c.bf16 %v1750, %v1750
      %v1783 = vpack.c.bf16 %v1751, %v1751
      %v1784 = vpack.c.bf16 %v1752, %v1752
      %v1785 = vpack.c.bf16 %v1753, %v1753
      %v1786 = vpack.c.bf16 %v1754, %v1754
      %v1787 = vpack.c.bf16 %v1755, %v1755
      %v1788 = vpack.c.bf16 %v1756, %v1756
      %v1789 = vpack.c.bf16 %v1757, %v1757
      %v1790 = vpack.c.bf16 %v1758, %v1758
      %v1791 = vpack.c.bf16 %v1759, %v1759
      %v1792 = vpack.c.bf16 %v1760, %v1760
      %v1793 = vpack.c.bf16 %v1761, %v1761
      %v1794 = vpack.c.bf16 %v1762, %v1762
      %v1795 = vpack.c.bf16 %v1763, %v1763
      %v1796 = vpack.c.bf16 %v1764, %v1764
      %v1797 = vpack.c.bf16 %v1765, %v1765
      %v1798 = vpack.c.bf16 %v1766, %v1766
      %v1799 = vpack.c.bf16 %v1767, %v1767
      %v1800 = vpack.c.bf16 %v1768, %v1768
      %v1801 = vpack.c.bf16 %v1769, %v1769
      %1802 = vst.msk [vmem:[#allocation3 + $0x10] sm:$0xf] %vm519, %v1770
      %1803 = vst.msk [vmem:[#allocation3 + $0x24] sm:$0xf] %vm519, %v1771
      %1804 = vst.msk [vmem:[#allocation3 + $0x38] sm:$0xf] %vm519, %v1772
      %1805 = vst.msk [vmem:[#allocation3 + $0x4c] sm:$0xf] %vm519, %v1773
      %1806 = vst.msk [vmem:[#allocation3 + $0x60] sm:$0xf] %vm519, %v1774
      %1807 = vst.msk [vmem:[#allocation3 + $0x74] sm:$0xf] %vm519, %v1775
      %1808 = vst.msk [vmem:[#allocation3 + $0x88] sm:$0xf] %vm519, %v1776
      %1809 = vst.msk [vmem:[#allocation3 + $0x9c] sm:$0xf] %vm519, %v1777
      %1810 = vst.msk [vmem:[#allocation3 + $0xb0] sm:$0xf] %vm519, %v1778
      %1811 = vst.msk [vmem:[#allocation3 + $0xc4] sm:$0xf] %vm519, %v1779
      %1812 = vst.msk [vmem:[#allocation3 + $0xd8] sm:$0xf] %vm519, %v1780
      %1813 = vst.msk [vmem:[#allocation3 + $0xec] sm:$0xf] %vm519, %v1781
      %1814 = vst.msk [vmem:[#allocation3 + $0x100] sm:$0xf] %vm519, %v1782
      %1815 = vst.msk [vmem:[#allocation3 + $0x114] sm:$0xf] %vm519, %v1783
      %1816 = vst.msk [vmem:[#allocation3 + $0x128] sm:$0xf] %vm519, %v1784
      %1817 = vst.msk [vmem:[#allocation3 + $0x13c] sm:$0xf] %vm519, %v1785
      %1818 = vst.msk [vmem:[#allocation3 + $0x150] sm:$0xf] %vm519, %v1786
      %1819 = vst.msk [vmem:[#allocation3 + $0x164] sm:$0xf] %vm519, %v1787
      %1820 = vst.msk [vmem:[#allocation3 + $0x178] sm:$0xf] %vm519, %v1788
      %1821 = vst.msk [vmem:[#allocation3 + $0x18c] sm:$0xf] %vm519, %v1789
      %1822 = vst.msk [vmem:[#allocation3 + $0x1a0] sm:$0xf] %vm519, %v1790
      %1823 = vst.msk [vmem:[#allocation3 + $0x1b4] sm:$0xf] %vm519, %v1791
      %1824 = vst.msk [vmem:[#allocation3 + $0x1c8] sm:$0xf] %vm519, %v1792
      %1825 = vst.msk [vmem:[#allocation3 + $0x1dc] sm:$0xf] %vm519, %v1793
      %1826 = vst.msk [vmem:[#allocation3 + $0x1f0] sm:$0xf] %vm519, %v1794
      %1827 = vst.msk [vmem:[#allocation3 + $0x204] sm:$0xf] %vm519, %v1795
      %1828 = vst.msk [vmem:[#allocation3 + $0x218] sm:$0xf] %vm519, %v1796
      %1829 = vst.msk [vmem:[#allocation3 + $0x22c] sm:$0xf] %vm519, %v1797
      %1830 = vst.msk [vmem:[#allocation3 + $0x240] sm:$0xf] %vm519, %v1798
      %1831 = vst.msk [vmem:[#allocation3 + $0x254] sm:$0xf] %vm519, %v1799
      %1832 = vst.msk [vmem:[#allocation3 + $0x268] sm:$0xf] %vm519, %v1800
      %1833 = vst.msk [vmem:[#allocation3 + $0x27c] sm:$0xf] %vm519, %v1801
      %v1834 = vld [vmem:[#allocation3] sm:$0xff]
      %v1835 = vld [vmem:[#allocation3 + $0x8] sm:$0xff]
      %v1836 = vld [vmem:[#allocation3 + $0x10] sm:$0xf]
      %v1837 = vld [vmem:[#allocation3 + $0x14] sm:$0xff]
      %v1838 = vld [vmem:[#allocation3 + $0x1c] sm:$0xff]
      %v1839 = vld [vmem:[#allocation3 + $0x24] sm:$0xf]
      %v1840 = vld [vmem:[#allocation3 + $0x28] sm:$0xff]
      %v1841 = vld [vmem:[#allocation3 + $0x30] sm:$0xff]
      %v1842 = vld [vmem:[#allocation3 + $0x38] sm:$0xf]
      %v1843 = vld [vmem:[#allocation3 + $0x3c] sm:$0xff]
      %v1844 = vld [vmem:[#allocation3 + $0x44] sm:$0xff]
      %v1845 = vld [vmem:[#allocation3 + $0x4c] sm:$0xf]
      %v1846 = vld [vmem:[#allocation3 + $0x50] sm:$0xff]
      %v1847 = vld [vmem:[#allocation3 + $0x58] sm:$0xff]
      %v1848 = vld [vmem:[#allocation3 + $0x60] sm:$0xf]
      %v1849 = vld [vmem:[#allocation3 + $0x64] sm:$0xff]
      %v1850 = vld [vmem:[#allocation3 + $0x6c] sm:$0xff]
      %v1851 = vld [vmem:[#allocation3 + $0x74] sm:$0xf]
      %v1852 = vld [vmem:[#allocation3 + $0x78] sm:$0xff]
      %v1853 = vld [vmem:[#allocation3 + $0x80] sm:$0xff]
      %v1854 = vld [vmem:[#allocation3 + $0x88] sm:$0xf]
      %v1855 = vld [vmem:[#allocation3 + $0x8c] sm:$0xff]
      %v1856 = vld [vmem:[#allocation3 + $0x94] sm:$0xff]
      %v1857 = vld [vmem:[#allocation3 + $0x9c] sm:$0xf]
      %v1858 = vld [vmem:[#allocation3 + $0xa0] sm:$0xff]
      %v1859 = vld [vmem:[#allocation3 + $0xa8] sm:$0xff]
      %v1860 = vld [vmem:[#allocation3 + $0xb0] sm:$0xf]
      %v1861 = vld [vmem:[#allocation3 + $0xb4] sm:$0xff]
      %v1862 = vld [vmem:[#allocation3 + $0xbc] sm:$0xff]
      %v1863 = vld [vmem:[#allocation3 + $0xc4] sm:$0xf]
      %v1864 = vld [vmem:[#allocation3 + $0xc8] sm:$0xff]
      %v1865 = vld [vmem:[#allocation3 + $0xd0] sm:$0xff]
      %v1866 = vld [vmem:[#allocation3 + $0xd8] sm:$0xf]
      %v1867 = vld [vmem:[#allocation3 + $0xdc] sm:$0xff]
      %v1868 = vld [vmem:[#allocation3 + $0xe4] sm:$0xff]
      %v1869 = vld [vmem:[#allocation3 + $0xec] sm:$0xf]
      %v1870 = vld [vmem:[#allocation3 + $0xf0] sm:$0xff]
      %v1871 = vld [vmem:[#allocation3 + $0xf8] sm:$0xff]
      %v1872 = vld [vmem:[#allocation3 + $0x100] sm:$0xf]
      %v1873 = vld [vmem:[#allocation3 + $0x104] sm:$0xff]
      %v1874 = vld [vmem:[#allocation3 + $0x10c] sm:$0xff]
      %v1875 = vld [vmem:[#allocation3 + $0x114] sm:$0xf]
      %v1876 = vld [vmem:[#allocation3 + $0x118] sm:$0xff]
      %v1877 = vld [vmem:[#allocation3 + $0x120] sm:$0xff]
      %v1878 = vld [vmem:[#allocation3 + $0x128] sm:$0xf]
      %v1879 = vld [vmem:[#allocation3 + $0x12c] sm:$0xff]
      %v1880 = vld [vmem:[#allocation3 + $0x134] sm:$0xff]
      %v1881 = vld [vmem:[#allocation3 + $0x13c] sm:$0xf]
      %v1882 = vld [vmem:[#allocation3 + $0x140] sm:$0xff]
      %v1883 = vld [vmem:[#allocation3 + $0x148] sm:$0xff]
      %v1884 = vld [vmem:[#allocation3 + $0x150] sm:$0xf]
      %v1885 = vld [vmem:[#allocation3 + $0x154] sm:$0xff]
      %v1886 = vld [vmem:[#allocation3 + $0x15c] sm:$0xff]
      %v1887 = vld [vmem:[#allocation3 + $0x164] sm:$0xf]
      %v1888 = vld [vmem:[#allocation3 + $0x168] sm:$0xff]
      %v1889 = vld [vmem:[#allocation3 + $0x170] sm:$0xff]
      %v1890 = vld [vmem:[#allocation3 + $0x178] sm:$0xf]
      %v1891 = vld [vmem:[#allocation3 + $0x17c] sm:$0xff]
      %v1892 = vld [vmem:[#allocation3 + $0x184] sm:$0xff]
      %v1893 = vld [vmem:[#allocation3 + $0x18c] sm:$0xf]
      %v1894 = vld [vmem:[#allocation3 + $0x190] sm:$0xff]
      %v1895 = vld [vmem:[#allocation3 + $0x198] sm:$0xff]
      %v1896 = vld [vmem:[#allocation3 + $0x1a0] sm:$0xf]
      %v1897 = vld [vmem:[#allocation3 + $0x1a4] sm:$0xff]
      %v1898 = vld [vmem:[#allocation3 + $0x1ac] sm:$0xff]
      %v1899 = vld [vmem:[#allocation3 + $0x1b4] sm:$0xf]
      %v1900 = vld [vmem:[#allocation3 + $0x1b8] sm:$0xff]
      %v1901 = vld [vmem:[#allocation3 + $0x1c0] sm:$0xff]
      %v1902 = vld [vmem:[#allocation3 + $0x1c8] sm:$0xf]
      %v1903 = vld [vmem:[#allocation3 + $0x1cc] sm:$0xff]
      %v1904 = vld [vmem:[#allocation3 + $0x1d4] sm:$0xff]
      %v1905 = vld [vmem:[#allocation3 + $0x1dc] sm:$0xf]
      %v1906 = vld [vmem:[#allocation3 + $0x1e0] sm:$0xff]
      %v1907 = vld [vmem:[#allocation3 + $0x1e8] sm:$0xff]
      %v1908 = vld [vmem:[#allocation3 + $0x1f0] sm:$0xf]
      %v1909 = vld [vmem:[#allocation3 + $0x1f4] sm:$0xff]
      %v1910 = vld [vmem:[#allocation3 + $0x1fc] sm:$0xff]
      %v1911 = vld [vmem:[#allocation3 + $0x204] sm:$0xf]
      %v1912 = vld [vmem:[#allocation3 + $0x208] sm:$0xff]
      %v1913 = vld [vmem:[#allocation3 + $0x210] sm:$0xff]
      %v1914 = vld [vmem:[#allocation3 + $0x218] sm:$0xf]
      %v1915 = vld [vmem:[#allocation3 + $0x21c] sm:$0xff]
      %v1916 = vld [vmem:[#allocation3 + $0x224] sm:$0xff]
      %v1917 = vld [vmem:[#allocation3 + $0x22c] sm:$0xf]
      %v1918 = vld [vmem:[#allocation3 + $0x230] sm:$0xff]
      %v1919 = vld [vmem:[#allocation3 + $0x238] sm:$0xff]
      %v1920 = vld [vmem:[#allocation3 + $0x240] sm:$0xf]
      %v1921 = vld [vmem:[#allocation3 + $0x244] sm:$0xff]
      %v1922 = vld [vmem:[#allocation3 + $0x24c] sm:$0xff]
      %v1923 = vld [vmem:[#allocation3 + $0x254] sm:$0xf]
      %v1924 = vld [vmem:[#allocation3 + $0x258] sm:$0xff]
      %v1925 = vld [vmem:[#allocation3 + $0x260] sm:$0xff]
      %v1926 = vld [vmem:[#allocation3 + $0x268] sm:$0xf]
      %v1927 = vld [vmem:[#allocation3 + $0x26c] sm:$0xff]
      %v1928 = vld [vmem:[#allocation3 + $0x274] sm:$0xff]
      %v1929 = vld [vmem:[#allocation3 + $0x27c] sm:$0xf]
      %v1930 = vld [vmem:[%s1] sm:$0xf]
      %v1931 = vld [vmem:[%s1 + $0x4] sm:$0xf]
      %v1932 = vld [vmem:[%s1 + $0x8] sm:$0xf]
      %v1933 = vld [vmem:[%s1 + $0xc] sm:$0xf]
      %v1934 = vld [vmem:[%s1 + $0x10] sm:$0xf]
      %v1935 = vld [vmem:[%s1 + $0x14] sm:$0xf]
      %v1936 = vld [vmem:[%s1 + $0x18] sm:$0xf]
      %v1937 = vld [vmem:[%s1 + $0x1c] sm:$0xf]
      %v1938 = vld [vmem:[%s1 + $0x20] sm:$0xf]
      %v1939 = vld [vmem:[%s1 + $0x24] sm:$0xf]
      %v1940 = vld [vmem:[%s1 + $0x28] sm:$0xf]
      %v1941 = vld [vmem:[%s1 + $0x2c] sm:$0xf]
      %v1942 = vld [vmem:[%s1 + $0x30] sm:$0xf]
      %v1943 = vld [vmem:[%s1 + $0x34] sm:$0xf]
      %v1944 = vld [vmem:[%s1 + $0x38] sm:$0xf]
      %v1945 = vld [vmem:[%s1 + $0x3c] sm:$0xf]
      %v1946 = vld [vmem:[%s1 + $0x40] sm:$0xf]
      %v1947 = vld [vmem:[%s1 + $0x44] sm:$0xf]
      %v1948 = vld [vmem:[%s1 + $0x48] sm:$0xf]
      %v1949 = vld [vmem:[%s1 + $0x4c] sm:$0xf]
      %v1950 = vld [vmem:[%s1 + $0x50] sm:$0xf]
      %v1951 = vld [vmem:[%s1 + $0x54] sm:$0xf]
      %v1952 = vld [vmem:[%s1 + $0x58] sm:$0xf]
      %v1953 = vld [vmem:[%s1 + $0x5c] sm:$0xf]
      %v1954 = vld [vmem:[%s1 + $0x60] sm:$0xf]
      %v1955 = vld [vmem:[%s1 + $0x64] sm:$0xf]
      %v1956 = vld [vmem:[%s1 + $0x68] sm:$0xf]
      %v1957 = vld [vmem:[%s1 + $0x6c] sm:$0xf]
      %v1958 = vld [vmem:[%s1 + $0x70] sm:$0xf]
      %v1959 = vld [vmem:[%s1 + $0x74] sm:$0xf]
      %v1960 = vld [vmem:[%s1 + $0x78] sm:$0xf]
      %v1961 = vld [vmem:[%s1 + $0x7c] sm:$0xf]
      %v1962 = vld [vmem:[%s1 + $0x80] sm:$0xf]
      %v1963 = vld [vmem:[%s1 + $0x84] sm:$0xf]
      %v1964 = vld [vmem:[%s1 + $0x88] sm:$0xf]
      %v1965 = vld [vmem:[%s1 + $0x8c] sm:$0xf]
      %v1966 = vld [vmem:[%s1 + $0x90] sm:$0xf]
      %v1967 = vld [vmem:[%s1 + $0x94] sm:$0xf]
      %v1968 = vld [vmem:[%s1 + $0x98] sm:$0xf]
      %v1969 = vld [vmem:[%s1 + $0x9c] sm:$0xf]
      %v1970 = vld [vmem:[%s1 + $0xa0] sm:$0xf]
      %v1971 = vld [vmem:[%s1 + $0xa4] sm:$0xf]
      %v1972 = vld [vmem:[%s1 + $0xa8] sm:$0xf]
      %v1973 = vld [vmem:[%s1 + $0xac] sm:$0xf]
      %v1974 = vld [vmem:[%s1 + $0xb0] sm:$0xf]
      %v1975 = vld [vmem:[%s1 + $0xb4] sm:$0xf]
      %v1976 = vld [vmem:[%s1 + $0xb8] sm:$0xf]
      %v1977 = vld [vmem:[%s1 + $0xbc] sm:$0xf]
      %v1978 = vld [vmem:[%s1 + $0xc0] sm:$0xf]
      %v1979 = vld [vmem:[%s1 + $0xc4] sm:$0xf]
      %v1980 = vld [vmem:[%s1 + $0xc8] sm:$0xf]
      %v1981 = vld [vmem:[%s1 + $0xcc] sm:$0xf]
      %v1982 = vld [vmem:[%s1 + $0xd0] sm:$0xf]
      %v1983 = vld [vmem:[%s1 + $0xd4] sm:$0xf]
      %v1984 = vld [vmem:[%s1 + $0xd8] sm:$0xf]
      %v1985 = vld [vmem:[%s1 + $0xdc] sm:$0xf]
      %v1986 = vld [vmem:[%s1 + $0xe0] sm:$0xf]
      %v1987 = vld [vmem:[%s1 + $0xe4] sm:$0xf]
      %v1988 = vld [vmem:[%s1 + $0xe8] sm:$0xf]
      %v1989 = vld [vmem:[%s1 + $0xec] sm:$0xf]
      %v1990 = vld [vmem:[%s1 + $0xf0] sm:$0xf]
      %v1991 = vld [vmem:[%s1 + $0xf4] sm:$0xf]
      %v1992 = vld [vmem:[%s1 + $0xf8] sm:$0xf]
      %v1993 = vld [vmem:[%s1 + $0xfc] sm:$0xf]
      %v1994 = vld [vmem:[%s1 + $0x100] sm:$0xf]
      %v1995 = vld [vmem:[%s1 + $0x104] sm:$0xf]
      %v1996 = vld [vmem:[%s1 + $0x108] sm:$0xf]
      %v1997 = vld [vmem:[%s1 + $0x10c] sm:$0xf]
      %v1998 = vld [vmem:[%s1 + $0x110] sm:$0xf]
      %v1999 = vld [vmem:[%s1 + $0x114] sm:$0xf]
      %v2000 = vld [vmem:[%s1 + $0x118] sm:$0xf]
      %v2001 = vld [vmem:[%s1 + $0x11c] sm:$0xf]
      %v2002 = vld [vmem:[%s2] sm:$0x1]
      %v2004 = vperm.slane %v2002, 0
      %v2102 = vunpack.c.l.b16 %v1834
      %v2103 = vunpack.c.h.b16 %v1834
      %v2104 = vunpack.c.l.b16 %v1835
      %v2105 = vunpack.c.h.b16 %v1835
      %v2106 = vunpack.c.l.b16 %v1836
      %v2107 = vunpack.c.l.b16 %v1837
      %v2108 = vunpack.c.h.b16 %v1837
      %v2109 = vunpack.c.l.b16 %v1838
      %v2110 = vunpack.c.h.b16 %v1838
      %v2111 = vunpack.c.l.b16 %v1839
      %v2112 = vunpack.c.l.b16 %v1840
      %v2113 = vunpack.c.h.b16 %v1840
      %v2114 = vunpack.c.l.b16 %v1841
      %v2115 = vunpack.c.h.b16 %v1841
      %v2116 = vunpack.c.l.b16 %v1842
      %v2117 = vunpack.c.l.b16 %v1843
      %v2118 = vunpack.c.h.b16 %v1843
      %v2119 = vunpack.c.l.b16 %v1844
      %v2120 = vunpack.c.h.b16 %v1844
      %v2121 = vunpack.c.l.b16 %v1845
      %v2122 = vunpack.c.l.b16 %v1846
      %v2123 = vunpack.c.h.b16 %v1846
      %v2124 = vunpack.c.l.b16 %v1847
      %v2125 = vunpack.c.h.b16 %v1847
      %v2126 = vunpack.c.l.b16 %v1848
      %v2127 = vunpack.c.l.b16 %v1849
      %v2128 = vunpack.c.h.b16 %v1849
      %v2129 = vunpack.c.l.b16 %v1850
      %v2130 = vunpack.c.h.b16 %v1850
      %v2131 = vunpack.c.l.b16 %v1851
      %v2132 = vunpack.c.l.b16 %v1852
      %v2133 = vunpack.c.h.b16 %v1852
      %v2134 = vunpack.c.l.b16 %v1853
      %v2135 = vunpack.c.h.b16 %v1853
      %v2136 = vunpack.c.l.b16 %v1854
      %v2137 = vunpack.c.l.b16 %v1855
      %v2138 = vunpack.c.h.b16 %v1855
      %v2139 = vunpack.c.l.b16 %v1856
      %v2140 = vunpack.c.h.b16 %v1856
      %v2141 = vunpack.c.l.b16 %v1857
      %v2142 = vunpack.c.l.b16 %v1858
      %v2143 = vunpack.c.h.b16 %v1858
      %v2144 = vunpack.c.l.b16 %v1859
      %v2145 = vunpack.c.h.b16 %v1859
      %v2146 = vunpack.c.l.b16 %v1860
      %v2147 = vunpack.c.l.b16 %v1861
      %v2148 = vunpack.c.h.b16 %v1861
      %v2149 = vunpack.c.l.b16 %v1862
      %v2150 = vunpack.c.h.b16 %v1862
      %v2151 = vunpack.c.l.b16 %v1863
      %v2152 = vunpack.c.l.b16 %v1864
      %v2153 = vunpack.c.h.b16 %v1864
      %v2154 = vunpack.c.l.b16 %v1865
      %v2155 = vunpack.c.h.b16 %v1865
      %v2156 = vunpack.c.l.b16 %v1866
      %v2157 = vunpack.c.l.b16 %v1867
      %v2158 = vunpack.c.h.b16 %v1867
      %v2159 = vunpack.c.l.b16 %v1868
      %v2160 = vunpack.c.h.b16 %v1868
      %v2161 = vunpack.c.l.b16 %v1869
      %v2162 = vunpack.c.l.b16 %v1870
      %v2163 = vunpack.c.h.b16 %v1870
      %v2164 = vunpack.c.l.b16 %v1871
      %v2165 = vunpack.c.h.b16 %v1871
      %v2166 = vunpack.c.l.b16 %v1872
      %v2167 = vunpack.c.l.b16 %v1873
      %v2168 = vunpack.c.h.b16 %v1873
      %v2169 = vunpack.c.l.b16 %v1874
      %v2170 = vunpack.c.h.b16 %v1874
      %v2171 = vunpack.c.l.b16 %v1875
      %v2172 = vunpack.c.l.b16 %v1876
      %v2173 = vunpack.c.h.b16 %v1876
      %v2174 = vunpack.c.l.b16 %v1877
      %v2175 = vunpack.c.h.b16 %v1877
      %v2176 = vunpack.c.l.b16 %v1878
      %v2177 = vunpack.c.l.b16 %v1879
      %v2178 = vunpack.c.h.b16 %v1879
      %v2179 = vunpack.c.l.b16 %v1880
      %v2180 = vunpack.c.h.b16 %v1880
      %v2181 = vunpack.c.l.b16 %v1881
      %v2182 = vunpack.c.l.b16 %v1882
      %v2183 = vunpack.c.h.b16 %v1882
      %v2184 = vunpack.c.l.b16 %v1883
      %v2185 = vunpack.c.h.b16 %v1883
      %v2186 = vunpack.c.l.b16 %v1884
      %v2187 = vunpack.c.l.b16 %v1885
      %v2188 = vunpack.c.h.b16 %v1885
      %v2189 = vunpack.c.l.b16 %v1886
      %v2190 = vunpack.c.h.b16 %v1886
      %v2191 = vunpack.c.l.b16 %v1887
      %v2192 = vunpack.c.l.b16 %v1888
      %v2193 = vunpack.c.h.b16 %v1888
      %v2194 = vunpack.c.l.b16 %v1889
      %v2195 = vunpack.c.h.b16 %v1889
      %v2196 = vunpack.c.l.b16 %v1890
      %v2197 = vunpack.c.l.b16 %v1891
      %v2198 = vunpack.c.h.b16 %v1891
      %v2199 = vunpack.c.l.b16 %v1892
      %v2200 = vunpack.c.h.b16 %v1892
      %v2201 = vunpack.c.l.b16 %v1893
      %v2202 = vunpack.c.l.b16 %v1894
      %v2203 = vunpack.c.h.b16 %v1894
      %v2204 = vunpack.c.l.b16 %v1895
      %v2205 = vunpack.c.h.b16 %v1895
      %v2206 = vunpack.c.l.b16 %v1896
      %v2207 = vunpack.c.l.b16 %v1897
      %v2208 = vunpack.c.h.b16 %v1897
      %v2209 = vunpack.c.l.b16 %v1898
      %v2210 = vunpack.c.h.b16 %v1898
      %v2211 = vunpack.c.l.b16 %v1899
      %v2212 = vunpack.c.l.b16 %v1900
      %v2213 = vunpack.c.h.b16 %v1900
      %v2214 = vunpack.c.l.b16 %v1901
      %v2215 = vunpack.c.h.b16 %v1901
      %v2216 = vunpack.c.l.b16 %v1902
      %v2217 = vunpack.c.l.b16 %v1903
      %v2218 = vunpack.c.h.b16 %v1903
      %v2219 = vunpack.c.l.b16 %v1904
      %v2220 = vunpack.c.h.b16 %v1904
      %v2221 = vunpack.c.l.b16 %v1905
      %v2222 = vunpack.c.l.b16 %v1906
      %v2223 = vunpack.c.h.b16 %v1906
      %v2224 = vunpack.c.l.b16 %v1907
      %v2225 = vunpack.c.h.b16 %v1907
      %v2226 = vunpack.c.l.b16 %v1908
      %v2227 = vunpack.c.l.b16 %v1909
      %v2228 = vunpack.c.h.b16 %v1909
      %v2229 = vunpack.c.l.b16 %v1910
      %v2230 = vunpack.c.h.b16 %v1910
      %v2231 = vunpack.c.l.b16 %v1911
      %v2232 = vunpack.c.l.b16 %v1912
      %v2233 = vunpack.c.h.b16 %v1912
      %v2234 = vunpack.c.l.b16 %v1913
      %v2235 = vunpack.c.h.b16 %v1913
      %v2236 = vunpack.c.l.b16 %v1914
      %v2237 = vunpack.c.l.b16 %v1915
      %v2238 = vunpack.c.h.b16 %v1915
      %v2239 = vunpack.c.l.b16 %v1916
      %v2240 = vunpack.c.h.b16 %v1916
      %v2241 = vunpack.c.l.b16 %v1917
      %v2242 = vunpack.c.l.b16 %v1918
      %v2243 = vunpack.c.h.b16 %v1918
      %v2244 = vunpack.c.l.b16 %v1919
      %v2245 = vunpack.c.h.b16 %v1919
      %v2246 = vunpack.c.l.b16 %v1920
      %v2247 = vunpack.c.l.b16 %v1921
      %v2248 = vunpack.c.h.b16 %v1921
      %v2249 = vunpack.c.l.b16 %v1922
      %v2250 = vunpack.c.h.b16 %v1922
      %v2251 = vunpack.c.l.b16 %v1923
      %v2252 = vunpack.c.l.b16 %v1924
      %v2253 = vunpack.c.h.b16 %v1924
      %v2254 = vunpack.c.l.b16 %v1925
      %v2255 = vunpack.c.h.b16 %v1925
      %v2256 = vunpack.c.l.b16 %v1926
      %v2257 = vunpack.c.l.b16 %v1927
      %v2258 = vunpack.c.h.b16 %v1927
      %v2259 = vunpack.c.l.b16 %v1928
      %v2260 = vunpack.c.h.b16 %v1928
      %v2261 = vunpack.c.l.b16 %v1929
      %v2262 = vpack.c.b16 %v2107, %v2102
      %v2263 = vpack.c.b16 %v2108, %v2103
      %v2264 = vpack.c.b16 %v2109, %v2104
      %v2265 = vpack.c.b16 %v2110, %v2105
      %v2266 = vpack.c.b16 %v2111, %v2106
      %v2267 = vpack.c.b16 %v2117, %v2112
      %v2268 = vpack.c.b16 %v2118, %v2113
      %v2269 = vpack.c.b16 %v2119, %v2114
      %v2270 = vpack.c.b16 %v2120, %v2115
      %v2271 = vpack.c.b16 %v2121, %v2116
      %v2272 = vpack.c.b16 %v2127, %v2122
      %v2273 = vpack.c.b16 %v2128, %v2123
      %v2274 = vpack.c.b16 %v2129, %v2124
      %v2275 = vpack.c.b16 %v2130, %v2125
      %v2276 = vpack.c.b16 %v2131, %v2126
      %v2277 = vpack.c.b16 %v2137, %v2132
      %v2278 = vpack.c.b16 %v2138, %v2133
      %v2279 = vpack.c.b16 %v2139, %v2134
      %v2280 = vpack.c.b16 %v2140, %v2135
      %v2281 = vpack.c.b16 %v2141, %v2136
      %v2282 = vpack.c.b16 %v2147, %v2142
      %v2283 = vpack.c.b16 %v2148, %v2143
      %v2284 = vpack.c.b16 %v2149, %v2144
      %v2285 = vpack.c.b16 %v2150, %v2145
      %v2286 = vpack.c.b16 %v2151, %v2146
      %v2287 = vpack.c.b16 %v2157, %v2152
      %v2288 = vpack.c.b16 %v2158, %v2153
      %v2289 = vpack.c.b16 %v2159, %v2154
      %v2290 = vpack.c.b16 %v2160, %v2155
      %v2291 = vpack.c.b16 %v2161, %v2156
      %v2292 = vpack.c.b16 %v2167, %v2162
      %v2293 = vpack.c.b16 %v2168, %v2163
      %v2294 = vpack.c.b16 %v2169, %v2164
      %v2295 = vpack.c.b16 %v2170, %v2165
      %v2296 = vpack.c.b16 %v2171, %v2166
      %v2297 = vpack.c.b16 %v2177, %v2172
      %v2298 = vpack.c.b16 %v2178, %v2173
      %v2299 = vpack.c.b16 %v2179, %v2174
      %v2300 = vpack.c.b16 %v2180, %v2175
      %v2301 = vpack.c.b16 %v2181, %v2176
      %v2302 = vpack.c.b16 %v2187, %v2182
      %v2303 = vpack.c.b16 %v2188, %v2183
      %v2304 = vpack.c.b16 %v2189, %v2184
      %v2305 = vpack.c.b16 %v2190, %v2185
      %v2306 = vpack.c.b16 %v2191, %v2186
      %v2307 = vpack.c.b16 %v2197, %v2192
      %v2308 = vpack.c.b16 %v2198, %v2193
      %v2309 = vpack.c.b16 %v2199, %v2194
      %v2310 = vpack.c.b16 %v2200, %v2195
      %v2311 = vpack.c.b16 %v2201, %v2196
      %v2312 = vpack.c.b16 %v2207, %v2202
      %v2313 = vpack.c.b16 %v2208, %v2203
      %v2314 = vpack.c.b16 %v2209, %v2204
      %v2315 = vpack.c.b16 %v2210, %v2205
      %v2316 = vpack.c.b16 %v2211, %v2206
      %v2317 = vpack.c.b16 %v2217, %v2212
      %v2318 = vpack.c.b16 %v2218, %v2213
      %v2319 = vpack.c.b16 %v2219, %v2214
      %v2320 = vpack.c.b16 %v2220, %v2215
      %v2321 = vpack.c.b16 %v2221, %v2216
      %v2322 = vpack.c.b16 %v2227, %v2222
      %v2323 = vpack.c.b16 %v2228, %v2223
      %v2324 = vpack.c.b16 %v2229, %v2224
      %v2325 = vpack.c.b16 %v2230, %v2225
      %v2326 = vpack.c.b16 %v2231, %v2226
      %v2327 = vpack.c.b16 %v2237, %v2232
      %v2328 = vpack.c.b16 %v2238, %v2233
      %v2329 = vpack.c.b16 %v2239, %v2234
      %v2330 = vpack.c.b16 %v2240, %v2235
      %v2331 = vpack.c.b16 %v2241, %v2236
      %v2332 = vpack.c.b16 %v2247, %v2242
      %v2333 = vpack.c.b16 %v2248, %v2243
      %v2334 = vpack.c.b16 %v2249, %v2244
      %v2335 = vpack.c.b16 %v2250, %v2245
      %v2336 = vpack.c.b16 %v2251, %v2246
      %v2337 = vpack.c.b16 %v2257, %v2252
      %v2338 = vpack.c.b16 %v2258, %v2253
      %v2339 = vpack.c.b16 %v2259, %v2254
      %v2340 = vpack.c.b16 %v2260, %v2255
      %v2341 = vpack.c.b16 %v2261, %v2256
      %v2478 = vunpack.c.l.b16 %v1930
      %v2479 = vunpack.c.l.b16 %v1931
      %v2480 = vunpack.c.l.b16 %v1932
      %v2481 = vunpack.c.l.b16 %v1933
      %v2482 = vunpack.c.l.b16 %v1934
      %v2483 = vunpack.c.l.b16 %v1935
      %v2484 = vunpack.c.l.b16 %v1936
      %v2485 = vunpack.c.l.b16 %v1937
      %v2486 = vunpack.c.l.b16 %v1938
      %v2487 = vunpack.c.l.b16 %v1939
      %v2488 = vunpack.c.l.b16 %v1940
      %v2489 = vunpack.c.l.b16 %v1941
      %v2490 = vunpack.c.l.b16 %v1942
      %v2491 = vunpack.c.l.b16 %v1943
      %v2492 = vunpack.c.l.b16 %v1944
      %v2493 = vunpack.c.l.b16 %v1945
      %v2494 = vunpack.c.l.b16 %v1946
      %v2495 = vunpack.c.l.b16 %v1947
      %v2496 = vunpack.c.l.b16 %v1948
      %v2497 = vunpack.c.l.b16 %v1949
      %v2498 = vunpack.c.l.b16 %v1950
      %v2499 = vunpack.c.l.b16 %v1951
      %v2500 = vunpack.c.l.b16 %v1952
      %v2501 = vunpack.c.l.b16 %v1953
      %v2502 = vunpack.c.l.b16 %v1954
      %v2503 = vunpack.c.l.b16 %v1955
      %v2504 = vunpack.c.l.b16 %v1956
      %v2505 = vunpack.c.l.b16 %v1957
      %v2506 = vunpack.c.l.b16 %v1958
      %v2507 = vunpack.c.l.b16 %v1959
      %v2508 = vunpack.c.l.b16 %v1960
      %v2509 = vunpack.c.l.b16 %v1961
      %v2510 = vunpack.c.l.b16 %v1962
      %v2511 = vunpack.c.l.b16 %v1963
      %v2512 = vunpack.c.l.b16 %v1964
      %v2513 = vunpack.c.l.b16 %v1965
      %v2514 = vunpack.c.l.b16 %v1966
      %v2515 = vunpack.c.l.b16 %v1967
      %v2516 = vunpack.c.l.b16 %v1968
      %v2517 = vunpack.c.l.b16 %v1969
      %v2518 = vunpack.c.l.b16 %v1970
      %v2519 = vunpack.c.l.b16 %v1971
      %v2520 = vunpack.c.l.b16 %v1972
      %v2521 = vunpack.c.l.b16 %v1973
      %v2522 = vunpack.c.l.b16 %v1974
      %v2523 = vunpack.c.l.b16 %v1975
      %v2524 = vunpack.c.l.b16 %v1976
      %v2525 = vunpack.c.l.b16 %v1977
      %v2526 = vunpack.c.l.b16 %v1978
      %v2527 = vunpack.c.l.b16 %v1979
      %v2528 = vunpack.c.l.b16 %v1980
      %v2529 = vunpack.c.l.b16 %v1981
      %v2530 = vunpack.c.l.b16 %v1982
      %v2531 = vunpack.c.l.b16 %v1983
      %v2532 = vunpack.c.l.b16 %v1984
      %v2533 = vunpack.c.l.b16 %v1985
      %v2534 = vunpack.c.l.b16 %v1986
      %v2535 = vunpack.c.l.b16 %v1987
      %v2536 = vunpack.c.l.b16 %v1988
      %v2537 = vunpack.c.l.b16 %v1989
      %v2538 = vunpack.c.l.b16 %v1990
      %v2539 = vunpack.c.l.b16 %v1991
      %v2540 = vunpack.c.l.b16 %v1992
      %v2541 = vunpack.c.l.b16 %v1993
      %v2542 = vunpack.c.l.b16 %v1994
      %v2543 = vunpack.c.l.b16 %v1995
      %v2544 = vunpack.c.l.b16 %v1996
      %v2545 = vunpack.c.l.b16 %v1997
      %v2546 = vunpack.c.l.b16 %v1998
      %v2547 = vunpack.c.l.b16 %v1999
      %v2548 = vunpack.c.l.b16 %v2000
      %v2549 = vunpack.c.l.b16 %v2001
      %v2550 = vpack.c.b16 %v2479, %v2478
      %v2551 = vpack.c.b16 %v2481, %v2480
      %v2552 = vpack.c.b16 %v2483, %v2482
      %v2553 = vpack.c.b16 %v2485, %v2484
      %v2554 = vpack.c.b16 %v2487, %v2486
      %v2555 = vpack.c.b16 %v2489, %v2488
      %v2556 = vpack.c.b16 %v2491, %v2490
      %v2557 = vpack.c.b16 %v2493, %v2492
      %v2558 = vpack.c.b16 %v2495, %v2494
      %v2559 = vpack.c.b16 %v2497, %v2496
      %v2560 = vpack.c.b16 %v2499, %v2498
      %v2561 = vpack.c.b16 %v2501, %v2500
      %v2562 = vpack.c.b16 %v2503, %v2502
      %v2563 = vpack.c.b16 %v2505, %v2504
      %v2564 = vpack.c.b16 %v2507, %v2506
      %v2565 = vpack.c.b16 %v2509, %v2508
      %v2566 = vpack.c.b16 %v2511, %v2510
      %v2567 = vpack.c.b16 %v2513, %v2512
      %v2568 = vpack.c.b16 %v2515, %v2514
      %v2569 = vpack.c.b16 %v2517, %v2516
      %v2570 = vpack.c.b16 %v2519, %v2518
      %v2571 = vpack.c.b16 %v2521, %v2520
      %v2572 = vpack.c.b16 %v2523, %v2522
      %v2573 = vpack.c.b16 %v2525, %v2524
      %v2574 = vpack.c.b16 %v2527, %v2526
      %v2575 = vpack.c.b16 %v2529, %v2528
      %v2576 = vpack.c.b16 %v2531, %v2530
      %v2577 = vpack.c.b16 %v2533, %v2532
      %v2578 = vpack.c.b16 %v2535, %v2534
      %v2579 = vpack.c.b16 %v2537, %v2536
      %v2580 = vpack.c.b16 %v2539, %v2538
      %v2581 = vpack.c.b16 %v2541, %v2540
      %v2582 = vpack.c.b16 %v2543, %v2542
      %v2583 = vpack.c.b16 %v2545, %v2544
      %v2584 = vpack.c.b16 %v2547, %v2546
      %v2585 = vpack.c.b16 %v2549, %v2548
      %v2623 = vsel %vm334, %v2266, 0
      %v2626 = vsel %vm334, %v2271, 0
      %v2629 = vsel %vm334, %v2276, 0
      %v2632 = vsel %vm334, %v2281, 0
      %v2635 = vsel %vm334, %v2286, 0
      %v2638 = vsel %vm334, %v2291, 0
      %v2641 = vsel %vm334, %v2296, 0
      %v2644 = vsel %vm334, %v2301, 0
      %v2647 = vsel %vm334, %v2306, 0
      %v2650 = vsel %vm334, %v2311, 0
      %v2653 = vsel %vm334, %v2316, 0
      %v2656 = vsel %vm334, %v2321, 0
      %v2659 = vsel %vm334, %v2326, 0
      %v2662 = vsel %vm334, %v2331, 0
      %v2665 = vsel %vm334, %v2336, 0
      %v2668 = vsel %vm334, %v2341, 0
      %2670 = vmatpush.bf16.msra.mxu0 %v2557
      %2671 = vmatpush.bf16.msra.mxu0 %v2556
      %2672 = vmatpush.bf16.msra.mxu0 %v2555
      %2673 = vmatpush.bf16.msra.mxu0 %v2554
      %2674 = vmatpush.bf16.msra.mxu0 %v2553
      %2675 = vmatpush.bf16.msra.mxu0 %v2552
      %2676 = vmatpush.bf16.msra.mxu0 %v2551
      %2677 = vmatpush.bf16.msra.mxu0 %v2550
      %2678 = vmatmul.bf16.gmra.mxu0 %v2262
      %v2679 = vpop.f32.mrf.mxu0
      %v2680 = vadd.f32 %v2004, %v2679
      %v2681 = vpop.f32.mrf.mxu0
      %v2682 = vadd.f32 %v2004, %v2681
      %2683 = vmatmul.bf16.gmra.mxu0 %v2267
      %v2684 = vpop.f32.mrf.mxu0
      %v2685 = vadd.f32 %v2004, %v2684
      %v2686 = vpop.f32.mrf.mxu0
      %v2687 = vadd.f32 %v2004, %v2686
      %2688 = vmatmul.bf16.gmra.mxu0 %v2272
      %v2689 = vpop.f32.mrf.mxu0
      %v2690 = vadd.f32 %v2004, %v2689
      %v2691 = vpop.f32.mrf.mxu0
      %v2692 = vadd.f32 %v2004, %v2691
      %2693 = vmatmul.bf16.gmra.mxu0 %v2277
      %v2694 = vpop.f32.mrf.mxu0
      %v2695 = vadd.f32 %v2004, %v2694
      %v2696 = vpop.f32.mrf.mxu0
      %v2697 = vadd.f32 %v2004, %v2696
      %2698 = vmatmul.bf16.gmra.mxu0 %v2282
      %v2699 = vpop.f32.mrf.mxu0
      %v2700 = vadd.f32 %v2004, %v2699
      %v2701 = vpop.f32.mrf.mxu0
      %v2702 = vadd.f32 %v2004, %v2701
      %2703 = vmatmul.bf16.gmra.mxu0 %v2287
      %v2704 = vpop.f32.mrf.mxu0
      %v2705 = vadd.f32 %v2004, %v2704
      %v2706 = vpop.f32.mrf.mxu0
      %v2707 = vadd.f32 %v2004, %v2706
      %2708 = vmatmul.bf16.gmra.mxu0 %v2292
      %v2709 = vpop.f32.mrf.mxu0
      %v2710 = vadd.f32 %v2004, %v2709
      %v2711 = vpop.f32.mrf.mxu0
      %v2712 = vadd.f32 %v2004, %v2711
      %2713 = vmatmul.bf16.gmra.mxu0 %v2297
      %v2714 = vpop.f32.mrf.mxu0
      %v2715 = vadd.f32 %v2004, %v2714
      %v2716 = vpop.f32.mrf.mxu0
      %v2717 = vadd.f32 %v2004, %v2716
      %2718 = vmatmul.bf16.gmra.mxu0 %v2302
      %v2719 = vpop.f32.mrf.mxu0
      %v2720 = vadd.f32 %v2004, %v2719
      %v2721 = vpop.f32.mrf.mxu0
      %v2722 = vadd.f32 %v2004, %v2721
      %2723 = vmatmul.bf16.gmra.mxu0 %v2307
      %v2724 = vpop.f32.mrf.mxu0
      %v2725 = vadd.f32 %v2004, %v2724
      %v2726 = vpop.f32.mrf.mxu0
      %v2727 = vadd.f32 %v2004, %v2726
      %2728 = vmatmul.bf16.gmra.mxu0 %v2312
      %v2729 = vpop.f32.mrf.mxu0
      %v2730 = vadd.f32 %v2004, %v2729
      %v2731 = vpop.f32.mrf.mxu0
      %v2732 = vadd.f32 %v2004, %v2731
      %2733 = vmatmul.bf16.gmra.mxu0 %v2317
      %v2734 = vpop.f32.mrf.mxu0
      %v2735 = vadd.f32 %v2004, %v2734
      %v2736 = vpop.f32.mrf.mxu0
      %v2737 = vadd.f32 %v2004, %v2736
      %2738 = vmatmul.bf16.gmra.mxu0 %v2322
      %v2739 = vpop.f32.mrf.mxu0
      %v2740 = vadd.f32 %v2004, %v2739
      %v2741 = vpop.f32.mrf.mxu0
      %v2742 = vadd.f32 %v2004, %v2741
      %2743 = vmatmul.bf16.gmra.mxu0 %v2327
      %v2744 = vpop.f32.mrf.mxu0
      %v2745 = vadd.f32 %v2004, %v2744
      %v2746 = vpop.f32.mrf.mxu0
      %v2747 = vadd.f32 %v2004, %v2746
      %2748 = vmatmul.bf16.gmra.mxu0 %v2332
      %v2749 = vpop.f32.mrf.mxu0
      %v2750 = vadd.f32 %v2004, %v2749
      %v2751 = vpop.f32.mrf.mxu0
      %v2752 = vadd.f32 %v2004, %v2751
      %2753 = vmatmul.bf16.gmra.mxu0 %v2337
      %v2754 = vpop.f32.mrf.mxu0
      %v2755 = vadd.f32 %v2004, %v2754
      %v2756 = vpop.f32.mrf.mxu0
      %v2757 = vadd.f32 %v2004, %v2756
      %2758 = vdwg.mxu0
      %2759 = vmatpush.bf16.msra.mxu0 %v2565
      %2760 = vmatpush.bf16.msra.mxu0 %v2564
      %2761 = vmatpush.bf16.msra.mxu0 %v2563
      %2762 = vmatpush.bf16.msra.mxu0 %v2562
      %2763 = vmatpush.bf16.msra.mxu0 %v2561
      %2764 = vmatpush.bf16.msra.mxu0 %v2560
      %2765 = vmatpush.bf16.msra.mxu0 %v2559
      %2766 = vmatpush.bf16.msra.mxu0 %v2558
      %2767 = vmatmul.bf16.gmra.mxu0 %v2263
      %v2768 = vpop.f32.mrf.mxu0
      %v2769 = vadd.f32 %v2680, %v2768
      %v2770 = vpop.f32.mrf.mxu0
      %v2771 = vadd.f32 %v2682, %v2770
      %2772 = vmatmul.bf16.gmra.mxu0 %v2268
      %v2773 = vpop.f32.mrf.mxu0
      %v2774 = vadd.f32 %v2685, %v2773
      %v2775 = vpop.f32.mrf.mxu0
      %v2776 = vadd.f32 %v2687, %v2775
      %2777 = vmatmul.bf16.gmra.mxu0 %v2273
      %v2778 = vpop.f32.mrf.mxu0
      %v2779 = vadd.f32 %v2690, %v2778
      %v2780 = vpop.f32.mrf.mxu0
      %v2781 = vadd.f32 %v2692, %v2780
      %2782 = vmatmul.bf16.gmra.mxu0 %v2278
      %v2783 = vpop.f32.mrf.mxu0
      %v2784 = vadd.f32 %v2695, %v2783
      %v2785 = vpop.f32.mrf.mxu0
      %v2786 = vadd.f32 %v2697, %v2785
      %2787 = vmatmul.bf16.gmra.mxu0 %v2283
      %v2788 = vpop.f32.mrf.mxu0
      %v2789 = vadd.f32 %v2700, %v2788
      %v2790 = vpop.f32.mrf.mxu0
      %v2791 = vadd.f32 %v2702, %v2790
      %2792 = vmatmul.bf16.gmra.mxu0 %v2288
      %v2793 = vpop.f32.mrf.mxu0
      %v2794 = vadd.f32 %v2705, %v2793
      %v2795 = vpop.f32.mrf.mxu0
      %v2796 = vadd.f32 %v2707, %v2795
      %2797 = vmatmul.bf16.gmra.mxu0 %v2293
      %v2798 = vpop.f32.mrf.mxu0
      %v2799 = vadd.f32 %v2710, %v2798
      %v2800 = vpop.f32.mrf.mxu0
      %v2801 = vadd.f32 %v2712, %v2800
      %2802 = vmatmul.bf16.gmra.mxu0 %v2298
      %v2803 = vpop.f32.mrf.mxu0
      %v2804 = vadd.f32 %v2715, %v2803
      %v2805 = vpop.f32.mrf.mxu0
      %v2806 = vadd.f32 %v2717, %v2805
      %2807 = vmatmul.bf16.gmra.mxu0 %v2303
      %v2808 = vpop.f32.mrf.mxu0
      %v2809 = vadd.f32 %v2720, %v2808
      %v2810 = vpop.f32.mrf.mxu0
      %v2811 = vadd.f32 %v2722, %v2810
      %2812 = vmatmul.bf16.gmra.mxu0 %v2308
      %v2813 = vpop.f32.mrf.mxu0
      %v2814 = vadd.f32 %v2725, %v2813
      %v2815 = vpop.f32.mrf.mxu0
      %v2816 = vadd.f32 %v2727, %v2815
      %2817 = vmatmul.bf16.gmra.mxu0 %v2313
      %v2818 = vpop.f32.mrf.mxu0
      %v2819 = vadd.f32 %v2730, %v2818
      %v2820 = vpop.f32.mrf.mxu0
      %v2821 = vadd.f32 %v2732, %v2820
      %2822 = vmatmul.bf16.gmra.mxu0 %v2318
      %v2823 = vpop.f32.mrf.mxu0
      %v2824 = vadd.f32 %v2735, %v2823
      %v2825 = vpop.f32.mrf.mxu0
      %v2826 = vadd.f32 %v2737, %v2825
      %2827 = vmatmul.bf16.gmra.mxu0 %v2323
      %v2828 = vpop.f32.mrf.mxu0
      %v2829 = vadd.f32 %v2740, %v2828
      %v2830 = vpop.f32.mrf.mxu0
      %v2831 = vadd.f32 %v2742, %v2830
      %2832 = vmatmul.bf16.gmra.mxu0 %v2328
      %v2833 = vpop.f32.mrf.mxu0
      %v2834 = vadd.f32 %v2745, %v2833
      %v2835 = vpop.f32.mrf.mxu0
      %v2836 = vadd.f32 %v2747, %v2835
      %2837 = vmatmul.bf16.gmra.mxu0 %v2333
      %v2838 = vpop.f32.mrf.mxu0
      %v2839 = vadd.f32 %v2750, %v2838
      %v2840 = vpop.f32.mrf.mxu0
      %v2841 = vadd.f32 %v2752, %v2840
      %2842 = vmatmul.bf16.gmra.mxu0 %v2338
      %v2843 = vpop.f32.mrf.mxu0
      %v2844 = vadd.f32 %v2755, %v2843
      %v2845 = vpop.f32.mrf.mxu0
      %v2846 = vadd.f32 %v2757, %v2845
      %2847 = vdwg.mxu0
      %2848 = vmatpush.bf16.msra.mxu0 %v2573
      %2849 = vmatpush.bf16.msra.mxu0 %v2572
      %2850 = vmatpush.bf16.msra.mxu0 %v2571
      %2851 = vmatpush.bf16.msra.mxu0 %v2570
      %2852 = vmatpush.bf16.msra.mxu0 %v2569
      %2853 = vmatpush.bf16.msra.mxu0 %v2568
      %2854 = vmatpush.bf16.msra.mxu0 %v2567
      %2855 = vmatpush.bf16.msra.mxu0 %v2566
      %2856 = vmatmul.bf16.gmra.mxu0 %v2264
      %v2857 = vpop.f32.mrf.mxu0
      %v2858 = vadd.f32 %v2769, %v2857
      %v2859 = vpop.f32.mrf.mxu0
      %v2860 = vadd.f32 %v2771, %v2859
      %2861 = vmatmul.bf16.gmra.mxu0 %v2269
      %v2862 = vpop.f32.mrf.mxu0
      %v2863 = vadd.f32 %v2774, %v2862
      %v2864 = vpop.f32.mrf.mxu0
      %v2865 = vadd.f32 %v2776, %v2864
      %2866 = vmatmul.bf16.gmra.mxu0 %v2274
      %v2867 = vpop.f32.mrf.mxu0
      %v2868 = vadd.f32 %v2779, %v2867
      %v2869 = vpop.f32.mrf.mxu0
      %v2870 = vadd.f32 %v2781, %v2869
      %2871 = vmatmul.bf16.gmra.mxu0 %v2279
      %v2872 = vpop.f32.mrf.mxu0
      %v2873 = vadd.f32 %v2784, %v2872
      %v2874 = vpop.f32.mrf.mxu0
      %v2875 = vadd.f32 %v2786, %v2874
      %2876 = vmatmul.bf16.gmra.mxu0 %v2284
      %v2877 = vpop.f32.mrf.mxu0
      %v2878 = vadd.f32 %v2789, %v2877
      %v2879 = vpop.f32.mrf.mxu0
      %v2880 = vadd.f32 %v2791, %v2879
      %2881 = vmatmul.bf16.gmra.mxu0 %v2289
      %v2882 = vpop.f32.mrf.mxu0
      %v2883 = vadd.f32 %v2794, %v2882
      %v2884 = vpop.f32.mrf.mxu0
      %v2885 = vadd.f32 %v2796, %v2884
      %2886 = vmatmul.bf16.gmra.mxu0 %v2294
      %v2887 = vpop.f32.mrf.mxu0
      %v2888 = vadd.f32 %v2799, %v2887
      %v2889 = vpop.f32.mrf.mxu0
      %v2890 = vadd.f32 %v2801, %v2889
      %2891 = vmatmul.bf16.gmra.mxu0 %v2299
      %v2892 = vpop.f32.mrf.mxu0
      %v2893 = vadd.f32 %v2804, %v2892
      %v2894 = vpop.f32.mrf.mxu0
      %v2895 = vadd.f32 %v2806, %v2894
      %2896 = vmatmul.bf16.gmra.mxu0 %v2304
      %v2897 = vpop.f32.mrf.mxu0
      %v2898 = vadd.f32 %v2809, %v2897
      %v2899 = vpop.f32.mrf.mxu0
      %v2900 = vadd.f32 %v2811, %v2899
      %2901 = vmatmul.bf16.gmra.mxu0 %v2309
      %v2902 = vpop.f32.mrf.mxu0
      %v2903 = vadd.f32 %v2814, %v2902
      %v2904 = vpop.f32.mrf.mxu0
      %v2905 = vadd.f32 %v2816, %v2904
      %2906 = vmatmul.bf16.gmra.mxu0 %v2314
      %v2907 = vpop.f32.mrf.mxu0
      %v2908 = vadd.f32 %v2819, %v2907
      %v2909 = vpop.f32.mrf.mxu0
      %v2910 = vadd.f32 %v2821, %v2909
      %2911 = vmatmul.bf16.gmra.mxu0 %v2319
      %v2912 = vpop.f32.mrf.mxu0
      %v2913 = vadd.f32 %v2824, %v2912
      %v2914 = vpop.f32.mrf.mxu0
      %v2915 = vadd.f32 %v2826, %v2914
      %2916 = vmatmul.bf16.gmra.mxu0 %v2324
      %v2917 = vpop.f32.mrf.mxu0
      %v2918 = vadd.f32 %v2829, %v2917
      %v2919 = vpop.f32.mrf.mxu0
      %v2920 = vadd.f32 %v2831, %v2919
      %2921 = vmatmul.bf16.gmra.mxu0 %v2329
      %v2922 = vpop.f32.mrf.mxu0
      %v2923 = vadd.f32 %v2834, %v2922
      %v2924 = vpop.f32.mrf.mxu0
      %v2925 = vadd.f32 %v2836, %v2924
      %2926 = vmatmul.bf16.gmra.mxu0 %v2334
      %v2927 = vpop.f32.mrf.mxu0
      %v2928 = vadd.f32 %v2839, %v2927
      %v2929 = vpop.f32.mrf.mxu0
      %v2930 = vadd.f32 %v2841, %v2929
      %2931 = vmatmul.bf16.gmra.mxu0 %v2339
      %v2932 = vpop.f32.mrf.mxu0
      %v2933 = vadd.f32 %v2844, %v2932
      %v2934 = vpop.f32.mrf.mxu0
      %v2935 = vadd.f32 %v2846, %v2934
      %2936 = vdwg.mxu0
      %2937 = vmatpush.bf16.msra.mxu0 %v2581
      %2938 = vmatpush.bf16.msra.mxu0 %v2580
      %2939 = vmatpush.bf16.msra.mxu0 %v2579
      %2940 = vmatpush.bf16.msra.mxu0 %v2578
      %2941 = vmatpush.bf16.msra.mxu0 %v2577
      %2942 = vmatpush.bf16.msra.mxu0 %v2576
      %2943 = vmatpush.bf16.msra.mxu0 %v2575
      %2944 = vmatpush.bf16.msra.mxu0 %v2574
      %2945 = vmatmul.bf16.gmra.mxu0 %v2265
      %v2946 = vpop.f32.mrf.mxu0
      %v2947 = vadd.f32 %v2858, %v2946
      %v2948 = vpop.f32.mrf.mxu0
      %v2949 = vadd.f32 %v2860, %v2948
      %2950 = vmatmul.bf16.gmra.mxu0 %v2270
      %v2951 = vpop.f32.mrf.mxu0
      %v2952 = vadd.f32 %v2863, %v2951
      %v2953 = vpop.f32.mrf.mxu0
      %v2954 = vadd.f32 %v2865, %v2953
      %2955 = vmatmul.bf16.gmra.mxu0 %v2275
      %v2956 = vpop.f32.mrf.mxu0
      %v2957 = vadd.f32 %v2868, %v2956
      %v2958 = vpop.f32.mrf.mxu0
      %v2959 = vadd.f32 %v2870, %v2958
      %2960 = vmatmul.bf16.gmra.mxu0 %v2280
      %v2961 = vpop.f32.mrf.mxu0
      %v2962 = vadd.f32 %v2873, %v2961
      %v2963 = vpop.f32.mrf.mxu0
      %v2964 = vadd.f32 %v2875, %v2963
      %2965 = vmatmul.bf16.gmra.mxu0 %v2285
      %v2966 = vpop.f32.mrf.mxu0
      %v2967 = vadd.f32 %v2878, %v2966
      %v2968 = vpop.f32.mrf.mxu0
      %v2969 = vadd.f32 %v2880, %v2968
      %2970 = vmatmul.bf16.gmra.mxu0 %v2290
      %v2971 = vpop.f32.mrf.mxu0
      %v2972 = vadd.f32 %v2883, %v2971
      %v2973 = vpop.f32.mrf.mxu0
      %v2974 = vadd.f32 %v2885, %v2973
      %2975 = vmatmul.bf16.gmra.mxu0 %v2295
      %v2976 = vpop.f32.mrf.mxu0
      %v2977 = vadd.f32 %v2888, %v2976
      %v2978 = vpop.f32.mrf.mxu0
      %v2979 = vadd.f32 %v2890, %v2978
      %2980 = vmatmul.bf16.gmra.mxu0 %v2300
      %v2981 = vpop.f32.mrf.mxu0
      %v2982 = vadd.f32 %v2893, %v2981
      %v2983 = vpop.f32.mrf.mxu0
      %v2984 = vadd.f32 %v2895, %v2983
      %2985 = vmatmul.bf16.gmra.mxu0 %v2305
      %v2986 = vpop.f32.mrf.mxu0
      %v2987 = vadd.f32 %v2898, %v2986
      %v2988 = vpop.f32.mrf.mxu0
      %v2989 = vadd.f32 %v2900, %v2988
      %2990 = vmatmul.bf16.gmra.mxu0 %v2310
      %v2991 = vpop.f32.mrf.mxu0
      %v2992 = vadd.f32 %v2903, %v2991
      %v2993 = vpop.f32.mrf.mxu0
      %v2994 = vadd.f32 %v2905, %v2993
      %2995 = vmatmul.bf16.gmra.mxu0 %v2315
      %v2996 = vpop.f32.mrf.mxu0
      %v2997 = vadd.f32 %v2908, %v2996
      %v2998 = vpop.f32.mrf.mxu0
      %v2999 = vadd.f32 %v2910, %v2998
      %3000 = vmatmul.bf16.gmra.mxu0 %v2320
      %v3001 = vpop.f32.mrf.mxu0
      %v3002 = vadd.f32 %v2913, %v3001
      %v3003 = vpop.f32.mrf.mxu0
      %v3004 = vadd.f32 %v2915, %v3003
      %3005 = vmatmul.bf16.gmra.mxu0 %v2325
      %v3006 = vpop.f32.mrf.mxu0
      %v3007 = vadd.f32 %v2918, %v3006
      %v3008 = vpop.f32.mrf.mxu0
      %v3009 = vadd.f32 %v2920, %v3008
      %3010 = vmatmul.bf16.gmra.mxu0 %v2330
      %v3011 = vpop.f32.mrf.mxu0
      %v3012 = vadd.f32 %v2923, %v3011
      %v3013 = vpop.f32.mrf.mxu0
      %v3014 = vadd.f32 %v2925, %v3013
      %3015 = vmatmul.bf16.gmra.mxu0 %v2335
      %v3016 = vpop.f32.mrf.mxu0
      %v3017 = vadd.f32 %v2928, %v3016
      %v3018 = vpop.f32.mrf.mxu0
      %v3019 = vadd.f32 %v2930, %v3018
      %3020 = vmatmul.bf16.gmra.mxu0 %v2340
      %v3021 = vpop.f32.mrf.mxu0
      %v3022 = vadd.f32 %v2933, %v3021
      %v3023 = vpop.f32.mrf.mxu0
      %v3024 = vadd.f32 %v2935, %v3023
      %3025 = vdwg.mxu0
      %3026 = vmatpush.bf16.msra.mxu0 0
      %3027 = vmatpush.bf16.msra.mxu0 0
      %3028 = vmatpush.bf16.msra.mxu0 0
      %3029 = vmatpush.bf16.msra.mxu0 0
      %3030 = vmatpush.bf16.msra.mxu0 %v2585
      %3031 = vmatpush.bf16.msra.mxu0 %v2584
      %3032 = vmatpush.bf16.msra.mxu0 %v2583
      %3033 = vmatpush.bf16.msra.mxu0 %v2582
      %3034 = vmatmul.bf16.gmra.mxu0 %v2623
      %v3035 = vpop.f32.mrf.mxu0
      %v3036 = vadd.f32 %v2947, %v3035
      %v3037 = vpop.f32.mrf.mxu0
      %v3038 = vadd.f32 %v2949, %v3037
      %3039 = vmatmul.bf16.gmra.mxu0 %v2626
      %v3040 = vpop.f32.mrf.mxu0
      %v3041 = vadd.f32 %v2952, %v3040
      %v3042 = vpop.f32.mrf.mxu0
      %v3043 = vadd.f32 %v2954, %v3042
      %3044 = vmatmul.bf16.gmra.mxu0 %v2629
      %v3045 = vpop.f32.mrf.mxu0
      %v3046 = vadd.f32 %v2957, %v3045
      %v3047 = vpop.f32.mrf.mxu0
      %v3048 = vadd.f32 %v2959, %v3047
      %3049 = vmatmul.bf16.gmra.mxu0 %v2632
      %v3050 = vpop.f32.mrf.mxu0
      %v3051 = vadd.f32 %v2962, %v3050
      %v3052 = vpop.f32.mrf.mxu0
      %v3053 = vadd.f32 %v2964, %v3052
      %3054 = vmatmul.bf16.gmra.mxu0 %v2635
      %v3055 = vpop.f32.mrf.mxu0
      %v3056 = vadd.f32 %v2967, %v3055
      %v3057 = vpop.f32.mrf.mxu0
      %v3058 = vadd.f32 %v2969, %v3057
      %3059 = vmatmul.bf16.gmra.mxu0 %v2638
      %v3060 = vpop.f32.mrf.mxu0
      %v3061 = vadd.f32 %v2972, %v3060
      %v3062 = vpop.f32.mrf.mxu0
      %v3063 = vadd.f32 %v2974, %v3062
      %3064 = vmatmul.bf16.gmra.mxu0 %v2641
      %v3065 = vpop.f32.mrf.mxu0
      %v3066 = vadd.f32 %v2977, %v3065
      %v3067 = vpop.f32.mrf.mxu0
      %v3068 = vadd.f32 %v2979, %v3067
      %3069 = vmatmul.bf16.gmra.mxu0 %v2644
      %v3070 = vpop.f32.mrf.mxu0
      %v3071 = vadd.f32 %v2982, %v3070
      %v3072 = vpop.f32.mrf.mxu0
      %v3073 = vadd.f32 %v2984, %v3072
      %3074 = vmatmul.bf16.gmra.mxu0 %v2647
      %v3075 = vpop.f32.mrf.mxu0
      %v3076 = vadd.f32 %v2987, %v3075
      %v3077 = vpop.f32.mrf.mxu0
      %v3078 = vadd.f32 %v2989, %v3077
      %3079 = vmatmul.bf16.gmra.mxu0 %v2650
      %v3080 = vpop.f32.mrf.mxu0
      %v3081 = vadd.f32 %v2992, %v3080
      %v3082 = vpop.f32.mrf.mxu0
      %v3083 = vadd.f32 %v2994, %v3082
      %3084 = vmatmul.bf16.gmra.mxu0 %v2653
      %v3085 = vpop.f32.mrf.mxu0
      %v3086 = vadd.f32 %v2997, %v3085
      %v3087 = vpop.f32.mrf.mxu0
      %v3088 = vadd.f32 %v2999, %v3087
      %3089 = vmatmul.bf16.gmra.mxu0 %v2656
      %v3090 = vpop.f32.mrf.mxu0
      %v3091 = vadd.f32 %v3002, %v3090
      %v3092 = vpop.f32.mrf.mxu0
      %v3093 = vadd.f32 %v3004, %v3092
      %3094 = vmatmul.bf16.gmra.mxu0 %v2659
      %v3095 = vpop.f32.mrf.mxu0
      %v3096 = vadd.f32 %v3007, %v3095
      %v3097 = vpop.f32.mrf.mxu0
      %v3098 = vadd.f32 %v3009, %v3097
      %3099 = vmatmul.bf16.gmra.mxu0 %v2662
      %v3100 = vpop.f32.mrf.mxu0
      %v3101 = vadd.f32 %v3012, %v3100
      %v3102 = vpop.f32.mrf.mxu0
      %v3103 = vadd.f32 %v3014, %v3102
      %3104 = vmatmul.bf16.gmra.mxu0 %v2665
      %v3105 = vpop.f32.mrf.mxu0
      %v3106 = vadd.f32 %v3017, %v3105
      %v3107 = vpop.f32.mrf.mxu0
      %v3108 = vadd.f32 %v3019, %v3107
      %3109 = vmatmul.bf16.gmra.mxu0 %v2668
      %v3110 = vpop.f32.mrf.mxu0
      %v3111 = vadd.f32 %v3022, %v3110
      %v3112 = vpop.f32.mrf.mxu0
      %v3113 = vadd.f32 %v3024, %v3112
      %3114 = vdwg.mxu0
      %v3115 = vmax.f32 %v3036, 0.0
      %v3116 = vmax.f32 %v3038, 0.0
      %v3117 = vmax.f32 %v3041, 0.0
      %v3118 = vmax.f32 %v3043, 0.0
      %v3119 = vmax.f32 %v3046, 0.0
      %v3120 = vmax.f32 %v3048, 0.0
      %v3121 = vmax.f32 %v3051, 0.0
      %v3122 = vmax.f32 %v3053, 0.0
      %v3123 = vmax.f32 %v3056, 0.0
      %v3124 = vmax.f32 %v3058, 0.0
      %v3125 = vmax.f32 %v3061, 0.0
      %v3126 = vmax.f32 %v3063, 0.0
      %v3127 = vmax.f32 %v3066, 0.0
      %v3128 = vmax.f32 %v3068, 0.0
      %v3129 = vmax.f32 %v3071, 0.0
      %v3130 = vmax.f32 %v3073, 0.0
      %v3131 = vmax.f32 %v3076, 0.0
      %v3132 = vmax.f32 %v3078, 0.0
      %v3133 = vmax.f32 %v3081, 0.0
      %v3134 = vmax.f32 %v3083, 0.0
      %v3135 = vmax.f32 %v3086, 0.0
      %v3136 = vmax.f32 %v3088, 0.0
      %v3137 = vmax.f32 %v3091, 0.0
      %v3138 = vmax.f32 %v3093, 0.0
      %v3139 = vmax.f32 %v3096, 0.0
      %v3140 = vmax.f32 %v3098, 0.0
      %v3141 = vmax.f32 %v3101, 0.0
      %v3142 = vmax.f32 %v3103, 0.0
      %v3143 = vmax.f32 %v3106, 0.0
      %v3144 = vmax.f32 %v3108, 0.0
      %v3145 = vmax.f32 %v3111, 0.0
      %v3146 = vmax.f32 %v3113, 0.0
      %3147 = vst.msk [vmem:[%s422 + $0x1] sm:$0xff] %vm334, %v3115
      %3148 = vst.msk [vmem:[%s422 + $0x9] sm:$0xff] %vm334, %v3116
      %3149 = vst.msk [vmem:[%s422 + $0x19] sm:$0xff] %vm334, %v3117
      %3150 = vst.msk [vmem:[%s422 + $0x21] sm:$0xff] %vm334, %v3118
      %3151 = vst.msk [vmem:[%s422 + $0x31] sm:$0xff] %vm334, %v3119
      %3152 = vst.msk [vmem:[%s422 + $0x39] sm:$0xff] %vm334, %v3120
      %3153 = vst.msk [vmem:[%s422 + $0x49] sm:$0xff] %vm334, %v3121
      %3154 = vst.msk [vmem:[%s422 + $0x51] sm:$0xff] %vm334, %v3122
      %3155 = vst.msk [vmem:[%s422 + $0x61] sm:$0xff] %vm334, %v3123
      %3156 = vst.msk [vmem:[%s422 + $0x69] sm:$0xff] %vm334, %v3124
      %3157 = vst.msk [vmem:[%s422 + $0x79] sm:$0xff] %vm334, %v3125
      %3158 = vst.msk [vmem:[%s422 + $0x81] sm:$0xff] %vm334, %v3126
      %3159 = vst.msk [vmem:[%s422 + $0x91] sm:$0xff] %vm334, %v3127
      %3160 = vst.msk [vmem:[%s422 + $0x99] sm:$0xff] %vm334, %v3128
      %3161 = vst.msk [vmem:[%s422 + $0xa9] sm:$0xff] %vm334, %v3129
      %3162 = vst.msk [vmem:[%s422 + $0xb1] sm:$0xff] %vm334, %v3130
      %3163 = vst.msk [vmem:[%s422 + $0xc1] sm:$0xff] %vm334, %v3131
      %3164 = vst.msk [vmem:[%s422 + $0xc9] sm:$0xff] %vm334, %v3132
      %3165 = vst.msk [vmem:[%s422 + $0xd9] sm:$0xff] %vm334, %v3133
      %3166 = vst.msk [vmem:[%s422 + $0xe1] sm:$0xff] %vm334, %v3134
      %3167 = vst.msk [vmem:[%s422 + $0xf1] sm:$0xff] %vm334, %v3135
      %3168 = vst.msk [vmem:[%s422 + $0xf9] sm:$0xff] %vm334, %v3136
      %3169 = vst.msk [vmem:[%s422 + $0x109] sm:$0xff] %vm334, %v3137
      %3170 = vst.msk [vmem:[%s422 + $0x111] sm:$0xff] %vm334, %v3138
      %3171 = vst.msk [vmem:[%s422 + $0x121] sm:$0xff] %vm334, %v3139
      %3172 = vst.msk [vmem:[%s422 + $0x129] sm:$0xff] %vm334, %v3140
      %3173 = vst.msk [vmem:[%s422 + $0x139] sm:$0xff] %vm334, %v3141
      %3174 = vst.msk [vmem:[%s422 + $0x141] sm:$0xff] %vm334, %v3142
      %3175 = vst.msk [vmem:[%s422 + $0x151] sm:$0xff] %vm334, %v3143
      %3176 = vst.msk [vmem:[%s422 + $0x159] sm:$0xff] %vm334, %v3144
      %3177 = vst.msk [vmem:[%s422 + $0x169] sm:$0xff] %vm334, %v3145
      %3178 = vst.msk [vmem:[%s422 + $0x171] sm:$0xff] %vm334, %v3146
      %v3179 = vld [vmem:[#allocation2] sm:$0xff]
      %v3180 = vld [vmem:[#allocation2 + $0x8] sm:$0xff]
      %v3181 = vld [vmem:[#allocation2 + $0x18] sm:$0xff]
      %v3182 = vld [vmem:[#allocation2 + $0x20] sm:$0xff]
      %v3183 = vld [vmem:[#allocation2 + $0x30] sm:$0xff]
      %v3184 = vld [vmem:[#allocation2 + $0x38] sm:$0xff]
      %v3185 = vld [vmem:[#allocation2 + $0x48] sm:$0xff]
      %v3186 = vld [vmem:[#allocation2 + $0x50] sm:$0xff]
      %v3187 = vld [vmem:[#allocation2 + $0x60] sm:$0xff]
      %v3188 = vld [vmem:[#allocation2 + $0x68] sm:$0xff]
      %v3189 = vld [vmem:[#allocation2 + $0x78] sm:$0xff]
      %v3190 = vld [vmem:[#allocation2 + $0x80] sm:$0xff]
      %v3191 = vld [vmem:[#allocation2 + $0x90] sm:$0xff]
      %v3192 = vld [vmem:[#allocation2 + $0x98] sm:$0xff]
      %v3193 = vld [vmem:[#allocation2 + $0xa8] sm:$0xff]
      %v3194 = vld [vmem:[#allocation2 + $0xb0] sm:$0xff]
      %v3195 = vld [vmem:[#allocation2 + $0xc0] sm:$0xff]
      %v3196 = vld [vmem:[#allocation2 + $0xc8] sm:$0xff]
      %v3197 = vld [vmem:[#allocation2 + $0xd8] sm:$0xff]
      %v3198 = vld [vmem:[#allocation2 + $0xe0] sm:$0xff]
      %v3199 = vld [vmem:[#allocation2 + $0xf0] sm:$0xff]
      %v3200 = vld [vmem:[#allocation2 + $0xf8] sm:$0xff]
      %v3201 = vld [vmem:[#allocation2 + $0x108] sm:$0xff]
      %v3202 = vld [vmem:[#allocation2 + $0x110] sm:$0xff]
      %v3203 = vld [vmem:[#allocation2 + $0x120] sm:$0xff]
      %v3204 = vld [vmem:[#allocation2 + $0x128] sm:$0xff]
      %v3205 = vld [vmem:[#allocation2 + $0x138] sm:$0xff]
      %v3206 = vld [vmem:[#allocation2 + $0x140] sm:$0xff]
      %v3207 = vld [vmem:[#allocation2 + $0x150] sm:$0xff]
      %v3208 = vld [vmem:[#allocation2 + $0x158] sm:$0xff]
      %v3209 = vld [vmem:[#allocation2 + $0x168] sm:$0xff]
      %v3210 = vld [vmem:[#allocation2 + $0x170] sm:$0xff]
      %v3211 = vpack.c.bf16 %v3179, %v3179
      %v3212 = vpack.c.bf16 %v3180, %v3180
      %v3213 = vpack.c.bf16 %v3181, %v3181
      %v3214 = vpack.c.bf16 %v3182, %v3182
      %v3215 = vpack.c.bf16 %v3183, %v3183
      %v3216 = vpack.c.bf16 %v3184, %v3184
      %v3217 = vpack.c.bf16 %v3185, %v3185
      %v3218 = vpack.c.bf16 %v3186, %v3186
      %v3219 = vpack.c.bf16 %v3187, %v3187
      %v3220 = vpack.c.bf16 %v3188, %v3188
      %v3221 = vpack.c.bf16 %v3189, %v3189
      %v3222 = vpack.c.bf16 %v3190, %v3190
      %v3223 = vpack.c.bf16 %v3191, %v3191
      %v3224 = vpack.c.bf16 %v3192, %v3192
      %v3225 = vpack.c.bf16 %v3193, %v3193
      %v3226 = vpack.c.bf16 %v3194, %v3194
      %v3227 = vpack.c.bf16 %v3195, %v3195
      %v3228 = vpack.c.bf16 %v3196, %v3196
      %v3229 = vpack.c.bf16 %v3197, %v3197
      %v3230 = vpack.c.bf16 %v3198, %v3198
      %v3231 = vpack.c.bf16 %v3199, %v3199
      %v3232 = vpack.c.bf16 %v3200, %v3200
      %v3233 = vpack.c.bf16 %v3201, %v3201
      %v3234 = vpack.c.bf16 %v3202, %v3202
      %v3235 = vpack.c.bf16 %v3203, %v3203
      %v3236 = vpack.c.bf16 %v3204, %v3204
      %v3237 = vpack.c.bf16 %v3205, %v3205
      %v3238 = vpack.c.bf16 %v3206, %v3206
      %v3239 = vpack.c.bf16 %v3207, %v3207
      %v3240 = vpack.c.bf16 %v3208, %v3208
      %v3241 = vpack.c.bf16 %v3209, %v3209
      %v3242 = vpack.c.bf16 %v3210, %v3210
      %3243 = vst.msk [vmem:[#allocation3] sm:$0xf] %vm519, %v3211
      %3244 = vst.msk [vmem:[#allocation3 + $0x14] sm:$0xf] %vm519, %v3212
      %3245 = vst.msk [vmem:[#allocation3 + $0x28] sm:$0xf] %vm519, %v3213
      %3246 = vst.msk [vmem:[#allocation3 + $0x3c] sm:$0xf] %vm519, %v3214
      %3247 = vst.msk [vmem:[#allocation3 + $0x50] sm:$0xf] %vm519, %v3215
      %3248 = vst.msk [vmem:[#allocation3 + $0x64] sm:$0xf] %vm519, %v3216
      %3249 = vst.msk [vmem:[#allocation3 + $0x78] sm:$0xf] %vm519, %v3217
      %3250 = vst.msk [vmem:[#allocation3 + $0x8c] sm:$0xf] %vm519, %v3218
      %3251 = vst.msk [vmem:[#allocation3 + $0xa0] sm:$0xf] %vm519, %v3219
      %3252 = vst.msk [vmem:[#allocation3 + $0xb4] sm:$0xf] %vm519, %v3220
      %3253 = vst.msk [vmem:[#allocation3 + $0xc8] sm:$0xf] %vm519, %v3221
      %3254 = vst.msk [vmem:[#allocation3 + $0xdc] sm:$0xf] %vm519, %v3222
      %3255 = vst.msk [vmem:[#allocation3 + $0xf0] sm:$0xf] %vm519, %v3223
      %3256 = vst.msk [vmem:[#allocation3 + $0x104] sm:$0xf] %vm519, %v3224
      %3257 = vst.msk [vmem:[#allocation3 + $0x118] sm:$0xf] %vm519, %v3225
      %3258 = vst.msk [vmem:[#allocation3 + $0x12c] sm:$0xf] %vm519, %v3226
      %3259 = vst.msk [vmem:[#allocation3 + $0x140] sm:$0xf] %vm519, %v3227
      %3260 = vst.msk [vmem:[#allocation3 + $0x154] sm:$0xf] %vm519, %v3228
      %3261 = vst.msk [vmem:[#allocation3 + $0x168] sm:$0xf] %vm519, %v3229
      %3262 = vst.msk [vmem:[#allocation3 + $0x17c] sm:$0xf] %vm519, %v3230
      %3263 = vst.msk [vmem:[#allocation3 + $0x190] sm:$0xf] %vm519, %v3231
      %3264 = vst.msk [vmem:[#allocation3 + $0x1a4] sm:$0xf] %vm519, %v3232
      %3265 = vst.msk [vmem:[#allocation3 + $0x1b8] sm:$0xf] %vm519, %v3233
      %3266 = vst.msk [vmem:[#allocation3 + $0x1cc] sm:$0xf] %vm519, %v3234
      %3267 = vst.msk [vmem:[#allocation3 + $0x1e0] sm:$0xf] %vm519, %v3235
      %3268 = vst.msk [vmem:[#allocation3 + $0x1f4] sm:$0xf] %vm519, %v3236
      %3269 = vst.msk [vmem:[#allocation3 + $0x208] sm:$0xf] %vm519, %v3237
      %3270 = vst.msk [vmem:[#allocation3 + $0x21c] sm:$0xf] %vm519, %v3238
      %3271 = vst.msk [vmem:[#allocation3 + $0x230] sm:$0xf] %vm519, %v3239
      %3272 = vst.msk [vmem:[#allocation3 + $0x244] sm:$0xf] %vm519, %v3240
      %3273 = vst.msk [vmem:[#allocation3 + $0x258] sm:$0xf] %vm519, %v3241
      %3274 = vst.msk [vmem:[#allocation3 + $0x26c] sm:$0xf] %vm519, %v3242
      %v3275 = vld [vmem:[#allocation2 + $0x1] sm:$0xff]
      %v3276 = vld [vmem:[#allocation2 + $0x9] sm:$0xff]
      %v3277 = vld [vmem:[#allocation2 + $0x19] sm:$0xff]
      %v3278 = vld [vmem:[#allocation2 + $0x21] sm:$0xff]
      %v3279 = vld [vmem:[#allocation2 + $0x31] sm:$0xff]
      %v3280 = vld [vmem:[#allocation2 + $0x39] sm:$0xff]
      %v3281 = vld [vmem:[#allocation2 + $0x49] sm:$0xff]
      %v3282 = vld [vmem:[#allocation2 + $0x51] sm:$0xff]
      %v3283 = vld [vmem:[#allocation2 + $0x61] sm:$0xff]
      %v3284 = vld [vmem:[#allocation2 + $0x69] sm:$0xff]
      %v3285 = vld [vmem:[#allocation2 + $0x79] sm:$0xff]
      %v3286 = vld [vmem:[#allocation2 + $0x81] sm:$0xff]
      %v3287 = vld [vmem:[#allocation2 + $0x91] sm:$0xff]
      %v3288 = vld [vmem:[#allocation2 + $0x99] sm:$0xff]
      %v3289 = vld [vmem:[#allocation2 + $0xa9] sm:$0xff]
      %v3290 = vld [vmem:[#allocation2 + $0xb1] sm:$0xff]
      %v3291 = vld [vmem:[#allocation2 + $0xc1] sm:$0xff]
      %v3292 = vld [vmem:[#allocation2 + $0xc9] sm:$0xff]
      %v3293 = vld [vmem:[#allocation2 + $0xd9] sm:$0xff]
      %v3294 = vld [vmem:[#allocation2 + $0xe1] sm:$0xff]
      %v3295 = vld [vmem:[#allocation2 + $0xf1] sm:$0xff]
      %v3296 = vld [vmem:[#allocation2 + $0xf9] sm:$0xff]
      %v3297 = vld [vmem:[#allocation2 + $0x109] sm:$0xff]
      %v3298 = vld [vmem:[#allocation2 + $0x111] sm:$0xff]
      %v3299 = vld [vmem:[#allocation2 + $0x121] sm:$0xff]
      %v3300 = vld [vmem:[#allocation2 + $0x129] sm:$0xff]
      %v3301 = vld [vmem:[#allocation2 + $0x139] sm:$0xff]
      %v3302 = vld [vmem:[#allocation2 + $0x141] sm:$0xff]
      %v3303 = vld [vmem:[#allocation2 + $0x151] sm:$0xff]
      %v3304 = vld [vmem:[#allocation2 + $0x159] sm:$0xff]
      %v3305 = vld [vmem:[#allocation2 + $0x169] sm:$0xff]
      %v3306 = vld [vmem:[#allocation2 + $0x171] sm:$0xff]
      %v3307 = vpack.c.bf16 %v3275, %v3275
      %v3308 = vpack.c.bf16 %v3276, %v3276
      %v3309 = vpack.c.bf16 %v3277, %v3277
      %v3310 = vpack.c.bf16 %v3278, %v3278
      %v3311 = vpack.c.bf16 %v3279, %v3279
      %v3312 = vpack.c.bf16 %v3280, %v3280
      %v3313 = vpack.c.bf16 %v3281, %v3281
      %v3314 = vpack.c.bf16 %v3282, %v3282
      %v3315 = vpack.c.bf16 %v3283, %v3283
      %v3316 = vpack.c.bf16 %v3284, %v3284
      %v3317 = vpack.c.bf16 %v3285, %v3285
      %v3318 = vpack.c.bf16 %v3286, %v3286
      %v3319 = vpack.c.bf16 %v3287, %v3287
      %v3320 = vpack.c.bf16 %v3288, %v3288
      %v3321 = vpack.c.bf16 %v3289, %v3289
      %v3322 = vpack.c.bf16 %v3290, %v3290
      %v3323 = vpack.c.bf16 %v3291, %v3291
      %v3324 = vpack.c.bf16 %v3292, %v3292
      %v3325 = vpack.c.bf16 %v3293, %v3293
      %v3326 = vpack.c.bf16 %v3294, %v3294
      %v3327 = vpack.c.bf16 %v3295, %v3295
      %v3328 = vpack.c.bf16 %v3296, %v3296
      %v3329 = vpack.c.bf16 %v3297, %v3297
      %v3330 = vpack.c.bf16 %v3298, %v3298
      %v3331 = vpack.c.bf16 %v3299, %v3299
      %v3332 = vpack.c.bf16 %v3300, %v3300
      %v3333 = vpack.c.bf16 %v3301, %v3301
      %v3334 = vpack.c.bf16 %v3302, %v3302
      %v3335 = vpack.c.bf16 %v3303, %v3303
      %v3336 = vpack.c.bf16 %v3304, %v3304
      %v3337 = vpack.c.bf16 %v3305, %v3305
      %v3338 = vpack.c.bf16 %v3306, %v3306
      %3371 = vrot.lane.b32.xlu0 %v3307, 64
      %v3372 = vpop.permute.xlu0 %3371
      %3373 = vrot.lane.b32.xlu0 %v3308, 64
      %v3374 = vpop.permute.xlu0 %3373
      %3375 = vrot.lane.b32.xlu0 %v3309, 64
      %v3376 = vpop.permute.xlu0 %3375
      %3377 = vrot.lane.b32.xlu0 %v3310, 64
      %v3378 = vpop.permute.xlu0 %3377
      %3379 = vrot.lane.b32.xlu0 %v3311, 64
      %v3380 = vpop.permute.xlu0 %3379
      %3381 = vrot.lane.b32.xlu0 %v3312, 64
      %v3382 = vpop.permute.xlu0 %3381
      %3383 = vrot.lane.b32.xlu0 %v3313, 64
      %v3384 = vpop.permute.xlu0 %3383
      %3385 = vrot.lane.b32.xlu0 %v3314, 64
      %v3386 = vpop.permute.xlu0 %3385
      %3387 = vrot.lane.b32.xlu0 %v3315, 64
      %v3388 = vpop.permute.xlu0 %3387
      %3389 = vrot.lane.b32.xlu0 %v3316, 64
      %v3390 = vpop.permute.xlu0 %3389
      %3391 = vrot.lane.b32.xlu0 %v3317, 64
      %v3392 = vpop.permute.xlu0 %3391
      %3393 = vrot.lane.b32.xlu0 %v3318, 64
      %v3394 = vpop.permute.xlu0 %3393
      %3395 = vrot.lane.b32.xlu0 %v3319, 64
      %v3396 = vpop.permute.xlu0 %3395
      %3397 = vrot.lane.b32.xlu0 %v3320, 64
      %v3398 = vpop.permute.xlu0 %3397
      %3399 = vrot.lane.b32.xlu0 %v3321, 64
      %v3400 = vpop.permute.xlu0 %3399
      %3401 = vrot.lane.b32.xlu0 %v3322, 64
      %v3402 = vpop.permute.xlu0 %3401
      %3403 = vrot.lane.b32.xlu0 %v3323, 64
      %v3404 = vpop.permute.xlu0 %3403
      %3405 = vrot.lane.b32.xlu0 %v3324, 64
      %v3406 = vpop.permute.xlu0 %3405
      %3407 = vrot.lane.b32.xlu0 %v3325, 64
      %v3408 = vpop.permute.xlu0 %3407
      %3409 = vrot.lane.b32.xlu0 %v3326, 64
      %v3410 = vpop.permute.xlu0 %3409
      %3411 = vrot.lane.b32.xlu0 %v3327, 64
      %v3412 = vpop.permute.xlu0 %3411
      %3413 = vrot.lane.b32.xlu0 %v3328, 64
      %v3414 = vpop.permute.xlu0 %3413
      %3415 = vrot.lane.b32.xlu0 %v3329, 64
      %v3416 = vpop.permute.xlu0 %3415
      %3417 = vrot.lane.b32.xlu0 %v3330, 64
      %v3418 = vpop.permute.xlu0 %3417
      %3419 = vrot.lane.b32.xlu0 %v3331, 64
      %v3420 = vpop.permute.xlu0 %3419
      %3421 = vrot.lane.b32.xlu0 %v3332, 64
      %v3422 = vpop.permute.xlu0 %3421
      %3423 = vrot.lane.b32.xlu0 %v3333, 64
      %v3424 = vpop.permute.xlu0 %3423
      %3425 = vrot.lane.b32.xlu0 %v3334, 64
      %v3426 = vpop.permute.xlu0 %3425
      %3427 = vrot.lane.b32.xlu0 %v3335, 64
      %v3428 = vpop.permute.xlu0 %3427
      %3429 = vrot.lane.b32.xlu0 %v3336, 64
      %v3430 = vpop.permute.xlu0 %3429
      %3431 = vrot.lane.b32.xlu0 %v3337, 64
      %v3432 = vpop.permute.xlu0 %3431
      %3433 = vrot.lane.b32.xlu0 %v3338, 64
      %v3434 = vpop.permute.xlu0 %3433
      %3467 = vst.msk [vmem:[#allocation3] sm:$0xf] %vm744, %v3372
      %3468 = vst.msk [vmem:[#allocation3 + $0x14] sm:$0xf] %vm744, %v3374
      %3469 = vst.msk [vmem:[#allocation3 + $0x28] sm:$0xf] %vm744, %v3376
      %3470 = vst.msk [vmem:[#allocation3 + $0x3c] sm:$0xf] %vm744, %v3378
      %3471 = vst.msk [vmem:[#allocation3 + $0x50] sm:$0xf] %vm744, %v3380
      %3472 = vst.msk [vmem:[#allocation3 + $0x64] sm:$0xf] %vm744, %v3382
      %3473 = vst.msk [vmem:[#allocation3 + $0x78] sm:$0xf] %vm744, %v3384
      %3474 = vst.msk [vmem:[#allocation3 + $0x8c] sm:$0xf] %vm744, %v3386
      %3475 = vst.msk [vmem:[#allocation3 + $0xa0] sm:$0xf] %vm744, %v3388
      %3476 = vst.msk [vmem:[#allocation3 + $0xb4] sm:$0xf] %vm744, %v3390
      %3477 = vst.msk [vmem:[#allocation3 + $0xc8] sm:$0xf] %vm744, %v3392
      %3478 = vst.msk [vmem:[#allocation3 + $0xdc] sm:$0xf] %vm744, %v3394
      %3479 = vst.msk [vmem:[#allocation3 + $0xf0] sm:$0xf] %vm744, %v3396
      %3480 = vst.msk [vmem:[#allocation3 + $0x104] sm:$0xf] %vm744, %v3398
      %3481 = vst.msk [vmem:[#allocation3 + $0x118] sm:$0xf] %vm744, %v3400
      %3482 = vst.msk [vmem:[#allocation3 + $0x12c] sm:$0xf] %vm744, %v3402
      %3483 = vst.msk [vmem:[#allocation3 + $0x140] sm:$0xf] %vm744, %v3404
      %3484 = vst.msk [vmem:[#allocation3 + $0x154] sm:$0xf] %vm744, %v3406
      %3485 = vst.msk [vmem:[#allocation3 + $0x168] sm:$0xf] %vm744, %v3408
      %3486 = vst.msk [vmem:[#allocation3 + $0x17c] sm:$0xf] %vm744, %v3410
      %3487 = vst.msk [vmem:[#allocation3 + $0x190] sm:$0xf] %vm744, %v3412
      %3488 = vst.msk [vmem:[#allocation3 + $0x1a4] sm:$0xf] %vm744, %v3414
      %3489 = vst.msk [vmem:[#allocation3 + $0x1b8] sm:$0xf] %vm744, %v3416
      %3490 = vst.msk [vmem:[#allocation3 + $0x1cc] sm:$0xf] %vm744, %v3418
      %3491 = vst.msk [vmem:[#allocation3 + $0x1e0] sm:$0xf] %vm744, %v3420
      %3492 = vst.msk [vmem:[#allocation3 + $0x1f4] sm:$0xf] %vm744, %v3422
      %3493 = vst.msk [vmem:[#allocation3 + $0x208] sm:$0xf] %vm744, %v3424
      %3494 = vst.msk [vmem:[#allocation3 + $0x21c] sm:$0xf] %vm744, %v3426
      %3495 = vst.msk [vmem:[#allocation3 + $0x230] sm:$0xf] %vm744, %v3428
      %3496 = vst.msk [vmem:[#allocation3 + $0x244] sm:$0xf] %vm744, %v3430
      %3497 = vst.msk [vmem:[#allocation3 + $0x258] sm:$0xf] %vm744, %v3432
      %3498 = vst.msk [vmem:[#allocation3 + $0x26c] sm:$0xf] %vm744, %v3434
      %v3499 = vld [vmem:[#allocation2 + $0x2] sm:$0xff]
      %v3500 = vld [vmem:[#allocation2 + $0xa] sm:$0xff]
      %v3501 = vld [vmem:[#allocation2 + $0x1a] sm:$0xff]
      %v3502 = vld [vmem:[#allocation2 + $0x22] sm:$0xff]
      %v3503 = vld [vmem:[#allocation2 + $0x32] sm:$0xff]
      %v3504 = vld [vmem:[#allocation2 + $0x3a] sm:$0xff]
      %v3505 = vld [vmem:[#allocation2 + $0x4a] sm:$0xff]
      %v3506 = vld [vmem:[#allocation2 + $0x52] sm:$0xff]
      %v3507 = vld [vmem:[#allocation2 + $0x62] sm:$0xff]
      %v3508 = vld [vmem:[#allocation2 + $0x6a] sm:$0xff]
      %v3509 = vld [vmem:[#allocation2 + $0x7a] sm:$0xff]
      %v3510 = vld [vmem:[#allocation2 + $0x82] sm:$0xff]
      %v3511 = vld [vmem:[#allocation2 + $0x92] sm:$0xff]
      %v3512 = vld [vmem:[#allocation2 + $0x9a] sm:$0xff]
      %v3513 = vld [vmem:[#allocation2 + $0xaa] sm:$0xff]
      %v3514 = vld [vmem:[#allocation2 + $0xb2] sm:$0xff]
      %v3515 = vld [vmem:[#allocation2 + $0xc2] sm:$0xff]
      %v3516 = vld [vmem:[#allocation2 + $0xca] sm:$0xff]
      %v3517 = vld [vmem:[#allocation2 + $0xda] sm:$0xff]
      %v3518 = vld [vmem:[#allocation2 + $0xe2] sm:$0xff]
      %v3519 = vld [vmem:[#allocation2 + $0xf2] sm:$0xff]
      %v3520 = vld [vmem:[#allocation2 + $0xfa] sm:$0xff]
      %v3521 = vld [vmem:[#allocation2 + $0x10a] sm:$0xff]
      %v3522 = vld [vmem:[#allocation2 + $0x112] sm:$0xff]
      %v3523 = vld [vmem:[#allocation2 + $0x122] sm:$0xff]
      %v3524 = vld [vmem:[#allocation2 + $0x12a] sm:$0xff]
      %v3525 = vld [vmem:[#allocation2 + $0x13a] sm:$0xff]
      %v3526 = vld [vmem:[#allocation2 + $0x142] sm:$0xff]
      %v3527 = vld [vmem:[#allocation2 + $0x152] sm:$0xff]
      %v3528 = vld [vmem:[#allocation2 + $0x15a] sm:$0xff]
      %v3529 = vld [vmem:[#allocation2 + $0x16a] sm:$0xff]
      %v3530 = vld [vmem:[#allocation2 + $0x172] sm:$0xff]
      %v3531 = vpack.c.bf16 %v3499, %v3499
      %v3532 = vpack.c.bf16 %v3500, %v3500
      %v3533 = vpack.c.bf16 %v3501, %v3501
      %v3534 = vpack.c.bf16 %v3502, %v3502
      %v3535 = vpack.c.bf16 %v3503, %v3503
      %v3536 = vpack.c.bf16 %v3504, %v3504
      %v3537 = vpack.c.bf16 %v3505, %v3505
      %v3538 = vpack.c.bf16 %v3506, %v3506
      %v3539 = vpack.c.bf16 %v3507, %v3507
      %v3540 = vpack.c.bf16 %v3508, %v3508
      %v3541 = vpack.c.bf16 %v3509, %v3509
      %v3542 = vpack.c.bf16 %v3510, %v3510
      %v3543 = vpack.c.bf16 %v3511, %v3511
      %v3544 = vpack.c.bf16 %v3512, %v3512
      %v3545 = vpack.c.bf16 %v3513, %v3513
      %v3546 = vpack.c.bf16 %v3514, %v3514
      %v3547 = vpack.c.bf16 %v3515, %v3515
      %v3548 = vpack.c.bf16 %v3516, %v3516
      %v3549 = vpack.c.bf16 %v3517, %v3517
      %v3550 = vpack.c.bf16 %v3518, %v3518
      %v3551 = vpack.c.bf16 %v3519, %v3519
      %v3552 = vpack.c.bf16 %v3520, %v3520
      %v3553 = vpack.c.bf16 %v3521, %v3521
      %v3554 = vpack.c.bf16 %v3522, %v3522
      %v3555 = vpack.c.bf16 %v3523, %v3523
      %v3556 = vpack.c.bf16 %v3524, %v3524
      %v3557 = vpack.c.bf16 %v3525, %v3525
      %v3558 = vpack.c.bf16 %v3526, %v3526
      %v3559 = vpack.c.bf16 %v3527, %v3527
      %v3560 = vpack.c.bf16 %v3528, %v3528
      %v3561 = vpack.c.bf16 %v3529, %v3529
      %v3562 = vpack.c.bf16 %v3530, %v3530
      %3563 = vst.msk [vmem:[#allocation3 + $0x4] sm:$0xf] %vm519, %v3531
      %3564 = vst.msk [vmem:[#allocation3 + $0x18] sm:$0xf] %vm519, %v3532
      %3565 = vst.msk [vmem:[#allocation3 + $0x2c] sm:$0xf] %vm519, %v3533
      %3566 = vst.msk [vmem:[#allocation3 + $0x40] sm:$0xf] %vm519, %v3534
      %3567 = vst.msk [vmem:[#allocation3 + $0x54] sm:$0xf] %vm519, %v3535
      %3568 = vst.msk [vmem:[#allocation3 + $0x68] sm:$0xf] %vm519, %v3536
      %3569 = vst.msk [vmem:[#allocation3 + $0x7c] sm:$0xf] %vm519, %v3537
      %3570 = vst.msk [vmem:[#allocation3 + $0x90] sm:$0xf] %vm519, %v3538
      %3571 = vst.msk [vmem:[#allocation3 + $0xa4] sm:$0xf] %vm519, %v3539
      %3572 = vst.msk [vmem:[#allocation3 + $0xb8] sm:$0xf] %vm519, %v3540
      %3573 = vst.msk [vmem:[#allocation3 + $0xcc] sm:$0xf] %vm519, %v3541
      %3574 = vst.msk [vmem:[#allocation3 + $0xe0] sm:$0xf] %vm519, %v3542
      %3575 = vst.msk [vmem:[#allocation3 + $0xf4] sm:$0xf] %vm519, %v3543
      %3576 = vst.msk [vmem:[#allocation3 + $0x108] sm:$0xf] %vm519, %v3544
      %3577 = vst.msk [vmem:[#allocation3 + $0x11c] sm:$0xf] %vm519, %v3545
      %3578 = vst.msk [vmem:[#allocation3 + $0x130] sm:$0xf] %vm519, %v3546
      %3579 = vst.msk [vmem:[#allocation3 + $0x144] sm:$0xf] %vm519, %v3547
      %3580 = vst.msk [vmem:[#allocation3 + $0x158] sm:$0xf] %vm519, %v3548
      %3581 = vst.msk [vmem:[#allocation3 + $0x16c] sm:$0xf] %vm519, %v3549
      %3582 = vst.msk [vmem:[#allocation3 + $0x180] sm:$0xf] %vm519, %v3550
      %3583 = vst.msk [vmem:[#allocation3 + $0x194] sm:$0xf] %vm519, %v3551
      %3584 = vst.msk [vmem:[#allocation3 + $0x1a8] sm:$0xf] %vm519, %v3552
      %3585 = vst.msk [vmem:[#allocation3 + $0x1bc] sm:$0xf] %vm519, %v3553
      %3586 = vst.msk [vmem:[#allocation3 + $0x1d0] sm:$0xf] %vm519, %v3554
      %3587 = vst.msk [vmem:[#allocation3 + $0x1e4] sm:$0xf] %vm519, %v3555
      %3588 = vst.msk [vmem:[#allocation3 + $0x1f8] sm:$0xf] %vm519, %v3556
      %3589 = vst.msk [vmem:[#allocation3 + $0x20c] sm:$0xf] %vm519, %v3557
      %3590 = vst.msk [vmem:[#allocation3 + $0x220] sm:$0xf] %vm519, %v3558
      %3591 = vst.msk [vmem:[#allocation3 + $0x234] sm:$0xf] %vm519, %v3559
      %3592 = vst.msk [vmem:[#allocation3 + $0x248] sm:$0xf] %vm519, %v3560
      %3593 = vst.msk [vmem:[#allocation3 + $0x25c] sm:$0xf] %vm519, %v3561
      %3594 = vst.msk [vmem:[#allocation3 + $0x270] sm:$0xf] %vm519, %v3562
      %v3595 = vld [vmem:[%s422] sm:$0xff]
      %v3596 = vld [vmem:[%s422 + $0x8] sm:$0xff]
      %v3597 = vld [vmem:[%s422 + $0x18] sm:$0xff]
      %v3598 = vld [vmem:[%s422 + $0x20] sm:$0xff]
      %v3599 = vld [vmem:[%s422 + $0x30] sm:$0xff]
      %v3600 = vld [vmem:[%s422 + $0x38] sm:$0xff]
      %v3601 = vld [vmem:[%s422 + $0x48] sm:$0xff]
      %v3602 = vld [vmem:[%s422 + $0x50] sm:$0xff]
      %v3603 = vld [vmem:[%s422 + $0x60] sm:$0xff]
      %v3604 = vld [vmem:[%s422 + $0x68] sm:$0xff]
      %v3605 = vld [vmem:[%s422 + $0x78] sm:$0xff]
      %v3606 = vld [vmem:[%s422 + $0x80] sm:$0xff]
      %v3607 = vld [vmem:[%s422 + $0x90] sm:$0xff]
      %v3608 = vld [vmem:[%s422 + $0x98] sm:$0xff]
      %v3609 = vld [vmem:[%s422 + $0xa8] sm:$0xff]
      %v3610 = vld [vmem:[%s422 + $0xb0] sm:$0xff]
      %v3611 = vld [vmem:[%s422 + $0xc0] sm:$0xff]
      %v3612 = vld [vmem:[%s422 + $0xc8] sm:$0xff]
      %v3613 = vld [vmem:[%s422 + $0xd8] sm:$0xff]
      %v3614 = vld [vmem:[%s422 + $0xe0] sm:$0xff]
      %v3615 = vld [vmem:[%s422 + $0xf0] sm:$0xff]
      %v3616 = vld [vmem:[%s422 + $0xf8] sm:$0xff]
      %v3617 = vld [vmem:[%s422 + $0x108] sm:$0xff]
      %v3618 = vld [vmem:[%s422 + $0x110] sm:$0xff]
      %v3619 = vld [vmem:[%s422 + $0x120] sm:$0xff]
      %v3620 = vld [vmem:[%s422 + $0x128] sm:$0xff]
      %v3621 = vld [vmem:[%s422 + $0x138] sm:$0xff]
      %v3622 = vld [vmem:[%s422 + $0x140] sm:$0xff]
      %v3623 = vld [vmem:[%s422 + $0x150] sm:$0xff]
      %v3624 = vld [vmem:[%s422 + $0x158] sm:$0xff]
      %v3625 = vld [vmem:[%s422 + $0x168] sm:$0xff]
      %v3626 = vld [vmem:[%s422 + $0x170] sm:$0xff]
      %v3627 = vpack.c.bf16 %v3595, %v3595
      %v3628 = vpack.c.bf16 %v3596, %v3596
      %v3629 = vpack.c.bf16 %v3597, %v3597
      %v3630 = vpack.c.bf16 %v3598, %v3598
      %v3631 = vpack.c.bf16 %v3599, %v3599
      %v3632 = vpack.c.bf16 %v3600, %v3600
      %v3633 = vpack.c.bf16 %v3601, %v3601
      %v3634 = vpack.c.bf16 %v3602, %v3602
      %v3635 = vpack.c.bf16 %v3603, %v3603
      %v3636 = vpack.c.bf16 %v3604, %v3604
      %v3637 = vpack.c.bf16 %v3605, %v3605
      %v3638 = vpack.c.bf16 %v3606, %v3606
      %v3639 = vpack.c.bf16 %v3607, %v3607
      %v3640 = vpack.c.bf16 %v3608, %v3608
      %v3641 = vpack.c.bf16 %v3609, %v3609
      %v3642 = vpack.c.bf16 %v3610, %v3610
      %v3643 = vpack.c.bf16 %v3611, %v3611
      %v3644 = vpack.c.bf16 %v3612, %v3612
      %v3645 = vpack.c.bf16 %v3613, %v3613
      %v3646 = vpack.c.bf16 %v3614, %v3614
      %v3647 = vpack.c.bf16 %v3615, %v3615
      %v3648 = vpack.c.bf16 %v3616, %v3616
      %v3649 = vpack.c.bf16 %v3617, %v3617
      %v3650 = vpack.c.bf16 %v3618, %v3618
      %v3651 = vpack.c.bf16 %v3619, %v3619
      %v3652 = vpack.c.bf16 %v3620, %v3620
      %v3653 = vpack.c.bf16 %v3621, %v3621
      %v3654 = vpack.c.bf16 %v3622, %v3622
      %v3655 = vpack.c.bf16 %v3623, %v3623
      %v3656 = vpack.c.bf16 %v3624, %v3624
      %v3657 = vpack.c.bf16 %v3625, %v3625
      %v3658 = vpack.c.bf16 %v3626, %v3626
      %3691 = vrot.lane.b32.xlu0 %v3627, 64
      %v3692 = vpop.permute.xlu0 %3691
      %3693 = vrot.lane.b32.xlu0 %v3628, 64
      %v3694 = vpop.permute.xlu0 %3693
      %3695 = vrot.lane.b32.xlu0 %v3629, 64
      %v3696 = vpop.permute.xlu0 %3695
      %3697 = vrot.lane.b32.xlu0 %v3630, 64
      %v3698 = vpop.permute.xlu0 %3697
      %3699 = vrot.lane.b32.xlu0 %v3631, 64
      %v3700 = vpop.permute.xlu0 %3699
      %3701 = vrot.lane.b32.xlu0 %v3632, 64
      %v3702 = vpop.permute.xlu0 %3701
      %3703 = vrot.lane.b32.xlu0 %v3633, 64
      %v3704 = vpop.permute.xlu0 %3703
      %3705 = vrot.lane.b32.xlu0 %v3634, 64
      %v3706 = vpop.permute.xlu0 %3705
      %3707 = vrot.lane.b32.xlu0 %v3635, 64
      %v3708 = vpop.permute.xlu0 %3707
      %3709 = vrot.lane.b32.xlu0 %v3636, 64
      %v3710 = vpop.permute.xlu0 %3709
      %3711 = vrot.lane.b32.xlu0 %v3637, 64
      %v3712 = vpop.permute.xlu0 %3711
      %3713 = vrot.lane.b32.xlu0 %v3638, 64
      %v3714 = vpop.permute.xlu0 %3713
      %3715 = vrot.lane.b32.xlu0 %v3639, 64
      %v3716 = vpop.permute.xlu0 %3715
      %3717 = vrot.lane.b32.xlu0 %v3640, 64
      %v3718 = vpop.permute.xlu0 %3717
      %3719 = vrot.lane.b32.xlu0 %v3641, 64
      %v3720 = vpop.permute.xlu0 %3719
      %3721 = vrot.lane.b32.xlu0 %v3642, 64
      %v3722 = vpop.permute.xlu0 %3721
      %3723 = vrot.lane.b32.xlu0 %v3643, 64
      %v3724 = vpop.permute.xlu0 %3723
      %3725 = vrot.lane.b32.xlu0 %v3644, 64
      %v3726 = vpop.permute.xlu0 %3725
      %3727 = vrot.lane.b32.xlu0 %v3645, 64
      %v3728 = vpop.permute.xlu0 %3727
      %3729 = vrot.lane.b32.xlu0 %v3646, 64
      %v3730 = vpop.permute.xlu0 %3729
      %3731 = vrot.lane.b32.xlu0 %v3647, 64
      %v3732 = vpop.permute.xlu0 %3731
      %3733 = vrot.lane.b32.xlu0 %v3648, 64
      %v3734 = vpop.permute.xlu0 %3733
      %3735 = vrot.lane.b32.xlu0 %v3649, 64
      %v3736 = vpop.permute.xlu0 %3735
      %3737 = vrot.lane.b32.xlu0 %v3650, 64
      %v3738 = vpop.permute.xlu0 %3737
      %3739 = vrot.lane.b32.xlu0 %v3651, 64
      %v3740 = vpop.permute.xlu0 %3739
      %3741 = vrot.lane.b32.xlu0 %v3652, 64
      %v3742 = vpop.permute.xlu0 %3741
      %3743 = vrot.lane.b32.xlu0 %v3653, 64
      %v3744 = vpop.permute.xlu0 %3743
      %3745 = vrot.lane.b32.xlu0 %v3654, 64
      %v3746 = vpop.permute.xlu0 %3745
      %3747 = vrot.lane.b32.xlu0 %v3655, 64
      %v3748 = vpop.permute.xlu0 %3747
      %3749 = vrot.lane.b32.xlu0 %v3656, 64
      %v3750 = vpop.permute.xlu0 %3749
      %3751 = vrot.lane.b32.xlu0 %v3657, 64
      %v3752 = vpop.permute.xlu0 %3751
      %3753 = vrot.lane.b32.xlu0 %v3658, 64
      %v3754 = vpop.permute.xlu0 %3753
      %3787 = vst.msk [vmem:[#allocation3 + $0x4] sm:$0xf] %vm744, %v3692
      %3788 = vst.msk [vmem:[#allocation3 + $0x18] sm:$0xf] %vm744, %v3694
      %3789 = vst.msk [vmem:[#allocation3 + $0x2c] sm:$0xf] %vm744, %v3696
      %3790 = vst.msk [vmem:[#allocation3 + $0x40] sm:$0xf] %vm744, %v3698
      %3791 = vst.msk [vmem:[#allocation3 + $0x54] sm:$0xf] %vm744, %v3700
      %3792 = vst.msk [vmem:[#allocation3 + $0x68] sm:$0xf] %vm744, %v3702
      %3793 = vst.msk [vmem:[#allocation3 + $0x7c] sm:$0xf] %vm744, %v3704
      %3794 = vst.msk [vmem:[#allocation3 + $0x90] sm:$0xf] %vm744, %v3706
      %3795 = vst.msk [vmem:[#allocation3 + $0xa4] sm:$0xf] %vm744, %v3708
      %3796 = vst.msk [vmem:[#allocation3 + $0xb8] sm:$0xf] %vm744, %v3710
      %3797 = vst.msk [vmem:[#allocation3 + $0xcc] sm:$0xf] %vm744, %v3712
      %3798 = vst.msk [vmem:[#allocation3 + $0xe0] sm:$0xf] %vm744, %v3714
      %3799 = vst.msk [vmem:[#allocation3 + $0xf4] sm:$0xf] %vm744, %v3716
      %3800 = vst.msk [vmem:[#allocation3 + $0x108] sm:$0xf] %vm744, %v3718
      %3801 = vst.msk [vmem:[#allocation3 + $0x11c] sm:$0xf] %vm744, %v3720
      %3802 = vst.msk [vmem:[#allocation3 + $0x130] sm:$0xf] %vm744, %v3722
      %3803 = vst.msk [vmem:[#allocation3 + $0x144] sm:$0xf] %vm744, %v3724
      %3804 = vst.msk [vmem:[#allocation3 + $0x158] sm:$0xf] %vm744, %v3726
      %3805 = vst.msk [vmem:[#allocation3 + $0x16c] sm:$0xf] %vm744, %v3728
      %3806 = vst.msk [vmem:[#allocation3 + $0x180] sm:$0xf] %vm744, %v3730
      %3807 = vst.msk [vmem:[#allocation3 + $0x194] sm:$0xf] %vm744, %v3732
      %3808 = vst.msk [vmem:[#allocation3 + $0x1a8] sm:$0xf] %vm744, %v3734
      %3809 = vst.msk [vmem:[#allocation3 + $0x1bc] sm:$0xf] %vm744, %v3736
      %3810 = vst.msk [vmem:[#allocation3 + $0x1d0] sm:$0xf] %vm744, %v3738
      %3811 = vst.msk [vmem:[#allocation3 + $0x1e4] sm:$0xf] %vm744, %v3740
      %3812 = vst.msk [vmem:[#allocation3 + $0x1f8] sm:$0xf] %vm744, %v3742
      %3813 = vst.msk [vmem:[#allocation3 + $0x20c] sm:$0xf] %vm744, %v3744
      %3814 = vst.msk [vmem:[#allocation3 + $0x220] sm:$0xf] %vm744, %v3746
      %3815 = vst.msk [vmem:[#allocation3 + $0x234] sm:$0xf] %vm744, %v3748
      %3816 = vst.msk [vmem:[#allocation3 + $0x248] sm:$0xf] %vm744, %v3750
      %3817 = vst.msk [vmem:[#allocation3 + $0x25c] sm:$0xf] %vm744, %v3752
      %3818 = vst.msk [vmem:[#allocation3 + $0x270] sm:$0xf] %vm744, %v3754
      %v3819 = vld [vmem:[%s422 + $0x1] sm:$0xff]
      %v3820 = vld [vmem:[%s422 + $0x9] sm:$0xff]
      %v3821 = vld [vmem:[%s422 + $0x19] sm:$0xff]
      %v3822 = vld [vmem:[%s422 + $0x21] sm:$0xff]
      %v3823 = vld [vmem:[%s422 + $0x31] sm:$0xff]
      %v3824 = vld [vmem:[%s422 + $0x39] sm:$0xff]
      %v3825 = vld [vmem:[%s422 + $0x49] sm:$0xff]
      %v3826 = vld [vmem:[%s422 + $0x51] sm:$0xff]
      %v3827 = vld [vmem:[%s422 + $0x61] sm:$0xff]
      %v3828 = vld [vmem:[%s422 + $0x69] sm:$0xff]
      %v3829 = vld [vmem:[%s422 + $0x79] sm:$0xff]
      %v3830 = vld [vmem:[%s422 + $0x81] sm:$0xff]
      %v3831 = vld [vmem:[%s422 + $0x91] sm:$0xff]
      %v3832 = vld [vmem:[%s422 + $0x99] sm:$0xff]
      %v3833 = vld [vmem:[%s422 + $0xa9] sm:$0xff]
      %v3834 = vld [vmem:[%s422 + $0xb1] sm:$0xff]
      %v3835 = vld [vmem:[%s422 + $0xc1] sm:$0xff]
      %v3836 = vld [vmem:[%s422 + $0xc9] sm:$0xff]
      %v3837 = vld [vmem:[%s422 + $0xd9] sm:$0xff]
      %v3838 = vld [vmem:[%s422 + $0xe1] sm:$0xff]
      %v3839 = vld [vmem:[%s422 + $0xf1] sm:$0xff]
      %v3840 = vld [vmem:[%s422 + $0xf9] sm:$0xff]
      %v3841 = vld [vmem:[%s422 + $0x109] sm:$0xff]
      %v3842 = vld [vmem:[%s422 + $0x111] sm:$0xff]
      %v3843 = vld [vmem:[%s422 + $0x121] sm:$0xff]
      %v3844 = vld [vmem:[%s422 + $0x129] sm:$0xff]
      %v3845 = vld [vmem:[%s422 + $0x139] sm:$0xff]
      %v3846 = vld [vmem:[%s422 + $0x141] sm:$0xff]
      %v3847 = vld [vmem:[%s422 + $0x151] sm:$0xff]
      %v3848 = vld [vmem:[%s422 + $0x159] sm:$0xff]
      %v3849 = vld [vmem:[%s422 + $0x169] sm:$0xff]
      %v3850 = vld [vmem:[%s422 + $0x171] sm:$0xff]
      %v3851 = vpack.c.bf16 %v3819, %v3819
      %v3852 = vpack.c.bf16 %v3820, %v3820
      %v3853 = vpack.c.bf16 %v3821, %v3821
      %v3854 = vpack.c.bf16 %v3822, %v3822
      %v3855 = vpack.c.bf16 %v3823, %v3823
      %v3856 = vpack.c.bf16 %v3824, %v3824
      %v3857 = vpack.c.bf16 %v3825, %v3825
      %v3858 = vpack.c.bf16 %v3826, %v3826
      %v3859 = vpack.c.bf16 %v3827, %v3827
      %v3860 = vpack.c.bf16 %v3828, %v3828
      %v3861 = vpack.c.bf16 %v3829, %v3829
      %v3862 = vpack.c.bf16 %v3830, %v3830
      %v3863 = vpack.c.bf16 %v3831, %v3831
      %v3864 = vpack.c.bf16 %v3832, %v3832
      %v3865 = vpack.c.bf16 %v3833, %v3833
      %v3866 = vpack.c.bf16 %v3834, %v3834
      %v3867 = vpack.c.bf16 %v3835, %v3835
      %v3868 = vpack.c.bf16 %v3836, %v3836
      %v3869 = vpack.c.bf16 %v3837, %v3837
      %v3870 = vpack.c.bf16 %v3838, %v3838
      %v3871 = vpack.c.bf16 %v3839, %v3839
      %v3872 = vpack.c.bf16 %v3840, %v3840
      %v3873 = vpack.c.bf16 %v3841, %v3841
      %v3874 = vpack.c.bf16 %v3842, %v3842
      %v3875 = vpack.c.bf16 %v3843, %v3843
      %v3876 = vpack.c.bf16 %v3844, %v3844
      %v3877 = vpack.c.bf16 %v3845, %v3845
      %v3878 = vpack.c.bf16 %v3846, %v3846
      %v3879 = vpack.c.bf16 %v3847, %v3847
      %v3880 = vpack.c.bf16 %v3848, %v3848
      %v3881 = vpack.c.bf16 %v3849, %v3849
      %v3882 = vpack.c.bf16 %v3850, %v3850
      %3883 = vst.msk [vmem:[#allocation3 + $0x8] sm:$0xf] %vm519, %v3851
      %3884 = vst.msk [vmem:[#allocation3 + $0x1c] sm:$0xf] %vm519, %v3852
      %3885 = vst.msk [vmem:[#allocation3 + $0x30] sm:$0xf] %vm519, %v3853
      %3886 = vst.msk [vmem:[#allocation3 + $0x44] sm:$0xf] %vm519, %v3854
      %3887 = vst.msk [vmem:[#allocation3 + $0x58] sm:$0xf] %vm519, %v3855
      %3888 = vst.msk [vmem:[#allocation3 + $0x6c] sm:$0xf] %vm519, %v3856
      %3889 = vst.msk [vmem:[#allocation3 + $0x80] sm:$0xf] %vm519, %v3857
      %3890 = vst.msk [vmem:[#allocation3 + $0x94] sm:$0xf] %vm519, %v3858
      %3891 = vst.msk [vmem:[#allocation3 + $0xa8] sm:$0xf] %vm519, %v3859
      %3892 = vst.msk [vmem:[#allocation3 + $0xbc] sm:$0xf] %vm519, %v3860
      %3893 = vst.msk [vmem:[#allocation3 + $0xd0] sm:$0xf] %vm519, %v3861
      %3894 = vst.msk [vmem:[#allocation3 + $0xe4] sm:$0xf] %vm519, %v3862
      %3895 = vst.msk [vmem:[#allocation3 + $0xf8] sm:$0xf] %vm519, %v3863
      %3896 = vst.msk [vmem:[#allocation3 + $0x10c] sm:$0xf] %vm519, %v3864
      %3897 = vst.msk [vmem:[#allocation3 + $0x120] sm:$0xf] %vm519, %v3865
      %3898 = vst.msk [vmem:[#allocation3 + $0x134] sm:$0xf] %vm519, %v3866
      %3899 = vst.msk [vmem:[#allocation3 + $0x148] sm:$0xf] %vm519, %v3867
      %3900 = vst.msk [vmem:[#allocation3 + $0x15c] sm:$0xf] %vm519, %v3868
      %3901 = vst.msk [vmem:[#allocation3 + $0x170] sm:$0xf] %vm519, %v3869
      %3902 = vst.msk [vmem:[#allocation3 + $0x184] sm:$0xf] %vm519, %v3870
      %3903 = vst.msk [vmem:[#allocation3 + $0x198] sm:$0xf] %vm519, %v3871
      %3904 = vst.msk [vmem:[#allocation3 + $0x1ac] sm:$0xf] %vm519, %v3872
      %3905 = vst.msk [vmem:[#allocation3 + $0x1c0] sm:$0xf] %vm519, %v3873
      %3906 = vst.msk [vmem:[#allocation3 + $0x1d4] sm:$0xf] %vm519, %v3874
      %3907 = vst.msk [vmem:[#allocation3 + $0x1e8] sm:$0xf] %vm519, %v3875
      %3908 = vst.msk [vmem:[#allocation3 + $0x1fc] sm:$0xf] %vm519, %v3876
      %3909 = vst.msk [vmem:[#allocation3 + $0x210] sm:$0xf] %vm519, %v3877
      %3910 = vst.msk [vmem:[#allocation3 + $0x224] sm:$0xf] %vm519, %v3878
      %3911 = vst.msk [vmem:[#allocation3 + $0x238] sm:$0xf] %vm519, %v3879
      %3912 = vst.msk [vmem:[#allocation3 + $0x24c] sm:$0xf] %vm519, %v3880
      %3913 = vst.msk [vmem:[#allocation3 + $0x260] sm:$0xf] %vm519, %v3881
      %3914 = vst.msk [vmem:[#allocation3 + $0x274] sm:$0xf] %vm519, %v3882
      %v3915 = vld [vmem:[%s422 + $0x2] sm:$0xff]
      %v3916 = vld [vmem:[%s422 + $0xa] sm:$0xff]
      %v3917 = vld [vmem:[%s422 + $0x1a] sm:$0xff]
      %v3918 = vld [vmem:[%s422 + $0x22] sm:$0xff]
      %v3919 = vld [vmem:[%s422 + $0x32] sm:$0xff]
      %v3920 = vld [vmem:[%s422 + $0x3a] sm:$0xff]
      %v3921 = vld [vmem:[%s422 + $0x4a] sm:$0xff]
      %v3922 = vld [vmem:[%s422 + $0x52] sm:$0xff]
      %v3923 = vld [vmem:[%s422 + $0x62] sm:$0xff]
      %v3924 = vld [vmem:[%s422 + $0x6a] sm:$0xff]
      %v3925 = vld [vmem:[%s422 + $0x7a] sm:$0xff]
      %v3926 = vld [vmem:[%s422 + $0x82] sm:$0xff]
      %v3927 = vld [vmem:[%s422 + $0x92] sm:$0xff]
      %v3928 = vld [vmem:[%s422 + $0x9a] sm:$0xff]
      %v3929 = vld [vmem:[%s422 + $0xaa] sm:$0xff]
      %v3930 = vld [vmem:[%s422 + $0xb2] sm:$0xff]
      %v3931 = vld [vmem:[%s422 + $0xc2] sm:$0xff]
      %v3932 = vld [vmem:[%s422 + $0xca] sm:$0xff]
      %v3933 = vld [vmem:[%s422 + $0xda] sm:$0xff]
      %v3934 = vld [vmem:[%s422 + $0xe2] sm:$0xff]
      %v3935 = vld [vmem:[%s422 + $0xf2] sm:$0xff]
      %v3936 = vld [vmem:[%s422 + $0xfa] sm:$0xff]
      %v3937 = vld [vmem:[%s422 + $0x10a] sm:$0xff]
      %v3938 = vld [vmem:[%s422 + $0x112] sm:$0xff]
      %v3939 = vld [vmem:[%s422 + $0x122] sm:$0xff]
      %v3940 = vld [vmem:[%s422 + $0x12a] sm:$0xff]
      %v3941 = vld [vmem:[%s422 + $0x13a] sm:$0xff]
      %v3942 = vld [vmem:[%s422 + $0x142] sm:$0xff]
      %v3943 = vld [vmem:[%s422 + $0x152] sm:$0xff]
      %v3944 = vld [vmem:[%s422 + $0x15a] sm:$0xff]
      %v3945 = vld [vmem:[%s422 + $0x16a] sm:$0xff]
      %v3946 = vld [vmem:[%s422 + $0x172] sm:$0xff]
      %v3947 = vpack.c.bf16 %v3915, %v3915
      %v3948 = vpack.c.bf16 %v3916, %v3916
      %v3949 = vpack.c.bf16 %v3917, %v3917
      %v3950 = vpack.c.bf16 %v3918, %v3918
      %v3951 = vpack.c.bf16 %v3919, %v3919
      %v3952 = vpack.c.bf16 %v3920, %v3920
      %v3953 = vpack.c.bf16 %v3921, %v3921
      %v3954 = vpack.c.bf16 %v3922, %v3922
      %v3955 = vpack.c.bf16 %v3923, %v3923
      %v3956 = vpack.c.bf16 %v3924, %v3924
      %v3957 = vpack.c.bf16 %v3925, %v3925
      %v3958 = vpack.c.bf16 %v3926, %v3926
      %v3959 = vpack.c.bf16 %v3927, %v3927
      %v3960 = vpack.c.bf16 %v3928, %v3928
      %v3961 = vpack.c.bf16 %v3929, %v3929
      %v3962 = vpack.c.bf16 %v3930, %v3930
      %v3963 = vpack.c.bf16 %v3931, %v3931
      %v3964 = vpack.c.bf16 %v3932, %v3932
      %v3965 = vpack.c.bf16 %v3933, %v3933
      %v3966 = vpack.c.bf16 %v3934, %v3934
      %v3967 = vpack.c.bf16 %v3935, %v3935
      %v3968 = vpack.c.bf16 %v3936, %v3936
      %v3969 = vpack.c.bf16 %v3937, %v3937
      %v3970 = vpack.c.bf16 %v3938, %v3938
      %v3971 = vpack.c.bf16 %v3939, %v3939
      %v3972 = vpack.c.bf16 %v3940, %v3940
      %v3973 = vpack.c.bf16 %v3941, %v3941
      %v3974 = vpack.c.bf16 %v3942, %v3942
      %v3975 = vpack.c.bf16 %v3943, %v3943
      %v3976 = vpack.c.bf16 %v3944, %v3944
      %v3977 = vpack.c.bf16 %v3945, %v3945
      %v3978 = vpack.c.bf16 %v3946, %v3946
      %4011 = vrot.lane.b32.xlu0 %v3947, 64
      %v4012 = vpop.permute.xlu0 %4011
      %4013 = vrot.lane.b32.xlu0 %v3948, 64
      %v4014 = vpop.permute.xlu0 %4013
      %4015 = vrot.lane.b32.xlu0 %v3949, 64
      %v4016 = vpop.permute.xlu0 %4015
      %4017 = vrot.lane.b32.xlu0 %v3950, 64
      %v4018 = vpop.permute.xlu0 %4017
      %4019 = vrot.lane.b32.xlu0 %v3951, 64
      %v4020 = vpop.permute.xlu0 %4019
      %4021 = vrot.lane.b32.xlu0 %v3952, 64
      %v4022 = vpop.permute.xlu0 %4021
      %4023 = vrot.lane.b32.xlu0 %v3953, 64
      %v4024 = vpop.permute.xlu0 %4023
      %4025 = vrot.lane.b32.xlu0 %v3954, 64
      %v4026 = vpop.permute.xlu0 %4025
      %4027 = vrot.lane.b32.xlu0 %v3955, 64
      %v4028 = vpop.permute.xlu0 %4027
      %4029 = vrot.lane.b32.xlu0 %v3956, 64
      %v4030 = vpop.permute.xlu0 %4029
      %4031 = vrot.lane.b32.xlu0 %v3957, 64
      %v4032 = vpop.permute.xlu0 %4031
      %4033 = vrot.lane.b32.xlu0 %v3958, 64
      %v4034 = vpop.permute.xlu0 %4033
      %4035 = vrot.lane.b32.xlu0 %v3959, 64
      %v4036 = vpop.permute.xlu0 %4035
      %4037 = vrot.lane.b32.xlu0 %v3960, 64
      %v4038 = vpop.permute.xlu0 %4037
      %4039 = vrot.lane.b32.xlu0 %v3961, 64
      %v4040 = vpop.permute.xlu0 %4039
      %4041 = vrot.lane.b32.xlu0 %v3962, 64
      %v4042 = vpop.permute.xlu0 %4041
      %4043 = vrot.lane.b32.xlu0 %v3963, 64
      %v4044 = vpop.permute.xlu0 %4043
      %4045 = vrot.lane.b32.xlu0 %v3964, 64
      %v4046 = vpop.permute.xlu0 %4045
      %4047 = vrot.lane.b32.xlu0 %v3965, 64
      %v4048 = vpop.permute.xlu0 %4047
      %4049 = vrot.lane.b32.xlu0 %v3966, 64
      %v4050 = vpop.permute.xlu0 %4049
      %4051 = vrot.lane.b32.xlu0 %v3967, 64
      %v4052 = vpop.permute.xlu0 %4051
      %4053 = vrot.lane.b32.xlu0 %v3968, 64
      %v4054 = vpop.permute.xlu0 %4053
      %4055 = vrot.lane.b32.xlu0 %v3969, 64
      %v4056 = vpop.permute.xlu0 %4055
      %4057 = vrot.lane.b32.xlu0 %v3970, 64
      %v4058 = vpop.permute.xlu0 %4057
      %4059 = vrot.lane.b32.xlu0 %v3971, 64
      %v4060 = vpop.permute.xlu0 %4059
      %4061 = vrot.lane.b32.xlu0 %v3972, 64
      %v4062 = vpop.permute.xlu0 %4061
      %4063 = vrot.lane.b32.xlu0 %v3973, 64
      %v4064 = vpop.permute.xlu0 %4063
      %4065 = vrot.lane.b32.xlu0 %v3974, 64
      %v4066 = vpop.permute.xlu0 %4065
      %4067 = vrot.lane.b32.xlu0 %v3975, 64
      %v4068 = vpop.permute.xlu0 %4067
      %4069 = vrot.lane.b32.xlu0 %v3976, 64
      %v4070 = vpop.permute.xlu0 %4069
      %4071 = vrot.lane.b32.xlu0 %v3977, 64
      %v4072 = vpop.permute.xlu0 %4071
      %4073 = vrot.lane.b32.xlu0 %v3978, 64
      %v4074 = vpop.permute.xlu0 %4073
      %4107 = vst.msk [vmem:[#allocation3 + $0x8] sm:$0xf] %vm744, %v4012
      %4108 = vst.msk [vmem:[#allocation3 + $0x1c] sm:$0xf] %vm744, %v4014
      %4109 = vst.msk [vmem:[#allocation3 + $0x30] sm:$0xf] %vm744, %v4016
      %4110 = vst.msk [vmem:[#allocation3 + $0x44] sm:$0xf] %vm744, %v4018
      %4111 = vst.msk [vmem:[#allocation3 + $0x58] sm:$0xf] %vm744, %v4020
      %4112 = vst.msk [vmem:[#allocation3 + $0x6c] sm:$0xf] %vm744, %v4022
      %4113 = vst.msk [vmem:[#allocation3 + $0x80] sm:$0xf] %vm744, %v4024
      %4114 = vst.msk [vmem:[#allocation3 + $0x94] sm:$0xf] %vm744, %v4026
      %4115 = vst.msk [vmem:[#allocation3 + $0xa8] sm:$0xf] %vm744, %v4028
      %4116 = vst.msk [vmem:[#allocation3 + $0xbc] sm:$0xf] %vm744, %v4030
      %4117 = vst.msk [vmem:[#allocation3 + $0xd0] sm:$0xf] %vm744, %v4032
      %4118 = vst.msk [vmem:[#allocation3 + $0xe4] sm:$0xf] %vm744, %v4034
      %4119 = vst.msk [vmem:[#allocation3 + $0xf8] sm:$0xf] %vm744, %v4036
      %4120 = vst.msk [vmem:[#allocation3 + $0x10c] sm:$0xf] %vm744, %v4038
      %4121 = vst.msk [vmem:[#allocation3 + $0x120] sm:$0xf] %vm744, %v4040
      %4122 = vst.msk [vmem:[#allocation3 + $0x134] sm:$0xf] %vm744, %v4042
      %4123 = vst.msk [vmem:[#allocation3 + $0x148] sm:$0xf] %vm744, %v4044
      %4124 = vst.msk [vmem:[#allocation3 + $0x15c] sm:$0xf] %vm744, %v4046
      %4125 = vst.msk [vmem:[#allocation3 + $0x170] sm:$0xf] %vm744, %v4048
      %4126 = vst.msk [vmem:[#allocation3 + $0x184] sm:$0xf] %vm744, %v4050
      %4127 = vst.msk [vmem:[#allocation3 + $0x198] sm:$0xf] %vm744, %v4052
      %4128 = vst.msk [vmem:[#allocation3 + $0x1ac] sm:$0xf] %vm744, %v4054
      %4129 = vst.msk [vmem:[#allocation3 + $0x1c0] sm:$0xf] %vm744, %v4056
      %4130 = vst.msk [vmem:[#allocation3 + $0x1d4] sm:$0xf] %vm744, %v4058
      %4131 = vst.msk [vmem:[#allocation3 + $0x1e8] sm:$0xf] %vm744, %v4060
      %4132 = vst.msk [vmem:[#allocation3 + $0x1fc] sm:$0xf] %vm744, %v4062
      %4133 = vst.msk [vmem:[#allocation3 + $0x210] sm:$0xf] %vm744, %v4064
      %4134 = vst.msk [vmem:[#allocation3 + $0x224] sm:$0xf] %vm744, %v4066
      %4135 = vst.msk [vmem:[#allocation3 + $0x238] sm:$0xf] %vm744, %v4068
      %4136 = vst.msk [vmem:[#allocation3 + $0x24c] sm:$0xf] %vm744, %v4070
      %4137 = vst.msk [vmem:[#allocation3 + $0x260] sm:$0xf] %vm744, %v4072
      %4138 = vst.msk [vmem:[#allocation3 + $0x274] sm:$0xf] %vm744, %v4074
      %v4139 = vld [vmem:[%s1417] sm:$0xff]
      %v4140 = vld [vmem:[%s1417 + $0x8] sm:$0xff]
      %v4141 = vld [vmem:[%s1417 + $0x18] sm:$0xff]
      %v4142 = vld [vmem:[%s1417 + $0x20] sm:$0xff]
      %v4143 = vld [vmem:[%s1417 + $0x30] sm:$0xff]
      %v4144 = vld [vmem:[%s1417 + $0x38] sm:$0xff]
      %v4145 = vld [vmem:[%s1417 + $0x48] sm:$0xff]
      %v4146 = vld [vmem:[%s1417 + $0x50] sm:$0xff]
      %v4147 = vld [vmem:[%s1417 + $0x60] sm:$0xff]
      %v4148 = vld [vmem:[%s1417 + $0x68] sm:$0xff]
      %v4149 = vld [vmem:[%s1417 + $0x78] sm:$0xff]
      %v4150 = vld [vmem:[%s1417 + $0x80] sm:$0xff]
      %v4151 = vld [vmem:[%s1417 + $0x90] sm:$0xff]
      %v4152 = vld [vmem:[%s1417 + $0x98] sm:$0xff]
      %v4153 = vld [vmem:[%s1417 + $0xa8] sm:$0xff]
      %v4154 = vld [vmem:[%s1417 + $0xb0] sm:$0xff]
      %v4155 = vld [vmem:[%s1417 + $0xc0] sm:$0xff]
      %v4156 = vld [vmem:[%s1417 + $0xc8] sm:$0xff]
      %v4157 = vld [vmem:[%s1417 + $0xd8] sm:$0xff]
      %v4158 = vld [vmem:[%s1417 + $0xe0] sm:$0xff]
      %v4159 = vld [vmem:[%s1417 + $0xf0] sm:$0xff]
      %v4160 = vld [vmem:[%s1417 + $0xf8] sm:$0xff]
      %v4161 = vld [vmem:[%s1417 + $0x108] sm:$0xff]
      %v4162 = vld [vmem:[%s1417 + $0x110] sm:$0xff]
      %v4163 = vld [vmem:[%s1417 + $0x120] sm:$0xff]
      %v4164 = vld [vmem:[%s1417 + $0x128] sm:$0xff]
      %v4165 = vld [vmem:[%s1417 + $0x138] sm:$0xff]
      %v4166 = vld [vmem:[%s1417 + $0x140] sm:$0xff]
      %v4167 = vld [vmem:[%s1417 + $0x150] sm:$0xff]
      %v4168 = vld [vmem:[%s1417 + $0x158] sm:$0xff]
      %v4169 = vld [vmem:[%s1417 + $0x168] sm:$0xff]
      %v4170 = vld [vmem:[%s1417 + $0x170] sm:$0xff]
      %v4171 = vpack.c.bf16 %v4139, %v4139
      %v4172 = vpack.c.bf16 %v4140, %v4140
      %v4173 = vpack.c.bf16 %v4141, %v4141
      %v4174 = vpack.c.bf16 %v4142, %v4142
      %v4175 = vpack.c.bf16 %v4143, %v4143
      %v4176 = vpack.c.bf16 %v4144, %v4144
      %v4177 = vpack.c.bf16 %v4145, %v4145
      %v4178 = vpack.c.bf16 %v4146, %v4146
      %v4179 = vpack.c.bf16 %v4147, %v4147
      %v4180 = vpack.c.bf16 %v4148, %v4148
      %v4181 = vpack.c.bf16 %v4149, %v4149
      %v4182 = vpack.c.bf16 %v4150, %v4150
      %v4183 = vpack.c.bf16 %v4151, %v4151
      %v4184 = vpack.c.bf16 %v4152, %v4152
      %v4185 = vpack.c.bf16 %v4153, %v4153
      %v4186 = vpack.c.bf16 %v4154, %v4154
      %v4187 = vpack.c.bf16 %v4155, %v4155
      %v4188 = vpack.c.bf16 %v4156, %v4156
      %v4189 = vpack.c.bf16 %v4157, %v4157
      %v4190 = vpack.c.bf16 %v4158, %v4158
      %v4191 = vpack.c.bf16 %v4159, %v4159
      %v4192 = vpack.c.bf16 %v4160, %v4160
      %v4193 = vpack.c.bf16 %v4161, %v4161
      %v4194 = vpack.c.bf16 %v4162, %v4162
      %v4195 = vpack.c.bf16 %v4163, %v4163
      %v4196 = vpack.c.bf16 %v4164, %v4164
      %v4197 = vpack.c.bf16 %v4165, %v4165
      %v4198 = vpack.c.bf16 %v4166, %v4166
      %v4199 = vpack.c.bf16 %v4167, %v4167
      %v4200 = vpack.c.bf16 %v4168, %v4168
      %v4201 = vpack.c.bf16 %v4169, %v4169
      %v4202 = vpack.c.bf16 %v4170, %v4170
      %4203 = vst.msk [vmem:[#allocation3 + $0xc] sm:$0xf] %vm519, %v4171
      %4204 = vst.msk [vmem:[#allocation3 + $0x20] sm:$0xf] %vm519, %v4172
      %4205 = vst.msk [vmem:[#allocation3 + $0x34] sm:$0xf] %vm519, %v4173
      %4206 = vst.msk [vmem:[#allocation3 + $0x48] sm:$0xf] %vm519, %v4174
      %4207 = vst.msk [vmem:[#allocation3 + $0x5c] sm:$0xf] %vm519, %v4175
      %4208 = vst.msk [vmem:[#allocation3 + $0x70] sm:$0xf] %vm519, %v4176
      %4209 = vst.msk [vmem:[#allocation3 + $0x84] sm:$0xf] %vm519, %v4177
      %4210 = vst.msk [vmem:[#allocation3 + $0x98] sm:$0xf] %vm519, %v4178
      %4211 = vst.msk [vmem:[#allocation3 + $0xac] sm:$0xf] %vm519, %v4179
      %4212 = vst.msk [vmem:[#allocation3 + $0xc0] sm:$0xf] %vm519, %v4180
      %4213 = vst.msk [vmem:[#allocation3 + $0xd4] sm:$0xf] %vm519, %v4181
      %4214 = vst.msk [vmem:[#allocation3 + $0xe8] sm:$0xf] %vm519, %v4182
      %4215 = vst.msk [vmem:[#allocation3 + $0xfc] sm:$0xf] %vm519, %v4183
      %4216 = vst.msk [vmem:[#allocation3 + $0x110] sm:$0xf] %vm519, %v4184
      %4217 = vst.msk [vmem:[#allocation3 + $0x124] sm:$0xf] %vm519, %v4185
      %4218 = vst.msk [vmem:[#allocation3 + $0x138] sm:$0xf] %vm519, %v4186
      %4219 = vst.msk [vmem:[#allocation3 + $0x14c] sm:$0xf] %vm519, %v4187
      %4220 = vst.msk [vmem:[#allocation3 + $0x160] sm:$0xf] %vm519, %v4188
      %4221 = vst.msk [vmem:[#allocation3 + $0x174] sm:$0xf] %vm519, %v4189
      %4222 = vst.msk [vmem:[#allocation3 + $0x188] sm:$0xf] %vm519, %v4190
      %4223 = vst.msk [vmem:[#allocation3 + $0x19c] sm:$0xf] %vm519, %v4191
      %4224 = vst.msk [vmem:[#allocation3 + $0x1b0] sm:$0xf] %vm519, %v4192
      %4225 = vst.msk [vmem:[#allocation3 + $0x1c4] sm:$0xf] %vm519, %v4193
      %4226 = vst.msk [vmem:[#allocation3 + $0x1d8] sm:$0xf] %vm519, %v4194
      %4227 = vst.msk [vmem:[#allocation3 + $0x1ec] sm:$0xf] %vm519, %v4195
      %4228 = vst.msk [vmem:[#allocation3 + $0x200] sm:$0xf] %vm519, %v4196
      %4229 = vst.msk [vmem:[#allocation3 + $0x214] sm:$0xf] %vm519, %v4197
      %4230 = vst.msk [vmem:[#allocation3 + $0x228] sm:$0xf] %vm519, %v4198
      %4231 = vst.msk [vmem:[#allocation3 + $0x23c] sm:$0xf] %vm519, %v4199
      %4232 = vst.msk [vmem:[#allocation3 + $0x250] sm:$0xf] %vm519, %v4200
      %4233 = vst.msk [vmem:[#allocation3 + $0x264] sm:$0xf] %vm519, %v4201
      %4234 = vst.msk [vmem:[#allocation3 + $0x278] sm:$0xf] %vm519, %v4202
      %v4235 = vld [vmem:[%s1417 + $0x1] sm:$0xff]
      %v4236 = vld [vmem:[%s1417 + $0x9] sm:$0xff]
      %v4237 = vld [vmem:[%s1417 + $0x19] sm:$0xff]
      %v4238 = vld [vmem:[%s1417 + $0x21] sm:$0xff]
      %v4239 = vld [vmem:[%s1417 + $0x31] sm:$0xff]
      %v4240 = vld [vmem:[%s1417 + $0x39] sm:$0xff]
      %v4241 = vld [vmem:[%s1417 + $0x49] sm:$0xff]
      %v4242 = vld [vmem:[%s1417 + $0x51] sm:$0xff]
      %v4243 = vld [vmem:[%s1417 + $0x61] sm:$0xff]
      %v4244 = vld [vmem:[%s1417 + $0x69] sm:$0xff]
      %v4245 = vld [vmem:[%s1417 + $0x79] sm:$0xff]
      %v4246 = vld [vmem:[%s1417 + $0x81] sm:$0xff]
      %v4247 = vld [vmem:[%s1417 + $0x91] sm:$0xff]
      %v4248 = vld [vmem:[%s1417 + $0x99] sm:$0xff]
      %v4249 = vld [vmem:[%s1417 + $0xa9] sm:$0xff]
      %v4250 = vld [vmem:[%s1417 + $0xb1] sm:$0xff]
      %v4251 = vld [vmem:[%s1417 + $0xc1] sm:$0xff]
      %v4252 = vld [vmem:[%s1417 + $0xc9] sm:$0xff]
      %v4253 = vld [vmem:[%s1417 + $0xd9] sm:$0xff]
      %v4254 = vld [vmem:[%s1417 + $0xe1] sm:$0xff]
      %v4255 = vld [vmem:[%s1417 + $0xf1] sm:$0xff]
      %v4256 = vld [vmem:[%s1417 + $0xf9] sm:$0xff]
      %v4257 = vld [vmem:[%s1417 + $0x109] sm:$0xff]
      %v4258 = vld [vmem:[%s1417 + $0x111] sm:$0xff]
      %v4259 = vld [vmem:[%s1417 + $0x121] sm:$0xff]
      %v4260 = vld [vmem:[%s1417 + $0x129] sm:$0xff]
      %v4261 = vld [vmem:[%s1417 + $0x139] sm:$0xff]
      %v4262 = vld [vmem:[%s1417 + $0x141] sm:$0xff]
      %v4263 = vld [vmem:[%s1417 + $0x151] sm:$0xff]
      %v4264 = vld [vmem:[%s1417 + $0x159] sm:$0xff]
      %v4265 = vld [vmem:[%s1417 + $0x169] sm:$0xff]
      %v4266 = vld [vmem:[%s1417 + $0x171] sm:$0xff]
      %v4267 = vpack.c.bf16 %v4235, %v4235
      %v4268 = vpack.c.bf16 %v4236, %v4236
      %v4269 = vpack.c.bf16 %v4237, %v4237
      %v4270 = vpack.c.bf16 %v4238, %v4238
      %v4271 = vpack.c.bf16 %v4239, %v4239
      %v4272 = vpack.c.bf16 %v4240, %v4240
      %v4273 = vpack.c.bf16 %v4241, %v4241
      %v4274 = vpack.c.bf16 %v4242, %v4242
      %v4275 = vpack.c.bf16 %v4243, %v4243
      %v4276 = vpack.c.bf16 %v4244, %v4244
      %v4277 = vpack.c.bf16 %v4245, %v4245
      %v4278 = vpack.c.bf16 %v4246, %v4246
      %v4279 = vpack.c.bf16 %v4247, %v4247
      %v4280 = vpack.c.bf16 %v4248, %v4248
      %v4281 = vpack.c.bf16 %v4249, %v4249
      %v4282 = vpack.c.bf16 %v4250, %v4250
      %v4283 = vpack.c.bf16 %v4251, %v4251
      %v4284 = vpack.c.bf16 %v4252, %v4252
      %v4285 = vpack.c.bf16 %v4253, %v4253
      %v4286 = vpack.c.bf16 %v4254, %v4254
      %v4287 = vpack.c.bf16 %v4255, %v4255
      %v4288 = vpack.c.bf16 %v4256, %v4256
      %v4289 = vpack.c.bf16 %v4257, %v4257
      %v4290 = vpack.c.bf16 %v4258, %v4258
      %v4291 = vpack.c.bf16 %v4259, %v4259
      %v4292 = vpack.c.bf16 %v4260, %v4260
      %v4293 = vpack.c.bf16 %v4261, %v4261
      %v4294 = vpack.c.bf16 %v4262, %v4262
      %v4295 = vpack.c.bf16 %v4263, %v4263
      %v4296 = vpack.c.bf16 %v4264, %v4264
      %v4297 = vpack.c.bf16 %v4265, %v4265
      %v4298 = vpack.c.bf16 %v4266, %v4266
      %4331 = vrot.lane.b32.xlu0 %v4267, 64
      %v4332 = vpop.permute.xlu0 %4331
      %4333 = vrot.lane.b32.xlu0 %v4268, 64
      %v4334 = vpop.permute.xlu0 %4333
      %4335 = vrot.lane.b32.xlu0 %v4269, 64
      %v4336 = vpop.permute.xlu0 %4335
      %4337 = vrot.lane.b32.xlu0 %v4270, 64
      %v4338 = vpop.permute.xlu0 %4337
      %4339 = vrot.lane.b32.xlu0 %v4271, 64
      %v4340 = vpop.permute.xlu0 %4339
      %4341 = vrot.lane.b32.xlu0 %v4272, 64
      %v4342 = vpop.permute.xlu0 %4341
      %4343 = vrot.lane.b32.xlu0 %v4273, 64
      %v4344 = vpop.permute.xlu0 %4343
      %4345 = vrot.lane.b32.xlu0 %v4274, 64
      %v4346 = vpop.permute.xlu0 %4345
      %4347 = vrot.lane.b32.xlu0 %v4275, 64
      %v4348 = vpop.permute.xlu0 %4347
      %4349 = vrot.lane.b32.xlu0 %v4276, 64
      %v4350 = vpop.permute.xlu0 %4349
      %4351 = vrot.lane.b32.xlu0 %v4277, 64
      %v4352 = vpop.permute.xlu0 %4351
      %4353 = vrot.lane.b32.xlu0 %v4278, 64
      %v4354 = vpop.permute.xlu0 %4353
      %4355 = vrot.lane.b32.xlu0 %v4279, 64
      %v4356 = vpop.permute.xlu0 %4355
      %4357 = vrot.lane.b32.xlu0 %v4280, 64
      %v4358 = vpop.permute.xlu0 %4357
      %4359 = vrot.lane.b32.xlu0 %v4281, 64
      %v4360 = vpop.permute.xlu0 %4359
      %4361 = vrot.lane.b32.xlu0 %v4282, 64
      %v4362 = vpop.permute.xlu0 %4361
      %4363 = vrot.lane.b32.xlu0 %v4283, 64
      %v4364 = vpop.permute.xlu0 %4363
      %4365 = vrot.lane.b32.xlu0 %v4284, 64
      %v4366 = vpop.permute.xlu0 %4365
      %4367 = vrot.lane.b32.xlu0 %v4285, 64
      %v4368 = vpop.permute.xlu0 %4367
      %4369 = vrot.lane.b32.xlu0 %v4286, 64
      %v4370 = vpop.permute.xlu0 %4369
      %4371 = vrot.lane.b32.xlu0 %v4287, 64
      %v4372 = vpop.permute.xlu0 %4371
      %4373 = vrot.lane.b32.xlu0 %v4288, 64
      %v4374 = vpop.permute.xlu0 %4373
      %4375 = vrot.lane.b32.xlu0 %v4289, 64
      %v4376 = vpop.permute.xlu0 %4375
      %4377 = vrot.lane.b32.xlu0 %v4290, 64
      %v4378 = vpop.permute.xlu0 %4377
      %4379 = vrot.lane.b32.xlu0 %v4291, 64
      %v4380 = vpop.permute.xlu0 %4379
      %4381 = vrot.lane.b32.xlu0 %v4292, 64
      %v4382 = vpop.permute.xlu0 %4381
      %4383 = vrot.lane.b32.xlu0 %v4293, 64
      %v4384 = vpop.permute.xlu0 %4383
      %4385 = vrot.lane.b32.xlu0 %v4294, 64
      %v4386 = vpop.permute.xlu0 %4385
      %4387 = vrot.lane.b32.xlu0 %v4295, 64
      %v4388 = vpop.permute.xlu0 %4387
      %4389 = vrot.lane.b32.xlu0 %v4296, 64
      %v4390 = vpop.permute.xlu0 %4389
      %4391 = vrot.lane.b32.xlu0 %v4297, 64
      %v4392 = vpop.permute.xlu0 %4391
      %4393 = vrot.lane.b32.xlu0 %v4298, 64
      %v4394 = vpop.permute.xlu0 %4393
      %4427 = vst.msk [vmem:[#allocation3 + $0xc] sm:$0xf] %vm744, %v4332
      %4428 = vst.msk [vmem:[#allocation3 + $0x20] sm:$0xf] %vm744, %v4334
      %4429 = vst.msk [vmem:[#allocation3 + $0x34] sm:$0xf] %vm744, %v4336
      %4430 = vst.msk [vmem:[#allocation3 + $0x48] sm:$0xf] %vm744, %v4338
      %4431 = vst.msk [vmem:[#allocation3 + $0x5c] sm:$0xf] %vm744, %v4340
      %4432 = vst.msk [vmem:[#allocation3 + $0x70] sm:$0xf] %vm744, %v4342
      %4433 = vst.msk [vmem:[#allocation3 + $0x84] sm:$0xf] %vm744, %v4344
      %4434 = vst.msk [vmem:[#allocation3 + $0x98] sm:$0xf] %vm744, %v4346
      %4435 = vst.msk [vmem:[#allocation3 + $0xac] sm:$0xf] %vm744, %v4348
      %4436 = vst.msk [vmem:[#allocation3 + $0xc0] sm:$0xf] %vm744, %v4350
      %4437 = vst.msk [vmem:[#allocation3 + $0xd4] sm:$0xf] %vm744, %v4352
      %4438 = vst.msk [vmem:[#allocation3 + $0xe8] sm:$0xf] %vm744, %v4354
      %4439 = vst.msk [vmem:[#allocation3 + $0xfc] sm:$0xf] %vm744, %v4356
      %4440 = vst.msk [vmem:[#allocation3 + $0x110] sm:$0xf] %vm744, %v4358
      %4441 = vst.msk [vmem:[#allocation3 + $0x124] sm:$0xf] %vm744, %v4360
      %4442 = vst.msk [vmem:[#allocation3 + $0x138] sm:$0xf] %vm744, %v4362
      %4443 = vst.msk [vmem:[#allocation3 + $0x14c] sm:$0xf] %vm744, %v4364
      %4444 = vst.msk [vmem:[#allocation3 + $0x160] sm:$0xf] %vm744, %v4366
      %4445 = vst.msk [vmem:[#allocation3 + $0x174] sm:$0xf] %vm744, %v4368
      %4446 = vst.msk [vmem:[#allocation3 + $0x188] sm:$0xf] %vm744, %v4370
      %4447 = vst.msk [vmem:[#allocation3 + $0x19c] sm:$0xf] %vm744, %v4372
      %4448 = vst.msk [vmem:[#allocation3 + $0x1b0] sm:$0xf] %vm744, %v4374
      %4449 = vst.msk [vmem:[#allocation3 + $0x1c4] sm:$0xf] %vm744, %v4376
      %4450 = vst.msk [vmem:[#allocation3 + $0x1d8] sm:$0xf] %vm744, %v4378
      %4451 = vst.msk [vmem:[#allocation3 + $0x1ec] sm:$0xf] %vm744, %v4380
      %4452 = vst.msk [vmem:[#allocation3 + $0x200] sm:$0xf] %vm744, %v4382
      %4453 = vst.msk [vmem:[#allocation3 + $0x214] sm:$0xf] %vm744, %v4384
      %4454 = vst.msk [vmem:[#allocation3 + $0x228] sm:$0xf] %vm744, %v4386
      %4455 = vst.msk [vmem:[#allocation3 + $0x23c] sm:$0xf] %vm744, %v4388
      %4456 = vst.msk [vmem:[#allocation3 + $0x250] sm:$0xf] %vm744, %v4390
      %4457 = vst.msk [vmem:[#allocation3 + $0x264] sm:$0xf] %vm744, %v4392
      %4458 = vst.msk [vmem:[#allocation3 + $0x278] sm:$0xf] %vm744, %v4394
      %v4459 = vld [vmem:[%s1417 + $0x2] sm:$0xff]
      %v4460 = vld [vmem:[%s1417 + $0xa] sm:$0xff]
      %v4461 = vld [vmem:[%s1417 + $0x1a] sm:$0xff]
      %v4462 = vld [vmem:[%s1417 + $0x22] sm:$0xff]
      %v4463 = vld [vmem:[%s1417 + $0x32] sm:$0xff]
      %v4464 = vld [vmem:[%s1417 + $0x3a] sm:$0xff]
      %v4465 = vld [vmem:[%s1417 + $0x4a] sm:$0xff]
      %v4466 = vld [vmem:[%s1417 + $0x52] sm:$0xff]
      %v4467 = vld [vmem:[%s1417 + $0x62] sm:$0xff]
      %v4468 = vld [vmem:[%s1417 + $0x6a] sm:$0xff]
      %v4469 = vld [vmem:[%s1417 + $0x7a] sm:$0xff]
      %v4470 = vld [vmem:[%s1417 + $0x82] sm:$0xff]
      %v4471 = vld [vmem:[%s1417 + $0x92] sm:$0xff]
      %v4472 = vld [vmem:[%s1417 + $0x9a] sm:$0xff]
      %v4473 = vld [vmem:[%s1417 + $0xaa] sm:$0xff]
      %v4474 = vld [vmem:[%s1417 + $0xb2] sm:$0xff]
      %v4475 = vld [vmem:[%s1417 + $0xc2] sm:$0xff]
      %v4476 = vld [vmem:[%s1417 + $0xca] sm:$0xff]
      %v4477 = vld [vmem:[%s1417 + $0xda] sm:$0xff]
      %v4478 = vld [vmem:[%s1417 + $0xe2] sm:$0xff]
      %v4479 = vld [vmem:[%s1417 + $0xf2] sm:$0xff]
      %v4480 = vld [vmem:[%s1417 + $0xfa] sm:$0xff]
      %v4481 = vld [vmem:[%s1417 + $0x10a] sm:$0xff]
      %v4482 = vld [vmem:[%s1417 + $0x112] sm:$0xff]
      %v4483 = vld [vmem:[%s1417 + $0x122] sm:$0xff]
      %v4484 = vld [vmem:[%s1417 + $0x12a] sm:$0xff]
      %v4485 = vld [vmem:[%s1417 + $0x13a] sm:$0xff]
      %v4486 = vld [vmem:[%s1417 + $0x142] sm:$0xff]
      %v4487 = vld [vmem:[%s1417 + $0x152] sm:$0xff]
      %v4488 = vld [vmem:[%s1417 + $0x15a] sm:$0xff]
      %v4489 = vld [vmem:[%s1417 + $0x16a] sm:$0xff]
      %v4490 = vld [vmem:[%s1417 + $0x172] sm:$0xff]
      %v4491 = vpack.c.bf16 %v4459, %v4459
      %v4492 = vpack.c.bf16 %v4460, %v4460
      %v4493 = vpack.c.bf16 %v4461, %v4461
      %v4494 = vpack.c.bf16 %v4462, %v4462
      %v4495 = vpack.c.bf16 %v4463, %v4463
      %v4496 = vpack.c.bf16 %v4464, %v4464
      %v4497 = vpack.c.bf16 %v4465, %v4465
      %v4498 = vpack.c.bf16 %v4466, %v4466
      %v4499 = vpack.c.bf16 %v4467, %v4467
      %v4500 = vpack.c.bf16 %v4468, %v4468
      %v4501 = vpack.c.bf16 %v4469, %v4469
      %v4502 = vpack.c.bf16 %v4470, %v4470
      %v4503 = vpack.c.bf16 %v4471, %v4471
      %v4504 = vpack.c.bf16 %v4472, %v4472
      %v4505 = vpack.c.bf16 %v4473, %v4473
      %v4506 = vpack.c.bf16 %v4474, %v4474
      %v4507 = vpack.c.bf16 %v4475, %v4475
      %v4508 = vpack.c.bf16 %v4476, %v4476
      %v4509 = vpack.c.bf16 %v4477, %v4477
      %v4510 = vpack.c.bf16 %v4478, %v4478
      %v4511 = vpack.c.bf16 %v4479, %v4479
      %v4512 = vpack.c.bf16 %v4480, %v4480
      %v4513 = vpack.c.bf16 %v4481, %v4481
      %v4514 = vpack.c.bf16 %v4482, %v4482
      %v4515 = vpack.c.bf16 %v4483, %v4483
      %v4516 = vpack.c.bf16 %v4484, %v4484
      %v4517 = vpack.c.bf16 %v4485, %v4485
      %v4518 = vpack.c.bf16 %v4486, %v4486
      %v4519 = vpack.c.bf16 %v4487, %v4487
      %v4520 = vpack.c.bf16 %v4488, %v4488
      %v4521 = vpack.c.bf16 %v4489, %v4489
      %v4522 = vpack.c.bf16 %v4490, %v4490
      %4523 = vst.msk [vmem:[#allocation3 + $0x10] sm:$0xf] %vm519, %v4491
      %4524 = vst.msk [vmem:[#allocation3 + $0x24] sm:$0xf] %vm519, %v4492
      %4525 = vst.msk [vmem:[#allocation3 + $0x38] sm:$0xf] %vm519, %v4493
      %4526 = vst.msk [vmem:[#allocation3 + $0x4c] sm:$0xf] %vm519, %v4494
      %4527 = vst.msk [vmem:[#allocation3 + $0x60] sm:$0xf] %vm519, %v4495
      %4528 = vst.msk [vmem:[#allocation3 + $0x74] sm:$0xf] %vm519, %v4496
      %4529 = vst.msk [vmem:[#allocation3 + $0x88] sm:$0xf] %vm519, %v4497
      %4530 = vst.msk [vmem:[#allocation3 + $0x9c] sm:$0xf] %vm519, %v4498
      %4531 = vst.msk [vmem:[#allocation3 + $0xb0] sm:$0xf] %vm519, %v4499
      %4532 = vst.msk [vmem:[#allocation3 + $0xc4] sm:$0xf] %vm519, %v4500
      %4533 = vst.msk [vmem:[#allocation3 + $0xd8] sm:$0xf] %vm519, %v4501
      %4534 = vst.msk [vmem:[#allocation3 + $0xec] sm:$0xf] %vm519, %v4502
      %4535 = vst.msk [vmem:[#allocation3 + $0x100] sm:$0xf] %vm519, %v4503
      %4536 = vst.msk [vmem:[#allocation3 + $0x114] sm:$0xf] %vm519, %v4504
      %4537 = vst.msk [vmem:[#allocation3 + $0x128] sm:$0xf] %vm519, %v4505
      %4538 = vst.msk [vmem:[#allocation3 + $0x13c] sm:$0xf] %vm519, %v4506
      %4539 = vst.msk [vmem:[#allocation3 + $0x150] sm:$0xf] %vm519, %v4507
      %4540 = vst.msk [vmem:[#allocation3 + $0x164] sm:$0xf] %vm519, %v4508
      %4541 = vst.msk [vmem:[#allocation3 + $0x178] sm:$0xf] %vm519, %v4509
      %4542 = vst.msk [vmem:[#allocation3 + $0x18c] sm:$0xf] %vm519, %v4510
      %4543 = vst.msk [vmem:[#allocation3 + $0x1a0] sm:$0xf] %vm519, %v4511
      %4544 = vst.msk [vmem:[#allocation3 + $0x1b4] sm:$0xf] %vm519, %v4512
      %4545 = vst.msk [vmem:[#allocation3 + $0x1c8] sm:$0xf] %vm519, %v4513
      %4546 = vst.msk [vmem:[#allocation3 + $0x1dc] sm:$0xf] %vm519, %v4514
      %4547 = vst.msk [vmem:[#allocation3 + $0x1f0] sm:$0xf] %vm519, %v4515
      %4548 = vst.msk [vmem:[#allocation3 + $0x204] sm:$0xf] %vm519, %v4516
      %4549 = vst.msk [vmem:[#allocation3 + $0x218] sm:$0xf] %vm519, %v4517
      %4550 = vst.msk [vmem:[#allocation3 + $0x22c] sm:$0xf] %vm519, %v4518
      %4551 = vst.msk [vmem:[#allocation3 + $0x240] sm:$0xf] %vm519, %v4519
      %4552 = vst.msk [vmem:[#allocation3 + $0x254] sm:$0xf] %vm519, %v4520
      %4553 = vst.msk [vmem:[#allocation3 + $0x268] sm:$0xf] %vm519, %v4521
      %4554 = vst.msk [vmem:[#allocation3 + $0x27c] sm:$0xf] %vm519, %v4522
      %v4555 = vld [vmem:[#allocation3] sm:$0xff]
      %v4556 = vld [vmem:[#allocation3 + $0x8] sm:$0xff]
      %v4557 = vld [vmem:[#allocation3 + $0x10] sm:$0xf]
      %v4558 = vld [vmem:[#allocation3 + $0x14] sm:$0xff]
      %v4559 = vld [vmem:[#allocation3 + $0x1c] sm:$0xff]
      %v4560 = vld [vmem:[#allocation3 + $0x24] sm:$0xf]
      %v4561 = vld [vmem:[#allocation3 + $0x28] sm:$0xff]
      %v4562 = vld [vmem:[#allocation3 + $0x30] sm:$0xff]
      %v4563 = vld [vmem:[#allocation3 + $0x38] sm:$0xf]
      %v4564 = vld [vmem:[#allocation3 + $0x3c] sm:$0xff]
      %v4565 = vld [vmem:[#allocation3 + $0x44] sm:$0xff]
      %v4566 = vld [vmem:[#allocation3 + $0x4c] sm:$0xf]
      %v4567 = vld [vmem:[#allocation3 + $0x50] sm:$0xff]
      %v4568 = vld [vmem:[#allocation3 + $0x58] sm:$0xff]
      %v4569 = vld [vmem:[#allocation3 + $0x60] sm:$0xf]
      %v4570 = vld [vmem:[#allocation3 + $0x64] sm:$0xff]
      %v4571 = vld [vmem:[#allocation3 + $0x6c] sm:$0xff]
      %v4572 = vld [vmem:[#allocation3 + $0x74] sm:$0xf]
      %v4573 = vld [vmem:[#allocation3 + $0x78] sm:$0xff]
      %v4574 = vld [vmem:[#allocation3 + $0x80] sm:$0xff]
      %v4575 = vld [vmem:[#allocation3 + $0x88] sm:$0xf]
      %v4576 = vld [vmem:[#allocation3 + $0x8c] sm:$0xff]
      %v4577 = vld [vmem:[#allocation3 + $0x94] sm:$0xff]
      %v4578 = vld [vmem:[#allocation3 + $0x9c] sm:$0xf]
      %v4579 = vld [vmem:[#allocation3 + $0xa0] sm:$0xff]
      %v4580 = vld [vmem:[#allocation3 + $0xa8] sm:$0xff]
      %v4581 = vld [vmem:[#allocation3 + $0xb0] sm:$0xf]
      %v4582 = vld [vmem:[#allocation3 + $0xb4] sm:$0xff]
      %v4583 = vld [vmem:[#allocation3 + $0xbc] sm:$0xff]
      %v4584 = vld [vmem:[#allocation3 + $0xc4] sm:$0xf]
      %v4585 = vld [vmem:[#allocation3 + $0xc8] sm:$0xff]
      %v4586 = vld [vmem:[#allocation3 + $0xd0] sm:$0xff]
      %v4587 = vld [vmem:[#allocation3 + $0xd8] sm:$0xf]
      %v4588 = vld [vmem:[#allocation3 + $0xdc] sm:$0xff]
      %v4589 = vld [vmem:[#allocation3 + $0xe4] sm:$0xff]
      %v4590 = vld [vmem:[#allocation3 + $0xec] sm:$0xf]
      %v4591 = vld [vmem:[#allocation3 + $0xf0] sm:$0xff]
      %v4592 = vld [vmem:[#allocation3 + $0xf8] sm:$0xff]
      %v4593 = vld [vmem:[#allocation3 + $0x100] sm:$0xf]
      %v4594 = vld [vmem:[#allocation3 + $0x104] sm:$0xff]
      %v4595 = vld [vmem:[#allocation3 + $0x10c] sm:$0xff]
      %v4596 = vld [vmem:[#allocation3 + $0x114] sm:$0xf]
      %v4597 = vld [vmem:[#allocation3 + $0x118] sm:$0xff]
      %v4598 = vld [vmem:[#allocation3 + $0x120] sm:$0xff]
      %v4599 = vld [vmem:[#allocation3 + $0x128] sm:$0xf]
      %v4600 = vld [vmem:[#allocation3 + $0x12c] sm:$0xff]
      %v4601 = vld [vmem:[#allocation3 + $0x134] sm:$0xff]
      %v4602 = vld [vmem:[#allocation3 + $0x13c] sm:$0xf]
      %v4603 = vld [vmem:[#allocation3 + $0x140] sm:$0xff]
      %v4604 = vld [vmem:[#allocation3 + $0x148] sm:$0xff]
      %v4605 = vld [vmem:[#allocation3 + $0x150] sm:$0xf]
      %v4606 = vld [vmem:[#allocation3 + $0x154] sm:$0xff]
      %v4607 = vld [vmem:[#allocation3 + $0x15c] sm:$0xff]
      %v4608 = vld [vmem:[#allocation3 + $0x164] sm:$0xf]
      %v4609 = vld [vmem:[#allocation3 + $0x168] sm:$0xff]
      %v4610 = vld [vmem:[#allocation3 + $0x170] sm:$0xff]
      %v4611 = vld [vmem:[#allocation3 + $0x178] sm:$0xf]
      %v4612 = vld [vmem:[#allocation3 + $0x17c] sm:$0xff]
      %v4613 = vld [vmem:[#allocation3 + $0x184] sm:$0xff]
      %v4614 = vld [vmem:[#allocation3 + $0x18c] sm:$0xf]
      %v4615 = vld [vmem:[#allocation3 + $0x190] sm:$0xff]
      %v4616 = vld [vmem:[#allocation3 + $0x198] sm:$0xff]
      %v4617 = vld [vmem:[#allocation3 + $0x1a0] sm:$0xf]
      %v4618 = vld [vmem:[#allocation3 + $0x1a4] sm:$0xff]
      %v4619 = vld [vmem:[#allocation3 + $0x1ac] sm:$0xff]
      %v4620 = vld [vmem:[#allocation3 + $0x1b4] sm:$0xf]
      %v4621 = vld [vmem:[#allocation3 + $0x1b8] sm:$0xff]
      %v4622 = vld [vmem:[#allocation3 + $0x1c0] sm:$0xff]
      %v4623 = vld [vmem:[#allocation3 + $0x1c8] sm:$0xf]
      %v4624 = vld [vmem:[#allocation3 + $0x1cc] sm:$0xff]
      %v4625 = vld [vmem:[#allocation3 + $0x1d4] sm:$0xff]
      %v4626 = vld [vmem:[#allocation3 + $0x1dc] sm:$0xf]
      %v4627 = vld [vmem:[#allocation3 + $0x1e0] sm:$0xff]
      %v4628 = vld [vmem:[#allocation3 + $0x1e8] sm:$0xff]
      %v4629 = vld [vmem:[#allocation3 + $0x1f0] sm:$0xf]
      %v4630 = vld [vmem:[#allocation3 + $0x1f4] sm:$0xff]
      %v4631 = vld [vmem:[#allocation3 + $0x1fc] sm:$0xff]
      %v4632 = vld [vmem:[#allocation3 + $0x204] sm:$0xf]
      %v4633 = vld [vmem:[#allocation3 + $0x208] sm:$0xff]
      %v4634 = vld [vmem:[#allocation3 + $0x210] sm:$0xff]
      %v4635 = vld [vmem:[#allocation3 + $0x218] sm:$0xf]
      %v4636 = vld [vmem:[#allocation3 + $0x21c] sm:$0xff]
      %v4637 = vld [vmem:[#allocation3 + $0x224] sm:$0xff]
      %v4638 = vld [vmem:[#allocation3 + $0x22c] sm:$0xf]
      %v4639 = vld [vmem:[#allocation3 + $0x230] sm:$0xff]
      %v4640 = vld [vmem:[#allocation3 + $0x238] sm:$0xff]
      %v4641 = vld [vmem:[#allocation3 + $0x240] sm:$0xf]
      %v4642 = vld [vmem:[#allocation3 + $0x244] sm:$0xff]
      %v4643 = vld [vmem:[#allocation3 + $0x24c] sm:$0xff]
      %v4644 = vld [vmem:[#allocation3 + $0x254] sm:$0xf]
      %v4645 = vld [vmem:[#allocation3 + $0x258] sm:$0xff]
      %v4646 = vld [vmem:[#allocation3 + $0x260] sm:$0xff]
      %v4647 = vld [vmem:[#allocation3 + $0x268] sm:$0xf]
      %v4648 = vld [vmem:[#allocation3 + $0x26c] sm:$0xff]
      %v4649 = vld [vmem:[#allocation3 + $0x274] sm:$0xff]
      %v4650 = vld [vmem:[#allocation3 + $0x27c] sm:$0xf]
      %v4651 = vld [vmem:[%s3] sm:$0xf]
      %v4652 = vld [vmem:[%s3 + $0x4] sm:$0xf]
      %v4653 = vld [vmem:[%s3 + $0x8] sm:$0xf]
      %v4654 = vld [vmem:[%s3 + $0xc] sm:$0xf]
      %v4655 = vld [vmem:[%s3 + $0x10] sm:$0xf]
      %v4656 = vld [vmem:[%s3 + $0x14] sm:$0xf]
      %v4657 = vld [vmem:[%s3 + $0x18] sm:$0xf]
      %v4658 = vld [vmem:[%s3 + $0x1c] sm:$0xf]
      %v4659 = vld [vmem:[%s3 + $0x20] sm:$0xf]
      %v4660 = vld [vmem:[%s3 + $0x24] sm:$0xf]
      %v4661 = vld [vmem:[%s3 + $0x28] sm:$0xf]
      %v4662 = vld [vmem:[%s3 + $0x2c] sm:$0xf]
      %v4663 = vld [vmem:[%s3 + $0x30] sm:$0xf]
      %v4664 = vld [vmem:[%s3 + $0x34] sm:$0xf]
      %v4665 = vld [vmem:[%s3 + $0x38] sm:$0xf]
      %v4666 = vld [vmem:[%s3 + $0x3c] sm:$0xf]
      %v4667 = vld [vmem:[%s3 + $0x40] sm:$0xf]
      %v4668 = vld [vmem:[%s3 + $0x44] sm:$0xf]
      %v4669 = vld [vmem:[%s3 + $0x48] sm:$0xf]
      %v4670 = vld [vmem:[%s3 + $0x4c] sm:$0xf]
      %v4671 = vld [vmem:[%s3 + $0x50] sm:$0xf]
      %v4672 = vld [vmem:[%s3 + $0x54] sm:$0xf]
      %v4673 = vld [vmem:[%s3 + $0x58] sm:$0xf]
      %v4674 = vld [vmem:[%s3 + $0x5c] sm:$0xf]
      %v4675 = vld [vmem:[%s3 + $0x60] sm:$0xf]
      %v4676 = vld [vmem:[%s3 + $0x64] sm:$0xf]
      %v4677 = vld [vmem:[%s3 + $0x68] sm:$0xf]
      %v4678 = vld [vmem:[%s3 + $0x6c] sm:$0xf]
      %v4679 = vld [vmem:[%s3 + $0x70] sm:$0xf]
      %v4680 = vld [vmem:[%s3 + $0x74] sm:$0xf]
      %v4681 = vld [vmem:[%s3 + $0x78] sm:$0xf]
      %v4682 = vld [vmem:[%s3 + $0x7c] sm:$0xf]
      %v4683 = vld [vmem:[%s3 + $0x80] sm:$0xf]
      %v4684 = vld [vmem:[%s3 + $0x84] sm:$0xf]
      %v4685 = vld [vmem:[%s3 + $0x88] sm:$0xf]
      %v4686 = vld [vmem:[%s3 + $0x8c] sm:$0xf]
      %v4687 = vld [vmem:[%s3 + $0x90] sm:$0xf]
      %v4688 = vld [vmem:[%s3 + $0x94] sm:$0xf]
      %v4689 = vld [vmem:[%s3 + $0x98] sm:$0xf]
      %v4690 = vld [vmem:[%s3 + $0x9c] sm:$0xf]
      %v4691 = vld [vmem:[%s3 + $0xa0] sm:$0xf]
      %v4692 = vld [vmem:[%s3 + $0xa4] sm:$0xf]
      %v4693 = vld [vmem:[%s3 + $0xa8] sm:$0xf]
      %v4694 = vld [vmem:[%s3 + $0xac] sm:$0xf]
      %v4695 = vld [vmem:[%s3 + $0xb0] sm:$0xf]
      %v4696 = vld [vmem:[%s3 + $0xb4] sm:$0xf]
      %v4697 = vld [vmem:[%s3 + $0xb8] sm:$0xf]
      %v4698 = vld [vmem:[%s3 + $0xbc] sm:$0xf]
      %v4699 = vld [vmem:[%s3 + $0xc0] sm:$0xf]
      %v4700 = vld [vmem:[%s3 + $0xc4] sm:$0xf]
      %v4701 = vld [vmem:[%s3 + $0xc8] sm:$0xf]
      %v4702 = vld [vmem:[%s3 + $0xcc] sm:$0xf]
      %v4703 = vld [vmem:[%s3 + $0xd0] sm:$0xf]
      %v4704 = vld [vmem:[%s3 + $0xd4] sm:$0xf]
      %v4705 = vld [vmem:[%s3 + $0xd8] sm:$0xf]
      %v4706 = vld [vmem:[%s3 + $0xdc] sm:$0xf]
      %v4707 = vld [vmem:[%s3 + $0xe0] sm:$0xf]
      %v4708 = vld [vmem:[%s3 + $0xe4] sm:$0xf]
      %v4709 = vld [vmem:[%s3 + $0xe8] sm:$0xf]
      %v4710 = vld [vmem:[%s3 + $0xec] sm:$0xf]
      %v4711 = vld [vmem:[%s3 + $0xf0] sm:$0xf]
      %v4712 = vld [vmem:[%s3 + $0xf4] sm:$0xf]
      %v4713 = vld [vmem:[%s3 + $0xf8] sm:$0xf]
      %v4714 = vld [vmem:[%s3 + $0xfc] sm:$0xf]
      %v4715 = vld [vmem:[%s3 + $0x100] sm:$0xf]
      %v4716 = vld [vmem:[%s3 + $0x104] sm:$0xf]
      %v4717 = vld [vmem:[%s3 + $0x108] sm:$0xf]
      %v4718 = vld [vmem:[%s3 + $0x10c] sm:$0xf]
      %v4719 = vld [vmem:[%s3 + $0x110] sm:$0xf]
      %v4720 = vld [vmem:[%s3 + $0x114] sm:$0xf]
      %v4721 = vld [vmem:[%s3 + $0x118] sm:$0xf]
      %v4722 = vld [vmem:[%s3 + $0x11c] sm:$0xf]
      %v4723 = vld [vmem:[%s4] sm:$0x1]
      %v4725 = vperm.slane %v4723, 0
      %v4823 = vunpack.c.l.b16 %v4555
      %v4824 = vunpack.c.h.b16 %v4555
      %v4825 = vunpack.c.l.b16 %v4556
      %v4826 = vunpack.c.h.b16 %v4556
      %v4827 = vunpack.c.l.b16 %v4557
      %v4828 = vunpack.c.l.b16 %v4558
      %v4829 = vunpack.c.h.b16 %v4558
      %v4830 = vunpack.c.l.b16 %v4559
      %v4831 = vunpack.c.h.b16 %v4559
      %v4832 = vunpack.c.l.b16 %v4560
      %v4833 = vunpack.c.l.b16 %v4561
      %v4834 = vunpack.c.h.b16 %v4561
      %v4835 = vunpack.c.l.b16 %v4562
      %v4836 = vunpack.c.h.b16 %v4562
      %v4837 = vunpack.c.l.b16 %v4563
      %v4838 = vunpack.c.l.b16 %v4564
      %v4839 = vunpack.c.h.b16 %v4564
      %v4840 = vunpack.c.l.b16 %v4565
      %v4841 = vunpack.c.h.b16 %v4565
      %v4842 = vunpack.c.l.b16 %v4566
      %v4843 = vunpack.c.l.b16 %v4567
      %v4844 = vunpack.c.h.b16 %v4567
      %v4845 = vunpack.c.l.b16 %v4568
      %v4846 = vunpack.c.h.b16 %v4568
      %v4847 = vunpack.c.l.b16 %v4569
      %v4848 = vunpack.c.l.b16 %v4570
      %v4849 = vunpack.c.h.b16 %v4570
      %v4850 = vunpack.c.l.b16 %v4571
      %v4851 = vunpack.c.h.b16 %v4571
      %v4852 = vunpack.c.l.b16 %v4572
      %v4853 = vunpack.c.l.b16 %v4573
      %v4854 = vunpack.c.h.b16 %v4573
      %v4855 = vunpack.c.l.b16 %v4574
      %v4856 = vunpack.c.h.b16 %v4574
      %v4857 = vunpack.c.l.b16 %v4575
      %v4858 = vunpack.c.l.b16 %v4576
      %v4859 = vunpack.c.h.b16 %v4576
      %v4860 = vunpack.c.l.b16 %v4577
      %v4861 = vunpack.c.h.b16 %v4577
      %v4862 = vunpack.c.l.b16 %v4578
      %v4863 = vunpack.c.l.b16 %v4579
      %v4864 = vunpack.c.h.b16 %v4579
      %v4865 = vunpack.c.l.b16 %v4580
      %v4866 = vunpack.c.h.b16 %v4580
      %v4867 = vunpack.c.l.b16 %v4581
      %v4868 = vunpack.c.l.b16 %v4582
      %v4869 = vunpack.c.h.b16 %v4582
      %v4870 = vunpack.c.l.b16 %v4583
      %v4871 = vunpack.c.h.b16 %v4583
      %v4872 = vunpack.c.l.b16 %v4584
      %v4873 = vunpack.c.l.b16 %v4585
      %v4874 = vunpack.c.h.b16 %v4585
      %v4875 = vunpack.c.l.b16 %v4586
      %v4876 = vunpack.c.h.b16 %v4586
      %v4877 = vunpack.c.l.b16 %v4587
      %v4878 = vunpack.c.l.b16 %v4588
      %v4879 = vunpack.c.h.b16 %v4588
      %v4880 = vunpack.c.l.b16 %v4589
      %v4881 = vunpack.c.h.b16 %v4589
      %v4882 = vunpack.c.l.b16 %v4590
      %v4883 = vunpack.c.l.b16 %v4591
      %v4884 = vunpack.c.h.b16 %v4591
      %v4885 = vunpack.c.l.b16 %v4592
      %v4886 = vunpack.c.h.b16 %v4592
      %v4887 = vunpack.c.l.b16 %v4593
      %v4888 = vunpack.c.l.b16 %v4594
      %v4889 = vunpack.c.h.b16 %v4594
      %v4890 = vunpack.c.l.b16 %v4595
      %v4891 = vunpack.c.h.b16 %v4595
      %v4892 = vunpack.c.l.b16 %v4596
      %v4893 = vunpack.c.l.b16 %v4597
      %v4894 = vunpack.c.h.b16 %v4597
      %v4895 = vunpack.c.l.b16 %v4598
      %v4896 = vunpack.c.h.b16 %v4598
      %v4897 = vunpack.c.l.b16 %v4599
      %v4898 = vunpack.c.l.b16 %v4600
      %v4899 = vunpack.c.h.b16 %v4600
      %v4900 = vunpack.c.l.b16 %v4601
      %v4901 = vunpack.c.h.b16 %v4601
      %v4902 = vunpack.c.l.b16 %v4602
      %v4903 = vunpack.c.l.b16 %v4603
      %v4904 = vunpack.c.h.b16 %v4603
      %v4905 = vunpack.c.l.b16 %v4604
      %v4906 = vunpack.c.h.b16 %v4604
      %v4907 = vunpack.c.l.b16 %v4605
      %v4908 = vunpack.c.l.b16 %v4606
      %v4909 = vunpack.c.h.b16 %v4606
      %v4910 = vunpack.c.l.b16 %v4607
      %v4911 = vunpack.c.h.b16 %v4607
      %v4912 = vunpack.c.l.b16 %v4608
      %v4913 = vunpack.c.l.b16 %v4609
      %v4914 = vunpack.c.h.b16 %v4609
      %v4915 = vunpack.c.l.b16 %v4610
      %v4916 = vunpack.c.h.b16 %v4610
      %v4917 = vunpack.c.l.b16 %v4611
      %v4918 = vunpack.c.l.b16 %v4612
      %v4919 = vunpack.c.h.b16 %v4612
      %v4920 = vunpack.c.l.b16 %v4613
      %v4921 = vunpack.c.h.b16 %v4613
      %v4922 = vunpack.c.l.b16 %v4614
      %v4923 = vunpack.c.l.b16 %v4615
      %v4924 = vunpack.c.h.b16 %v4615
      %v4925 = vunpack.c.l.b16 %v4616
      %v4926 = vunpack.c.h.b16 %v4616
      %v4927 = vunpack.c.l.b16 %v4617
      %v4928 = vunpack.c.l.b16 %v4618
      %v4929 = vunpack.c.h.b16 %v4618
      %v4930 = vunpack.c.l.b16 %v4619
      %v4931 = vunpack.c.h.b16 %v4619
      %v4932 = vunpack.c.l.b16 %v4620
      %v4933 = vunpack.c.l.b16 %v4621
      %v4934 = vunpack.c.h.b16 %v4621
      %v4935 = vunpack.c.l.b16 %v4622
      %v4936 = vunpack.c.h.b16 %v4622
      %v4937 = vunpack.c.l.b16 %v4623
      %v4938 = vunpack.c.l.b16 %v4624
      %v4939 = vunpack.c.h.b16 %v4624
      %v4940 = vunpack.c.l.b16 %v4625
      %v4941 = vunpack.c.h.b16 %v4625
      %v4942 = vunpack.c.l.b16 %v4626
      %v4943 = vunpack.c.l.b16 %v4627
      %v4944 = vunpack.c.h.b16 %v4627
      %v4945 = vunpack.c.l.b16 %v4628
      %v4946 = vunpack.c.h.b16 %v4628
      %v4947 = vunpack.c.l.b16 %v4629
      %v4948 = vunpack.c.l.b16 %v4630
      %v4949 = vunpack.c.h.b16 %v4630
      %v4950 = vunpack.c.l.b16 %v4631
      %v4951 = vunpack.c.h.b16 %v4631
      %v4952 = vunpack.c.l.b16 %v4632
      %v4953 = vunpack.c.l.b16 %v4633
      %v4954 = vunpack.c.h.b16 %v4633
      %v4955 = vunpack.c.l.b16 %v4634
      %v4956 = vunpack.c.h.b16 %v4634
      %v4957 = vunpack.c.l.b16 %v4635
      %v4958 = vunpack.c.l.b16 %v4636
      %v4959 = vunpack.c.h.b16 %v4636
      %v4960 = vunpack.c.l.b16 %v4637
      %v4961 = vunpack.c.h.b16 %v4637
      %v4962 = vunpack.c.l.b16 %v4638
      %v4963 = vunpack.c.l.b16 %v4639
      %v4964 = vunpack.c.h.b16 %v4639
      %v4965 = vunpack.c.l.b16 %v4640
      %v4966 = vunpack.c.h.b16 %v4640
      %v4967 = vunpack.c.l.b16 %v4641
      %v4968 = vunpack.c.l.b16 %v4642
      %v4969 = vunpack.c.h.b16 %v4642
      %v4970 = vunpack.c.l.b16 %v4643
      %v4971 = vunpack.c.h.b16 %v4643
      %v4972 = vunpack.c.l.b16 %v4644
      %v4973 = vunpack.c.l.b16 %v4645
      %v4974 = vunpack.c.h.b16 %v4645
      %v4975 = vunpack.c.l.b16 %v4646
      %v4976 = vunpack.c.h.b16 %v4646
      %v4977 = vunpack.c.l.b16 %v4647
      %v4978 = vunpack.c.l.b16 %v4648
      %v4979 = vunpack.c.h.b16 %v4648
      %v4980 = vunpack.c.l.b16 %v4649
      %v4981 = vunpack.c.h.b16 %v4649
      %v4982 = vunpack.c.l.b16 %v4650
      %v4983 = vpack.c.b16 %v4828, %v4823
      %v4984 = vpack.c.b16 %v4829, %v4824
      %v4985 = vpack.c.b16 %v4830, %v4825
      %v4986 = vpack.c.b16 %v4831, %v4826
      %v4987 = vpack.c.b16 %v4832, %v4827
      %v4988 = vpack.c.b16 %v4838, %v4833
      %v4989 = vpack.c.b16 %v4839, %v4834
      %v4990 = vpack.c.b16 %v4840, %v4835
      %v4991 = vpack.c.b16 %v4841, %v4836
      %v4992 = vpack.c.b16 %v4842, %v4837
      %v4993 = vpack.c.b16 %v4848, %v4843
      %v4994 = vpack.c.b16 %v4849, %v4844
      %v4995 = vpack.c.b16 %v4850, %v4845
      %v4996 = vpack.c.b16 %v4851, %v4846
      %v4997 = vpack.c.b16 %v4852, %v4847
      %v4998 = vpack.c.b16 %v4858, %v4853
      %v4999 = vpack.c.b16 %v4859, %v4854
      %v5000 = vpack.c.b16 %v4860, %v4855
      %v5001 = vpack.c.b16 %v4861, %v4856
      %v5002 = vpack.c.b16 %v4862, %v4857
      %v5003 = vpack.c.b16 %v4868, %v4863
      %v5004 = vpack.c.b16 %v4869, %v4864
      %v5005 = vpack.c.b16 %v4870, %v4865
      %v5006 = vpack.c.b16 %v4871, %v4866
      %v5007 = vpack.c.b16 %v4872, %v4867
      %v5008 = vpack.c.b16 %v4878, %v4873
      %v5009 = vpack.c.b16 %v4879, %v4874
      %v5010 = vpack.c.b16 %v4880, %v4875
      %v5011 = vpack.c.b16 %v4881, %v4876
      %v5012 = vpack.c.b16 %v4882, %v4877
      %v5013 = vpack.c.b16 %v4888, %v4883
      %v5014 = vpack.c.b16 %v4889, %v4884
      %v5015 = vpack.c.b16 %v4890, %v4885
      %v5016 = vpack.c.b16 %v4891, %v4886
      %v5017 = vpack.c.b16 %v4892, %v4887
      %v5018 = vpack.c.b16 %v4898, %v4893
      %v5019 = vpack.c.b16 %v4899, %v4894
      %v5020 = vpack.c.b16 %v4900, %v4895
      %v5021 = vpack.c.b16 %v4901, %v4896
      %v5022 = vpack.c.b16 %v4902, %v4897
      %v5023 = vpack.c.b16 %v4908, %v4903
      %v5024 = vpack.c.b16 %v4909, %v4904
      %v5025 = vpack.c.b16 %v4910, %v4905
      %v5026 = vpack.c.b16 %v4911, %v4906
      %v5027 = vpack.c.b16 %v4912, %v4907
      %v5028 = vpack.c.b16 %v4918, %v4913
      %v5029 = vpack.c.b16 %v4919, %v4914
      %v5030 = vpack.c.b16 %v4920, %v4915
      %v5031 = vpack.c.b16 %v4921, %v4916
      %v5032 = vpack.c.b16 %v4922, %v4917
      %v5033 = vpack.c.b16 %v4928, %v4923
      %v5034 = vpack.c.b16 %v4929, %v4924
      %v5035 = vpack.c.b16 %v4930, %v4925
      %v5036 = vpack.c.b16 %v4931, %v4926
      %v5037 = vpack.c.b16 %v4932, %v4927
      %v5038 = vpack.c.b16 %v4938, %v4933
      %v5039 = vpack.c.b16 %v4939, %v4934
      %v5040 = vpack.c.b16 %v4940, %v4935
      %v5041 = vpack.c.b16 %v4941, %v4936
      %v5042 = vpack.c.b16 %v4942, %v4937
      %v5043 = vpack.c.b16 %v4948, %v4943
      %v5044 = vpack.c.b16 %v4949, %v4944
      %v5045 = vpack.c.b16 %v4950, %v4945
      %v5046 = vpack.c.b16 %v4951, %v4946
      %v5047 = vpack.c.b16 %v4952, %v4947
      %v5048 = vpack.c.b16 %v4958, %v4953
      %v5049 = vpack.c.b16 %v4959, %v4954
      %v5050 = vpack.c.b16 %v4960, %v4955
      %v5051 = vpack.c.b16 %v4961, %v4956
      %v5052 = vpack.c.b16 %v4962, %v4957
      %v5053 = vpack.c.b16 %v4968, %v4963
      %v5054 = vpack.c.b16 %v4969, %v4964
      %v5055 = vpack.c.b16 %v4970, %v4965
      %v5056 = vpack.c.b16 %v4971, %v4966
      %v5057 = vpack.c.b16 %v4972, %v4967
      %v5058 = vpack.c.b16 %v4978, %v4973
      %v5059 = vpack.c.b16 %v4979, %v4974
      %v5060 = vpack.c.b16 %v4980, %v4975
      %v5061 = vpack.c.b16 %v4981, %v4976
      %v5062 = vpack.c.b16 %v4982, %v4977
      %v5199 = vunpack.c.l.b16 %v4651
      %v5200 = vunpack.c.l.b16 %v4652
      %v5201 = vunpack.c.l.b16 %v4653
      %v5202 = vunpack.c.l.b16 %v4654
      %v5203 = vunpack.c.l.b16 %v4655
      %v5204 = vunpack.c.l.b16 %v4656
      %v5205 = vunpack.c.l.b16 %v4657
      %v5206 = vunpack.c.l.b16 %v4658
      %v5207 = vunpack.c.l.b16 %v4659
      %v5208 = vunpack.c.l.b16 %v4660
      %v5209 = vunpack.c.l.b16 %v4661
      %v5210 = vunpack.c.l.b16 %v4662
      %v5211 = vunpack.c.l.b16 %v4663
      %v5212 = vunpack.c.l.b16 %v4664
      %v5213 = vunpack.c.l.b16 %v4665
      %v5214 = vunpack.c.l.b16 %v4666
      %v5215 = vunpack.c.l.b16 %v4667
      %v5216 = vunpack.c.l.b16 %v4668
      %v5217 = vunpack.c.l.b16 %v4669
      %v5218 = vunpack.c.l.b16 %v4670
      %v5219 = vunpack.c.l.b16 %v4671
      %v5220 = vunpack.c.l.b16 %v4672
      %v5221 = vunpack.c.l.b16 %v4673
      %v5222 = vunpack.c.l.b16 %v4674
      %v5223 = vunpack.c.l.b16 %v4675
      %v5224 = vunpack.c.l.b16 %v4676
      %v5225 = vunpack.c.l.b16 %v4677
      %v5226 = vunpack.c.l.b16 %v4678
      %v5227 = vunpack.c.l.b16 %v4679
      %v5228 = vunpack.c.l.b16 %v4680
      %v5229 = vunpack.c.l.b16 %v4681
      %v5230 = vunpack.c.l.b16 %v4682
      %v5231 = vunpack.c.l.b16 %v4683
      %v5232 = vunpack.c.l.b16 %v4684
      %v5233 = vunpack.c.l.b16 %v4685
      %v5234 = vunpack.c.l.b16 %v4686
      %v5235 = vunpack.c.l.b16 %v4687
      %v5236 = vunpack.c.l.b16 %v4688
      %v5237 = vunpack.c.l.b16 %v4689
      %v5238 = vunpack.c.l.b16 %v4690
      %v5239 = vunpack.c.l.b16 %v4691
      %v5240 = vunpack.c.l.b16 %v4692
      %v5241 = vunpack.c.l.b16 %v4693
      %v5242 = vunpack.c.l.b16 %v4694
      %v5243 = vunpack.c.l.b16 %v4695
      %v5244 = vunpack.c.l.b16 %v4696
      %v5245 = vunpack.c.l.b16 %v4697
      %v5246 = vunpack.c.l.b16 %v4698
      %v5247 = vunpack.c.l.b16 %v4699
      %v5248 = vunpack.c.l.b16 %v4700
      %v5249 = vunpack.c.l.b16 %v4701
      %v5250 = vunpack.c.l.b16 %v4702
      %v5251 = vunpack.c.l.b16 %v4703
      %v5252 = vunpack.c.l.b16 %v4704
      %v5253 = vunpack.c.l.b16 %v4705
      %v5254 = vunpack.c.l.b16 %v4706
      %v5255 = vunpack.c.l.b16 %v4707
      %v5256 = vunpack.c.l.b16 %v4708
      %v5257 = vunpack.c.l.b16 %v4709
      %v5258 = vunpack.c.l.b16 %v4710
      %v5259 = vunpack.c.l.b16 %v4711
      %v5260 = vunpack.c.l.b16 %v4712
      %v5261 = vunpack.c.l.b16 %v4713
      %v5262 = vunpack.c.l.b16 %v4714
      %v5263 = vunpack.c.l.b16 %v4715
      %v5264 = vunpack.c.l.b16 %v4716
      %v5265 = vunpack.c.l.b16 %v4717
      %v5266 = vunpack.c.l.b16 %v4718
      %v5267 = vunpack.c.l.b16 %v4719
      %v5268 = vunpack.c.l.b16 %v4720
      %v5269 = vunpack.c.l.b16 %v4721
      %v5270 = vunpack.c.l.b16 %v4722
      %v5271 = vpack.c.b16 %v5200, %v5199
      %v5272 = vpack.c.b16 %v5202, %v5201
      %v5273 = vpack.c.b16 %v5204, %v5203
      %v5274 = vpack.c.b16 %v5206, %v5205
      %v5275 = vpack.c.b16 %v5208, %v5207
      %v5276 = vpack.c.b16 %v5210, %v5209
      %v5277 = vpack.c.b16 %v5212, %v5211
      %v5278 = vpack.c.b16 %v5214, %v5213
      %v5279 = vpack.c.b16 %v5216, %v5215
      %v5280 = vpack.c.b16 %v5218, %v5217
      %v5281 = vpack.c.b16 %v5220, %v5219
      %v5282 = vpack.c.b16 %v5222, %v5221
      %v5283 = vpack.c.b16 %v5224, %v5223
      %v5284 = vpack.c.b16 %v5226, %v5225
      %v5285 = vpack.c.b16 %v5228, %v5227
      %v5286 = vpack.c.b16 %v5230, %v5229
      %v5287 = vpack.c.b16 %v5232, %v5231
      %v5288 = vpack.c.b16 %v5234, %v5233
      %v5289 = vpack.c.b16 %v5236, %v5235
      %v5290 = vpack.c.b16 %v5238, %v5237
      %v5291 = vpack.c.b16 %v5240, %v5239
      %v5292 = vpack.c.b16 %v5242, %v5241
      %v5293 = vpack.c.b16 %v5244, %v5243
      %v5294 = vpack.c.b16 %v5246, %v5245
      %v5295 = vpack.c.b16 %v5248, %v5247
      %v5296 = vpack.c.b16 %v5250, %v5249
      %v5297 = vpack.c.b16 %v5252, %v5251
      %v5298 = vpack.c.b16 %v5254, %v5253
      %v5299 = vpack.c.b16 %v5256, %v5255
      %v5300 = vpack.c.b16 %v5258, %v5257
      %v5301 = vpack.c.b16 %v5260, %v5259
      %v5302 = vpack.c.b16 %v5262, %v5261
      %v5303 = vpack.c.b16 %v5264, %v5263
      %v5304 = vpack.c.b16 %v5266, %v5265
      %v5305 = vpack.c.b16 %v5268, %v5267
      %v5306 = vpack.c.b16 %v5270, %v5269
      %v5344 = vsel %vm334, %v4987, 0
      %v5347 = vsel %vm334, %v4992, 0
      %v5350 = vsel %vm334, %v4997, 0
      %v5353 = vsel %vm334, %v5002, 0
      %v5356 = vsel %vm334, %v5007, 0
      %v5359 = vsel %vm334, %v5012, 0
      %v5362 = vsel %vm334, %v5017, 0
      %v5365 = vsel %vm334, %v5022, 0
      %v5368 = vsel %vm334, %v5027, 0
      %v5371 = vsel %vm334, %v5032, 0
      %v5374 = vsel %vm334, %v5037, 0
      %v5377 = vsel %vm334, %v5042, 0
      %v5380 = vsel %vm334, %v5047, 0
      %v5383 = vsel %vm334, %v5052, 0
      %v5386 = vsel %vm334, %v5057, 0
      %v5389 = vsel %vm334, %v5062, 0
      %5391 = vmatpush.bf16.msra.mxu0 %v5278
      %5392 = vmatpush.bf16.msra.mxu0 %v5277
      %5393 = vmatpush.bf16.msra.mxu0 %v5276
      %5394 = vmatpush.bf16.msra.mxu0 %v5275
      %5395 = vmatpush.bf16.msra.mxu0 %v5274
      %5396 = vmatpush.bf16.msra.mxu0 %v5273
      %5397 = vmatpush.bf16.msra.mxu0 %v5272
      %5398 = vmatpush.bf16.msra.mxu0 %v5271
      %5399 = vmatmul.bf16.gmra.mxu0 %v4983
      %v5400 = vpop.f32.mrf.mxu0
      %v5401 = vadd.f32 %v4725, %v5400
      %v5402 = vpop.f32.mrf.mxu0
      %v5403 = vadd.f32 %v4725, %v5402
      %5404 = vmatmul.bf16.gmra.mxu0 %v4988
      %v5405 = vpop.f32.mrf.mxu0
      %v5406 = vadd.f32 %v4725, %v5405
      %v5407 = vpop.f32.mrf.mxu0
      %v5408 = vadd.f32 %v4725, %v5407
      %5409 = vmatmul.bf16.gmra.mxu0 %v4993
      %v5410 = vpop.f32.mrf.mxu0
      %v5411 = vadd.f32 %v4725, %v5410
      %v5412 = vpop.f32.mrf.mxu0
      %v5413 = vadd.f32 %v4725, %v5412
      %5414 = vmatmul.bf16.gmra.mxu0 %v4998
      %v5415 = vpop.f32.mrf.mxu0
      %v5416 = vadd.f32 %v4725, %v5415
      %v5417 = vpop.f32.mrf.mxu0
      %v5418 = vadd.f32 %v4725, %v5417
      %5419 = vmatmul.bf16.gmra.mxu0 %v5003
      %v5420 = vpop.f32.mrf.mxu0
      %v5421 = vadd.f32 %v4725, %v5420
      %v5422 = vpop.f32.mrf.mxu0
      %v5423 = vadd.f32 %v4725, %v5422
      %5424 = vmatmul.bf16.gmra.mxu0 %v5008
      %v5425 = vpop.f32.mrf.mxu0
      %v5426 = vadd.f32 %v4725, %v5425
      %v5427 = vpop.f32.mrf.mxu0
      %v5428 = vadd.f32 %v4725, %v5427
      %5429 = vmatmul.bf16.gmra.mxu0 %v5013
      %v5430 = vpop.f32.mrf.mxu0
      %v5431 = vadd.f32 %v4725, %v5430
      %v5432 = vpop.f32.mrf.mxu0
      %v5433 = vadd.f32 %v4725, %v5432
      %5434 = vmatmul.bf16.gmra.mxu0 %v5018
      %v5435 = vpop.f32.mrf.mxu0
      %v5436 = vadd.f32 %v4725, %v5435
      %v5437 = vpop.f32.mrf.mxu0
      %v5438 = vadd.f32 %v4725, %v5437
      %5439 = vmatmul.bf16.gmra.mxu0 %v5023
      %v5440 = vpop.f32.mrf.mxu0
      %v5441 = vadd.f32 %v4725, %v5440
      %v5442 = vpop.f32.mrf.mxu0
      %v5443 = vadd.f32 %v4725, %v5442
      %5444 = vmatmul.bf16.gmra.mxu0 %v5028
      %v5445 = vpop.f32.mrf.mxu0
      %v5446 = vadd.f32 %v4725, %v5445
      %v5447 = vpop.f32.mrf.mxu0
      %v5448 = vadd.f32 %v4725, %v5447
      %5449 = vmatmul.bf16.gmra.mxu0 %v5033
      %v5450 = vpop.f32.mrf.mxu0
      %v5451 = vadd.f32 %v4725, %v5450
      %v5452 = vpop.f32.mrf.mxu0
      %v5453 = vadd.f32 %v4725, %v5452
      %5454 = vmatmul.bf16.gmra.mxu0 %v5038
      %v5455 = vpop.f32.mrf.mxu0
      %v5456 = vadd.f32 %v4725, %v5455
      %v5457 = vpop.f32.mrf.mxu0
      %v5458 = vadd.f32 %v4725, %v5457
      %5459 = vmatmul.bf16.gmra.mxu0 %v5043
      %v5460 = vpop.f32.mrf.mxu0
      %v5461 = vadd.f32 %v4725, %v5460
      %v5462 = vpop.f32.mrf.mxu0
      %v5463 = vadd.f32 %v4725, %v5462
      %5464 = vmatmul.bf16.gmra.mxu0 %v5048
      %v5465 = vpop.f32.mrf.mxu0
      %v5466 = vadd.f32 %v4725, %v5465
      %v5467 = vpop.f32.mrf.mxu0
      %v5468 = vadd.f32 %v4725, %v5467
      %5469 = vmatmul.bf16.gmra.mxu0 %v5053
      %v5470 = vpop.f32.mrf.mxu0
      %v5471 = vadd.f32 %v4725, %v5470
      %v5472 = vpop.f32.mrf.mxu0
      %v5473 = vadd.f32 %v4725, %v5472
      %5474 = vmatmul.bf16.gmra.mxu0 %v5058
      %v5475 = vpop.f32.mrf.mxu0
      %v5476 = vadd.f32 %v4725, %v5475
      %v5477 = vpop.f32.mrf.mxu0
      %v5478 = vadd.f32 %v4725, %v5477
      %5479 = vdwg.mxu0
      %5480 = vmatpush.bf16.msra.mxu0 %v5286
      %5481 = vmatpush.bf16.msra.mxu0 %v5285
      %5482 = vmatpush.bf16.msra.mxu0 %v5284
      %5483 = vmatpush.bf16.msra.mxu0 %v5283
      %5484 = vmatpush.bf16.msra.mxu0 %v5282
      %5485 = vmatpush.bf16.msra.mxu0 %v5281
      %5486 = vmatpush.bf16.msra.mxu0 %v5280
      %5487 = vmatpush.bf16.msra.mxu0 %v5279
      %5488 = vmatmul.bf16.gmra.mxu0 %v4984
      %v5489 = vpop.f32.mrf.mxu0
      %v5490 = vadd.f32 %v5401, %v5489
      %v5491 = vpop.f32.mrf.mxu0
      %v5492 = vadd.f32 %v5403, %v5491
      %5493 = vmatmul.bf16.gmra.mxu0 %v4989
      %v5494 = vpop.f32.mrf.mxu0
      %v5495 = vadd.f32 %v5406, %v5494
      %v5496 = vpop.f32.mrf.mxu0
      %v5497 = vadd.f32 %v5408, %v5496
      %5498 = vmatmul.bf16.gmra.mxu0 %v4994
      %v5499 = vpop.f32.mrf.mxu0
      %v5500 = vadd.f32 %v5411, %v5499
      %v5501 = vpop.f32.mrf.mxu0
      %v5502 = vadd.f32 %v5413, %v5501
      %5503 = vmatmul.bf16.gmra.mxu0 %v4999
      %v5504 = vpop.f32.mrf.mxu0
      %v5505 = vadd.f32 %v5416, %v5504
      %v5506 = vpop.f32.mrf.mxu0
      %v5507 = vadd.f32 %v5418, %v5506
      %5508 = vmatmul.bf16.gmra.mxu0 %v5004
      %v5509 = vpop.f32.mrf.mxu0
      %v5510 = vadd.f32 %v5421, %v5509
      %v5511 = vpop.f32.mrf.mxu0
      %v5512 = vadd.f32 %v5423, %v5511
      %5513 = vmatmul.bf16.gmra.mxu0 %v5009
      %v5514 = vpop.f32.mrf.mxu0
      %v5515 = vadd.f32 %v5426, %v5514
      %v5516 = vpop.f32.mrf.mxu0
      %v5517 = vadd.f32 %v5428, %v5516
      %5518 = vmatmul.bf16.gmra.mxu0 %v5014
      %v5519 = vpop.f32.mrf.mxu0
      %v5520 = vadd.f32 %v5431, %v5519
      %v5521 = vpop.f32.mrf.mxu0
      %v5522 = vadd.f32 %v5433, %v5521
      %5523 = vmatmul.bf16.gmra.mxu0 %v5019
      %v5524 = vpop.f32.mrf.mxu0
      %v5525 = vadd.f32 %v5436, %v5524
      %v5526 = vpop.f32.mrf.mxu0
      %v5527 = vadd.f32 %v5438, %v5526
      %5528 = vmatmul.bf16.gmra.mxu0 %v5024
      %v5529 = vpop.f32.mrf.mxu0
      %v5530 = vadd.f32 %v5441, %v5529
      %v5531 = vpop.f32.mrf.mxu0
      %v5532 = vadd.f32 %v5443, %v5531
      %5533 = vmatmul.bf16.gmra.mxu0 %v5029
      %v5534 = vpop.f32.mrf.mxu0
      %v5535 = vadd.f32 %v5446, %v5534
      %v5536 = vpop.f32.mrf.mxu0
      %v5537 = vadd.f32 %v5448, %v5536
      %5538 = vmatmul.bf16.gmra.mxu0 %v5034
      %v5539 = vpop.f32.mrf.mxu0
      %v5540 = vadd.f32 %v5451, %v5539
      %v5541 = vpop.f32.mrf.mxu0
      %v5542 = vadd.f32 %v5453, %v5541
      %5543 = vmatmul.bf16.gmra.mxu0 %v5039
      %v5544 = vpop.f32.mrf.mxu0
      %v5545 = vadd.f32 %v5456, %v5544
      %v5546 = vpop.f32.mrf.mxu0
      %v5547 = vadd.f32 %v5458, %v5546
      %5548 = vmatmul.bf16.gmra.mxu0 %v5044
      %v5549 = vpop.f32.mrf.mxu0
      %v5550 = vadd.f32 %v5461, %v5549
      %v5551 = vpop.f32.mrf.mxu0
      %v5552 = vadd.f32 %v5463, %v5551
      %5553 = vmatmul.bf16.gmra.mxu0 %v5049
      %v5554 = vpop.f32.mrf.mxu0
      %v5555 = vadd.f32 %v5466, %v5554
      %v5556 = vpop.f32.mrf.mxu0
      %v5557 = vadd.f32 %v5468, %v5556
      %5558 = vmatmul.bf16.gmra.mxu0 %v5054
      %v5559 = vpop.f32.mrf.mxu0
      %v5560 = vadd.f32 %v5471, %v5559
      %v5561 = vpop.f32.mrf.mxu0
      %v5562 = vadd.f32 %v5473, %v5561
      %5563 = vmatmul.bf16.gmra.mxu0 %v5059
      %v5564 = vpop.f32.mrf.mxu0
      %v5565 = vadd.f32 %v5476, %v5564
      %v5566 = vpop.f32.mrf.mxu0
      %v5567 = vadd.f32 %v5478, %v5566
      %5568 = vdwg.mxu0
      %5569 = vmatpush.bf16.msra.mxu0 %v5294
      %5570 = vmatpush.bf16.msra.mxu0 %v5293
      %5571 = vmatpush.bf16.msra.mxu0 %v5292
      %5572 = vmatpush.bf16.msra.mxu0 %v5291
      %5573 = vmatpush.bf16.msra.mxu0 %v5290
      %5574 = vmatpush.bf16.msra.mxu0 %v5289
      %5575 = vmatpush.bf16.msra.mxu0 %v5288
      %5576 = vmatpush.bf16.msra.mxu0 %v5287
      %5577 = vmatmul.bf16.gmra.mxu0 %v4985
      %v5578 = vpop.f32.mrf.mxu0
      %v5579 = vadd.f32 %v5490, %v5578
      %v5580 = vpop.f32.mrf.mxu0
      %v5581 = vadd.f32 %v5492, %v5580
      %5582 = vmatmul.bf16.gmra.mxu0 %v4990
      %v5583 = vpop.f32.mrf.mxu0
      %v5584 = vadd.f32 %v5495, %v5583
      %v5585 = vpop.f32.mrf.mxu0
      %v5586 = vadd.f32 %v5497, %v5585
      %5587 = vmatmul.bf16.gmra.mxu0 %v4995
      %v5588 = vpop.f32.mrf.mxu0
      %v5589 = vadd.f32 %v5500, %v5588
      %v5590 = vpop.f32.mrf.mxu0
      %v5591 = vadd.f32 %v5502, %v5590
      %5592 = vmatmul.bf16.gmra.mxu0 %v5000
      %v5593 = vpop.f32.mrf.mxu0
      %v5594 = vadd.f32 %v5505, %v5593
      %v5595 = vpop.f32.mrf.mxu0
      %v5596 = vadd.f32 %v5507, %v5595
      %5597 = vmatmul.bf16.gmra.mxu0 %v5005
      %v5598 = vpop.f32.mrf.mxu0
      %v5599 = vadd.f32 %v5510, %v5598
      %v5600 = vpop.f32.mrf.mxu0
      %v5601 = vadd.f32 %v5512, %v5600
      %5602 = vmatmul.bf16.gmra.mxu0 %v5010
      %v5603 = vpop.f32.mrf.mxu0
      %v5604 = vadd.f32 %v5515, %v5603
      %v5605 = vpop.f32.mrf.mxu0
      %v5606 = vadd.f32 %v5517, %v5605
      %5607 = vmatmul.bf16.gmra.mxu0 %v5015
      %v5608 = vpop.f32.mrf.mxu0
      %v5609 = vadd.f32 %v5520, %v5608
      %v5610 = vpop.f32.mrf.mxu0
      %v5611 = vadd.f32 %v5522, %v5610
      %5612 = vmatmul.bf16.gmra.mxu0 %v5020
      %v5613 = vpop.f32.mrf.mxu0
      %v5614 = vadd.f32 %v5525, %v5613
      %v5615 = vpop.f32.mrf.mxu0
      %v5616 = vadd.f32 %v5527, %v5615
      %5617 = vmatmul.bf16.gmra.mxu0 %v5025
      %v5618 = vpop.f32.mrf.mxu0
      %v5619 = vadd.f32 %v5530, %v5618
      %v5620 = vpop.f32.mrf.mxu0
      %v5621 = vadd.f32 %v5532, %v5620
      %5622 = vmatmul.bf16.gmra.mxu0 %v5030
      %v5623 = vpop.f32.mrf.mxu0
      %v5624 = vadd.f32 %v5535, %v5623
      %v5625 = vpop.f32.mrf.mxu0
      %v5626 = vadd.f32 %v5537, %v5625
      %5627 = vmatmul.bf16.gmra.mxu0 %v5035
      %v5628 = vpop.f32.mrf.mxu0
      %v5629 = vadd.f32 %v5540, %v5628
      %v5630 = vpop.f32.mrf.mxu0
      %v5631 = vadd.f32 %v5542, %v5630
      %5632 = vmatmul.bf16.gmra.mxu0 %v5040
      %v5633 = vpop.f32.mrf.mxu0
      %v5634 = vadd.f32 %v5545, %v5633
      %v5635 = vpop.f32.mrf.mxu0
      %v5636 = vadd.f32 %v5547, %v5635
      %5637 = vmatmul.bf16.gmra.mxu0 %v5045
      %v5638 = vpop.f32.mrf.mxu0
      %v5639 = vadd.f32 %v5550, %v5638
      %v5640 = vpop.f32.mrf.mxu0
      %v5641 = vadd.f32 %v5552, %v5640
      %5642 = vmatmul.bf16.gmra.mxu0 %v5050
      %v5643 = vpop.f32.mrf.mxu0
      %v5644 = vadd.f32 %v5555, %v5643
      %v5645 = vpop.f32.mrf.mxu0
      %v5646 = vadd.f32 %v5557, %v5645
      %5647 = vmatmul.bf16.gmra.mxu0 %v5055
      %v5648 = vpop.f32.mrf.mxu0
      %v5649 = vadd.f32 %v5560, %v5648
      %v5650 = vpop.f32.mrf.mxu0
      %v5651 = vadd.f32 %v5562, %v5650
      %5652 = vmatmul.bf16.gmra.mxu0 %v5060
      %v5653 = vpop.f32.mrf.mxu0
      %v5654 = vadd.f32 %v5565, %v5653
      %v5655 = vpop.f32.mrf.mxu0
      %v5656 = vadd.f32 %v5567, %v5655
      %5657 = vdwg.mxu0
      %5658 = vmatpush.bf16.msra.mxu0 %v5302
      %5659 = vmatpush.bf16.msra.mxu0 %v5301
      %5660 = vmatpush.bf16.msra.mxu0 %v5300
      %5661 = vmatpush.bf16.msra.mxu0 %v5299
      %5662 = vmatpush.bf16.msra.mxu0 %v5298
      %5663 = vmatpush.bf16.msra.mxu0 %v5297
      %5664 = vmatpush.bf16.msra.mxu0 %v5296
      %5665 = vmatpush.bf16.msra.mxu0 %v5295
      %5666 = vmatmul.bf16.gmra.mxu0 %v4986
      %v5667 = vpop.f32.mrf.mxu0
      %v5668 = vadd.f32 %v5579, %v5667
      %v5669 = vpop.f32.mrf.mxu0
      %v5670 = vadd.f32 %v5581, %v5669
      %5671 = vmatmul.bf16.gmra.mxu0 %v4991
      %v5672 = vpop.f32.mrf.mxu0
      %v5673 = vadd.f32 %v5584, %v5672
      %v5674 = vpop.f32.mrf.mxu0
      %v5675 = vadd.f32 %v5586, %v5674
      %5676 = vmatmul.bf16.gmra.mxu0 %v4996
      %v5677 = vpop.f32.mrf.mxu0
      %v5678 = vadd.f32 %v5589, %v5677
      %v5679 = vpop.f32.mrf.mxu0
      %v5680 = vadd.f32 %v5591, %v5679
      %5681 = vmatmul.bf16.gmra.mxu0 %v5001
      %v5682 = vpop.f32.mrf.mxu0
      %v5683 = vadd.f32 %v5594, %v5682
      %v5684 = vpop.f32.mrf.mxu0
      %v5685 = vadd.f32 %v5596, %v5684
      %5686 = vmatmul.bf16.gmra.mxu0 %v5006
      %v5687 = vpop.f32.mrf.mxu0
      %v5688 = vadd.f32 %v5599, %v5687
      %v5689 = vpop.f32.mrf.mxu0
      %v5690 = vadd.f32 %v5601, %v5689
      %5691 = vmatmul.bf16.gmra.mxu0 %v5011
      %v5692 = vpop.f32.mrf.mxu0
      %v5693 = vadd.f32 %v5604, %v5692
      %v5694 = vpop.f32.mrf.mxu0
      %v5695 = vadd.f32 %v5606, %v5694
      %5696 = vmatmul.bf16.gmra.mxu0 %v5016
      %v5697 = vpop.f32.mrf.mxu0
      %v5698 = vadd.f32 %v5609, %v5697
      %v5699 = vpop.f32.mrf.mxu0
      %v5700 = vadd.f32 %v5611, %v5699
      %5701 = vmatmul.bf16.gmra.mxu0 %v5021
      %v5702 = vpop.f32.mrf.mxu0
      %v5703 = vadd.f32 %v5614, %v5702
      %v5704 = vpop.f32.mrf.mxu0
      %v5705 = vadd.f32 %v5616, %v5704
      %5706 = vmatmul.bf16.gmra.mxu0 %v5026
      %v5707 = vpop.f32.mrf.mxu0
      %v5708 = vadd.f32 %v5619, %v5707
      %v5709 = vpop.f32.mrf.mxu0
      %v5710 = vadd.f32 %v5621, %v5709
      %5711 = vmatmul.bf16.gmra.mxu0 %v5031
      %v5712 = vpop.f32.mrf.mxu0
      %v5713 = vadd.f32 %v5624, %v5712
      %v5714 = vpop.f32.mrf.mxu0
      %v5715 = vadd.f32 %v5626, %v5714
      %5716 = vmatmul.bf16.gmra.mxu0 %v5036
      %v5717 = vpop.f32.mrf.mxu0
      %v5718 = vadd.f32 %v5629, %v5717
      %v5719 = vpop.f32.mrf.mxu0
      %v5720 = vadd.f32 %v5631, %v5719
      %5721 = vmatmul.bf16.gmra.mxu0 %v5041
      %v5722 = vpop.f32.mrf.mxu0
      %v5723 = vadd.f32 %v5634, %v5722
      %v5724 = vpop.f32.mrf.mxu0
      %v5725 = vadd.f32 %v5636, %v5724
      %5726 = vmatmul.bf16.gmra.mxu0 %v5046
      %v5727 = vpop.f32.mrf.mxu0
      %v5728 = vadd.f32 %v5639, %v5727
      %v5729 = vpop.f32.mrf.mxu0
      %v5730 = vadd.f32 %v5641, %v5729
      %5731 = vmatmul.bf16.gmra.mxu0 %v5051
      %v5732 = vpop.f32.mrf.mxu0
      %v5733 = vadd.f32 %v5644, %v5732
      %v5734 = vpop.f32.mrf.mxu0
      %v5735 = vadd.f32 %v5646, %v5734
      %5736 = vmatmul.bf16.gmra.mxu0 %v5056
      %v5737 = vpop.f32.mrf.mxu0
      %v5738 = vadd.f32 %v5649, %v5737
      %v5739 = vpop.f32.mrf.mxu0
      %v5740 = vadd.f32 %v5651, %v5739
      %5741 = vmatmul.bf16.gmra.mxu0 %v5061
      %v5742 = vpop.f32.mrf.mxu0
      %v5743 = vadd.f32 %v5654, %v5742
      %v5744 = vpop.f32.mrf.mxu0
      %v5745 = vadd.f32 %v5656, %v5744
      %5746 = vdwg.mxu0
      %5747 = vmatpush.bf16.msra.mxu0 0
      %5748 = vmatpush.bf16.msra.mxu0 0
      %5749 = vmatpush.bf16.msra.mxu0 0
      %5750 = vmatpush.bf16.msra.mxu0 0
      %5751 = vmatpush.bf16.msra.mxu0 %v5306
      %5752 = vmatpush.bf16.msra.mxu0 %v5305
      %5753 = vmatpush.bf16.msra.mxu0 %v5304
      %5754 = vmatpush.bf16.msra.mxu0 %v5303
      %5755 = vmatmul.bf16.gmra.mxu0 %v5344
      %v5756 = vpop.f32.mrf.mxu0
      %v5757 = vadd.f32 %v5668, %v5756
      %v5758 = vpop.f32.mrf.mxu0
      %v5759 = vadd.f32 %v5670, %v5758
      %5760 = vmatmul.bf16.gmra.mxu0 %v5347
      %v5761 = vpop.f32.mrf.mxu0
      %v5762 = vadd.f32 %v5673, %v5761
      %v5763 = vpop.f32.mrf.mxu0
      %v5764 = vadd.f32 %v5675, %v5763
      %5765 = vmatmul.bf16.gmra.mxu0 %v5350
      %v5766 = vpop.f32.mrf.mxu0
      %v5767 = vadd.f32 %v5678, %v5766
      %v5768 = vpop.f32.mrf.mxu0
      %v5769 = vadd.f32 %v5680, %v5768
      %5770 = vmatmul.bf16.gmra.mxu0 %v5353
      %v5771 = vpop.f32.mrf.mxu0
      %v5772 = vadd.f32 %v5683, %v5771
      %v5773 = vpop.f32.mrf.mxu0
      %v5774 = vadd.f32 %v5685, %v5773
      %5775 = vmatmul.bf16.gmra.mxu0 %v5356
      %v5776 = vpop.f32.mrf.mxu0
      %v5777 = vadd.f32 %v5688, %v5776
      %v5778 = vpop.f32.mrf.mxu0
      %v5779 = vadd.f32 %v5690, %v5778
      %5780 = vmatmul.bf16.gmra.mxu0 %v5359
      %v5781 = vpop.f32.mrf.mxu0
      %v5782 = vadd.f32 %v5693, %v5781
      %v5783 = vpop.f32.mrf.mxu0
      %v5784 = vadd.f32 %v5695, %v5783
      %5785 = vmatmul.bf16.gmra.mxu0 %v5362
      %v5786 = vpop.f32.mrf.mxu0
      %v5787 = vadd.f32 %v5698, %v5786
      %v5788 = vpop.f32.mrf.mxu0
      %v5789 = vadd.f32 %v5700, %v5788
      %5790 = vmatmul.bf16.gmra.mxu0 %v5365
      %v5791 = vpop.f32.mrf.mxu0
      %v5792 = vadd.f32 %v5703, %v5791
      %v5793 = vpop.f32.mrf.mxu0
      %v5794 = vadd.f32 %v5705, %v5793
      %5795 = vmatmul.bf16.gmra.mxu0 %v5368
      %v5796 = vpop.f32.mrf.mxu0
      %v5797 = vadd.f32 %v5708, %v5796
      %v5798 = vpop.f32.mrf.mxu0
      %v5799 = vadd.f32 %v5710, %v5798
      %5800 = vmatmul.bf16.gmra.mxu0 %v5371
      %v5801 = vpop.f32.mrf.mxu0
      %v5802 = vadd.f32 %v5713, %v5801
      %v5803 = vpop.f32.mrf.mxu0
      %v5804 = vadd.f32 %v5715, %v5803
      %5805 = vmatmul.bf16.gmra.mxu0 %v5374
      %v5806 = vpop.f32.mrf.mxu0
      %v5807 = vadd.f32 %v5718, %v5806
      %v5808 = vpop.f32.mrf.mxu0
      %v5809 = vadd.f32 %v5720, %v5808
      %5810 = vmatmul.bf16.gmra.mxu0 %v5377
      %v5811 = vpop.f32.mrf.mxu0
      %v5812 = vadd.f32 %v5723, %v5811
      %v5813 = vpop.f32.mrf.mxu0
      %v5814 = vadd.f32 %v5725, %v5813
      %5815 = vmatmul.bf16.gmra.mxu0 %v5380
      %v5816 = vpop.f32.mrf.mxu0
      %v5817 = vadd.f32 %v5728, %v5816
      %v5818 = vpop.f32.mrf.mxu0
      %v5819 = vadd.f32 %v5730, %v5818
      %5820 = vmatmul.bf16.gmra.mxu0 %v5383
      %v5821 = vpop.f32.mrf.mxu0
      %v5822 = vadd.f32 %v5733, %v5821
      %v5823 = vpop.f32.mrf.mxu0
      %v5824 = vadd.f32 %v5735, %v5823
      %5825 = vmatmul.bf16.gmra.mxu0 %v5386
      %v5826 = vpop.f32.mrf.mxu0
      %v5827 = vadd.f32 %v5738, %v5826
      %v5828 = vpop.f32.mrf.mxu0
      %v5829 = vadd.f32 %v5740, %v5828
      %5830 = vmatmul.bf16.gmra.mxu0 %v5389
      %v5831 = vpop.f32.mrf.mxu0
      %v5832 = vadd.f32 %v5743, %v5831
      %v5833 = vpop.f32.mrf.mxu0
      %v5834 = vadd.f32 %v5745, %v5833
      %5835 = vdwg.mxu0
      %v5836 = vsel %vm334, %v5757, 0.0
      %v5837 = vsel %vm334, %v5759, 0.0
      %v5838 = vadd.f32 %v5836, %v5837
      %v5839 = vsel %vm334, %v5762, 0.0
      %v5840 = vadd.f32 %v5838, %v5839
      %v5841 = vsel %vm334, %v5764, 0.0
      %v5842 = vadd.f32 %v5840, %v5841
      %v5843 = vsel %vm334, %v5767, 0.0
      %v5844 = vadd.f32 %v5842, %v5843
      %v5845 = vsel %vm334, %v5769, 0.0
      %v5846 = vadd.f32 %v5844, %v5845
      %v5847 = vsel %vm334, %v5772, 0.0
      %v5848 = vadd.f32 %v5846, %v5847
      %v5849 = vsel %vm334, %v5774, 0.0
      %v5850 = vadd.f32 %v5848, %v5849
      %v5851 = vsel %vm334, %v5777, 0.0
      %v5852 = vadd.f32 %v5850, %v5851
      %v5853 = vsel %vm334, %v5779, 0.0
      %v5854 = vadd.f32 %v5852, %v5853
      %v5855 = vsel %vm334, %v5782, 0.0
      %v5856 = vadd.f32 %v5854, %v5855
      %v5857 = vsel %vm334, %v5784, 0.0
      %v5858 = vadd.f32 %v5856, %v5857
      %v5859 = vsel %vm334, %v5787, 0.0
      %v5860 = vadd.f32 %v5858, %v5859
      %v5861 = vsel %vm334, %v5789, 0.0
      %v5862 = vadd.f32 %v5860, %v5861
      %v5863 = vsel %vm334, %v5792, 0.0
      %v5864 = vadd.f32 %v5862, %v5863
      %v5865 = vsel %vm334, %v5794, 0.0
      %v5866 = vadd.f32 %v5864, %v5865
      %v5867 = vsel %vm334, %v5797, 0.0
      %v5868 = vadd.f32 %v5866, %v5867
      %v5869 = vsel %vm334, %v5799, 0.0
      %v5870 = vadd.f32 %v5868, %v5869
      %v5871 = vsel %vm334, %v5802, 0.0
      %v5872 = vadd.f32 %v5870, %v5871
      %v5873 = vsel %vm334, %v5804, 0.0
      %v5874 = vadd.f32 %v5872, %v5873
      %v5875 = vsel %vm334, %v5807, 0.0
      %v5876 = vadd.f32 %v5874, %v5875
      %v5877 = vsel %vm334, %v5809, 0.0
      %v5878 = vadd.f32 %v5876, %v5877
      %v5879 = vsel %vm334, %v5812, 0.0
      %v5880 = vadd.f32 %v5878, %v5879
      %v5881 = vsel %vm334, %v5814, 0.0
      %v5882 = vadd.f32 %v5880, %v5881
      %v5883 = vsel %vm334, %v5817, 0.0
      %v5884 = vadd.f32 %v5882, %v5883
      %v5885 = vsel %vm334, %v5819, 0.0
      %v5886 = vadd.f32 %v5884, %v5885
      %v5887 = vsel %vm334, %v5822, 0.0
      %v5888 = vadd.f32 %v5886, %v5887
      %v5889 = vsel %vm334, %v5824, 0.0
      %v5890 = vadd.f32 %v5888, %v5889
      %v5891 = vsel %vm334, %v5827, 0.0
      %v5892 = vadd.f32 %v5890, %v5891
      %v5893 = vsel %vm334, %v5829, 0.0
      %v5894 = vadd.f32 %v5892, %v5893
      %v5895 = vsel %vm334, %v5832, 0.0
      %v5896 = vadd.f32 %v5894, %v5895
      %v5897 = vsel %vm334, %v5834, 0.0
      %v5898 = vadd.f32 %v5896, %v5897
      %v5899 = vrot.slane %v5898, 4
      %v5900 = vadd.f32 %v5898, %v5899
      %v5901 = vrot.slane %v5900, 2
      %v5902 = vadd.f32 %v5900, %v5901
      %v5903 = vrot.slane %v5902, 1
      %v5904 = vadd.f32 %v5902, %v5903
      %v5905 = vmul.f32 %v5904, 0.00390625
      %v5906 = vld [vmem:[%s5] sm:$0xff]
      %v5907 = vld [vmem:[%s5 + $0x8] sm:$0xff]
      %v5908 = vld [vmem:[%s5 + $0x10] sm:$0xff]
      %v5909 = vld [vmem:[%s5 + $0x18] sm:$0xff]
      %v5910 = vld [vmem:[%s5 + $0x20] sm:$0xff]
      %v5911 = vld [vmem:[%s5 + $0x28] sm:$0xff]
      %v5912 = vld [vmem:[%s5 + $0x30] sm:$0xff]
      %v5913 = vld [vmem:[%s5 + $0x38] sm:$0xff]
      %v5914 = vld [vmem:[%s6] sm:$0x1]
      %v5916 = vsel %vm334, %v5905, 0
      %5918 = vmatpush.msra.mxu0 0.0
      %5919 = vmatpush.msra.mxu0 0.0
      %5920 = vmatpush.msra.mxu0 0.0
      %5921 = vmatpush.msra.mxu0 0.0
      %5922 = vmatpush.msra.mxu0 0.0
      %5923 = vmatpush.msra.mxu0 0.0
      %5924 = vmatpush.msra.mxu0 0.0
      %5925 = vmatpush.msra.mxu0 0.0
      %5926 = vmatpush.msra.mxu0 %v5913
      %5927 = vmatpush.msra.mxu0 %v5912
      %5928 = vmatpush.msra.mxu0 %v5911
      %5929 = vmatpush.msra.mxu0 %v5910
      %5930 = vmatpush.msra.mxu0 %v5909
      %5931 = vmatpush.msra.mxu0 %v5908
      %5932 = vmatpush.msra.mxu0 %v5907
      %5933 = vmatpush.msra.mxu0 %v5906
      %5934 = vmatmul.f32.gmra.mxu0 %v5916
      %v5935 = vpop.f32.mrf.mxu0
      %v5936 = vadd.f32 %v5914, %v5935
      %5937 = vdwg.mxu0
      %v5938 = vmax.f32 %v5936, 0.0
      %v5939 = vld [vmem:[%s7] sm:$0xf]
      %v5940 = vld [vmem:[%s8] sm:$0x1]
      %vm5941 = vcmask 31744
      %v5943 = vsel %vm5941, %v5938, 0
      %vm5945 = vcmask 1043456
      %v5947 = vsel %vm5945, %v5939, 0
      %5949 = vmatpush.msra.mxu0 0.0
      %5950 = vmatpush.msra.mxu0 0.0
      %5951 = vmatpush.msra.mxu0 0.0
      %5952 = vmatpush.msra.mxu0 0.0
      %5953 = vmatpush.msra.mxu0 0.0
      %5954 = vmatpush.msra.mxu0 0.0
      %5955 = vmatpush.msra.mxu0 0.0
      %5956 = vmatpush.msra.mxu0 0.0
      %5957 = vmatpush.msra.mxu0 0.0
      %5958 = vmatpush.msra.mxu0 0.0
      %5959 = vmatpush.msra.mxu0 0.0
      %5960 = vmatpush.msra.mxu0 0.0
      %5961 = vmatpush.msra.mxu0 0.0
      %5962 = vmatpush.msra.mxu0 0.0
      %5963 = vmatpush.msra.mxu0 0.0
      %5964 = vmatpush.msra.mxu0 %v5947
      %5965 = vmatmul.f32.gmra.mxu0 %v5943
      %v5966 = vpop.f32.mrf.mxu0
      %v5967 = vadd.f32 %v5940, %v5966
      %5968 = vdwg.mxu0
      %v5969 = vxor.u32 %v5967, 2147483648
      %v5970 = vmul.f32 %v5969, 1.442695
      %v5971 = vpow.pop %v5970
      %v5972 = vadd.f32 %v5971, 1.0
      %v5973 = vrcp.pop %v5972
      %v5974 = vmul.f32 %v5972, %v5973
      %v5975 = vsub.f32 1.0, %v5974
      %v5976 = vmul.f32 %v5973, %v5975
      %v5977 = vadd.f32 %v5973, %v5976
      %vm5978 = vweird.f32 %v5972
      %vm5979 = vweird.f32 %v5973
      %vm5980 = vmor %vm5978, %vm5979
      %v5981 = vsel %vm5980, %v5973, %v5977
      %v5982 = vand.u32 2147483647, %v5972
      %vm5983 = vcmp.eq.f32.partialorder %v5982, 8.507059e+37
      %v5984 = vand.u32 %v5972, 2147483648
      %v5985 = vor.u32 1.1754944e-38, %v5984
      %v5986 = vsel %vm5983, %v5985, %v5981
      %v5987 = vmul.f32 1.0, %v5986
      %v5988 = vperm.slane %v5987, 0
      %v5989 = vmul.f32 %v5757, %v5988
      %v5990 = vmul.f32 %v5759, %v5988
      %v5991 = vmul.f32 %v5762, %v5988
      %v5992 = vmul.f32 %v5764, %v5988
      %v5993 = vmul.f32 %v5767, %v5988
      %v5994 = vmul.f32 %v5769, %v5988
      %v5995 = vmul.f32 %v5772, %v5988
      %v5996 = vmul.f32 %v5774, %v5988
      %v5997 = vmul.f32 %v5777, %v5988
      %v5998 = vmul.f32 %v5779, %v5988
      %v5999 = vmul.f32 %v5782, %v5988
      %v6000 = vmul.f32 %v5784, %v5988
      %v6001 = vmul.f32 %v5787, %v5988
      %v6002 = vmul.f32 %v5789, %v5988
      %v6003 = vmul.f32 %v5792, %v5988
      %v6004 = vmul.f32 %v5794, %v5988
      %v6005 = vmul.f32 %v5797, %v5988
      %v6006 = vmul.f32 %v5799, %v5988
      %v6007 = vmul.f32 %v5802, %v5988
      %v6008 = vmul.f32 %v5804, %v5988
      %v6009 = vmul.f32 %v5807, %v5988
      %v6010 = vmul.f32 %v5809, %v5988
      %v6011 = vmul.f32 %v5812, %v5988
      %v6012 = vmul.f32 %v5814, %v5988
      %v6013 = vmul.f32 %v5817, %v5988
      %v6014 = vmul.f32 %v5819, %v5988
      %v6015 = vmul.f32 %v5822, %v5988
      %v6016 = vmul.f32 %v5824, %v5988
      %v6017 = vmul.f32 %v5827, %v5988
      %v6018 = vmul.f32 %v5829, %v5988
      %v6019 = vmul.f32 %v5832, %v5988
      %v6020 = vmul.f32 %v5834, %v5988
      %v6021 = vadd.f32 %v390, %v5989
      %v6022 = vadd.f32 %v391, %v5990
      %v6023 = vadd.f32 %v392, %v5991
      %v6024 = vadd.f32 %v393, %v5992
      %v6025 = vadd.f32 %v394, %v5993
      %v6026 = vadd.f32 %v395, %v5994
      %v6027 = vadd.f32 %v396, %v5995
      %v6028 = vadd.f32 %v397, %v5996
      %v6029 = vadd.f32 %v398, %v5997
      %v6030 = vadd.f32 %v399, %v5998
      %v6031 = vadd.f32 %v400, %v5999
      %v6032 = vadd.f32 %v401, %v6000
      %v6033 = vadd.f32 %v402, %v6001
      %v6034 = vadd.f32 %v403, %v6002
      %v6035 = vadd.f32 %v404, %v6003
      %v6036 = vadd.f32 %v405, %v6004
      %v6037 = vadd.f32 %v406, %v6005
      %v6038 = vadd.f32 %v407, %v6006
      %v6039 = vadd.f32 %v408, %v6007
      %v6040 = vadd.f32 %v409, %v6008
      %v6041 = vadd.f32 %v410, %v6009
      %v6042 = vadd.f32 %v411, %v6010
      %v6043 = vadd.f32 %v412, %v6011
      %v6044 = vadd.f32 %v413, %v6012
      %v6045 = vadd.f32 %v414, %v6013
      %v6046 = vadd.f32 %v415, %v6014
      %v6047 = vadd.f32 %v416, %v6015
      %v6048 = vadd.f32 %v417, %v6016
      %v6049 = vadd.f32 %v418, %v6017
      %v6050 = vadd.f32 %v419, %v6018
      %v6051 = vadd.f32 %v420, %v6019
      %v6052 = vadd.f32 %v421, %v6020
      %6053 = vst.msk [vmem:[%s332] sm:$0xff] %vm334, %v6021
      %6054 = vst.msk [vmem:[%s332 + $0x8] sm:$0xff] %vm334, %v6022
      %6055 = vst.msk [vmem:[%s332 + $0x10] sm:$0xff] %vm334, %v6023
      %6056 = vst.msk [vmem:[%s332 + $0x18] sm:$0xff] %vm334, %v6024
      %6057 = vst.msk [vmem:[%s332 + $0x20] sm:$0xff] %vm334, %v6025
      %6058 = vst.msk [vmem:[%s332 + $0x28] sm:$0xff] %vm334, %v6026
      %6059 = vst.msk [vmem:[%s332 + $0x30] sm:$0xff] %vm334, %v6027
      %6060 = vst.msk [vmem:[%s332 + $0x38] sm:$0xff] %vm334, %v6028
      %6061 = vst.msk [vmem:[%s332 + $0x40] sm:$0xff] %vm334, %v6029
      %6062 = vst.msk [vmem:[%s332 + $0x48] sm:$0xff] %vm334, %v6030
      %6063 = vst.msk [vmem:[%s332 + $0x50] sm:$0xff] %vm334, %v6031
      %6064 = vst.msk [vmem:[%s332 + $0x58] sm:$0xff] %vm334, %v6032
      %6065 = vst.msk [vmem:[%s332 + $0x60] sm:$0xff] %vm334, %v6033
      %6066 = vst.msk [vmem:[%s332 + $0x68] sm:$0xff] %vm334, %v6034
      %6067 = vst.msk [vmem:[%s332 + $0x70] sm:$0xff] %vm334, %v6035
      %6068 = vst.msk [vmem:[%s332 + $0x78] sm:$0xff] %vm334, %v6036
      %6069 = vst.msk [vmem:[%s332 + $0x80] sm:$0xff] %vm334, %v6037
      %6070 = vst.msk [vmem:[%s332 + $0x88] sm:$0xff] %vm334, %v6038
      %6071 = vst.msk [vmem:[%s332 + $0x90] sm:$0xff] %vm334, %v6039
      %6072 = vst.msk [vmem:[%s332 + $0x98] sm:$0xff] %vm334, %v6040
      %6073 = vst.msk [vmem:[%s332 + $0xa0] sm:$0xff] %vm334, %v6041
      %6074 = vst.msk [vmem:[%s332 + $0xa8] sm:$0xff] %vm334, %v6042
      %6075 = vst.msk [vmem:[%s332 + $0xb0] sm:$0xff] %vm334, %v6043
      %6076 = vst.msk [vmem:[%s332 + $0xb8] sm:$0xff] %vm334, %v6044
      %6077 = vst.msk [vmem:[%s332 + $0xc0] sm:$0xff] %vm334, %v6045
      %6078 = vst.msk [vmem:[%s332 + $0xc8] sm:$0xff] %vm334, %v6046
      %6079 = vst.msk [vmem:[%s332 + $0xd0] sm:$0xff] %vm334, %v6047
      %6080 = vst.msk [vmem:[%s332 + $0xd8] sm:$0xff] %vm334, %v6048
      %6081 = vst.msk [vmem:[%s332 + $0xe0] sm:$0xff] %vm334, %v6049
      %6082 = vst.msk [vmem:[%s332 + $0xe8] sm:$0xff] %vm334, %v6050
      %6083 = vst.msk [vmem:[%s332 + $0xf0] sm:$0xff] %vm334, %v6051
      %6084 = vst.msk [vmem:[%s332 + $0xf8] sm:$0xff] %vm334, %v6052
      %p6085 = scmp.lt.s32.totalorder %s20, 1
      %s6086 = scalar_select %p6085, %s20, 1
      %s6087 = smul.addr %s6086, 32
      %s6088 = smul.addr %s6087, 8
      %s6089 = scalar_lea.vmem %s9, %s6088
      // Predicated region
      $region57: #{residual_group_forward.5} parent=55 // pred_check
        %p6090 = pneg %p232
      $region58: #{residual_group_forward.5} parent=55 // pred_check_branch
        %6092 = sbr.rel (%p6090) target = $region60
      $region59: #{residual_group_forward.5} parent=55 // pred_region
        _
      $region60: #{residual_group_forward.5} parent=55 // pred_fallthru
        _
    $region56: #{residual_group_forward.5} parent=5 // pred_fallthru
      _
    %p6093 = scmp.le.s32.totalorder 2, %s15
    // Predicated region
    $region61: #{residual_group_forward.5} parent=5 // pred_check
      %p6094 = pneg %p6093
    $region62: #{residual_group_forward.5} parent=5 // pred_check_branch
      %6096 = sbr.rel (%p6094) target = $region64
    $region63: #{residual_group_forward.5} parent=5 // pred_region
      %s6097 = ssub.s32 %s15, 2
      // Predicated region
      $region65: #{residual_group_forward.5} parent=63 // pred_check
        %p6098 = pneg %p238
      $region66: #{residual_group_forward.5} parent=63 // pred_check_branch
        %6100 = sbr.rel (%p6098) target = $region68
      $region67: #{residual_group_forward.5} parent=63 // pred_region
        %p6101 = scmp.lt.s32.totalorder %s21, 1
        %s6102 = scalar_select %p6101, %s21, 1
        %s6103 = smul.addr %s6102, 32
        %s6104 = smul.addr %s6103, 8
        %s6105 = scalar_lea.vmem %s9, %s6104
      $region68: #{residual_group_forward.5} parent=63 // pred_fallthru
        _
    $region64: #{residual_group_forward.5} parent=5 // pred_fallthru
      _
  $region6: #{residual_group_forward.5} parent=0 // loop_footer
    %s19 = sadd.s32 1, %s15
  $region7: #{residual_group_forward.5} parent=0 // loop_footer_branch
    %14 = sbr.rel target = $region3
  $region8: #{residual_group_forward.5} parent=0 // loop_exit
    _

</llo_original>
